<compile_context>
chip_gen: v7x
topology: tpu7x:2x2x1
jax: 0.10.0
libtpu: 0.0.40
codegen_flags: <defaults>
</compile_context>

<pallas_src>
import functools

import jax
import jax.numpy as jnp
from jax import lax
from jax.experimental import pallas as pl
from jax.experimental.pallas import tpu as pltpu

_VMEM = pltpu.MemorySpace.VMEM
_PARALLEL = pltpu.CompilerParams(dimension_semantics=("parallel",))


# ----------------------------- Pallas kernels ------------------------------

def _linear_kernel(x_ref, w_t_ref, b_ref, o_ref):
    """y = x @ W^T + b  (bf16 MXU matmul, f32 accumulate)."""
    o_ref[...] = (jnp.dot(x_ref[...].astype(jnp.bfloat16), w_t_ref[...],
                          preferred_element_type=jnp.float32) + b_ref[...])


def _ctx_sess_gates_kernel(x_ref, wc_t_ref, bc_ref, wih_t_ref, bih_ref, o_ref):
    """Fused context encoder (Linear+Sigmoid) + session-GRU input-gate matmul."""
    g = jax.nn.sigmoid(
        jnp.dot(x_ref[...].astype(jnp.bfloat16), wc_t_ref[...],
                preferred_element_type=jnp.float32) + bc_ref[...])
    o_ref[...] = (jnp.dot(g.astype(jnp.bfloat16), wih_t_ref[...],
                          preferred_element_type=jnp.float32) + bih_ref[...])


def _bigru_hid_kernel(gi_ref, whh_t_ref, bhh_ref, len_ref, h_ref):
    """One direction (grid axis d) of a masked bidirectional GRU.

    Final hidden only — no per-step sequence writeback.
      gi_ref : [T, B, 3H]  precomputed x @ W_ih^T + b_ih (gate order r, z, n)
      whh_t  : [H, 3H]     bhh: [1, 3H]     len_ref: [B, 1] int32
      h_ref  : [B, H]      final hidden of this direction
    d == 0 walks t = 0..T-1; d == 1 walks t = T-1..0 (packed backward dir).
    Steps whose time index >= length keep the previous hidden state, which
    reproduces pack_padded_sequence semantics for the final hidden.
    """
    T = gi_ref.shape[0]
    B, H = h_ref.shape
    d = pl.program_id(0)
    whh_t = whh_t_ref[...]
    bhh = bhh_ref[...]
    lengths = len_ref[...]                       # [B, 1] int32

    def step(t, h):
        idx = jnp.where(d == 1, T - 1 - t, t)
        gi = gi_ref[idx]                         # [B, 3H]
        gh = jnp.dot(h, whh_t, preferred_element_type=jnp.float32) + bhh
        r = jax.nn.sigmoid(gi[:, 0:H] + gh[:, 0:H])
        z = jax.nn.sigmoid(gi[:, H:2 * H] + gh[:, H:2 * H])
        n = jnp.tanh(gi[:, 2 * H:] + r * gh[:, 2 * H:])
        h_new = (1.0 - z) * n + z * h
        return jnp.where(idx < lengths, h_new, h)

    h_ref[...] = lax.fori_loop(0, T, step, jnp.zeros((B, H), jnp.float32),
                               unroll=True)


def _bigru_seq_kernel(gi_ref, whh_t_ref, bhh_ref, out_ref):
    """One direction of a full-length bidirectional GRU with full outputs.

    Backward direction (d == 1) reads gi_ref[T-1-t] and writes out_ref[T-1-t],
    so outputs come back in natural time order for both directions.
    """
    T = gi_ref.shape[0]
    H = out_ref.shape[-1]
    B = out_ref.shape[1]
    d = pl.program_id(0)
    whh_t = whh_t_ref[...]
    bhh = bhh_ref[...]

    def step(t, h):
        idx = jnp.where(d == 1, T - 1 - t, t)
        gi = gi_ref[idx]
        gh = jnp.dot(h, whh_t, preferred_element_type=jnp.float32) + bhh
        r = jax.nn.sigmoid(gi[:, 0:H] + gh[:, 0:H])
        z = jax.nn.sigmoid(gi[:, H:2 * H] + gh[:, H:2 * H])
        n = jnp.tanh(gi[:, 2 * H:] + r * gh[:, 2 * H:])
        h_new = (1.0 - z) * n + z * h
        out_ref[idx] = h_new
        return h_new

    lax.fori_loop(0, T, step, jnp.zeros((B, H), jnp.float32), unroll=True)


def _bilstm_seq_kernel(gi_ref, whh_t_ref, h0_ref, out_ref, hf_ref):
    """One direction of a full-length bidirectional LSTM (gate order i,f,g,o).

    gi already contains x @ W_ih^T + b_ih + b_hh (both biases folded in).
    """
    T = gi_ref.shape[0]
    B, H = h0_ref.shape
    d = pl.program_id(0)
    whh_t = whh_t_ref[...]

    def step(t, carry):
        h, c = carry
        idx = jnp.where(d == 1, T - 1 - t, t)
        g = gi_ref[idx] + jnp.dot(h, whh_t, preferred_element_type=jnp.float32)
        i = jax.nn.sigmoid(g[:, 0:H])
        f = jax.nn.sigmoid(g[:, H:2 * H])
        gg = jnp.tanh(g[:, 2 * H:3 * H])
        o = jax.nn.sigmoid(g[:, 3 * H:])
        c_new = f * c + i * gg
        h_new = o * jnp.tanh(c_new)
        out_ref[idx] = h_new
        return (h_new, c_new)

    h_fin, _ = lax.fori_loop(0, T, step,
                             (h0_ref[...], jnp.zeros((B, H), jnp.float32)),
                             unroll=True)
    hf_ref[...] = h_fin


# --------------------------- pallas_call wrappers ---------------------------

def linear(x, w_t, b):
    """x: [N, in] f32, w_t: [in, out] bf16, b: [out] f32 -> [N, out] f32."""
    N = x.shape[0]
    out_dim = w_t.shape[1]
    return pl.pallas_call(
        _linear_kernel,
        out_shape=jax.ShapeDtypeStruct((N, out_dim), jnp.float32),
        in_specs=[pl.BlockSpec(memory_space=_VMEM)] * 3,
        out_specs=pl.BlockSpec(memory_space=_VMEM),
    )(x, w_t, b[None, :])


def ctx_session_gates(x, wc_t, bc, wih_t, bih):
    """sigmoid(x @ Wc^T + bc) @ Wih^T + bih   (fused, one launch)."""
    N = x.shape[0]
    out_dim = wih_t.shape[1]
    return pl.pallas_call(
        _ctx_sess_gates_kernel,
        out_shape=jax.ShapeDtypeStruct((N, out_dim), jnp.float32),
        in_specs=[pl.BlockSpec(memory_space=_VMEM)] * 5,
        out_specs=pl.BlockSpec(memory_space=_VMEM),
    )(x, wc_t, bc[None, :], wih_t, bih[None, :])


def bigru_hidden(gi_s, whh_s, bhh_s, lengths):
    """gi_s: [2, T, B, 3H] per-direction input gates.  Returns [2, B, H]."""
    _, T, Bn, G3 = gi_s.shape
    H = G3 // 3
    return pl.pallas_call(
        _bigru_hid_kernel,
        grid=(2,),
        out_shape=jax.ShapeDtypeStruct((2, Bn, H), jnp.float32),
        in_specs=[
            pl.BlockSpec((None, T, Bn, G3), lambda d: (d, 0, 0, 0)),
            pl.BlockSpec((None, H, G3), lambda d: (d, 0, 0)),
            pl.BlockSpec((None, 1, G3), lambda d: (d, 0, 0)),
            pl.BlockSpec((Bn, 1), lambda d: (0, 0)),
        ],
        out_specs=pl.BlockSpec((None, Bn, H), lambda d: (d, 0, 0)),
        compiler_params=_PARALLEL,
    )(gi_s, whh_s, bhh_s, lengths.astype(jnp.int32)[:, None])


def bigru_seq(gi_s, whh_s, bhh_s):
    """Full-length bidirectional GRU outputs: [2, T, B, H] (natural time order)."""
    _, T, Bn, G3 = gi_s.shape
    H = G3 // 3
    return pl.pallas_call(
        _bigru_seq_kernel,
        grid=(2,),
        out_shape=jax.ShapeDtypeStruct((2, T, Bn, H), jnp.float32),
        in_specs=[
            pl.BlockSpec((None, T, Bn, G3), lambda d: (d, 0, 0, 0)),
            pl.BlockSpec((None, H, G3), lambda d: (d, 0, 0)),
            pl.BlockSpec((None, 1, G3), lambda d: (d, 0, 0)),
        ],
        out_specs=pl.BlockSpec((None, T, Bn, H), lambda d: (d, 0, 0, 0)),
        compiler_params=_PARALLEL,
    )(gi_s, whh_s, bhh_s)


def bilstm_seq(gi_s, whh_s, h0_s):
    """Full-length bidirectional LSTM: returns (out [2,T,B,H], h_final [2,B,H])."""
    _, T, Bn, G4 = gi_s.shape
    H = G4 // 4
    return pl.pallas_call(
        _bilstm_seq_kernel,
        grid=(2,),
        out_shape=(jax.ShapeDtypeStruct((2, T, Bn, H), jnp.float32),
                   jax.ShapeDtypeStruct((2, Bn, H), jnp.float32)),
        in_specs=[
            pl.BlockSpec((None, T, Bn, G4), lambda d: (d, 0, 0, 0)),
            pl.BlockSpec((None, H, G4), lambda d: (d, 0, 0)),
            pl.BlockSpec((None, Bn, H), lambda d: (d, 0, 0)),
        ],
        out_specs=(pl.BlockSpec((None, T, Bn, H), lambda d: (d, 0, 0, 0)),
                   pl.BlockSpec((None, Bn, H), lambda d: (d, 0, 0))),
        compiler_params=_PARALLEL,
    )(gi_s, whh_s, h0_s)


# ------------------------- gate-precompute plumbing --------------------------

def _split_dirs_bm(gi_rows, Bn, T):
    """Rows ordered (batch-major, time-minor): [Bn*T, 2G] -> [2, T, Bn, G]."""
    G = gi_rows.shape[-1] // 2
    return jnp.transpose(gi_rows.reshape(Bn, T, 2, G), (2, 1, 0, 3))


def _split_dirs_tm(gi_rows, T, Bn):
    """Rows ordered (time-major, batch-minor): [T*Bn, 2G] -> [2, T, Bn, G]."""
    G = gi_rows.shape[-1] // 2
    return jnp.transpose(gi_rows.reshape(T, Bn, 2, G), (2, 0, 1, 3))


def bigru_final_hidden(x, lengths, p):
    """x: [Bn, T, E] batch-major.  Returns concat(fwd, bwd) final hidden [Bn, 2H]."""
    Bn, T, E = x.shape
    gi = linear(x.reshape(Bn * T, E), p['w_ih_t'], p['b_ih'])     # one big matmul
    gi = _split_dirs_bm(gi, Bn, T)                                # [2, T, Bn, 3H]
    hfin = bigru_hidden(gi, p['w_hh_t'], p['b_hh'], lengths)      # [2, Bn, H]
    return jnp.concatenate([hfin[0], hfin[1]], axis=-1)


# ------------------------------- parameters ---------------------------------

def _xavier(key, shape):
    a = (6.0 / (shape[0] + shape[1])) ** 0.5
    return jax.random.uniform(key, shape, jnp.float32, -a, a)


def _gru_params(key, in_dim, hidden):
    k = jax.random.split(key, 4)
    G = 3 * hidden
    return {
        'w_ih_t': jnp.concatenate([_xavier(k[0], (in_dim, G)),
                                   _xavier(k[1], (in_dim, G))],
                                  axis=1).astype(jnp.bfloat16),    # [in, 6H]
        'b_ih': jnp.zeros((2 * G,), jnp.float32),
        'w_hh_t': jnp.stack([_xavier(k[2], (hidden, G)),
                             _xavier(k[3], (hidden, G))]),         # [2, H, 3H]
        'b_hh': jnp.zeros((2, 1, G), jnp.float32),
    }


def _lstm_params(key, in_dim, hidden):
    k = jax.random.split(key, 4)
    G = 4 * hidden
    return {
        'w_ih_t': jnp.concatenate([_xavier(k[0], (in_dim, G)),
                                   _xavier(k[1], (in_dim, G))],
                                  axis=1).astype(jnp.bfloat16),    # [in, 8H]
        'b': jnp.zeros((2 * G,), jnp.float32),                     # b_ih+b_hh folded
        'w_hh_t': jnp.stack([_xavier(k[2], (hidden, G)),
                             _xavier(k[3], (hidden, G))]),         # [2, H, 4H]
    }


def init_params(key, vocab_size, embed_size, hidden_size, slot_size,
                intent_size):
    keys = jax.random.split(key, 9)
    h = hidden_size
    return {
        'embed': _xavier(keys[0], (vocab_size, embed_size)),
        'bigru_m': _gru_params(keys[1], embed_size, h),
        'bigru_c': _gru_params(keys[2], embed_size, h),
        'ctx_w_t': _xavier(keys[3], (4 * h, 2 * h)).astype(jnp.bfloat16),
        'ctx_b': jnp.zeros((2 * h,), jnp.float32),
        'session': _gru_params(keys[4], 2 * h, 2 * h),
        'dec1': _gru_params(keys[5], embed_size, 2 * h),
        'dec2': _lstm_params(keys[6], 4 * h, 2 * h),               # LSTM
        'intent_w_t': _xavier(keys[7], (4 * h, intent_size)).astype(jnp.bfloat16),
        'intent_b': jnp.zeros((intent_size,), jnp.float32),
        'slot_w_t': _xavier(keys[8], (4 * h, slot_size)).astype(jnp.bfloat16),
        'slot_b': jnp.zeros((slot_size,), jnp.float32),
    }


# ------------------------------- forward pass --------------------------------

def sden_forward(params, history, current, pad_idx=0):
    """history: int32 [B, T_hist, L_hist], current: int32 [B, L_cur].

    Returns (slot_prob [B*L_cur, slot_size], intent_prob [B, intent_size]) —
    raw logits, matching the reference module.
    """
    B, T_h, L_h = history.shape
    _, L_c = current.shape
    embed = params['embed']
    h = params['bigru_m']['w_hh_t'].shape[1]                       # hidden_size

    # TODO(synk): dropout layers are treated as inference identity (no RNG mask).

    # ---- memory (history) encoder: each utterance through bigru_m, hidden only
    hist_flat = history.reshape(B * T_h, L_h)
    hist_len = jnp.maximum((hist_flat != pad_idx).sum(-1), 1).astype(jnp.int32)
    hist_emb = embed[hist_flat]                                    # [B*T_h, L_h, E]
    M = bigru_final_hidden(hist_emb, hist_len,
                           params['bigru_m']).reshape(B, T_h, 2 * h)

    # ---- current-utterance encoder, hidden only
    cur_len = jnp.maximum((current != pad_idx).sum(-1), 1).astype(jnp.int32)
    cur_emb = embed[current]                                       # [B, L_c, E]
    C = bigru_final_hidden(cur_emb, cur_len, params['bigru_c'])    # [B, 2h]
    C = jnp.broadcast_to(C[:, None, :], (B, T_h, 2 * h))

    # ---- fused context encoder (Linear+Sigmoid) + session-GRU gate precompute
    CONCAT = jnp.concatenate([M, C], axis=-1).reshape(B * T_h, 4 * h)
    sess = params['session']
    gi_sess = ctx_session_gates(CONCAT, params['ctx_w_t'], params['ctx_b'],
                                sess['w_ih_t'], sess['b_ih'])      # [B*T_h, 12h]
    gi_sess = _split_dirs_bm(gi_sess, B, T_h)                      # [2, T_h, B, 6h]
    h_sess = bigru_hidden(gi_sess, sess['w_hh_t'], sess['b_hh'],
                          jnp.full((B,), T_h, jnp.int32))          # [2, B, 2h]

    # ---- decoder 1: full-length bidirectional GRU over current embeddings
    dec1 = params['dec1']
    gi_d1 = linear(cur_emb.reshape(B * L_c, -1), dec1['w_ih_t'], dec1['b_ih'])
    gi_d1 = _split_dirs_bm(gi_d1, B, L_c)                          # [2, L_c, B, 6h]
    O1_d = bigru_seq(gi_d1, dec1['w_hh_t'], dec1['b_hh'])          # [2, L_c, B, 2h]
    O1 = jnp.concatenate([O1_d[0], O1_d[1]], axis=-1)              # [L_c, B, 4h]

    # ---- decoder 2: full-length bidirectional LSTM, h0 = session hidden, c0 = 0
    dec2 = params['dec2']
    gi_d2 = linear(O1.reshape(L_c * B, 4 * h), dec2['w_ih_t'], dec2['b'])
    gi_d2 = _split_dirs_tm(gi_d2, L_c, B)                          # [2, L_c, B, 8h]
    O2_d, S2 = bilstm_seq(gi_d2, dec2['w_hh_t'], h_sess)
    O2 = jnp.transpose(jnp.concatenate([O2_d[0], O2_d[1]], axis=-1),
                       (1, 0, 2))                                  # [B, L_c, 4h]

    S = jnp.concatenate([S2[0], S2[1]], axis=-1)                   # [B, 4h]
    intent_prob = linear(S, params['intent_w_t'], params['intent_b'])
    slot_prob = linear(O2.reshape(B * L_c, 4 * h),
                       params['slot_w_t'], params['slot_b'])
    return slot_prob, intent_prob


# ----------------------------------- main ------------------------------------

if __name__ == "__main__":
    vocab_size, embed_size, hidden_size = 32, 16, 16
    slot_size, intent_size = 10, 5
    B, T_hist, L = 2, 3, 8

    key = jax.random.PRNGKey(0)
    kp, k1, k2, k3, k4 = jax.random.split(key, 5)

    params = init_params(kp, vocab_size, embed_size, hidden_size,
                         slot_size, intent_size)

    pos = jnp.arange(L)
    hist_tok = jax.random.randint(k1, (B, T_hist, L), 1, vocab_size)
    hist_len = jax.random.randint(k2, (B, T_hist), 3, L + 1)
    history = jnp.where(pos[None, None, :] < hist_len[:, :, None],
                        hist_tok, 0).astype(jnp.int32)

    cur_tok = jax.random.randint(k3, (B, L), 1, vocab_size)
    cur_len = jax.random.randint(k4, (B,), 3, L + 1)
    current = jnp.where(pos[None, :] < cur_len[:, None],
                        cur_tok, 0).astype(jnp.int32)

    fwd = jax.jit(sden_forward)
    slot_prob, intent_prob = fwd(params, history, current)
    jax.block_until_ready((slot_prob, intent_prob))

    assert slot_prob.shape == (B * L, slot_size)
    assert intent_prob.shape == (B, intent_size)
    assert bool(jnp.isfinite(slot_prob).all()) and bool(
        jnp.isfinite(intent_prob).all())
    print("KERNEL_OK")
</pallas_src>

<mosaic_0001>
module attributes {stable_mosaic.version = 11 : i64} {
  func.func @_linear_kernel(%arg0: memref<16x16xf32, #tpu.memory_space<vmem>>, %arg1: memref<16x96xbf16, #tpu.memory_space<vmem>>, %arg2: memref<1x96xf32, #tpu.memory_space<vmem>>, %arg3: memref<16x96xf32, #tpu.memory_space<vmem>>) attributes {dimension_semantics = [], scalar_prefetch = 0 : i64, scratch_operands = 0 : i64, tpu.core_type = #tpu.core_type<tc>} {
    %c0 = arith.constant 0 : index
    %c0_0 = arith.constant 0 : index
    %0 = vector.load %arg0[%c0, %c0_0] : memref<16x16xf32, #tpu.memory_space<vmem>>, vector<16x16xf32>
    %1 = arith.truncf %0 : vector<16x16xf32> to vector<16x16xbf16>
    %c0_1 = arith.constant 0 : index
    %c0_2 = arith.constant 0 : index
    %2 = vector.load %arg1[%c0_1, %c0_2] : memref<16x96xbf16, #tpu.memory_space<vmem>>, vector<16x96xbf16>
    %cst = arith.constant dense<0.000000e+00> : vector<16x96xf32>
    %3 = tpu.matmul %1, %2, %cst {dimension_numbers = #tpu.dot_dimension_numbers<[1], [0], [0], [1], [0, 0, 1, 1], [], []>} : vector<16x16xbf16>, vector<16x96xbf16>, vector<16x96xf32> -> vector<16x96xf32>
    %c0_3 = arith.constant 0 : index
    %c0_4 = arith.constant 0 : index
    %4 = vector.load %arg2[%c0_3, %c0_4] : memref<1x96xf32, #tpu.memory_space<vmem>>, vector<1x96xf32>
    %5 = vector.broadcast %4 : vector<1x96xf32> to vector<16x96xf32>
    %6 = arith.addf %3, %5 : vector<16x96xf32>
    %c0_5 = arith.constant 0 : index
    %c0_6 = arith.constant 0 : index
    %7 = vector.load %arg3[%c0_5, %c0_6] : memref<16x96xf32, #tpu.memory_space<vmem>>, vector<16x96xf32>
    tpu.vector_store %arg3[%c0_5, %c0_6], %6 {strides = array<i32>} : memref<16x96xf32, #tpu.memory_space<vmem>>, vector<16x96xf32>,
    return
  }
}

module attributes {stable_mosaic.version = 11 : i64} {
  func.func @_bigru_hid_kernel(%arg0: i32, %arg1: memref<1x8x2x48xf32, #tpu.memory_space<vmem>>, %arg2: memref<1x16x48xf32, #tpu.memory_space<vmem>>, %arg3: memref<1x1x48xf32, #tpu.memory_space<vmem>>, %arg4: memref<2x1xi32, #tpu.memory_space<vmem>>, %arg5: memref<1x2x16xf32, #tpu.memory_space<vmem>>) attributes {dimension_semantics = [#tpu.dimension_semantics<parallel>], iteration_bounds = array<i64: 2>, scalar_prefetch = 0 : i64, scratch_operands = 0 : i64, tpu.core_type = #tpu.core_type<tc>, window_params = [{transform_indices = @transform_0, window_bounds = array<i64: 1, 8, 2, 48>}, {transform_indices = @transform_1, window_bounds = array<i64: 1, 16, 48>}, {transform_indices = @transform_2, window_bounds = array<i64: 1, 1, 48>}, {pipeline_mode = #tpu.pipeline_mode<synchronous>, transform_indices = @transform_3, window_bounds = array<i64: 2, 1>}, {transform_indices = @transform_4, window_bounds = array<i64: 1, 2, 16>}]} {
    %c0 = arith.constant 0 : index
    %c0_0 = arith.constant 0 : index
    %c0_1 = arith.constant 0 : index
    %0 = vector.load %arg2[%c0, %c0_0, %c0_1] : memref<1x16x48xf32, #tpu.memory_space<vmem>>, vector<1x16x48xf32>
    %1 = vector.shape_cast %0 : vector<1x16x48xf32> to vector<16x48xf32>
    %c0_2 = arith.constant 0 : index
    %c0_3 = arith.constant 0 : index
    %c0_4 = arith.constant 0 : index
    %2 = vector.load %arg3[%c0_2, %c0_3, %c0_4] : memref<1x1x48xf32, #tpu.memory_space<vmem>>, vector<1x1x48xf32>
    %3 = vector.shape_cast %2 : vector<1x1x48xf32> to vector<1x48xf32>
    %c0_5 = arith.constant 0 : index
    %c0_6 = arith.constant 0 : index
    %4 = vector.load %arg4[%c0_5, %c0_6] : memref<2x1xi32, #tpu.memory_space<vmem>>, vector<2x1xi32>
    %cst = arith.constant 0.000000e+00 : f32
    %5 = vector.broadcast %cst : f32 to vector<2x16xf32>
    %c0_i32 = arith.constant 0 : i32
    %c1_i32 = arith.constant 1 : i32
    %6 = arith.cmpi eq, %arg0, %c1_i32 : i32
    %c7_i32 = arith.constant 7 : i32
    %7 = arith.subi %c7_i32, %c0_i32 : i32
    %8 = arith.select %6, %7, %c0_i32 : i32
    %c0_7 = arith.constant 0 : index
    %9 = arith.index_cast %8 : i32 to index
    %c0_8 = arith.constant 0 : index
    %c0_9 = arith.constant 0 : index
    %10 = vector.load %arg1[%c0_7, %9, %c0_8, %c0_9] : memref<1x8x2x48xf32, #tpu.memory_space<vmem>>, vector<1x1x2x48xf32>
    %11 = vector.shape_cast %10 : vector<1x1x2x48xf32> to vector<2x48xf32>
    %cst_10 = arith.constant dense<0.000000e+00> : vector<2x48xf32>
    %12 = tpu.matmul %5, %1, %cst_10 {dimension_numbers = #tpu.dot_dimension_numbers<[1], [0], [0], [1], [0, 0, 1, 1], [], []>} : vector<2x16xf32>, vector<16x48xf32>, vector<2x48xf32> -> vector<2x48xf32>
    %13 = vector.broadcast %3 : vector<1x48xf32> to vector<2x48xf32>
    %14 = arith.addf %12, %13 : vector<2x48xf32>
    %15 = vector.extract_strided_slice %11 {offsets = [0, 0], sizes = [2, 16], strides = [1, 1]} : vector<2x48xf32> to vector<2x16xf32>
    %16 = vector.extract_strided_slice %14 {offsets = [0, 0], sizes = [2, 16], strides = [1, 1]} : vector<2x48xf32> to vector<2x16xf32>
    %17 = arith.addf %15, %16 : vector<2x16xf32>
    %18 = arith.negf %17 : vector<2x16xf32>
    %19 = math.exp %18 : vector<2x16xf32>
    %cst_11 = arith.constant 1.000000e+00 : f32
    %20 = vector.broadcast %cst_11 : f32 to vector<2x16xf32>
    %21 = arith.addf %20, %19 : vector<2x16xf32>
    %22 = arith.divf %20, %21 : vector<2x16xf32>
    %23 = vector.extract_strided_slice %11 {offsets = [0, 16], sizes = [2, 16], strides = [1, 1]} : vector<2x48xf32> to vector<2x16xf32>
    %24 = vector.extract_strided_slice %14 {offsets = [0, 16], sizes = [2, 16], strides = [1, 1]} : vector<2x48xf32> to vector<2x16xf32>
    %25 = arith.addf %23, %24 : vector<2x16xf32>
    %26 = arith.negf %25 : vector<2x16xf32>
    %27 = math.exp %26 : vector<2x16xf32>
    %cst_12 = arith.constant 1.000000e+00 : f32
    %28 = vector.broadcast %cst_12 : f32 to vector<2x16xf32>
    %29 = arith.addf %28, %27 : vector<2x16xf32>
    %30 = arith.divf %28, %29 : vector<2x16xf32>
    %31 = vector.extract_strided_slice %11 {offsets = [0, 32], sizes = [2, 16], strides = [1, 1]} : vector<2x48xf32> to vector<2x16xf32>
    %32 = vector.extract_strided_slice %14 {offsets = [0, 32], sizes = [2, 16], strides = [1, 1]} : vector<2x48xf32> to vector<2x16xf32>
    %33 = arith.mulf %22, %32 : vector<2x16xf32>
    %34 = arith.addf %31, %33 : vector<2x16xf32>
    %35 = math.tanh %34 : vector<2x16xf32>
    %cst_13 = arith.constant 1.000000e+00 : f32
    %36 = vector.broadcast %cst_13 : f32 to vector<2x16xf32>
    %37 = arith.subf %36, %30 : vector<2x16xf32>
    %38 = arith.mulf %37, %35 : vector<2x16xf32>
    %39 = arith.mulf %30, %5 : vector<2x16xf32>
    %40 = arith.addf %38, %39 : vector<2x16xf32>
    %41 = vector.broadcast %8 : i32 to vector<2x1xi32>
    %42 = arith.cmpi slt, %41, %4 : vector<2x1xi32>
    %43 = vector.shape_cast %42 : vector<2x1xi1> to vector<2x1xi1>
    %44 = vector.broadcast %43 : vector<2x1xi1> to vector<2x16xi1>
    %45 = arith.select %44, %40, %5 : vector<2x16xi1>, vector<2x16xf32>
    %c1_i32_14 = arith.constant 1 : i32
    %c1_i32_15 = arith.constant 1 : i32
    %46 = arith.cmpi eq, %arg0, %c1_i32_15 : i32
    %c7_i32_16 = arith.constant 7 : i32
    %47 = arith.subi %c7_i32_16, %c1_i32_14 : i32
    %48 = arith.select %46, %47, %c1_i32_14 : i32
    %c0_17 = arith.constant 0 : index
    %49 = arith.index_cast %48 : i32 to index
    %c0_18 = arith.constant 0 : index
    %c0_19 = arith.constant 0 : index
    %50 = vector.load %arg1[%c0_17, %49, %c0_18, %c0_19] : memref<1x8x2x48xf32, #tpu.memory_space<vmem>>, vector<1x1x2x48xf32>
    %51 = vector.shape_cast %50 : vector<1x1x2x48xf32> to vector<2x48xf32>
    %cst_20 = arith.constant dense<0.000000e+00> : vector<2x48xf32>
    %52 = tpu.matmul %45, %1, %cst_20 {dimension_numbers = #tpu.dot_dimension_numbers<[1], [0], [0], [1], [0, 0, 1, 1], [], []>} : vector<2x16xf32>, vector<16x48xf32>, vector<2x48xf32> -> vector<2x48xf32>
    %53 = vector.broadcast %3 : vector<1x48xf32> to vector<2x48xf32>
    %54 = arith.addf %52, %53 : vector<2x48xf32>
    %55 = vector.extract_strided_slice %51 {offsets = [0, 0], sizes = [2, 16], strides = [1, 1]} : vector<2x48xf32> to vector<2x16xf32>
    %56 = vector.extract_strided_slice %54 {offsets = [0, 0], sizes = [2, 16], strides = [1, 1]} : vector<2x48xf32> to vector<2x16xf32>
    %57 = arith.addf %55, %56 : vector<2x16xf32>
    %58 = arith.negf %57 : vector<2x16xf32>
    %59 = math.exp %58 : vector<2x16xf32>
    %cst_21 = arith.constant 1.000000e+00 : f32
    %60 = vector.broadcast %cst_21 : f32 to vector<2x16xf32>
    %61 = arith.addf %60, %59 : vector<2x16xf32>
    %62 = arith.divf %60, %61 : vector<2x16xf32>
    %63 = vector.extract_strided_slice %51 {offsets = [0, 16], sizes = [2, 16], strides = [1, 1]} : vector<2x48xf32> to vector<2x16xf32>
    %64 = vector.extract_strided_slice %54 {offsets = [0, 16], sizes = [2, 16], strides = [1, 1]} : vector<2x48xf32> to vector<2x16xf32>
    %65 = arith.addf %63, %64 : vector<2x16xf32>
    %66 = arith.negf %65 : vector<2x16xf32>
    %67 = math.exp %66 : vector<2x16xf32>
    %cst_22 = arith.constant 1.000000e+00 : f32
    %68 = vector.broadcast %cst_22 : f32 to vector<2x16xf32>
    %69 = arith.addf %68, %67 : vector<2x16xf32>
    %70 = arith.divf %68, %69 : vector<2x16xf32>
    %71 = vector.extract_strided_slice %51 {offsets = [0, 32], sizes = [2, 16], strides = [1, 1]} : vector<2x48xf32> to vector<2x16xf32>
    %72 = vector.extract_strided_slice %54 {offsets = [0, 32], sizes = [2, 16], strides = [1, 1]} : vector<2x48xf32> to vector<2x16xf32>
    %73 = arith.mulf %62, %72 : vector<2x16xf32>
    %74 = arith.addf %71, %73 : vector<2x16xf32>
    %75 = math.tanh %74 : vector<2x16xf32>
    %cst_23 = arith.constant 1.000000e+00 : f32
    %76 = vector.broadcast %cst_23 : f32 to vector<2x16xf32>
    %77 = arith.subf %76, %70 : vector<2x16xf32>
    %78 = arith.mulf %77, %75 : vector<2x16xf32>
    %79 = arith.mulf %70, %45 : vector<2x16xf32>
    %80 = arith.addf %78, %79 : vector<2x16xf32>
    %81 = vector.broadcast %48 : i32 to vector<2x1xi32>
    %82 = arith.cmpi slt, %81, %4 : vector<2x1xi32>
    %83 = vector.shape_cast %82 : vector<2x1xi1> to vector<2x1xi1>
    %84 = vector.broadcast %83 : vector<2x1xi1> to vector<2x16xi1>
    %85 = arith.select %84, %80, %45 : vector<2x16xi1>, vector<2x16xf32>
    %c2_i32 = arith.constant 2 : i32
    %c1_i32_24 = arith.constant 1 : i32
    %86 = arith.cmpi eq, %arg0, %c1_i32_24 : i32
    %c7_i32_25 = arith.constant 7 : i32
    %87 = arith.subi %c7_i32_25, %c2_i32 : i32
    %88 = arith.select %86, %87, %c2_i32 : i32
    %c0_26 = arith.constant 0 : index
    %89 = arith.index_cast %88 : i32 to index
    %c0_27 = arith.constant 0 : index
    %c0_28 = arith.constant 0 : index
    %90 = vector.load %arg1[%c0_26, %89, %c0_27, %c0_28] : memref<1x8x2x48xf32, #tpu.memory_space<vmem>>, vector<1x1x2x48xf32>
    %91 = vector.shape_cast %90 : vector<1x1x2x48xf32> to vector<2x48xf32>
    %cst_29 = arith.constant dense<0.000000e+00> : vector<2x48xf32>
    %92 = tpu.matmul %85, %1, %cst_29 {dimension_numbers = #tpu.dot_dimension_numbers<[1], [0], [0], [1], [0, 0, 1, 1], [], []>} : vector<2x16xf32>, vector<16x48xf32>, vector<2x48xf32> -> vector<2x48xf32>
    %93 = vector.broadcast %3 : vector<1x48xf32> to vector<2x48xf32>
    %94 = arith.addf %92, %93 : vector<2x48xf32>
    %95 = vector.extract_strided_slice %91 {offsets = [0, 0], sizes = [2, 16], strides = [1, 1]} : vector<2x48xf32> to vector<2x16xf32>
    %96 = vector.extract_strided_slice %94 {offsets = [0, 0], sizes = [2, 16], strides = [1, 1]} : vector<2x48xf32> to vector<2x16xf32>
    %97 = arith.addf %95, %96 : vector<2x16xf32>
    %98 = arith.negf %97 : vector<2x16xf32>
    %99 = math.exp %98 : vector<2x16xf32>
    %cst_30 = arith.constant 1.000000e+00 : f32
    %100 = vector.broadcast %cst_30 : f32 to vector<2x16xf32>
    %101 = arith.addf %100, %99 : vector<2x16xf32>
    %102 = arith.divf %100, %101 : vector<2x16xf32>
    %103 = vector.extract_strided_slice %91 {offsets = [0, 16], sizes = [2, 16], strides = [1, 1]} : vector<2x48xf32> to vector<2x16xf32>
    %104 = vector.extract_strided_slice %94 {offsets = [0, 16], sizes = [2, 16], strides = [1, 1]} : vector<2x48xf32> to vector<2x16xf32>
    %105 = arith.addf %103, %104 : vector<2x16xf32>
    %106 = arith.negf %105 : vector<2x16xf32>
    %107 = math.exp %106 : vector<2x16xf32>
    %cst_31 = arith.constant 1.000000e+00 : f32
    %108 = vector.broadcast %cst_31 : f32 to vector<2x16xf32>
    %109 = arith.addf %108, %107 : vector<2x16xf32>
    %110 = arith.divf %108, %109 : vector<2x16xf32>
    %111 = vector.extract_strided_slice %91 {offsets = [0, 32], sizes = [2, 16], strides = [1, 1]} : vector<2x48xf32> to vector<2x16xf32>
    %112 = vector.extract_strided_slice %94 {offsets = [0, 32], sizes = [2, 16], strides = [1, 1]} : vector<2x48xf32> to vector<2x16xf32>
    %113 = arith.mulf %102, %112 : vector<2x16xf32>
    %114 = arith.addf %111, %113 : vector<2x16xf32>
    %115 = math.tanh %114 : vector<2x16xf32>
    %cst_32 = arith.constant 1.000000e+00 : f32
    %116 = vector.broadcast %cst_32 : f32 to vector<2x16xf32>
    %117 = arith.subf %116, %110 : vector<2x16xf32>
    %118 = arith.mulf %117, %115 : vector<2x16xf32>
    %119 = arith.mulf %110, %85 : vector<2x16xf32>
    %120 = arith.addf %118, %119 : vector<2x16xf32>
    %121 = vector.broadcast %88 : i32 to vector<2x1xi32>
    %122 = arith.cmpi slt, %121, %4 : vector<2x1xi32>
    %123 = vector.shape_cast %122 : vector<2x1xi1> to vector<2x1xi1>
    %124 = vector.broadcast %123 : vector<2x1xi1> to vector<2x16xi1>
    %125 = arith.select %124, %120, %85 : vector<2x16xi1>, vector<2x16xf32>
    %c3_i32 = arith.constant 3 : i32
    %c1_i32_33 = arith.constant 1 : i32
    %126 = arith.cmpi eq, %arg0, %c1_i32_33 : i32
    %c7_i32_34 = arith.constant 7 : i32
    %127 = arith.subi %c7_i32_34, %c3_i32 : i32
    %128 = arith.select %126, %127, %c3_i32 : i32
    %c0_35 = arith.constant 0 : index
    %129 = arith.index_cast %128 : i32 to index
    %c0_36 = arith.constant 0 : index
    %c0_37 = arith.constant 0 : index
    %130 = vector.load %arg1[%c0_35, %129, %c0_36, %c0_37] : memref<1x8x2x48xf32, #tpu.memory_space<vmem>>, vector<1x1x2x48xf32>
    %131 = vector.shape_cast %130 : vector<1x1x2x48xf32> to vector<2x48xf32>
    %cst_38 = arith.constant dense<0.000000e+00> : vector<2x48xf32>
    %132 = tpu.matmul %125, %1, %cst_38 {dimension_numbers = #tpu.dot_dimension_numbers<[1], [0], [0], [1], [0, 0, 1, 1], [], []>} : vector<2x16xf32>, vector<16x48xf32>, vector<2x48xf32> -> vector<2x48xf32>
    %133 = vector.broadcast %3 : vector<1x48xf32> to vector<2x48xf32>
    %134 = arith.addf %132, %133 : vector<2x48xf32>
    %135 = vector.extract_strided_slice %131 {offsets = [0, 0], sizes = [2, 16], strides = [1, 1]} : vector<2x48xf32> to vector<2x16xf32>
    %136 = vector.extract_strided_slice %134 {offsets = [0, 0], sizes = [2, 16], strides = [1, 1]} : vector<2x48xf32> to vector<2x16xf32>
    %137 = arith.addf %135, %136 : vector<2x16xf32>
    %138 = arith.negf %137 : vector<2x16xf32>
    %139 = math.exp %138 : vector<2x16xf32>
    %cst_39 = arith.constant 1.000000e+00 : f32
    %140 = vector.broadcast %cst_39 : f32 to vector<2x16xf32>
    %141 = arith.addf %140, %139 : vector<2x16xf32>
    %142 = arith.divf %140, %141 : vector<2x16xf32>
    %143 = vector.extract_strided_slice %131 {offsets = [0, 16], sizes = [2, 16], strides = [1, 1]} : vector<2x48xf32> to vector<2x16xf32>
    %144 = vector.extract_strided_slice %134 {offsets = [0, 16], sizes = [2, 16], strides = [1, 1]} : vector<2x48xf32> to vector<2x16xf32>
    %145 = arith.addf %143, %144 : vector<2x16xf32>
    %146 = arith.negf %145 : vector<2x16xf32>
    %147 = math.exp %146 : vector<2x16xf32>
    %cst_40 = arith.constant 1.000000e+00 : f32
    %148 = vector.broadcast %cst_40 : f32 to vector<2x16xf32>
    %149 = arith.addf %148, %147 : vector<2x16xf32>
    %150 = arith.divf %148, %149 : vector<2x16xf32>
    %151 = vector.extract_strided_slice %131 {offsets = [0, 32], sizes = [2, 16], strides = [1, 1]} : vector<2x48xf32> to vector<2x16xf32>
    %152 = vector.extract_strided_slice %134 {offsets = [0, 32], sizes = [2, 16], strides = [1, 1]} : vector<2x48xf32> to vector<2x16xf32>
    %153 = arith.mulf %142, %152 : vector<2x16xf32>
    %154 = arith.addf %151, %153 : vector<2x16xf32>
    %155 = math.tanh %154 : vector<2x16xf32>
    %cst_41 = arith.constant 1.000000e+00 : f32
    %156 = vector.broadcast %cst_41 : f32 to vector<2x16xf32>
    %157 = arith.subf %156, %150 : vector<2x16xf32>
    %158 = arith.mulf %157, %155 : vector<2x16xf32>
    %159 = arith.mulf %150, %125 : vector<2x16xf32>
    %160 = arith.addf %158, %159 : vector<2x16xf32>
    %161 = vector.broadcast %128 : i32 to vector<2x1xi32>
    %162 = arith.cmpi slt, %161, %4 : vector<2x1xi32>
    %163 = vector.shape_cast %162 : vector<2x1xi1> to vector<2x1xi1>
    %164 = vector.broadcast %163 : vector<2x1xi1> to vector<2x16xi1>
    %165 = arith.select %164, %160, %125 : vector<2x16xi1>, vector<2x16xf32>
    %c4_i32 = arith.constant 4 : i32
    %c1_i32_42 = arith.constant 1 : i32
    %166 = arith.cmpi eq, %arg0, %c1_i32_42 : i32
    %c7_i32_43 = arith.constant 7 : i32
    %167 = arith.subi %c7_i32_43, %c4_i32 : i32
    %168 = arith.select %166, %167, %c4_i32 : i32
    %c0_44 = arith.constant 0 : index
    %169 = arith.index_cast %168 : i32 to index
    %c0_45 = arith.constant 0 : index
    %c0_46 = arith.constant 0 : index
    %170 = vector.load %arg1[%c0_44, %169, %c0_45, %c0_46] : memref<1x8x2x48xf32, #tpu.memory_space<vmem>>, vector<1x1x2x48xf32>
    %171 = vector.shape_cast %170 : vector<1x1x2x48xf32> to vector<2x48xf32>
    %cst_47 = arith.constant dense<0.000000e+00> : vector<2x48xf32>
    %172 = tpu.matmul %165, %1, %cst_47 {dimension_numbers = #tpu.dot_dimension_numbers<[1], [0], [0], [1], [0, 0, 1, 1], [], []>} : vector<2x16xf32>, vector<16x48xf32>, vector<2x48xf32> -> vector<2x48xf32>
    %173 = vector.broadcast %3 : vector<1x48xf32> to vector<2x48xf32>
    %174 = arith.addf %172, %173 : vector<2x48xf32>
    %175 = vector.extract_strided_slice %171 {offsets = [0, 0], sizes = [2, 16], strides = [1, 1]} : vector<2x48xf32> to vector<2x16xf32>
    %176 = vector.extract_strided_slice %174 {offsets = [0, 0], sizes = [2, 16], strides = [1, 1]} : vector<2x48xf32> to vector<2x16xf32>
    %177 = arith.addf %175, %176 : vector<2x16xf32>
    %178 = arith.negf %177 : vector<2x16xf32>
    %179 = math.exp %178 : vector<2x16xf32>
    %cst_48 = arith.constant 1.000000e+00 : f32
    %180 = vector.broadcast %cst_48 : f32 to vector<2x16xf32>
    %181 = arith.addf %180, %179 : vector<2x16xf32>
    %182 = arith.divf %180, %181 : vector<2x16xf32>
    %183 = vector.extract_strided_slice %171 {offsets = [0, 16], sizes = [2, 16], strides = [1, 1]} : vector<2x48xf32> to vector<2x16xf32>
    %184 = vector.extract_strided_slice %174 {offsets = [0, 16], sizes = [2, 16], strides = [1, 1]} : vector<2x48xf32> to vector<2x16xf32>
    %185 = arith.addf %183, %184 : vector<2x16xf32>
    %186 = arith.negf %185 : vector<2x16xf32>
    %187 = math.exp %186 : vector<2x16xf32>
    %cst_49 = arith.constant 1.000000e+00 : f32
    %188 = vector.broadcast %cst_49 : f32 to vector<2x16xf32>
    %189 = arith.addf %188, %187 : vector<2x16xf32>
    %190 = arith.divf %188, %189 : vector<2x16xf32>
    %191 = vector.extract_strided_slice %171 {offsets = [0, 32], sizes = [2, 16], strides = [1, 1]} : vector<2x48xf32> to vector<2x16xf32>
    %192 = vector.extract_strided_slice %174 {offsets = [0, 32], sizes = [2, 16], strides = [1, 1]} : vector<2x48xf32> to vector<2x16xf32>
    %193 = arith.mulf %182, %192 : vector<2x16xf32>
    %194 = arith.addf %191, %193 : vector<2x16xf32>
    %195 = math.tanh %194 : vector<2x16xf32>
    %cst_50 = arith.constant 1.000000e+00 : f32
    %196 = vector.broadcast %cst_50 : f32 to vector<2x16xf32>
    %197 = arith.subf %196, %190 : vector<2x16xf32>
    %198 = arith.mulf %197, %195 : vector<2x16xf32>
    %199 = arith.mulf %190, %165 : vector<2x16xf32>
    %200 = arith.addf %198, %199 : vector<2x16xf32>
    %201 = vector.broadcast %168 : i32 to vector<2x1xi32>
    %202 = arith.cmpi slt, %201, %4 : vector<2x1xi32>
    %203 = vector.shape_cast %202 : vector<2x1xi1> to vector<2x1xi1>
    %204 = vector.broadcast %203 : vector<2x1xi1> to vector<2x16xi1>
    %205 = arith.select %204, %200, %165 : vector<2x16xi1>, vector<2x16xf32>
    %c5_i32 = arith.constant 5 : i32
    %c1_i32_51 = arith.constant 1 : i32
    %206 = arith.cmpi eq, %arg0, %c1_i32_51 : i32
    %c7_i32_52 = arith.constant 7 : i32
    %207 = arith.subi %c7_i32_52, %c5_i32 : i32
    %208 = arith.select %206, %207, %c5_i32 : i32
    %c0_53 = arith.constant 0 : index
    %209 = arith.index_cast %208 : i32 to index
    %c0_54 = arith.constant 0 : index
    %c0_55 = arith.constant 0 : index
    %210 = vector.load %arg1[%c0_53, %209, %c0_54, %c0_55] : memref<1x8x2x48xf32, #tpu.memory_space<vmem>>, vector<1x1x2x48xf32>
    %211 = vector.shape_cast %210 : vector<1x1x2x48xf32> to vector<2x48xf32>
    %cst_56 = arith.constant dense<0.000000e+00> : vector<2x48xf32>
    %212 = tpu.matmul %205, %1, %cst_56 {dimension_numbers = #tpu.dot_dimension_numbers<[1], [0], [0], [1], [0, 0, 1, 1], [], []>} : vector<2x16xf32>, vector<16x48xf32>, vector<2x48xf32> -> vector<2x48xf32>
    %213 = vector.broadcast %3 : vector<1x48xf32> to vector<2x48xf32>
    %214 = arith.addf %212, %213 : vector<2x48xf32>
    %215 = vector.extract_strided_slice %211 {offsets = [0, 0], sizes = [2, 16], strides = [1, 1]} : vector<2x48xf32> to vector<2x16xf32>
    %216 = vector.extract_strided_slice %214 {offsets = [0, 0], sizes = [2, 16], strides = [1, 1]} : vector<2x48xf32> to vector<2x16xf32>
    %217 = arith.addf %215, %216 : vector<2x16xf32>
    %218 = arith.negf %217 : vector<2x16xf32>
    %219 = math.exp %218 : vector<2x16xf32>
    %cst_57 = arith.constant 1.000000e+00 : f32
    %220 = vector.broadcast %cst_57 : f32 to vector<2x16xf32>
    %221 = arith.addf %220, %219 : vector<2x16xf32>
    %222 = arith.divf %220, %221 : vector<2x16xf32>
    %223 = vector.extract_strided_slice %211 {offsets = [0, 16], sizes = [2, 16], strides = [1, 1]} : vector<2x48xf32> to vector<2x16xf32>
    %224 = vector.extract_strided_slice %214 {offsets = [0, 16], sizes = [2, 16], strides = [1, 1]} : vector<2x48xf32> to vector<2x16xf32>
    %225 = arith.addf %223, %224 : vector<2x16xf32>
    %226 = arith.negf %225 : vector<2x16xf32>
    %227 = math.exp %226 : vector<2x16xf32>
    %cst_58 = arith.constant 1.000000e+00 : f32
    %228 = vector.broadcast %cst_58 : f32 to vector<2x16xf32>
    %229 = arith.addf %228, %227 : vector<2x16xf32>
    %230 = arith.divf %228, %229 : vector<2x16xf32>
    %231 = vector.extract_strided_slice %211 {offsets = [0, 32], sizes = [2, 16], strides = [1, 1]} : vector<2x48xf32> to vector<2x16xf32>
    %232 = vector.extract_strided_slice %214 {offsets = [0, 32], sizes = [2, 16], strides = [1, 1]} : vector<2x48xf32> to vector<2x16xf32>
    %233 = arith.mulf %222, %232 : vector<2x16xf32>
    %234 = arith.addf %231, %233 : vector<2x16xf32>
    %235 = math.tanh %234 : vector<2x16xf32>
    %cst_59 = arith.constant 1.000000e+00 : f32
    %236 = vector.broadcast %cst_59 : f32 to vector<2x16xf32>
    %237 = arith.subf %236, %230 : vector<2x16xf32>
    %238 = arith.mulf %237, %235 : vector<2x16xf32>
    %239 = arith.mulf %230, %205 : vector<2x16xf32>
    %240 = arith.addf %238, %239 : vector<2x16xf32>
    %241 = vector.broadcast %208 : i32 to vector<2x1xi32>
    %242 = arith.cmpi slt, %241, %4 : vector<2x1xi32>
    %243 = vector.shape_cast %242 : vector<2x1xi1> to vector<2x1xi1>
    %244 = vector.broadcast %243 : vector<2x1xi1> to vector<2x16xi1>
    %245 = arith.select %244, %240, %205 : vector<2x16xi1>, vector<2x16xf32>
    %c6_i32 = arith.constant 6 : i32
    %c1_i32_60 = arith.constant 1 : i32
    %246 = arith.cmpi eq, %arg0, %c1_i32_60 : i32
    %c7_i32_61 = arith.constant 7 : i32
    %247 = arith.subi %c7_i32_61, %c6_i32 : i32
    %248 = arith.select %246, %247, %c6_i32 : i32
    %c0_62 = arith.constant 0 : index
    %249 = arith.index_cast %248 : i32 to index
    %c0_63 = arith.constant 0 : index
    %c0_64 = arith.constant 0 : index
    %250 = vector.load %arg1[%c0_62, %249, %c0_63, %c0_64] : memref<1x8x2x48xf32, #tpu.memory_space<vmem>>, vector<1x1x2x48xf32>
    %251 = vector.shape_cast %250 : vector<1x1x2x48xf32> to vector<2x48xf32>
    %cst_65 = arith.constant dense<0.000000e+00> : vector<2x48xf32>
    %252 = tpu.matmul %245, %1, %cst_65 {dimension_numbers = #tpu.dot_dimension_numbers<[1], [0], [0], [1], [0, 0, 1, 1], [], []>} : vector<2x16xf32>, vector<16x48xf32>, vector<2x48xf32> -> vector<2x48xf32>
    %253 = vector.broadcast %3 : vector<1x48xf32> to vector<2x48xf32>
    %254 = arith.addf %252, %253 : vector<2x48xf32>
    %255 = vector.extract_strided_slice %251 {offsets = [0, 0], sizes = [2, 16], strides = [1, 1]} : vector<2x48xf32> to vector<2x16xf32>
    %256 = vector.extract_strided_slice %254 {offsets = [0, 0], sizes = [2, 16], strides = [1, 1]} : vector<2x48xf32> to vector<2x16xf32>
    %257 = arith.addf %255, %256 : vector<2x16xf32>
    %258 = arith.negf %257 : vector<2x16xf32>
    %259 = math.exp %258 : vector<2x16xf32>
    %cst_66 = arith.constant 1.000000e+00 : f32
    %260 = vector.broadcast %cst_66 : f32 to vector<2x16xf32>
    %261 = arith.addf %260, %259 : vector<2x16xf32>
    %262 = arith.divf %260, %261 : vector<2x16xf32>
    %263 = vector.extract_strided_slice %251 {offsets = [0, 16], sizes = [2, 16], strides = [1, 1]} : vector<2x48xf32> to vector<2x16xf32>
    %264 = vector.extract_strided_slice %254 {offsets = [0, 16], sizes = [2, 16], strides = [1, 1]} : vector<2x48xf32> to vector<2x16xf32>
    %265 = arith.addf %263, %264 : vector<2x16xf32>
    %266 = arith.negf %265 : vector<2x16xf32>
    %267 = math.exp %266 : vector<2x16xf32>
    %cst_67 = arith.constant 1.000000e+00 : f32
    %268 = vector.broadcast %cst_67 : f32 to vector<2x16xf32>
    %269 = arith.addf %268, %267 : vector<2x16xf32>
    %270 = arith.divf %268, %269 : vector<2x16xf32>
    %271 = vector.extract_strided_slice %251 {offsets = [0, 32], sizes = [2, 16], strides = [1, 1]} : vector<2x48xf32> to vector<2x16xf32>
    %272 = vector.extract_strided_slice %254 {offsets = [0, 32], sizes = [2, 16], strides = [1, 1]} : vector<2x48xf32> to vector<2x16xf32>
    %273 = arith.mulf %262, %272 : vector<2x16xf32>
    %274 = arith.addf %271, %273 : vector<2x16xf32>
    %275 = math.tanh %274 : vector<2x16xf32>
    %cst_68 = arith.constant 1.000000e+00 : f32
    %276 = vector.broadcast %cst_68 : f32 to vector<2x16xf32>
    %277 = arith.subf %276, %270 : vector<2x16xf32>
    %278 = arith.mulf %277, %275 : vector<2x16xf32>
    %279 = arith.mulf %270, %245 : vector<2x16xf32>
    %280 = arith.addf %278, %279 : vector<2x16xf32>
    %281 = vector.broadcast %248 : i32 to vector<2x1xi32>
    %282 = arith.cmpi slt, %281, %4 : vector<2x1xi32>
    %283 = vector.shape_cast %282 : vector<2x1xi1> to vector<2x1xi1>
    %284 = vector.broadcast %283 : vector<2x1xi1> to vector<2x16xi1>
    %285 = arith.select %284, %280, %245 : vector<2x16xi1>, vector<2x16xf32>
    %c7_i32_69 = arith.constant 7 : i32
    %c1_i32_70 = arith.constant 1 : i32
    %286 = arith.cmpi eq, %arg0, %c1_i32_70 : i32
    %c7_i32_71 = arith.constant 7 : i32
    %287 = arith.subi %c7_i32_71, %c7_i32_69 : i32
    %288 = arith.select %286, %287, %c7_i32_69 : i32
    %c0_72 = arith.constant 0 : index
    %289 = arith.index_cast %288 : i32 to index
    %c0_73 = arith.constant 0 : index
    %c0_74 = arith.constant 0 : index
    %290 = vector.load %arg1[%c0_72, %289, %c0_73, %c0_74] : memref<1x8x2x48xf32, #tpu.memory_space<vmem>>, vector<1x1x2x48xf32>
    %291 = vector.shape_cast %290 : vector<1x1x2x48xf32> to vector<2x48xf32>
    %cst_75 = arith.constant dense<0.000000e+00> : vector<2x48xf32>
    %292 = tpu.matmul %285, %1, %cst_75 {dimension_numbers = #tpu.dot_dimension_numbers<[1], [0], [0], [1], [0, 0, 1, 1], [], []>} : vector<2x16xf32>, vector<16x48xf32>, vector<2x48xf32> -> vector<2x48xf32>
    %293 = vector.broadcast %3 : vector<1x48xf32> to vector<2x48xf32>
    %294 = arith.addf %292, %293 : vector<2x48xf32>
    %295 = vector.extract_strided_slice %291 {offsets = [0, 0], sizes = [2, 16], strides = [1, 1]} : vector<2x48xf32> to vector<2x16xf32>
    %296 = vector.extract_strided_slice %294 {offsets = [0, 0], sizes = [2, 16], strides = [1, 1]} : vector<2x48xf32> to vector<2x16xf32>
    %297 = arith.addf %295, %296 : vector<2x16xf32>
    %298 = arith.negf %297 : vector<2x16xf32>
    %299 = math.exp %298 : vector<2x16xf32>
    %cst_76 = arith.constant 1.000000e+00 : f32
    %300 = vector.broadcast %cst_76 : f32 to vector<2x16xf32>
    %301 = arith.addf %300, %299 : vector<2x16xf32>
    %302 = arith.divf %300, %301 : vector<2x16xf32>
    %303 = vector.extract_strided_slice %291 {offsets = [0, 16], sizes = [2, 16], strides = [1, 1]} : vector<2x48xf32> to vector<2x16xf32>
    %304 = vector.extract_strided_slice %294 {offsets = [0, 16], sizes = [2, 16], strides = [1, 1]} : vector<2x48xf32> to vector<2x16xf32>
    %305 = arith.addf %303, %304 : vector<2x16xf32>
    %306 = arith.negf %305 : vector<2x16xf32>
    %307 = math.exp %306 : vector<2x16xf32>
    %cst_77 = arith.constant 1.000000e+00 : f32
    %308 = vector.broadcast %cst_77 : f32 to vector<2x16xf32>
    %309 = arith.addf %308, %307 : vector<2x16xf32>
    %310 = arith.divf %308, %309 : vector<2x16xf32>
    %311 = vector.extract_strided_slice %291 {offsets = [0, 32], sizes = [2, 16], strides = [1, 1]} : vector<2x48xf32> to vector<2x16xf32>
    %312 = vector.extract_strided_slice %294 {offsets = [0, 32], sizes = [2, 16], strides = [1, 1]} : vector<2x48xf32> to vector<2x16xf32>
    %313 = arith.mulf %302, %312 : vector<2x16xf32>
    %314 = arith.addf %311, %313 : vector<2x16xf32>
    %315 = math.tanh %314 : vector<2x16xf32>
    %cst_78 = arith.constant 1.000000e+00 : f32
    %316 = vector.broadcast %cst_78 : f32 to vector<2x16xf32>
    %317 = arith.subf %316, %310 : vector<2x16xf32>
    %318 = arith.mulf %317, %315 : vector<2x16xf32>
    %319 = arith.mulf %310, %285 : vector<2x16xf32>
    %320 = arith.addf %318, %319 : vector<2x16xf32>
    %321 = vector.broadcast %288 : i32 to vector<2x1xi32>
    %322 = arith.cmpi slt, %321, %4 : vector<2x1xi32>
    %323 = vector.shape_cast %322 : vector<2x1xi1> to vector<2x1xi1>
    %324 = vector.broadcast %323 : vector<2x1xi1> to vector<2x16xi1>
    %325 = arith.select %324, %320, %285 : vector<2x16xi1>, vector<2x16xf32>
    %c8_i32 = arith.constant 8 : i32
    %c0_79 = arith.constant 0 : index
    %c0_80 = arith.constant 0 : index
    %c0_81 = arith.constant 0 : index
    %326 = vector.load %arg5[%c0_79, %c0_80, %c0_81] : memref<1x2x16xf32, #tpu.memory_space<vmem>>, vector<1x2x16xf32>
    %327 = vector.shape_cast %326 : vector<1x2x16xf32> to vector<2x16xf32>
    %328 = vector.shape_cast %325 : vector<2x16xf32> to vector<1x2x16xf32>
    tpu.vector_store %arg5[%c0_79, %c0_80, %c0_81], %328 {strides = array<i32>} : memref<1x2x16xf32, #tpu.memory_space<vmem>>, vector<1x2x16xf32>,
    return
  }
  func.func @transform_0(%arg0: i32) -> (i32, i32, i32, i32) {
    %c0_i32 = arith.constant 0 : i32
    %c0_i32_0 = arith.constant 0 : i32
    %c0_i32_1 = arith.constant 0 : i32
    %c0_i32_2 = arith.constant 0 : i32
    return %arg0, %c0_i32, %c0_i32_0, %c0_i32_1 : i32, i32, i32, i32
  }
  func.func @transform_1(%arg0: i32) -> (i32, i32, i32) {
    %c0_i32 = arith.constant 0 : i32
    %c0_i32_0 = arith.constant 0 : i32
    %c0_i32_1 = arith.constant 0 : i32
    return %arg0, %c0_i32, %c0_i32_0 : i32, i32, i32
  }
  func.func @transform_2(%arg0: i32) -> (i32, i32, i32) {
    %c0_i32 = arith.constant 0 : i32
    %c0_i32_0 = arith.constant 0 : i32
    %c0_i32_1 = arith.constant 0 : i32
    return %arg0, %c0_i32, %c0_i32_0 : i32, i32, i32
  }
  func.func @transform_3(%arg0: i32) -> (i32, i32) {
    %c0_i32 = arith.constant 0 : i32
    %c0_i32_0 = arith.constant 0 : i32
    %c0_i32_1 = arith.constant 0 : i32
    return %c0_i32, %c0_i32_0 : i32, i32
  }
  func.func @transform_4(%arg0: i32) -> (i32, i32, i32) {
    %c0_i32 = arith.constant 0 : i32
    %c0_i32_0 = arith.constant 0 : i32
    %c0_i32_1 = arith.constant 0 : i32
    return %arg0, %c0_i32, %c0_i32_0 : i32, i32, i32
  }
}

module attributes {stable_mosaic.version = 11 : i64} {
  func.func @_linear_kernel(%arg0: memref<48x16xf32, #tpu.memory_space<vmem>>, %arg1: memref<16x96xbf16, #tpu.memory_space<vmem>>, %arg2: memref<1x96xf32, #tpu.memory_space<vmem>>, %arg3: memref<48x96xf32, #tpu.memory_space<vmem>>) attributes {dimension_semantics = [], scalar_prefetch = 0 : i64, scratch_operands = 0 : i64, tpu.core_type = #tpu.core_type<tc>} {
    %c0 = arith.constant 0 : index
    %c0_0 = arith.constant 0 : index
    %0 = vector.load %arg0[%c0, %c0_0] : memref<48x16xf32, #tpu.memory_space<vmem>>, vector<48x16xf32>
    %1 = arith.truncf %0 : vector<48x16xf32> to vector<48x16xbf16>
    %c0_1 = arith.constant 0 : index
    %c0_2 = arith.constant 0 : index
    %2 = vector.load %arg1[%c0_1, %c0_2] : memref<16x96xbf16, #tpu.memory_space<vmem>>, vector<16x96xbf16>
    %cst = arith.constant dense<0.000000e+00> : vector<48x96xf32>
    %3 = tpu.matmul %1, %2, %cst {dimension_numbers = #tpu.dot_dimension_numbers<[1], [0], [0], [1], [0, 0, 1, 1], [], []>} : vector<48x16xbf16>, vector<16x96xbf16>, vector<48x96xf32> -> vector<48x96xf32>
    %c0_3 = arith.constant 0 : index
    %c0_4 = arith.constant 0 : index
    %4 = vector.load %arg2[%c0_3, %c0_4] : memref<1x96xf32, #tpu.memory_space<vmem>>, vector<1x96xf32>
    %5 = vector.broadcast %4 : vector<1x96xf32> to vector<48x96xf32>
    %6 = arith.addf %3, %5 : vector<48x96xf32>
    %c0_5 = arith.constant 0 : index
    %c0_6 = arith.constant 0 : index
    %7 = vector.load %arg3[%c0_5, %c0_6] : memref<48x96xf32, #tpu.memory_space<vmem>>, vector<48x96xf32>
    tpu.vector_store %arg3[%c0_5, %c0_6], %6 {strides = array<i32>} : memref<48x96xf32, #tpu.memory_space<vmem>>, vector<48x96xf32>,
    return
  }
}

module attributes {stable_mosaic.version = 11 : i64} {
  func.func @_bigru_hid_kernel(%arg0: i32, %arg1: memref<1x8x6x48xf32, #tpu.memory_space<vmem>>, %arg2: memref<1x16x48xf32, #tpu.memory_space<vmem>>, %arg3: memref<1x1x48xf32, #tpu.memory_space<vmem>>, %arg4: memref<6x1xi32, #tpu.memory_space<vmem>>, %arg5: memref<1x6x16xf32, #tpu.memory_space<vmem>>) attributes {dimension_semantics = [#tpu.dimension_semantics<parallel>], iteration_bounds = array<i64: 2>, scalar_prefetch = 0 : i64, scratch_operands = 0 : i64, tpu.core_type = #tpu.core_type<tc>, window_params = [{transform_indices = @transform_0, window_bounds = array<i64: 1, 8, 6, 48>}, {transform_indices = @transform_1, window_bounds = array<i64: 1, 16, 48>}, {transform_indices = @transform_2, window_bounds = array<i64: 1, 1, 48>}, {pipeline_mode = #tpu.pipeline_mode<synchronous>, transform_indices = @transform_3, window_bounds = array<i64: 6, 1>}, {transform_indices = @transform_4, window_bounds = array<i64: 1, 6, 16>}]} {
    %c0 = arith.constant 0 : index
    %c0_0 = arith.constant 0 : index
    %c0_1 = arith.constant 0 : index
    %0 = vector.load %arg2[%c0, %c0_0, %c0_1] : memref<1x16x48xf32, #tpu.memory_space<vmem>>, vector<1x16x48xf32>
    %1 = vector.shape_cast %0 : vector<1x16x48xf32> to vector<16x48xf32>
    %c0_2 = arith.constant 0 : index
    %c0_3 = arith.constant 0 : index
    %c0_4 = arith.constant 0 : index
    %2 = vector.load %arg3[%c0_2, %c0_3, %c0_4] : memref<1x1x48xf32, #tpu.memory_space<vmem>>, vector<1x1x48xf32>
    %3 = vector.shape_cast %2 : vector<1x1x48xf32> to vector<1x48xf32>
    %c0_5 = arith.constant 0 : index
    %c0_6 = arith.constant 0 : index
    %4 = vector.load %arg4[%c0_5, %c0_6] : memref<6x1xi32, #tpu.memory_space<vmem>>, vector<6x1xi32>
    %cst = arith.constant 0.000000e+00 : f32
    %5 = vector.broadcast %cst : f32 to vector<6x16xf32>
    %c0_i32 = arith.constant 0 : i32
    %c1_i32 = arith.constant 1 : i32
    %6 = arith.cmpi eq, %arg0, %c1_i32 : i32
    %c7_i32 = arith.constant 7 : i32
    %7 = arith.subi %c7_i32, %c0_i32 : i32
    %8 = arith.select %6, %7, %c0_i32 : i32
    %c0_7 = arith.constant 0 : index
    %9 = arith.index_cast %8 : i32 to index
    %c0_8 = arith.constant 0 : index
    %c0_9 = arith.constant 0 : index
    %10 = vector.load %arg1[%c0_7, %9, %c0_8, %c0_9] : memref<1x8x6x48xf32, #tpu.memory_space<vmem>>, vector<1x1x6x48xf32>
    %11 = vector.shape_cast %10 : vector<1x1x6x48xf32> to vector<6x48xf32>
    %cst_10 = arith.constant dense<0.000000e+00> : vector<6x48xf32>
    %12 = tpu.matmul %5, %1, %cst_10 {dimension_numbers = #tpu.dot_dimension_numbers<[1], [0], [0], [1], [0, 0, 1, 1], [], []>} : vector<6x16xf32>, vector<16x48xf32>, vector<6x48xf32> -> vector<6x48xf32>
    %13 = vector.broadcast %3 : vector<1x48xf32> to vector<6x48xf32>
    %14 = arith.addf %12, %13 : vector<6x48xf32>
    %15 = vector.extract_strided_slice %11 {offsets = [0, 0], sizes = [6, 16], strides = [1, 1]} : vector<6x48xf32> to vector<6x16xf32>
    %16 = vector.extract_strided_slice %14 {offsets = [0, 0], sizes = [6, 16], strides = [1, 1]} : vector<6x48xf32> to vector<6x16xf32>
    %17 = arith.addf %15, %16 : vector<6x16xf32>
    %18 = arith.negf %17 : vector<6x16xf32>
    %19 = math.exp %18 : vector<6x16xf32>
    %cst_11 = arith.constant 1.000000e+00 : f32
    %20 = vector.broadcast %cst_11 : f32 to vector<6x16xf32>
    %21 = arith.addf %20, %19 : vector<6x16xf32>
    %22 = arith.divf %20, %21 : vector<6x16xf32>
    %23 = vector.extract_strided_slice %11 {offsets = [0, 16], sizes = [6, 16], strides = [1, 1]} : vector<6x48xf32> to vector<6x16xf32>
    %24 = vector.extract_strided_slice %14 {offsets = [0, 16], sizes = [6, 16], strides = [1, 1]} : vector<6x48xf32> to vector<6x16xf32>
    %25 = arith.addf %23, %24 : vector<6x16xf32>
    %26 = arith.negf %25 : vector<6x16xf32>
    %27 = math.exp %26 : vector<6x16xf32>
    %cst_12 = arith.constant 1.000000e+00 : f32
    %28 = vector.broadcast %cst_12 : f32 to vector<6x16xf32>
    %29 = arith.addf %28, %27 : vector<6x16xf32>
    %30 = arith.divf %28, %29 : vector<6x16xf32>
    %31 = vector.extract_strided_slice %11 {offsets = [0, 32], sizes = [6, 16], strides = [1, 1]} : vector<6x48xf32> to vector<6x16xf32>
    %32 = vector.extract_strided_slice %14 {offsets = [0, 32], sizes = [6, 16], strides = [1, 1]} : vector<6x48xf32> to vector<6x16xf32>
    %33 = arith.mulf %22, %32 : vector<6x16xf32>
    %34 = arith.addf %31, %33 : vector<6x16xf32>
    %35 = math.tanh %34 : vector<6x16xf32>
    %cst_13 = arith.constant 1.000000e+00 : f32
    %36 = vector.broadcast %cst_13 : f32 to vector<6x16xf32>
    %37 = arith.subf %36, %30 : vector<6x16xf32>
    %38 = arith.mulf %37, %35 : vector<6x16xf32>
    %39 = arith.mulf %30, %5 : vector<6x16xf32>
    %40 = arith.addf %38, %39 : vector<6x16xf32>
    %41 = vector.broadcast %8 : i32 to vector<6x1xi32>
    %42 = arith.cmpi slt, %41, %4 : vector<6x1xi32>
    %43 = vector.shape_cast %42 : vector<6x1xi1> to vector<6x1xi1>
    %44 = vector.broadcast %43 : vector<6x1xi1> to vector<6x16xi1>
    %45 = arith.select %44, %40, %5 : vector<6x16xi1>, vector<6x16xf32>
    %c1_i32_14 = arith.constant 1 : i32
    %c1_i32_15 = arith.constant 1 : i32
    %46 = arith.cmpi eq, %arg0, %c1_i32_15 : i32
    %c7_i32_16 = arith.constant 7 : i32
    %47 = arith.subi %c7_i32_16, %c1_i32_14 : i32
    %48 = arith.select %46, %47, %c1_i32_14 : i32
    %c0_17 = arith.constant 0 : index
    %49 = arith.index_cast %48 : i32 to index
    %c0_18 = arith.constant 0 : index
    %c0_19 = arith.constant 0 : index
    %50 = vector.load %arg1[%c0_17, %49, %c0_18, %c0_19] : memref<1x8x6x48xf32, #tpu.memory_space<vmem>>, vector<1x1x6x48xf32>
    %51 = vector.shape_cast %50 : vector<1x1x6x48xf32> to vector<6x48xf32>
    %cst_20 = arith.constant dense<0.000000e+00> : vector<6x48xf32>
    %52 = tpu.matmul %45, %1, %cst_20 {dimension_numbers = #tpu.dot_dimension_numbers<[1], [0], [0], [1], [0, 0, 1, 1], [], []>} : vector<6x16xf32>, vector<16x48xf32>, vector<6x48xf32> -> vector<6x48xf32>
    %53 = vector.broadcast %3 : vector<1x48xf32> to vector<6x48xf32>
    %54 = arith.addf %52, %53 : vector<6x48xf32>
    %55 = vector.extract_strided_slice %51 {offsets = [0, 0], sizes = [6, 16], strides = [1, 1]} : vector<6x48xf32> to vector<6x16xf32>
    %56 = vector.extract_strided_slice %54 {offsets = [0, 0], sizes = [6, 16], strides = [1, 1]} : vector<6x48xf32> to vector<6x16xf32>
    %57 = arith.addf %55, %56 : vector<6x16xf32>
    %58 = arith.negf %57 : vector<6x16xf32>
    %59 = math.exp %58 : vector<6x16xf32>
    %cst_21 = arith.constant 1.000000e+00 : f32
    %60 = vector.broadcast %cst_21 : f32 to vector<6x16xf32>
    %61 = arith.addf %60, %59 : vector<6x16xf32>
    %62 = arith.divf %60, %61 : vector<6x16xf32>
    %63 = vector.extract_strided_slice %51 {offsets = [0, 16], sizes = [6, 16], strides = [1, 1]} : vector<6x48xf32> to vector<6x16xf32>
    %64 = vector.extract_strided_slice %54 {offsets = [0, 16], sizes = [6, 16], strides = [1, 1]} : vector<6x48xf32> to vector<6x16xf32>
    %65 = arith.addf %63, %64 : vector<6x16xf32>
    %66 = arith.negf %65 : vector<6x16xf32>
    %67 = math.exp %66 : vector<6x16xf32>
    %cst_22 = arith.constant 1.000000e+00 : f32
    %68 = vector.broadcast %cst_22 : f32 to vector<6x16xf32>
    %69 = arith.addf %68, %67 : vector<6x16xf32>
    %70 = arith.divf %68, %69 : vector<6x16xf32>
    %71 = vector.extract_strided_slice %51 {offsets = [0, 32], sizes = [6, 16], strides = [1, 1]} : vector<6x48xf32> to vector<6x16xf32>
    %72 = vector.extract_strided_slice %54 {offsets = [0, 32], sizes = [6, 16], strides = [1, 1]} : vector<6x48xf32> to vector<6x16xf32>
    %73 = arith.mulf %62, %72 : vector<6x16xf32>
    %74 = arith.addf %71, %73 : vector<6x16xf32>
    %75 = math.tanh %74 : vector<6x16xf32>
    %cst_23 = arith.constant 1.000000e+00 : f32
    %76 = vector.broadcast %cst_23 : f32 to vector<6x16xf32>
    %77 = arith.subf %76, %70 : vector<6x16xf32>
    %78 = arith.mulf %77, %75 : vector<6x16xf32>
    %79 = arith.mulf %70, %45 : vector<6x16xf32>
    %80 = arith.addf %78, %79 : vector<6x16xf32>
    %81 = vector.broadcast %48 : i32 to vector<6x1xi32>
    %82 = arith.cmpi slt, %81, %4 : vector<6x1xi32>
    %83 = vector.shape_cast %82 : vector<6x1xi1> to vector<6x1xi1>
    %84 = vector.broadcast %83 : vector<6x1xi1> to vector<6x16xi1>
    %85 = arith.select %84, %80, %45 : vector<6x16xi1>, vector<6x16xf32>
    %c2_i32 = arith.constant 2 : i32
    %c1_i32_24 = arith.constant 1 : i32
    %86 = arith.cmpi eq, %arg0, %c1_i32_24 : i32
    %c7_i32_25 = arith.constant 7 : i32
    %87 = arith.subi %c7_i32_25, %c2_i32 : i32
    %88 = arith.select %86, %87, %c2_i32 : i32
    %c0_26 = arith.constant 0 : index
    %89 = arith.index_cast %88 : i32 to index
    %c0_27 = arith.constant 0 : index
    %c0_28 = arith.constant 0 : index
    %90 = vector.load %arg1[%c0_26, %89, %c0_27, %c0_28] : memref<1x8x6x48xf32, #tpu.memory_space<vmem>>, vector<1x1x6x48xf32>
    %91 = vector.shape_cast %90 : vector<1x1x6x48xf32> to vector<6x48xf32>
    %cst_29 = arith.constant dense<0.000000e+00> : vector<6x48xf32>
    %92 = tpu.matmul %85, %1, %cst_29 {dimension_numbers = #tpu.dot_dimension_numbers<[1], [0], [0], [1], [0, 0, 1, 1], [], []>} : vector<6x16xf32>, vector<16x48xf32>, vector<6x48xf32> -> vector<6x48xf32>
    %93 = vector.broadcast %3 : vector<1x48xf32> to vector<6x48xf32>
    %94 = arith.addf %92, %93 : vector<6x48xf32>
    %95 = vector.extract_strided_slice %91 {offsets = [0, 0], sizes = [6, 16], strides = [1, 1]} : vector<6x48xf32> to vector<6x16xf32>
    %96 = vector.extract_strided_slice %94 {offsets = [0, 0], sizes = [6, 16], strides = [1, 1]} : vector<6x48xf32> to vector<6x16xf32>
    %97 = arith.addf %95, %96 : vector<6x16xf32>
    %98 = arith.negf %97 : vector<6x16xf32>
    %99 = math.exp %98 : vector<6x16xf32>
    %cst_30 = arith.constant 1.000000e+00 : f32
    %100 = vector.broadcast %cst_30 : f32 to vector<6x16xf32>
    %101 = arith.addf %100, %99 : vector<6x16xf32>
    %102 = arith.divf %100, %101 : vector<6x16xf32>
    %103 = vector.extract_strided_slice %91 {offsets = [0, 16], sizes = [6, 16], strides = [1, 1]} : vector<6x48xf32> to vector<6x16xf32>
    %104 = vector.extract_strided_slice %94 {offsets = [0, 16], sizes = [6, 16], strides = [1, 1]} : vector<6x48xf32> to vector<6x16xf32>
    %105 = arith.addf %103, %104 : vector<6x16xf32>
    %106 = arith.negf %105 : vector<6x16xf32>
    %107 = math.exp %106 : vector<6x16xf32>
    %cst_31 = arith.constant 1.000000e+00 : f32
    %108 = vector.broadcast %cst_31 : f32 to vector<6x16xf32>
    %109 = arith.addf %108, %107 : vector<6x16xf32>
    %110 = arith.divf %108, %109 : vector<6x16xf32>
    %111 = vector.extract_strided_slice %91 {offsets = [0, 32], sizes = [6, 16], strides = [1, 1]} : vector<6x48xf32> to vector<6x16xf32>
    %112 = vector.extract_strided_slice %94 {offsets = [0, 32], sizes = [6, 16], strides = [1, 1]} : vector<6x48xf32> to vector<6x16xf32>
    %113 = arith.mulf %102, %112 : vector<6x16xf32>
    %114 = arith.addf %111, %113 : vector<6x16xf32>
    %115 = math.tanh %114 : vector<6x16xf32>
    %cst_32 = arith.constant 1.000000e+00 : f32
    %116 = vector.broadcast %cst_32 : f32 to vector<6x16xf32>
    %117 = arith.subf %116, %110 : vector<6x16xf32>
    %118 = arith.mulf %117, %115 : vector<6x16xf32>
    %119 = arith.mulf %110, %85 : vector<6x16xf32>
    %120 = arith.addf %118, %119 : vector<6x16xf32>
    %121 = vector.broadcast %88 : i32 to vector<6x1xi32>
    %122 = arith.cmpi slt, %121, %4 : vector<6x1xi32>
    %123 = vector.shape_cast %122 : vector<6x1xi1> to vector<6x1xi1>
    %124 = vector.broadcast %123 : vector<6x1xi1> to vector<6x16xi1>
    %125 = arith.select %124, %120, %85 : vector<6x16xi1>, vector<6x16xf32>
    %c3_i32 = arith.constant 3 : i32
    %c1_i32_33 = arith.constant 1 : i32
    %126 = arith.cmpi eq, %arg0, %c1_i32_33 : i32
    %c7_i32_34 = arith.constant 7 : i32
    %127 = arith.subi %c7_i32_34, %c3_i32 : i32
    %128 = arith.select %126, %127, %c3_i32 : i32
    %c0_35 = arith.constant 0 : index
    %129 = arith.index_cast %128 : i32 to index
    %c0_36 = arith.constant 0 : index
    %c0_37 = arith.constant 0 : index
    %130 = vector.load %arg1[%c0_35, %129, %c0_36, %c0_37] : memref<1x8x6x48xf32, #tpu.memory_space<vmem>>, vector<1x1x6x48xf32>
    %131 = vector.shape_cast %130 : vector<1x1x6x48xf32> to vector<6x48xf32>
    %cst_38 = arith.constant dense<0.000000e+00> : vector<6x48xf32>
    %132 = tpu.matmul %125, %1, %cst_38 {dimension_numbers = #tpu.dot_dimension_numbers<[1], [0], [0], [1], [0, 0, 1, 1], [], []>} : vector<6x16xf32>, vector<16x48xf32>, vector<6x48xf32> -> vector<6x48xf32>
    %133 = vector.broadcast %3 : vector<1x48xf32> to vector<6x48xf32>
    %134 = arith.addf %132, %133 : vector<6x48xf32>
    %135 = vector.extract_strided_slice %131 {offsets = [0, 0], sizes = [6, 16], strides = [1, 1]} : vector<6x48xf32> to vector<6x16xf32>
    %136 = vector.extract_strided_slice %134 {offsets = [0, 0], sizes = [6, 16], strides = [1, 1]} : vector<6x48xf32> to vector<6x16xf32>
    %137 = arith.addf %135, %136 : vector<6x16xf32>
    %138 = arith.negf %137 : vector<6x16xf32>
    %139 = math.exp %138 : vector<6x16xf32>
    %cst_39 = arith.constant 1.000000e+00 : f32
    %140 = vector.broadcast %cst_39 : f32 to vector<6x16xf32>
    %141 = arith.addf %140, %139 : vector<6x16xf32>
    %142 = arith.divf %140, %141 : vector<6x16xf32>
    %143 = vector.extract_strided_slice %131 {offsets = [0, 16], sizes = [6, 16], strides = [1, 1]} : vector<6x48xf32> to vector<6x16xf32>
    %144 = vector.extract_strided_slice %134 {offsets = [0, 16], sizes = [6, 16], strides = [1, 1]} : vector<6x48xf32> to vector<6x16xf32>
    %145 = arith.addf %143, %144 : vector<6x16xf32>
    %146 = arith.negf %145 : vector<6x16xf32>
    %147 = math.exp %146 : vector<6x16xf32>
    %cst_40 = arith.constant 1.000000e+00 : f32
    %148 = vector.broadcast %cst_40 : f32 to vector<6x16xf32>
    %149 = arith.addf %148, %147 : vector<6x16xf32>
    %150 = arith.divf %148, %149 : vector<6x16xf32>
    %151 = vector.extract_strided_slice %131 {offsets = [0, 32], sizes = [6, 16], strides = [1, 1]} : vector<6x48xf32> to vector<6x16xf32>
    %152 = vector.extract_strided_slice %134 {offsets = [0, 32], sizes = [6, 16], strides = [1, 1]} : vector<6x48xf32> to vector<6x16xf32>
    %153 = arith.mulf %142, %152 : vector<6x16xf32>
    %154 = arith.addf %151, %153 : vector<6x16xf32>
    %155 = math.tanh %154 : vector<6x16xf32>
    %cst_41 = arith.constant 1.000000e+00 : f32
    %156 = vector.broadcast %cst_41 : f32 to vector<6x16xf32>
    %157 = arith.subf %156, %150 : vector<6x16xf32>
    %158 = arith.mulf %157, %155 : vector<6x16xf32>
    %159 = arith.mulf %150, %125 : vector<6x16xf32>
    %160 = arith.addf %158, %159 : vector<6x16xf32>
    %161 = vector.broadcast %128 : i32 to vector<6x1xi32>
    %162 = arith.cmpi slt, %161, %4 : vector<6x1xi32>
    %163 = vector.shape_cast %162 : vector<6x1xi1> to vector<6x1xi1>
    %164 = vector.broadcast %163 : vector<6x1xi1> to vector<6x16xi1>
    %165 = arith.select %164, %160, %125 : vector<6x16xi1>, vector<6x16xf32>
    %c4_i32 = arith.constant 4 : i32
    %c1_i32_42 = arith.constant 1 : i32
    %166 = arith.cmpi eq, %arg0, %c1_i32_42 : i32
    %c7_i32_43 = arith.constant 7 : i32
    %167 = arith.subi %c7_i32_43, %c4_i32 : i32
    %168 = arith.select %166, %167, %c4_i32 : i32
    %c0_44 = arith.constant 0 : index
    %169 = arith.index_cast %168 : i32 to index
    %c0_45 = arith.constant 0 : index
    %c0_46 = arith.constant 0 : index
    %170 = vector.load %arg1[%c0_44, %169, %c0_45, %c0_46] : memref<1x8x6x48xf32, #tpu.memory_space<vmem>>, vector<1x1x6x48xf32>
    %171 = vector.shape_cast %170 : vector<1x1x6x48xf32> to vector<6x48xf32>
    %cst_47 = arith.constant dense<0.000000e+00> : vector<6x48xf32>
    %172 = tpu.matmul %165, %1, %cst_47 {dimension_numbers = #tpu.dot_dimension_numbers<[1], [0], [0], [1], [0, 0, 1, 1], [], []>} : vector<6x16xf32>, vector<16x48xf32>, vector<6x48xf32> -> vector<6x48xf32>
    %173 = vector.broadcast %3 : vector<1x48xf32> to vector<6x48xf32>
    %174 = arith.addf %172, %173 : vector<6x48xf32>
    %175 = vector.extract_strided_slice %171 {offsets = [0, 0], sizes = [6, 16], strides = [1, 1]} : vector<6x48xf32> to vector<6x16xf32>
    %176 = vector.extract_strided_slice %174 {offsets = [0, 0], sizes = [6, 16], strides = [1, 1]} : vector<6x48xf32> to vector<6x16xf32>
    %177 = arith.addf %175, %176 : vector<6x16xf32>
    %178 = arith.negf %177 : vector<6x16xf32>
    %179 = math.exp %178 : vector<6x16xf32>
    %cst_48 = arith.constant 1.000000e+00 : f32
    %180 = vector.broadcast %cst_48 : f32 to vector<6x16xf32>
    %181 = arith.addf %180, %179 : vector<6x16xf32>
    %182 = arith.divf %180, %181 : vector<6x16xf32>
    %183 = vector.extract_strided_slice %171 {offsets = [0, 16], sizes = [6, 16], strides = [1, 1]} : vector<6x48xf32> to vector<6x16xf32>
    %184 = vector.extract_strided_slice %174 {offsets = [0, 16], sizes = [6, 16], strides = [1, 1]} : vector<6x48xf32> to vector<6x16xf32>
    %185 = arith.addf %183, %184 : vector<6x16xf32>
    %186 = arith.negf %185 : vector<6x16xf32>
    %187 = math.exp %186 : vector<6x16xf32>
    %cst_49 = arith.constant 1.000000e+00 : f32
    %188 = vector.broadcast %cst_49 : f32 to vector<6x16xf32>
    %189 = arith.addf %188, %187 : vector<6x16xf32>
    %190 = arith.divf %188, %189 : vector<6x16xf32>
    %191 = vector.extract_strided_slice %171 {offsets = [0, 32], sizes = [6, 16], strides = [1, 1]} : vector<6x48xf32> to vector<6x16xf32>
    %192 = vector.extract_strided_slice %174 {offsets = [0, 32], sizes = [6, 16], strides = [1, 1]} : vector<6x48xf32> to vector<6x16xf32>
    %193 = arith.mulf %182, %192 : vector<6x16xf32>
    %194 = arith.addf %191, %193 : vector<6x16xf32>
    %195 = math.tanh %194 : vector<6x16xf32>
    %cst_50 = arith.constant 1.000000e+00 : f32
    %196 = vector.broadcast %cst_50 : f32 to vector<6x16xf32>
    %197 = arith.subf %196, %190 : vector<6x16xf32>
    %198 = arith.mulf %197, %195 : vector<6x16xf32>
    %199 = arith.mulf %190, %165 : vector<6x16xf32>
    %200 = arith.addf %198, %199 : vector<6x16xf32>
    %201 = vector.broadcast %168 : i32 to vector<6x1xi32>
    %202 = arith.cmpi slt, %201, %4 : vector<6x1xi32>
    %203 = vector.shape_cast %202 : vector<6x1xi1> to vector<6x1xi1>
    %204 = vector.broadcast %203 : vector<6x1xi1> to vector<6x16xi1>
    %205 = arith.select %204, %200, %165 : vector<6x16xi1>, vector<6x16xf32>
    %c5_i32 = arith.constant 5 : i32
    %c1_i32_51 = arith.constant 1 : i32
    %206 = arith.cmpi eq, %arg0, %c1_i32_51 : i32
    %c7_i32_52 = arith.constant 7 : i32
    %207 = arith.subi %c7_i32_52, %c5_i32 : i32
    %208 = arith.select %206, %207, %c5_i32 : i32
    %c0_53 = arith.constant 0 : index
    %209 = arith.index_cast %208 : i32 to index
    %c0_54 = arith.constant 0 : index
    %c0_55 = arith.constant 0 : index
    %210 = vector.load %arg1[%c0_53, %209, %c0_54, %c0_55] : memref<1x8x6x48xf32, #tpu.memory_space<vmem>>, vector<1x1x6x48xf32>
    %211 = vector.shape_cast %210 : vector<1x1x6x48xf32> to vector<6x48xf32>
    %cst_56 = arith.constant dense<0.000000e+00> : vector<6x48xf32>
    %212 = tpu.matmul %205, %1, %cst_56 {dimension_numbers = #tpu.dot_dimension_numbers<[1], [0], [0], [1], [0, 0, 1, 1], [], []>} : vector<6x16xf32>, vector<16x48xf32>, vector<6x48xf32> -> vector<6x48xf32>
    %213 = vector.broadcast %3 : vector<1x48xf32> to vector<6x48xf32>
    %214 = arith.addf %212, %213 : vector<6x48xf32>
    %215 = vector.extract_strided_slice %211 {offsets = [0, 0], sizes = [6, 16], strides = [1, 1]} : vector<6x48xf32> to vector<6x16xf32>
    %216 = vector.extract_strided_slice %214 {offsets = [0, 0], sizes = [6, 16], strides = [1, 1]} : vector<6x48xf32> to vector<6x16xf32>
    %217 = arith.addf %215, %216 : vector<6x16xf32>
    %218 = arith.negf %217 : vector<6x16xf32>
    %219 = math.exp %218 : vector<6x16xf32>
    %cst_57 = arith.constant 1.000000e+00 : f32
    %220 = vector.broadcast %cst_57 : f32 to vector<6x16xf32>
    %221 = arith.addf %220, %219 : vector<6x16xf32>
    %222 = arith.divf %220, %221 : vector<6x16xf32>
    %223 = vector.extract_strided_slice %211 {offsets = [0, 16], sizes = [6, 16], strides = [1, 1]} : vector<6x48xf32> to vector<6x16xf32>
    %224 = vector.extract_strided_slice %214 {offsets = [0, 16], sizes = [6, 16], strides = [1, 1]} : vector<6x48xf32> to vector<6x16xf32>
    %225 = arith.addf %223, %224 : vector<6x16xf32>
    %226 = arith.negf %225 : vector<6x16xf32>
    %227 = math.exp %226 : vector<6x16xf32>
    %cst_58 = arith.constant 1.000000e+00 : f32
    %228 = vector.broadcast %cst_58 : f32 to vector<6x16xf32>
    %229 = arith.addf %228, %227 : vector<6x16xf32>
    %230 = arith.divf %228, %229 : vector<6x16xf32>
    %231 = vector.extract_strided_slice %211 {offsets = [0, 32], sizes = [6, 16], strides = [1, 1]} : vector<6x48xf32> to vector<6x16xf32>
    %232 = vector.extract_strided_slice %214 {offsets = [0, 32], sizes = [6, 16], strides = [1, 1]} : vector<6x48xf32> to vector<6x16xf32>
    %233 = arith.mulf %222, %232 : vector<6x16xf32>
    %234 = arith.addf %231, %233 : vector<6x16xf32>
    %235 = math.tanh %234 : vector<6x16xf32>
    %cst_59 = arith.constant 1.000000e+00 : f32
    %236 = vector.broadcast %cst_59 : f32 to vector<6x16xf32>
    %237 = arith.subf %236, %230 : vector<6x16xf32>
    %238 = arith.mulf %237, %235 : vector<6x16xf32>
    %239 = arith.mulf %230, %205 : vector<6x16xf32>
    %240 = arith.addf %238, %239 : vector<6x16xf32>
    %241 = vector.broadcast %208 : i32 to vector<6x1xi32>
    %242 = arith.cmpi slt, %241, %4 : vector<6x1xi32>
    %243 = vector.shape_cast %242 : vector<6x1xi1> to vector<6x1xi1>
    %244 = vector.broadcast %243 : vector<6x1xi1> to vector<6x16xi1>
    %245 = arith.select %244, %240, %205 : vector<6x16xi1>, vector<6x16xf32>
    %c6_i32 = arith.constant 6 : i32
    %c1_i32_60 = arith.constant 1 : i32
    %246 = arith.cmpi eq, %arg0, %c1_i32_60 : i32
    %c7_i32_61 = arith.constant 7 : i32
    %247 = arith.subi %c7_i32_61, %c6_i32 : i32
    %248 = arith.select %246, %247, %c6_i32 : i32
    %c0_62 = arith.constant 0 : index
    %249 = arith.index_cast %248 : i32 to index
    %c0_63 = arith.constant 0 : index
    %c0_64 = arith.constant 0 : index
    %250 = vector.load %arg1[%c0_62, %249, %c0_63, %c0_64] : memref<1x8x6x48xf32, #tpu.memory_space<vmem>>, vector<1x1x6x48xf32>
    %251 = vector.shape_cast %250 : vector<1x1x6x48xf32> to vector<6x48xf32>
    %cst_65 = arith.constant dense<0.000000e+00> : vector<6x48xf32>
    %252 = tpu.matmul %245, %1, %cst_65 {dimension_numbers = #tpu.dot_dimension_numbers<[1], [0], [0], [1], [0, 0, 1, 1], [], []>} : vector<6x16xf32>, vector<16x48xf32>, vector<6x48xf32> -> vector<6x48xf32>
    %253 = vector.broadcast %3 : vector<1x48xf32> to vector<6x48xf32>
    %254 = arith.addf %252, %253 : vector<6x48xf32>
    %255 = vector.extract_strided_slice %251 {offsets = [0, 0], sizes = [6, 16], strides = [1, 1]} : vector<6x48xf32> to vector<6x16xf32>
    %256 = vector.extract_strided_slice %254 {offsets = [0, 0], sizes = [6, 16], strides = [1, 1]} : vector<6x48xf32> to vector<6x16xf32>
    %257 = arith.addf %255, %256 : vector<6x16xf32>
    %258 = arith.negf %257 : vector<6x16xf32>
    %259 = math.exp %258 : vector<6x16xf32>
    %cst_66 = arith.constant 1.000000e+00 : f32
    %260 = vector.broadcast %cst_66 : f32 to vector<6x16xf32>
    %261 = arith.addf %260, %259 : vector<6x16xf32>
    %262 = arith.divf %260, %261 : vector<6x16xf32>
    %263 = vector.extract_strided_slice %251 {offsets = [0, 16], sizes = [6, 16], strides = [1, 1]} : vector<6x48xf32> to vector<6x16xf32>
    %264 = vector.extract_strided_slice %254 {offsets = [0, 16], sizes = [6, 16], strides = [1, 1]} : vector<6x48xf32> to vector<6x16xf32>
    %265 = arith.addf %263, %264 : vector<6x16xf32>
    %266 = arith.negf %265 : vector<6x16xf32>
    %267 = math.exp %266 : vector<6x16xf32>
    %cst_67 = arith.constant 1.000000e+00 : f32
    %268 = vector.broadcast %cst_67 : f32 to vector<6x16xf32>
    %269 = arith.addf %268, %267 : vector<6x16xf32>
    %270 = arith.divf %268, %269 : vector<6x16xf32>
    %271 = vector.extract_strided_slice %251 {offsets = [0, 32], sizes = [6, 16], strides = [1, 1]} : vector<6x48xf32> to vector<6x16xf32>
    %272 = vector.extract_strided_slice %254 {offsets = [0, 32], sizes = [6, 16], strides = [1, 1]} : vector<6x48xf32> to vector<6x16xf32>
    %273 = arith.mulf %262, %272 : vector<6x16xf32>
    %274 = arith.addf %271, %273 : vector<6x16xf32>
    %275 = math.tanh %274 : vector<6x16xf32>
    %cst_68 = arith.constant 1.000000e+00 : f32
    %276 = vector.broadcast %cst_68 : f32 to vector<6x16xf32>
    %277 = arith.subf %276, %270 : vector<6x16xf32>
    %278 = arith.mulf %277, %275 : vector<6x16xf32>
    %279 = arith.mulf %270, %245 : vector<6x16xf32>
    %280 = arith.addf %278, %279 : vector<6x16xf32>
    %281 = vector.broadcast %248 : i32 to vector<6x1xi32>
    %282 = arith.cmpi slt, %281, %4 : vector<6x1xi32>
    %283 = vector.shape_cast %282 : vector<6x1xi1> to vector<6x1xi1>
    %284 = vector.broadcast %283 : vector<6x1xi1> to vector<6x16xi1>
    %285 = arith.select %284, %280, %245 : vector<6x16xi1>, vector<6x16xf32>
    %c7_i32_69 = arith.constant 7 : i32
    %c1_i32_70 = arith.constant 1 : i32
    %286 = arith.cmpi eq, %arg0, %c1_i32_70 : i32
    %c7_i32_71 = arith.constant 7 : i32
    %287 = arith.subi %c7_i32_71, %c7_i32_69 : i32
    %288 = arith.select %286, %287, %c7_i32_69 : i32
    %c0_72 = arith.constant 0 : index
    %289 = arith.index_cast %288 : i32 to index
    %c0_73 = arith.constant 0 : index
    %c0_74 = arith.constant 0 : index
    %290 = vector.load %arg1[%c0_72, %289, %c0_73, %c0_74] : memref<1x8x6x48xf32, #tpu.memory_space<vmem>>, vector<1x1x6x48xf32>
    %291 = vector.shape_cast %290 : vector<1x1x6x48xf32> to vector<6x48xf32>
    %cst_75 = arith.constant dense<0.000000e+00> : vector<6x48xf32>
    %292 = tpu.matmul %285, %1, %cst_75 {dimension_numbers = #tpu.dot_dimension_numbers<[1], [0], [0], [1], [0, 0, 1, 1], [], []>} : vector<6x16xf32>, vector<16x48xf32>, vector<6x48xf32> -> vector<6x48xf32>
    %293 = vector.broadcast %3 : vector<1x48xf32> to vector<6x48xf32>
    %294 = arith.addf %292, %293 : vector<6x48xf32>
    %295 = vector.extract_strided_slice %291 {offsets = [0, 0], sizes = [6, 16], strides = [1, 1]} : vector<6x48xf32> to vector<6x16xf32>
    %296 = vector.extract_strided_slice %294 {offsets = [0, 0], sizes = [6, 16], strides = [1, 1]} : vector<6x48xf32> to vector<6x16xf32>
    %297 = arith.addf %295, %296 : vector<6x16xf32>
    %298 = arith.negf %297 : vector<6x16xf32>
    %299 = math.exp %298 : vector<6x16xf32>
    %cst_76 = arith.constant 1.000000e+00 : f32
    %300 = vector.broadcast %cst_76 : f32 to vector<6x16xf32>
    %301 = arith.addf %300, %299 : vector<6x16xf32>
    %302 = arith.divf %300, %301 : vector<6x16xf32>
    %303 = vector.extract_strided_slice %291 {offsets = [0, 16], sizes = [6, 16], strides = [1, 1]} : vector<6x48xf32> to vector<6x16xf32>
    %304 = vector.extract_strided_slice %294 {offsets = [0, 16], sizes = [6, 16], strides = [1, 1]} : vector<6x48xf32> to vector<6x16xf32>
    %305 = arith.addf %303, %304 : vector<6x16xf32>
    %306 = arith.negf %305 : vector<6x16xf32>
    %307 = math.exp %306 : vector<6x16xf32>
    %cst_77 = arith.constant 1.000000e+00 : f32
    %308 = vector.broadcast %cst_77 : f32 to vector<6x16xf32>
    %309 = arith.addf %308, %307 : vector<6x16xf32>
    %310 = arith.divf %308, %309 : vector<6x16xf32>
    %311 = vector.extract_strided_slice %291 {offsets = [0, 32], sizes = [6, 16], strides = [1, 1]} : vector<6x48xf32> to vector<6x16xf32>
    %312 = vector.extract_strided_slice %294 {offsets = [0, 32], sizes = [6, 16], strides = [1, 1]} : vector<6x48xf32> to vector<6x16xf32>
    %313 = arith.mulf %302, %312 : vector<6x16xf32>
    %314 = arith.addf %311, %313 : vector<6x16xf32>
    %315 = math.tanh %314 : vector<6x16xf32>
    %cst_78 = arith.constant 1.000000e+00 : f32
    %316 = vector.broadcast %cst_78 : f32 to vector<6x16xf32>
    %317 = arith.subf %316, %310 : vector<6x16xf32>
    %318 = arith.mulf %317, %315 : vector<6x16xf32>
    %319 = arith.mulf %310, %285 : vector<6x16xf32>
    %320 = arith.addf %318, %319 : vector<6x16xf32>
    %321 = vector.broadcast %288 : i32 to vector<6x1xi32>
    %322 = arith.cmpi slt, %321, %4 : vector<6x1xi32>
    %323 = vector.shape_cast %322 : vector<6x1xi1> to vector<6x1xi1>
    %324 = vector.broadcast %323 : vector<6x1xi1> to vector<6x16xi1>
    %325 = arith.select %324, %320, %285 : vector<6x16xi1>, vector<6x16xf32>
    %c8_i32 = arith.constant 8 : i32
    %c0_79 = arith.constant 0 : index
    %c0_80 = arith.constant 0 : index
    %c0_81 = arith.constant 0 : index
    %326 = vector.load %arg5[%c0_79, %c0_80, %c0_81] : memref<1x6x16xf32, #tpu.memory_space<vmem>>, vector<1x6x16xf32>
    %327 = vector.shape_cast %326 : vector<1x6x16xf32> to vector<6x16xf32>
    %328 = vector.shape_cast %325 : vector<6x16xf32> to vector<1x6x16xf32>
    tpu.vector_store %arg5[%c0_79, %c0_80, %c0_81], %328 {strides = array<i32>} : memref<1x6x16xf32, #tpu.memory_space<vmem>>, vector<1x6x16xf32>,
    return
  }
  func.func @transform_0(%arg0: i32) -> (i32, i32, i32, i32) {
    %c0_i32 = arith.constant 0 : i32
    %c0_i32_0 = arith.constant 0 : i32
    %c0_i32_1 = arith.constant 0 : i32
    %c0_i32_2 = arith.constant 0 : i32
    return %arg0, %c0_i32, %c0_i32_0, %c0_i32_1 : i32, i32, i32, i32
  }
  func.func @transform_1(%arg0: i32) -> (i32, i32, i32) {
    %c0_i32 = arith.constant 0 : i32
    %c0_i32_0 = arith.constant 0 : i32
    %c0_i32_1 = arith.constant 0 : i32
    return %arg0, %c0_i32, %c0_i32_0 : i32, i32, i32
  }
  func.func @transform_2(%arg0: i32) -> (i32, i32, i32) {
    %c0_i32 = arith.constant 0 : i32
    %c0_i32_0 = arith.constant 0 : i32
    %c0_i32_1 = arith.constant 0 : i32
    return %arg0, %c0_i32, %c0_i32_0 : i32, i32, i32
  }
  func.func @transform_3(%arg0: i32) -> (i32, i32) {
    %c0_i32 = arith.constant 0 : i32
    %c0_i32_0 = arith.constant 0 : i32
    %c0_i32_1 = arith.constant 0 : i32
    return %c0_i32, %c0_i32_0 : i32, i32
  }
  func.func @transform_4(%arg0: i32) -> (i32, i32, i32) {
    %c0_i32 = arith.constant 0 : i32
    %c0_i32_0 = arith.constant 0 : i32
    %c0_i32_1 = arith.constant 0 : i32
    return %arg0, %c0_i32, %c0_i32_0 : i32, i32, i32
  }
}

module attributes {stable_mosaic.version = 11 : i64} {
  func.func @_ctx_sess_gates_kernel(%arg0: memref<6x64xf32, #tpu.memory_space<vmem>>, %arg1: memref<64x32xbf16, #tpu.memory_space<vmem>>, %arg2: memref<1x32xf32, #tpu.memory_space<vmem>>, %arg3: memref<32x192xbf16, #tpu.memory_space<vmem>>, %arg4: memref<1x192xf32, #tpu.memory_space<vmem>>, %arg5: memref<6x192xf32, #tpu.memory_space<vmem>>) attributes {dimension_semantics = [], scalar_prefetch = 0 : i64, scratch_operands = 0 : i64, tpu.core_type = #tpu.core_type<tc>} {
    %c0 = arith.constant 0 : index
    %c0_0 = arith.constant 0 : index
    %0 = vector.load %arg0[%c0, %c0_0] : memref<6x64xf32, #tpu.memory_space<vmem>>, vector<6x64xf32>
    %1 = arith.truncf %0 : vector<6x64xf32> to vector<6x64xbf16>
    %c0_1 = arith.constant 0 : index
    %c0_2 = arith.constant 0 : index
    %2 = vector.load %arg1[%c0_1, %c0_2] : memref<64x32xbf16, #tpu.memory_space<vmem>>, vector<64x32xbf16>
    %cst = arith.constant dense<0.000000e+00> : vector<6x32xf32>
    %3 = tpu.matmul %1, %2, %cst {dimension_numbers = #tpu.dot_dimension_numbers<[1], [0], [0], [1], [0, 0, 1, 1], [], []>} : vector<6x64xbf16>, vector<64x32xbf16>, vector<6x32xf32> -> vector<6x32xf32>
    %c0_3 = arith.constant 0 : index
    %c0_4 = arith.constant 0 : index
    %4 = vector.load %arg2[%c0_3, %c0_4] : memref<1x32xf32, #tpu.memory_space<vmem>>, vector<1x32xf32>
    %5 = vector.broadcast %4 : vector<1x32xf32> to vector<6x32xf32>
    %6 = arith.addf %3, %5 : vector<6x32xf32>
    %7 = arith.negf %6 : vector<6x32xf32>
    %8 = math.exp %7 : vector<6x32xf32>
    %cst_5 = arith.constant 1.000000e+00 : f32
    %9 = vector.broadcast %cst_5 : f32 to vector<6x32xf32>
    %10 = arith.addf %9, %8 : vector<6x32xf32>
    %11 = arith.divf %9, %10 : vector<6x32xf32>
    %12 = arith.truncf %11 : vector<6x32xf32> to vector<6x32xbf16>
    %c0_6 = arith.constant 0 : index
    %c0_7 = arith.constant 0 : index
    %13 = vector.load %arg3[%c0_6, %c0_7] : memref<32x192xbf16, #tpu.memory_space<vmem>>, vector<32x192xbf16>
    %cst_8 = arith.constant dense<0.000000e+00> : vector<6x192xf32>
    %14 = tpu.matmul %12, %13, %cst_8 {dimension_numbers = #tpu.dot_dimension_numbers<[1], [0], [0], [1], [0, 0, 1, 1], [], []>} : vector<6x32xbf16>, vector<32x192xbf16>, vector<6x192xf32> -> vector<6x192xf32>
    %c0_9 = arith.constant 0 : index
    %c0_10 = arith.constant 0 : index
    %15 = vector.load %arg4[%c0_9, %c0_10] : memref<1x192xf32, #tpu.memory_space<vmem>>, vector<1x192xf32>
    %16 = vector.broadcast %15 : vector<1x192xf32> to vector<6x192xf32>
    %17 = arith.addf %14, %16 : vector<6x192xf32>
    %c0_11 = arith.constant 0 : index
    %c0_12 = arith.constant 0 : index
    %18 = vector.load %arg5[%c0_11, %c0_12] : memref<6x192xf32, #tpu.memory_space<vmem>>, vector<6x192xf32>
    tpu.vector_store %arg5[%c0_11, %c0_12], %17 {strides = array<i32>} : memref<6x192xf32, #tpu.memory_space<vmem>>, vector<6x192xf32>,
    return
  }
}

module attributes {stable_mosaic.version = 11 : i64} {
  func.func @_bigru_hid_kernel(%arg0: i32, %arg1: memref<1x3x2x96xf32, #tpu.memory_space<vmem>>, %arg2: memref<1x32x96xf32, #tpu.memory_space<vmem>>, %arg3: memref<1x1x96xf32, #tpu.memory_space<vmem>>, %arg4: memref<2x1xi32, #tpu.memory_space<vmem>>, %arg5: memref<1x2x32xf32, #tpu.memory_space<vmem>>) attributes {dimension_semantics = [#tpu.dimension_semantics<parallel>], iteration_bounds = array<i64: 2>, scalar_prefetch = 0 : i64, scratch_operands = 0 : i64, tpu.core_type = #tpu.core_type<tc>, window_params = [{transform_indices = @transform_0, window_bounds = array<i64: 1, 3, 2, 96>}, {transform_indices = @transform_1, window_bounds = array<i64: 1, 32, 96>}, {transform_indices = @transform_2, window_bounds = array<i64: 1, 1, 96>}, {pipeline_mode = #tpu.pipeline_mode<synchronous>, transform_indices = @transform_3, window_bounds = array<i64: 2, 1>}, {transform_indices = @transform_4, window_bounds = array<i64: 1, 2, 32>}]} {
    %c0 = arith.constant 0 : index
    %c0_0 = arith.constant 0 : index
    %c0_1 = arith.constant 0 : index
    %0 = vector.load %arg2[%c0, %c0_0, %c0_1] : memref<1x32x96xf32, #tpu.memory_space<vmem>>, vector<1x32x96xf32>
    %1 = vector.shape_cast %0 : vector<1x32x96xf32> to vector<32x96xf32>
    %c0_2 = arith.constant 0 : index
    %c0_3 = arith.constant 0 : index
    %c0_4 = arith.constant 0 : index
    %2 = vector.load %arg3[%c0_2, %c0_3, %c0_4] : memref<1x1x96xf32, #tpu.memory_space<vmem>>, vector<1x1x96xf32>
    %3 = vector.shape_cast %2 : vector<1x1x96xf32> to vector<1x96xf32>
    %c0_5 = arith.constant 0 : index
    %c0_6 = arith.constant 0 : index
    %4 = vector.load %arg4[%c0_5, %c0_6] : memref<2x1xi32, #tpu.memory_space<vmem>>, vector<2x1xi32>
    %cst = arith.constant 0.000000e+00 : f32
    %5 = vector.broadcast %cst : f32 to vector<2x32xf32>
    %c0_i32 = arith.constant 0 : i32
    %c1_i32 = arith.constant 1 : i32
    %6 = arith.cmpi eq, %arg0, %c1_i32 : i32
    %c2_i32 = arith.constant 2 : i32
    %7 = arith.subi %c2_i32, %c0_i32 : i32
    %8 = arith.select %6, %7, %c0_i32 : i32
    %c0_7 = arith.constant 0 : index
    %9 = arith.index_cast %8 : i32 to index
    %c0_8 = arith.constant 0 : index
    %c0_9 = arith.constant 0 : index
    %10 = vector.load %arg1[%c0_7, %9, %c0_8, %c0_9] : memref<1x3x2x96xf32, #tpu.memory_space<vmem>>, vector<1x1x2x96xf32>
    %11 = vector.shape_cast %10 : vector<1x1x2x96xf32> to vector<2x96xf32>
    %cst_10 = arith.constant dense<0.000000e+00> : vector<2x96xf32>
    %12 = tpu.matmul %5, %1, %cst_10 {dimension_numbers = #tpu.dot_dimension_numbers<[1], [0], [0], [1], [0, 0, 1, 1], [], []>} : vector<2x32xf32>, vector<32x96xf32>, vector<2x96xf32> -> vector<2x96xf32>
    %13 = vector.broadcast %3 : vector<1x96xf32> to vector<2x96xf32>
    %14 = arith.addf %12, %13 : vector<2x96xf32>
    %15 = vector.extract_strided_slice %11 {offsets = [0, 0], sizes = [2, 32], strides = [1, 1]} : vector<2x96xf32> to vector<2x32xf32>
    %16 = vector.extract_strided_slice %14 {offsets = [0, 0], sizes = [2, 32], strides = [1, 1]} : vector<2x96xf32> to vector<2x32xf32>
    %17 = arith.addf %15, %16 : vector<2x32xf32>
    %18 = arith.negf %17 : vector<2x32xf32>
    %19 = math.exp %18 : vector<2x32xf32>
    %cst_11 = arith.constant 1.000000e+00 : f32
    %20 = vector.broadcast %cst_11 : f32 to vector<2x32xf32>
    %21 = arith.addf %20, %19 : vector<2x32xf32>
    %22 = arith.divf %20, %21 : vector<2x32xf32>
    %23 = vector.extract_strided_slice %11 {offsets = [0, 32], sizes = [2, 32], strides = [1, 1]} : vector<2x96xf32> to vector<2x32xf32>
    %24 = vector.extract_strided_slice %14 {offsets = [0, 32], sizes = [2, 32], strides = [1, 1]} : vector<2x96xf32> to vector<2x32xf32>
    %25 = arith.addf %23, %24 : vector<2x32xf32>
    %26 = arith.negf %25 : vector<2x32xf32>
    %27 = math.exp %26 : vector<2x32xf32>
    %cst_12 = arith.constant 1.000000e+00 : f32
    %28 = vector.broadcast %cst_12 : f32 to vector<2x32xf32>
    %29 = arith.addf %28, %27 : vector<2x32xf32>
    %30 = arith.divf %28, %29 : vector<2x32xf32>
    %31 = vector.extract_strided_slice %11 {offsets = [0, 64], sizes = [2, 32], strides = [1, 1]} : vector<2x96xf32> to vector<2x32xf32>
    %32 = vector.extract_strided_slice %14 {offsets = [0, 64], sizes = [2, 32], strides = [1, 1]} : vector<2x96xf32> to vector<2x32xf32>
    %33 = arith.mulf %22, %32 : vector<2x32xf32>
    %34 = arith.addf %31, %33 : vector<2x32xf32>
    %35 = math.tanh %34 : vector<2x32xf32>
    %cst_13 = arith.constant 1.000000e+00 : f32
    %36 = vector.broadcast %cst_13 : f32 to vector<2x32xf32>
    %37 = arith.subf %36, %30 : vector<2x32xf32>
    %38 = arith.mulf %37, %35 : vector<2x32xf32>
    %39 = arith.mulf %30, %5 : vector<2x32xf32>
    %40 = arith.addf %38, %39 : vector<2x32xf32>
    %41 = vector.broadcast %8 : i32 to vector<2x1xi32>
    %42 = arith.cmpi slt, %41, %4 : vector<2x1xi32>
    %43 = vector.shape_cast %42 : vector<2x1xi1> to vector<2x1xi1>
    %44 = vector.broadcast %43 : vector<2x1xi1> to vector<2x32xi1>
    %45 = arith.select %44, %40, %5 : vector<2x32xi1>, vector<2x32xf32>
    %c1_i32_14 = arith.constant 1 : i32
    %c1_i32_15 = arith.constant 1 : i32
    %46 = arith.cmpi eq, %arg0, %c1_i32_15 : i32
    %c2_i32_16 = arith.constant 2 : i32
    %47 = arith.subi %c2_i32_16, %c1_i32_14 : i32
    %48 = arith.select %46, %47, %c1_i32_14 : i32
    %c0_17 = arith.constant 0 : index
    %49 = arith.index_cast %48 : i32 to index
    %c0_18 = arith.constant 0 : index
    %c0_19 = arith.constant 0 : index
    %50 = vector.load %arg1[%c0_17, %49, %c0_18, %c0_19] : memref<1x3x2x96xf32, #tpu.memory_space<vmem>>, vector<1x1x2x96xf32>
    %51 = vector.shape_cast %50 : vector<1x1x2x96xf32> to vector<2x96xf32>
    %cst_20 = arith.constant dense<0.000000e+00> : vector<2x96xf32>
    %52 = tpu.matmul %45, %1, %cst_20 {dimension_numbers = #tpu.dot_dimension_numbers<[1], [0], [0], [1], [0, 0, 1, 1], [], []>} : vector<2x32xf32>, vector<32x96xf32>, vector<2x96xf32> -> vector<2x96xf32>
    %53 = vector.broadcast %3 : vector<1x96xf32> to vector<2x96xf32>
    %54 = arith.addf %52, %53 : vector<2x96xf32>
    %55 = vector.extract_strided_slice %51 {offsets = [0, 0], sizes = [2, 32], strides = [1, 1]} : vector<2x96xf32> to vector<2x32xf32>
    %56 = vector.extract_strided_slice %54 {offsets = [0, 0], sizes = [2, 32], strides = [1, 1]} : vector<2x96xf32> to vector<2x32xf32>
    %57 = arith.addf %55, %56 : vector<2x32xf32>
    %58 = arith.negf %57 : vector<2x32xf32>
    %59 = math.exp %58 : vector<2x32xf32>
    %cst_21 = arith.constant 1.000000e+00 : f32
    %60 = vector.broadcast %cst_21 : f32 to vector<2x32xf32>
    %61 = arith.addf %60, %59 : vector<2x32xf32>
    %62 = arith.divf %60, %61 : vector<2x32xf32>
    %63 = vector.extract_strided_slice %51 {offsets = [0, 32], sizes = [2, 32], strides = [1, 1]} : vector<2x96xf32> to vector<2x32xf32>
    %64 = vector.extract_strided_slice %54 {offsets = [0, 32], sizes = [2, 32], strides = [1, 1]} : vector<2x96xf32> to vector<2x32xf32>
    %65 = arith.addf %63, %64 : vector<2x32xf32>
    %66 = arith.negf %65 : vector<2x32xf32>
    %67 = math.exp %66 : vector<2x32xf32>
    %cst_22 = arith.constant 1.000000e+00 : f32
    %68 = vector.broadcast %cst_22 : f32 to vector<2x32xf32>
    %69 = arith.addf %68, %67 : vector<2x32xf32>
    %70 = arith.divf %68, %69 : vector<2x32xf32>
    %71 = vector.extract_strided_slice %51 {offsets = [0, 64], sizes = [2, 32], strides = [1, 1]} : vector<2x96xf32> to vector<2x32xf32>
    %72 = vector.extract_strided_slice %54 {offsets = [0, 64], sizes = [2, 32], strides = [1, 1]} : vector<2x96xf32> to vector<2x32xf32>
    %73 = arith.mulf %62, %72 : vector<2x32xf32>
    %74 = arith.addf %71, %73 : vector<2x32xf32>
    %75 = math.tanh %74 : vector<2x32xf32>
    %cst_23 = arith.constant 1.000000e+00 : f32
    %76 = vector.broadcast %cst_23 : f32 to vector<2x32xf32>
    %77 = arith.subf %76, %70 : vector<2x32xf32>
    %78 = arith.mulf %77, %75 : vector<2x32xf32>
    %79 = arith.mulf %70, %45 : vector<2x32xf32>
    %80 = arith.addf %78, %79 : vector<2x32xf32>
    %81 = vector.broadcast %48 : i32 to vector<2x1xi32>
    %82 = arith.cmpi slt, %81, %4 : vector<2x1xi32>
    %83 = vector.shape_cast %82 : vector<2x1xi1> to vector<2x1xi1>
    %84 = vector.broadcast %83 : vector<2x1xi1> to vector<2x32xi1>
    %85 = arith.select %84, %80, %45 : vector<2x32xi1>, vector<2x32xf32>
    %c2_i32_24 = arith.constant 2 : i32
    %c1_i32_25 = arith.constant 1 : i32
    %86 = arith.cmpi eq, %arg0, %c1_i32_25 : i32
    %c2_i32_26 = arith.constant 2 : i32
    %87 = arith.subi %c2_i32_26, %c2_i32_24 : i32
    %88 = arith.select %86, %87, %c2_i32_24 : i32
    %c0_27 = arith.constant 0 : index
    %89 = arith.index_cast %88 : i32 to index
    %c0_28 = arith.constant 0 : index
    %c0_29 = arith.constant 0 : index
    %90 = vector.load %arg1[%c0_27, %89, %c0_28, %c0_29] : memref<1x3x2x96xf32, #tpu.memory_space<vmem>>, vector<1x1x2x96xf32>
    %91 = vector.shape_cast %90 : vector<1x1x2x96xf32> to vector<2x96xf32>
    %cst_30 = arith.constant dense<0.000000e+00> : vector<2x96xf32>
    %92 = tpu.matmul %85, %1, %cst_30 {dimension_numbers = #tpu.dot_dimension_numbers<[1], [0], [0], [1], [0, 0, 1, 1], [], []>} : vector<2x32xf32>, vector<32x96xf32>, vector<2x96xf32> -> vector<2x96xf32>
    %93 = vector.broadcast %3 : vector<1x96xf32> to vector<2x96xf32>
    %94 = arith.addf %92, %93 : vector<2x96xf32>
    %95 = vector.extract_strided_slice %91 {offsets = [0, 0], sizes = [2, 32], strides = [1, 1]} : vector<2x96xf32> to vector<2x32xf32>
    %96 = vector.extract_strided_slice %94 {offsets = [0, 0], sizes = [2, 32], strides = [1, 1]} : vector<2x96xf32> to vector<2x32xf32>
    %97 = arith.addf %95, %96 : vector<2x32xf32>
    %98 = arith.negf %97 : vector<2x32xf32>
    %99 = math.exp %98 : vector<2x32xf32>
    %cst_31 = arith.constant 1.000000e+00 : f32
    %100 = vector.broadcast %cst_31 : f32 to vector<2x32xf32>
    %101 = arith.addf %100, %99 : vector<2x32xf32>
    %102 = arith.divf %100, %101 : vector<2x32xf32>
    %103 = vector.extract_strided_slice %91 {offsets = [0, 32], sizes = [2, 32], strides = [1, 1]} : vector<2x96xf32> to vector<2x32xf32>
    %104 = vector.extract_strided_slice %94 {offsets = [0, 32], sizes = [2, 32], strides = [1, 1]} : vector<2x96xf32> to vector<2x32xf32>
    %105 = arith.addf %103, %104 : vector<2x32xf32>
    %106 = arith.negf %105 : vector<2x32xf32>
    %107 = math.exp %106 : vector<2x32xf32>
    %cst_32 = arith.constant 1.000000e+00 : f32
    %108 = vector.broadcast %cst_32 : f32 to vector<2x32xf32>
    %109 = arith.addf %108, %107 : vector<2x32xf32>
    %110 = arith.divf %108, %109 : vector<2x32xf32>
    %111 = vector.extract_strided_slice %91 {offsets = [0, 64], sizes = [2, 32], strides = [1, 1]} : vector<2x96xf32> to vector<2x32xf32>
    %112 = vector.extract_strided_slice %94 {offsets = [0, 64], sizes = [2, 32], strides = [1, 1]} : vector<2x96xf32> to vector<2x32xf32>
    %113 = arith.mulf %102, %112 : vector<2x32xf32>
    %114 = arith.addf %111, %113 : vector<2x32xf32>
    %115 = math.tanh %114 : vector<2x32xf32>
    %cst_33 = arith.constant 1.000000e+00 : f32
    %116 = vector.broadcast %cst_33 : f32 to vector<2x32xf32>
    %117 = arith.subf %116, %110 : vector<2x32xf32>
    %118 = arith.mulf %117, %115 : vector<2x32xf32>
    %119 = arith.mulf %110, %85 : vector<2x32xf32>
    %120 = arith.addf %118, %119 : vector<2x32xf32>
    %121 = vector.broadcast %88 : i32 to vector<2x1xi32>
    %122 = arith.cmpi slt, %121, %4 : vector<2x1xi32>
    %123 = vector.shape_cast %122 : vector<2x1xi1> to vector<2x1xi1>
    %124 = vector.broadcast %123 : vector<2x1xi1> to vector<2x32xi1>
    %125 = arith.select %124, %120, %85 : vector<2x32xi1>, vector<2x32xf32>
    %c3_i32 = arith.constant 3 : i32
    %c0_34 = arith.constant 0 : index
    %c0_35 = arith.constant 0 : index
    %c0_36 = arith.constant 0 : index
    %126 = vector.load %arg5[%c0_34, %c0_35, %c0_36] : memref<1x2x32xf32, #tpu.memory_space<vmem>>, vector<1x2x32xf32>
    %127 = vector.shape_cast %126 : vector<1x2x32xf32> to vector<2x32xf32>
    %128 = vector.shape_cast %125 : vector<2x32xf32> to vector<1x2x32xf32>
    tpu.vector_store %arg5[%c0_34, %c0_35, %c0_36], %128 {strides = array<i32>} : memref<1x2x32xf32, #tpu.memory_space<vmem>>, vector<1x2x32xf32>,
    return
  }
  func.func @transform_0(%arg0: i32) -> (i32, i32, i32, i32) {
    %c0_i32 = arith.constant 0 : i32
    %c0_i32_0 = arith.constant 0 : i32
    %c0_i32_1 = arith.constant 0 : i32
    %c0_i32_2 = arith.constant 0 : i32
    return %arg0, %c0_i32, %c0_i32_0, %c0_i32_1 : i32, i32, i32, i32
  }
  func.func @transform_1(%arg0: i32) -> (i32, i32, i32) {
    %c0_i32 = arith.constant 0 : i32
    %c0_i32_0 = arith.constant 0 : i32
    %c0_i32_1 = arith.constant 0 : i32
    return %arg0, %c0_i32, %c0_i32_0 : i32, i32, i32
  }
  func.func @transform_2(%arg0: i32) -> (i32, i32, i32) {
    %c0_i32 = arith.constant 0 : i32
    %c0_i32_0 = arith.constant 0 : i32
    %c0_i32_1 = arith.constant 0 : i32
    return %arg0, %c0_i32, %c0_i32_0 : i32, i32, i32
  }
  func.func @transform_3(%arg0: i32) -> (i32, i32) {
    %c0_i32 = arith.constant 0 : i32
    %c0_i32_0 = arith.constant 0 : i32
    %c0_i32_1 = arith.constant 0 : i32
    return %c0_i32, %c0_i32_0 : i32, i32
  }
  func.func @transform_4(%arg0: i32) -> (i32, i32, i32) {
    %c0_i32 = arith.constant 0 : i32
    %c0_i32_0 = arith.constant 0 : i32
    %c0_i32_1 = arith.constant 0 : i32
    return %arg0, %c0_i32, %c0_i32_0 : i32, i32, i32
  }
}

module attributes {stable_mosaic.version = 11 : i64} {
  func.func @_linear_kernel(%arg0: memref<16x16xf32, #tpu.memory_space<vmem>>, %arg1: memref<16x192xbf16, #tpu.memory_space<vmem>>, %arg2: memref<1x192xf32, #tpu.memory_space<vmem>>, %arg3: memref<16x192xf32, #tpu.memory_space<vmem>>) attributes {dimension_semantics = [], scalar_prefetch = 0 : i64, scratch_operands = 0 : i64, tpu.core_type = #tpu.core_type<tc>} {
    %c0 = arith.constant 0 : index
    %c0_0 = arith.constant 0 : index
    %0 = vector.load %arg0[%c0, %c0_0] : memref<16x16xf32, #tpu.memory_space<vmem>>, vector<16x16xf32>
    %1 = arith.truncf %0 : vector<16x16xf32> to vector<16x16xbf16>
    %c0_1 = arith.constant 0 : index
    %c0_2 = arith.constant 0 : index
    %2 = vector.load %arg1[%c0_1, %c0_2] : memref<16x192xbf16, #tpu.memory_space<vmem>>, vector<16x192xbf16>
    %cst = arith.constant dense<0.000000e+00> : vector<16x192xf32>
    %3 = tpu.matmul %1, %2, %cst {dimension_numbers = #tpu.dot_dimension_numbers<[1], [0], [0], [1], [0, 0, 1, 1], [], []>} : vector<16x16xbf16>, vector<16x192xbf16>, vector<16x192xf32> -> vector<16x192xf32>
    %c0_3 = arith.constant 0 : index
    %c0_4 = arith.constant 0 : index
    %4 = vector.load %arg2[%c0_3, %c0_4] : memref<1x192xf32, #tpu.memory_space<vmem>>, vector<1x192xf32>
    %5 = vector.broadcast %4 : vector<1x192xf32> to vector<16x192xf32>
    %6 = arith.addf %3, %5 : vector<16x192xf32>
    %c0_5 = arith.constant 0 : index
    %c0_6 = arith.constant 0 : index
    %7 = vector.load %arg3[%c0_5, %c0_6] : memref<16x192xf32, #tpu.memory_space<vmem>>, vector<16x192xf32>
    tpu.vector_store %arg3[%c0_5, %c0_6], %6 {strides = array<i32>} : memref<16x192xf32, #tpu.memory_space<vmem>>, vector<16x192xf32>,
    return
  }
}

module attributes {stable_mosaic.version = 11 : i64} {
  func.func @_bigru_seq_kernel(%arg0: i32, %arg1: memref<1x8x2x96xf32, #tpu.memory_space<vmem>>, %arg2: memref<1x32x96xf32, #tpu.memory_space<vmem>>, %arg3: memref<1x1x96xf32, #tpu.memory_space<vmem>>, %arg4: memref<1x8x2x32xf32, #tpu.memory_space<vmem>>) attributes {dimension_semantics = [#tpu.dimension_semantics<parallel>], iteration_bounds = array<i64: 2>, scalar_prefetch = 0 : i64, scratch_operands = 0 : i64, tpu.core_type = #tpu.core_type<tc>, window_params = [{transform_indices = @transform_0, window_bounds = array<i64: 1, 8, 2, 96>}, {transform_indices = @transform_1, window_bounds = array<i64: 1, 32, 96>}, {transform_indices = @transform_2, window_bounds = array<i64: 1, 1, 96>}, {transform_indices = @transform_3, window_bounds = array<i64: 1, 8, 2, 32>}]} {
    %c0 = arith.constant 0 : index
    %c0_0 = arith.constant 0 : index
    %c0_1 = arith.constant 0 : index
    %0 = vector.load %arg2[%c0, %c0_0, %c0_1] : memref<1x32x96xf32, #tpu.memory_space<vmem>>, vector<1x32x96xf32>
    %1 = vector.shape_cast %0 : vector<1x32x96xf32> to vector<32x96xf32>
    %c0_2 = arith.constant 0 : index
    %c0_3 = arith.constant 0 : index
    %c0_4 = arith.constant 0 : index
    %2 = vector.load %arg3[%c0_2, %c0_3, %c0_4] : memref<1x1x96xf32, #tpu.memory_space<vmem>>, vector<1x1x96xf32>
    %3 = vector.shape_cast %2 : vector<1x1x96xf32> to vector<1x96xf32>
    %cst = arith.constant 0.000000e+00 : f32
    %4 = vector.broadcast %cst : f32 to vector<2x32xf32>
    %c0_i32 = arith.constant 0 : i32
    %c1_i32 = arith.constant 1 : i32
    %5 = arith.cmpi eq, %arg0, %c1_i32 : i32
    %c7_i32 = arith.constant 7 : i32
    %6 = arith.subi %c7_i32, %c0_i32 : i32
    %7 = arith.select %5, %6, %c0_i32 : i32
    %c0_5 = arith.constant 0 : index
    %8 = arith.index_cast %7 : i32 to index
    %c0_6 = arith.constant 0 : index
    %c0_7 = arith.constant 0 : index
    %9 = vector.load %arg1[%c0_5, %8, %c0_6, %c0_7] : memref<1x8x2x96xf32, #tpu.memory_space<vmem>>, vector<1x1x2x96xf32>
    %10 = vector.shape_cast %9 : vector<1x1x2x96xf32> to vector<2x96xf32>
    %cst_8 = arith.constant dense<0.000000e+00> : vector<2x96xf32>
    %11 = tpu.matmul %4, %1, %cst_8 {dimension_numbers = #tpu.dot_dimension_numbers<[1], [0], [0], [1], [0, 0, 1, 1], [], []>} : vector<2x32xf32>, vector<32x96xf32>, vector<2x96xf32> -> vector<2x96xf32>
    %12 = vector.broadcast %3 : vector<1x96xf32> to vector<2x96xf32>
    %13 = arith.addf %11, %12 : vector<2x96xf32>
    %14 = vector.extract_strided_slice %10 {offsets = [0, 0], sizes = [2, 32], strides = [1, 1]} : vector<2x96xf32> to vector<2x32xf32>
    %15 = vector.extract_strided_slice %13 {offsets = [0, 0], sizes = [2, 32], strides = [1, 1]} : vector<2x96xf32> to vector<2x32xf32>
    %16 = arith.addf %14, %15 : vector<2x32xf32>
    %17 = arith.negf %16 : vector<2x32xf32>
    %18 = math.exp %17 : vector<2x32xf32>
    %cst_9 = arith.constant 1.000000e+00 : f32
    %19 = vector.broadcast %cst_9 : f32 to vector<2x32xf32>
    %20 = arith.addf %19, %18 : vector<2x32xf32>
    %21 = arith.divf %19, %20 : vector<2x32xf32>
    %22 = vector.extract_strided_slice %10 {offsets = [0, 32], sizes = [2, 32], strides = [1, 1]} : vector<2x96xf32> to vector<2x32xf32>
    %23 = vector.extract_strided_slice %13 {offsets = [0, 32], sizes = [2, 32], strides = [1, 1]} : vector<2x96xf32> to vector<2x32xf32>
    %24 = arith.addf %22, %23 : vector<2x32xf32>
    %25 = arith.negf %24 : vector<2x32xf32>
    %26 = math.exp %25 : vector<2x32xf32>
    %cst_10 = arith.constant 1.000000e+00 : f32
    %27 = vector.broadcast %cst_10 : f32 to vector<2x32xf32>
    %28 = arith.addf %27, %26 : vector<2x32xf32>
    %29 = arith.divf %27, %28 : vector<2x32xf32>
    %30 = vector.extract_strided_slice %10 {offsets = [0, 64], sizes = [2, 32], strides = [1, 1]} : vector<2x96xf32> to vector<2x32xf32>
    %31 = vector.extract_strided_slice %13 {offsets = [0, 64], sizes = [2, 32], strides = [1, 1]} : vector<2x96xf32> to vector<2x32xf32>
    %32 = arith.mulf %21, %31 : vector<2x32xf32>
    %33 = arith.addf %30, %32 : vector<2x32xf32>
    %34 = math.tanh %33 : vector<2x32xf32>
    %cst_11 = arith.constant 1.000000e+00 : f32
    %35 = vector.broadcast %cst_11 : f32 to vector<2x32xf32>
    %36 = arith.subf %35, %29 : vector<2x32xf32>
    %37 = arith.mulf %36, %34 : vector<2x32xf32>
    %38 = arith.mulf %29, %4 : vector<2x32xf32>
    %39 = arith.addf %37, %38 : vector<2x32xf32>
    %c0_12 = arith.constant 0 : index
    %40 = arith.index_cast %7 : i32 to index
    %c0_13 = arith.constant 0 : index
    %c0_14 = arith.constant 0 : index
    %41 = vector.load %arg4[%c0_12, %40, %c0_13, %c0_14] : memref<1x8x2x32xf32, #tpu.memory_space<vmem>>, vector<1x1x2x32xf32>
    %42 = vector.shape_cast %41 : vector<1x1x2x32xf32> to vector<2x32xf32>
    %43 = vector.shape_cast %39 : vector<2x32xf32> to vector<1x1x2x32xf32>
    tpu.vector_store %arg4[%c0_12, %40, %c0_13, %c0_14], %43 {strides = array<i32>} : memref<1x8x2x32xf32, #tpu.memory_space<vmem>>, vector<1x1x2x32xf32>,
    %c1_i32_15 = arith.constant 1 : i32
    %c1_i32_16 = arith.constant 1 : i32
    %44 = arith.cmpi eq, %arg0, %c1_i32_16 : i32
    %c7_i32_17 = arith.constant 7 : i32
    %45 = arith.subi %c7_i32_17, %c1_i32_15 : i32
    %46 = arith.select %44, %45, %c1_i32_15 : i32
    %c0_18 = arith.constant 0 : index
    %47 = arith.index_cast %46 : i32 to index
    %c0_19 = arith.constant 0 : index
    %c0_20 = arith.constant 0 : index
    %48 = vector.load %arg1[%c0_18, %47, %c0_19, %c0_20] : memref<1x8x2x96xf32, #tpu.memory_space<vmem>>, vector<1x1x2x96xf32>
    %49 = vector.shape_cast %48 : vector<1x1x2x96xf32> to vector<2x96xf32>
    %cst_21 = arith.constant dense<0.000000e+00> : vector<2x96xf32>
    %50 = tpu.matmul %39, %1, %cst_21 {dimension_numbers = #tpu.dot_dimension_numbers<[1], [0], [0], [1], [0, 0, 1, 1], [], []>} : vector<2x32xf32>, vector<32x96xf32>, vector<2x96xf32> -> vector<2x96xf32>
    %51 = vector.broadcast %3 : vector<1x96xf32> to vector<2x96xf32>
    %52 = arith.addf %50, %51 : vector<2x96xf32>
    %53 = vector.extract_strided_slice %49 {offsets = [0, 0], sizes = [2, 32], strides = [1, 1]} : vector<2x96xf32> to vector<2x32xf32>
    %54 = vector.extract_strided_slice %52 {offsets = [0, 0], sizes = [2, 32], strides = [1, 1]} : vector<2x96xf32> to vector<2x32xf32>
    %55 = arith.addf %53, %54 : vector<2x32xf32>
    %56 = arith.negf %55 : vector<2x32xf32>
    %57 = math.exp %56 : vector<2x32xf32>
    %cst_22 = arith.constant 1.000000e+00 : f32
    %58 = vector.broadcast %cst_22 : f32 to vector<2x32xf32>
    %59 = arith.addf %58, %57 : vector<2x32xf32>
    %60 = arith.divf %58, %59 : vector<2x32xf32>
    %61 = vector.extract_strided_slice %49 {offsets = [0, 32], sizes = [2, 32], strides = [1, 1]} : vector<2x96xf32> to vector<2x32xf32>
    %62 = vector.extract_strided_slice %52 {offsets = [0, 32], sizes = [2, 32], strides = [1, 1]} : vector<2x96xf32> to vector<2x32xf32>
    %63 = arith.addf %61, %62 : vector<2x32xf32>
    %64 = arith.negf %63 : vector<2x32xf32>
    %65 = math.exp %64 : vector<2x32xf32>
    %cst_23 = arith.constant 1.000000e+00 : f32
    %66 = vector.broadcast %cst_23 : f32 to vector<2x32xf32>
    %67 = arith.addf %66, %65 : vector<2x32xf32>
    %68 = arith.divf %66, %67 : vector<2x32xf32>
    %69 = vector.extract_strided_slice %49 {offsets = [0, 64], sizes = [2, 32], strides = [1, 1]} : vector<2x96xf32> to vector<2x32xf32>
    %70 = vector.extract_strided_slice %52 {offsets = [0, 64], sizes = [2, 32], strides = [1, 1]} : vector<2x96xf32> to vector<2x32xf32>
    %71 = arith.mulf %60, %70 : vector<2x32xf32>
    %72 = arith.addf %69, %71 : vector<2x32xf32>
    %73 = math.tanh %72 : vector<2x32xf32>
    %cst_24 = arith.constant 1.000000e+00 : f32
    %74 = vector.broadcast %cst_24 : f32 to vector<2x32xf32>
    %75 = arith.subf %74, %68 : vector<2x32xf32>
    %76 = arith.mulf %75, %73 : vector<2x32xf32>
    %77 = arith.mulf %68, %39 : vector<2x32xf32>
    %78 = arith.addf %76, %77 : vector<2x32xf32>
    %c0_25 = arith.constant 0 : index
    %79 = arith.index_cast %46 : i32 to index
    %c0_26 = arith.constant 0 : index
    %c0_27 = arith.constant 0 : index
    %80 = vector.load %arg4[%c0_25, %79, %c0_26, %c0_27] : memref<1x8x2x32xf32, #tpu.memory_space<vmem>>, vector<1x1x2x32xf32>
    %81 = vector.shape_cast %80 : vector<1x1x2x32xf32> to vector<2x32xf32>
    %82 = vector.shape_cast %78 : vector<2x32xf32> to vector<1x1x2x32xf32>
    tpu.vector_store %arg4[%c0_25, %79, %c0_26, %c0_27], %82 {strides = array<i32>} : memref<1x8x2x32xf32, #tpu.memory_space<vmem>>, vector<1x1x2x32xf32>,
    %c2_i32 = arith.constant 2 : i32
    %c1_i32_28 = arith.constant 1 : i32
    %83 = arith.cmpi eq, %arg0, %c1_i32_28 : i32
    %c7_i32_29 = arith.constant 7 : i32
    %84 = arith.subi %c7_i32_29, %c2_i32 : i32
    %85 = arith.select %83, %84, %c2_i32 : i32
    %c0_30 = arith.constant 0 : index
    %86 = arith.index_cast %85 : i32 to index
    %c0_31 = arith.constant 0 : index
    %c0_32 = arith.constant 0 : index
    %87 = vector.load %arg1[%c0_30, %86, %c0_31, %c0_32] : memref<1x8x2x96xf32, #tpu.memory_space<vmem>>, vector<1x1x2x96xf32>
    %88 = vector.shape_cast %87 : vector<1x1x2x96xf32> to vector<2x96xf32>
    %cst_33 = arith.constant dense<0.000000e+00> : vector<2x96xf32>
    %89 = tpu.matmul %78, %1, %cst_33 {dimension_numbers = #tpu.dot_dimension_numbers<[1], [0], [0], [1], [0, 0, 1, 1], [], []>} : vector<2x32xf32>, vector<32x96xf32>, vector<2x96xf32> -> vector<2x96xf32>
    %90 = vector.broadcast %3 : vector<1x96xf32> to vector<2x96xf32>
    %91 = arith.addf %89, %90 : vector<2x96xf32>
    %92 = vector.extract_strided_slice %88 {offsets = [0, 0], sizes = [2, 32], strides = [1, 1]} : vector<2x96xf32> to vector<2x32xf32>
    %93 = vector.extract_strided_slice %91 {offsets = [0, 0], sizes = [2, 32], strides = [1, 1]} : vector<2x96xf32> to vector<2x32xf32>
    %94 = arith.addf %92, %93 : vector<2x32xf32>
    %95 = arith.negf %94 : vector<2x32xf32>
    %96 = math.exp %95 : vector<2x32xf32>
    %cst_34 = arith.constant 1.000000e+00 : f32
    %97 = vector.broadcast %cst_34 : f32 to vector<2x32xf32>
    %98 = arith.addf %97, %96 : vector<2x32xf32>
    %99 = arith.divf %97, %98 : vector<2x32xf32>
    %100 = vector.extract_strided_slice %88 {offsets = [0, 32], sizes = [2, 32], strides = [1, 1]} : vector<2x96xf32> to vector<2x32xf32>
    %101 = vector.extract_strided_slice %91 {offsets = [0, 32], sizes = [2, 32], strides = [1, 1]} : vector<2x96xf32> to vector<2x32xf32>
    %102 = arith.addf %100, %101 : vector<2x32xf32>
    %103 = arith.negf %102 : vector<2x32xf32>
    %104 = math.exp %103 : vector<2x32xf32>
    %cst_35 = arith.constant 1.000000e+00 : f32
    %105 = vector.broadcast %cst_35 : f32 to vector<2x32xf32>
    %106 = arith.addf %105, %104 : vector<2x32xf32>
    %107 = arith.divf %105, %106 : vector<2x32xf32>
    %108 = vector.extract_strided_slice %88 {offsets = [0, 64], sizes = [2, 32], strides = [1, 1]} : vector<2x96xf32> to vector<2x32xf32>
    %109 = vector.extract_strided_slice %91 {offsets = [0, 64], sizes = [2, 32], strides = [1, 1]} : vector<2x96xf32> to vector<2x32xf32>
    %110 = arith.mulf %99, %109 : vector<2x32xf32>
    %111 = arith.addf %108, %110 : vector<2x32xf32>
    %112 = math.tanh %111 : vector<2x32xf32>
    %cst_36 = arith.constant 1.000000e+00 : f32
    %113 = vector.broadcast %cst_36 : f32 to vector<2x32xf32>
    %114 = arith.subf %113, %107 : vector<2x32xf32>
    %115 = arith.mulf %114, %112 : vector<2x32xf32>
    %116 = arith.mulf %107, %78 : vector<2x32xf32>
    %117 = arith.addf %115, %116 : vector<2x32xf32>
    %c0_37 = arith.constant 0 : index
    %118 = arith.index_cast %85 : i32 to index
    %c0_38 = arith.constant 0 : index
    %c0_39 = arith.constant 0 : index
    %119 = vector.load %arg4[%c0_37, %118, %c0_38, %c0_39] : memref<1x8x2x32xf32, #tpu.memory_space<vmem>>, vector<1x1x2x32xf32>
    %120 = vector.shape_cast %119 : vector<1x1x2x32xf32> to vector<2x32xf32>
    %121 = vector.shape_cast %117 : vector<2x32xf32> to vector<1x1x2x32xf32>
    tpu.vector_store %arg4[%c0_37, %118, %c0_38, %c0_39], %121 {strides = array<i32>} : memref<1x8x2x32xf32, #tpu.memory_space<vmem>>, vector<1x1x2x32xf32>,
    %c3_i32 = arith.constant 3 : i32
    %c1_i32_40 = arith.constant 1 : i32
    %122 = arith.cmpi eq, %arg0, %c1_i32_40 : i32
    %c7_i32_41 = arith.constant 7 : i32
    %123 = arith.subi %c7_i32_41, %c3_i32 : i32
    %124 = arith.select %122, %123, %c3_i32 : i32
    %c0_42 = arith.constant 0 : index
    %125 = arith.index_cast %124 : i32 to index
    %c0_43 = arith.constant 0 : index
    %c0_44 = arith.constant 0 : index
    %126 = vector.load %arg1[%c0_42, %125, %c0_43, %c0_44] : memref<1x8x2x96xf32, #tpu.memory_space<vmem>>, vector<1x1x2x96xf32>
    %127 = vector.shape_cast %126 : vector<1x1x2x96xf32> to vector<2x96xf32>
    %cst_45 = arith.constant dense<0.000000e+00> : vector<2x96xf32>
    %128 = tpu.matmul %117, %1, %cst_45 {dimension_numbers = #tpu.dot_dimension_numbers<[1], [0], [0], [1], [0, 0, 1, 1], [], []>} : vector<2x32xf32>, vector<32x96xf32>, vector<2x96xf32> -> vector<2x96xf32>
    %129 = vector.broadcast %3 : vector<1x96xf32> to vector<2x96xf32>
    %130 = arith.addf %128, %129 : vector<2x96xf32>
    %131 = vector.extract_strided_slice %127 {offsets = [0, 0], sizes = [2, 32], strides = [1, 1]} : vector<2x96xf32> to vector<2x32xf32>
    %132 = vector.extract_strided_slice %130 {offsets = [0, 0], sizes = [2, 32], strides = [1, 1]} : vector<2x96xf32> to vector<2x32xf32>
    %133 = arith.addf %131, %132 : vector<2x32xf32>
    %134 = arith.negf %133 : vector<2x32xf32>
    %135 = math.exp %134 : vector<2x32xf32>
    %cst_46 = arith.constant 1.000000e+00 : f32
    %136 = vector.broadcast %cst_46 : f32 to vector<2x32xf32>
    %137 = arith.addf %136, %135 : vector<2x32xf32>
    %138 = arith.divf %136, %137 : vector<2x32xf32>
    %139 = vector.extract_strided_slice %127 {offsets = [0, 32], sizes = [2, 32], strides = [1, 1]} : vector<2x96xf32> to vector<2x32xf32>
    %140 = vector.extract_strided_slice %130 {offsets = [0, 32], sizes = [2, 32], strides = [1, 1]} : vector<2x96xf32> to vector<2x32xf32>
    %141 = arith.addf %139, %140 : vector<2x32xf32>
    %142 = arith.negf %141 : vector<2x32xf32>
    %143 = math.exp %142 : vector<2x32xf32>
    %cst_47 = arith.constant 1.000000e+00 : f32
    %144 = vector.broadcast %cst_47 : f32 to vector<2x32xf32>
    %145 = arith.addf %144, %143 : vector<2x32xf32>
    %146 = arith.divf %144, %145 : vector<2x32xf32>
    %147 = vector.extract_strided_slice %127 {offsets = [0, 64], sizes = [2, 32], strides = [1, 1]} : vector<2x96xf32> to vector<2x32xf32>
    %148 = vector.extract_strided_slice %130 {offsets = [0, 64], sizes = [2, 32], strides = [1, 1]} : vector<2x96xf32> to vector<2x32xf32>
    %149 = arith.mulf %138, %148 : vector<2x32xf32>
    %150 = arith.addf %147, %149 : vector<2x32xf32>
    %151 = math.tanh %150 : vector<2x32xf32>
    %cst_48 = arith.constant 1.000000e+00 : f32
    %152 = vector.broadcast %cst_48 : f32 to vector<2x32xf32>
    %153 = arith.subf %152, %146 : vector<2x32xf32>
    %154 = arith.mulf %153, %151 : vector<2x32xf32>
    %155 = arith.mulf %146, %117 : vector<2x32xf32>
    %156 = arith.addf %154, %155 : vector<2x32xf32>
    %c0_49 = arith.constant 0 : index
    %157 = arith.index_cast %124 : i32 to index
    %c0_50 = arith.constant 0 : index
    %c0_51 = arith.constant 0 : index
    %158 = vector.load %arg4[%c0_49, %157, %c0_50, %c0_51] : memref<1x8x2x32xf32, #tpu.memory_space<vmem>>, vector<1x1x2x32xf32>
    %159 = vector.shape_cast %158 : vector<1x1x2x32xf32> to vector<2x32xf32>
    %160 = vector.shape_cast %156 : vector<2x32xf32> to vector<1x1x2x32xf32>
    tpu.vector_store %arg4[%c0_49, %157, %c0_50, %c0_51], %160 {strides = array<i32>} : memref<1x8x2x32xf32, #tpu.memory_space<vmem>>, vector<1x1x2x32xf32>,
    %c4_i32 = arith.constant 4 : i32
    %c1_i32_52 = arith.constant 1 : i32
    %161 = arith.cmpi eq, %arg0, %c1_i32_52 : i32
    %c7_i32_53 = arith.constant 7 : i32
    %162 = arith.subi %c7_i32_53, %c4_i32 : i32
    %163 = arith.select %161, %162, %c4_i32 : i32
    %c0_54 = arith.constant 0 : index
    %164 = arith.index_cast %163 : i32 to index
    %c0_55 = arith.constant 0 : index
    %c0_56 = arith.constant 0 : index
    %165 = vector.load %arg1[%c0_54, %164, %c0_55, %c0_56] : memref<1x8x2x96xf32, #tpu.memory_space<vmem>>, vector<1x1x2x96xf32>
    %166 = vector.shape_cast %165 : vector<1x1x2x96xf32> to vector<2x96xf32>
    %cst_57 = arith.constant dense<0.000000e+00> : vector<2x96xf32>
    %167 = tpu.matmul %156, %1, %cst_57 {dimension_numbers = #tpu.dot_dimension_numbers<[1], [0], [0], [1], [0, 0, 1, 1], [], []>} : vector<2x32xf32>, vector<32x96xf32>, vector<2x96xf32> -> vector<2x96xf32>
    %168 = vector.broadcast %3 : vector<1x96xf32> to vector<2x96xf32>
    %169 = arith.addf %167, %168 : vector<2x96xf32>
    %170 = vector.extract_strided_slice %166 {offsets = [0, 0], sizes = [2, 32], strides = [1, 1]} : vector<2x96xf32> to vector<2x32xf32>
    %171 = vector.extract_strided_slice %169 {offsets = [0, 0], sizes = [2, 32], strides = [1, 1]} : vector<2x96xf32> to vector<2x32xf32>
    %172 = arith.addf %170, %171 : vector<2x32xf32>
    %173 = arith.negf %172 : vector<2x32xf32>
    %174 = math.exp %173 : vector<2x32xf32>
    %cst_58 = arith.constant 1.000000e+00 : f32
    %175 = vector.broadcast %cst_58 : f32 to vector<2x32xf32>
    %176 = arith.addf %175, %174 : vector<2x32xf32>
    %177 = arith.divf %175, %176 : vector<2x32xf32>
    %178 = vector.extract_strided_slice %166 {offsets = [0, 32], sizes = [2, 32], strides = [1, 1]} : vector<2x96xf32> to vector<2x32xf32>
    %179 = vector.extract_strided_slice %169 {offsets = [0, 32], sizes = [2, 32], strides = [1, 1]} : vector<2x96xf32> to vector<2x32xf32>
    %180 = arith.addf %178, %179 : vector<2x32xf32>
    %181 = arith.negf %180 : vector<2x32xf32>
    %182 = math.exp %181 : vector<2x32xf32>
    %cst_59 = arith.constant 1.000000e+00 : f32
    %183 = vector.broadcast %cst_59 : f32 to vector<2x32xf32>
    %184 = arith.addf %183, %182 : vector<2x32xf32>
    %185 = arith.divf %183, %184 : vector<2x32xf32>
    %186 = vector.extract_strided_slice %166 {offsets = [0, 64], sizes = [2, 32], strides = [1, 1]} : vector<2x96xf32> to vector<2x32xf32>
    %187 = vector.extract_strided_slice %169 {offsets = [0, 64], sizes = [2, 32], strides = [1, 1]} : vector<2x96xf32> to vector<2x32xf32>
    %188 = arith.mulf %177, %187 : vector<2x32xf32>
    %189 = arith.addf %186, %188 : vector<2x32xf32>
    %190 = math.tanh %189 : vector<2x32xf32>
    %cst_60 = arith.constant 1.000000e+00 : f32
    %191 = vector.broadcast %cst_60 : f32 to vector<2x32xf32>
    %192 = arith.subf %191, %185 : vector<2x32xf32>
    %193 = arith.mulf %192, %190 : vector<2x32xf32>
    %194 = arith.mulf %185, %156 : vector<2x32xf32>
    %195 = arith.addf %193, %194 : vector<2x32xf32>
    %c0_61 = arith.constant 0 : index
    %196 = arith.index_cast %163 : i32 to index
    %c0_62 = arith.constant 0 : index
    %c0_63 = arith.constant 0 : index
    %197 = vector.load %arg4[%c0_61, %196, %c0_62, %c0_63] : memref<1x8x2x32xf32, #tpu.memory_space<vmem>>, vector<1x1x2x32xf32>
    %198 = vector.shape_cast %197 : vector<1x1x2x32xf32> to vector<2x32xf32>
    %199 = vector.shape_cast %195 : vector<2x32xf32> to vector<1x1x2x32xf32>
    tpu.vector_store %arg4[%c0_61, %196, %c0_62, %c0_63], %199 {strides = array<i32>} : memref<1x8x2x32xf32, #tpu.memory_space<vmem>>, vector<1x1x2x32xf32>,
    %c5_i32 = arith.constant 5 : i32
    %c1_i32_64 = arith.constant 1 : i32
    %200 = arith.cmpi eq, %arg0, %c1_i32_64 : i32
    %c7_i32_65 = arith.constant 7 : i32
    %201 = arith.subi %c7_i32_65, %c5_i32 : i32
    %202 = arith.select %200, %201, %c5_i32 : i32
    %c0_66 = arith.constant 0 : index
    %203 = arith.index_cast %202 : i32 to index
    %c0_67 = arith.constant 0 : index
    %c0_68 = arith.constant 0 : index
    %204 = vector.load %arg1[%c0_66, %203, %c0_67, %c0_68] : memref<1x8x2x96xf32, #tpu.memory_space<vmem>>, vector<1x1x2x96xf32>
    %205 = vector.shape_cast %204 : vector<1x1x2x96xf32> to vector<2x96xf32>
    %cst_69 = arith.constant dense<0.000000e+00> : vector<2x96xf32>
    %206 = tpu.matmul %195, %1, %cst_69 {dimension_numbers = #tpu.dot_dimension_numbers<[1], [0], [0], [1], [0, 0, 1, 1], [], []>} : vector<2x32xf32>, vector<32x96xf32>, vector<2x96xf32> -> vector<2x96xf32>
    %207 = vector.broadcast %3 : vector<1x96xf32> to vector<2x96xf32>
    %208 = arith.addf %206, %207 : vector<2x96xf32>
    %209 = vector.extract_strided_slice %205 {offsets = [0, 0], sizes = [2, 32], strides = [1, 1]} : vector<2x96xf32> to vector<2x32xf32>
    %210 = vector.extract_strided_slice %208 {offsets = [0, 0], sizes = [2, 32], strides = [1, 1]} : vector<2x96xf32> to vector<2x32xf32>
    %211 = arith.addf %209, %210 : vector<2x32xf32>
    %212 = arith.negf %211 : vector<2x32xf32>
    %213 = math.exp %212 : vector<2x32xf32>
    %cst_70 = arith.constant 1.000000e+00 : f32
    %214 = vector.broadcast %cst_70 : f32 to vector<2x32xf32>
    %215 = arith.addf %214, %213 : vector<2x32xf32>
    %216 = arith.divf %214, %215 : vector<2x32xf32>
    %217 = vector.extract_strided_slice %205 {offsets = [0, 32], sizes = [2, 32], strides = [1, 1]} : vector<2x96xf32> to vector<2x32xf32>
    %218 = vector.extract_strided_slice %208 {offsets = [0, 32], sizes = [2, 32], strides = [1, 1]} : vector<2x96xf32> to vector<2x32xf32>
    %219 = arith.addf %217, %218 : vector<2x32xf32>
    %220 = arith.negf %219 : vector<2x32xf32>
    %221 = math.exp %220 : vector<2x32xf32>
    %cst_71 = arith.constant 1.000000e+00 : f32
    %222 = vector.broadcast %cst_71 : f32 to vector<2x32xf32>
    %223 = arith.addf %222, %221 : vector<2x32xf32>
    %224 = arith.divf %222, %223 : vector<2x32xf32>
    %225 = vector.extract_strided_slice %205 {offsets = [0, 64], sizes = [2, 32], strides = [1, 1]} : vector<2x96xf32> to vector<2x32xf32>
    %226 = vector.extract_strided_slice %208 {offsets = [0, 64], sizes = [2, 32], strides = [1, 1]} : vector<2x96xf32> to vector<2x32xf32>
    %227 = arith.mulf %216, %226 : vector<2x32xf32>
    %228 = arith.addf %225, %227 : vector<2x32xf32>
    %229 = math.tanh %228 : vector<2x32xf32>
    %cst_72 = arith.constant 1.000000e+00 : f32
    %230 = vector.broadcast %cst_72 : f32 to vector<2x32xf32>
    %231 = arith.subf %230, %224 : vector<2x32xf32>
    %232 = arith.mulf %231, %229 : vector<2x32xf32>
    %233 = arith.mulf %224, %195 : vector<2x32xf32>
    %234 = arith.addf %232, %233 : vector<2x32xf32>
    %c0_73 = arith.constant 0 : index
    %235 = arith.index_cast %202 : i32 to index
    %c0_74 = arith.constant 0 : index
    %c0_75 = arith.constant 0 : index
    %236 = vector.load %arg4[%c0_73, %235, %c0_74, %c0_75] : memref<1x8x2x32xf32, #tpu.memory_space<vmem>>, vector<1x1x2x32xf32>
    %237 = vector.shape_cast %236 : vector<1x1x2x32xf32> to vector<2x32xf32>
    %238 = vector.shape_cast %234 : vector<2x32xf32> to vector<1x1x2x32xf32>
    tpu.vector_store %arg4[%c0_73, %235, %c0_74, %c0_75], %238 {strides = array<i32>} : memref<1x8x2x32xf32, #tpu.memory_space<vmem>>, vector<1x1x2x32xf32>,
    %c6_i32 = arith.constant 6 : i32
    %c1_i32_76 = arith.constant 1 : i32
    %239 = arith.cmpi eq, %arg0, %c1_i32_76 : i32
    %c7_i32_77 = arith.constant 7 : i32
    %240 = arith.subi %c7_i32_77, %c6_i32 : i32
    %241 = arith.select %239, %240, %c6_i32 : i32
    %c0_78 = arith.constant 0 : index
    %242 = arith.index_cast %241 : i32 to index
    %c0_79 = arith.constant 0 : index
    %c0_80 = arith.constant 0 : index
    %243 = vector.load %arg1[%c0_78, %242, %c0_79, %c0_80] : memref<1x8x2x96xf32, #tpu.memory_space<vmem>>, vector<1x1x2x96xf32>
    %244 = vector.shape_cast %243 : vector<1x1x2x96xf32> to vector<2x96xf32>
    %cst_81 = arith.constant dense<0.000000e+00> : vector<2x96xf32>
    %245 = tpu.matmul %234, %1, %cst_81 {dimension_numbers = #tpu.dot_dimension_numbers<[1], [0], [0], [1], [0, 0, 1, 1], [], []>} : vector<2x32xf32>, vector<32x96xf32>, vector<2x96xf32> -> vector<2x96xf32>
    %246 = vector.broadcast %3 : vector<1x96xf32> to vector<2x96xf32>
    %247 = arith.addf %245, %246 : vector<2x96xf32>
    %248 = vector.extract_strided_slice %244 {offsets = [0, 0], sizes = [2, 32], strides = [1, 1]} : vector<2x96xf32> to vector<2x32xf32>
    %249 = vector.extract_strided_slice %247 {offsets = [0, 0], sizes = [2, 32], strides = [1, 1]} : vector<2x96xf32> to vector<2x32xf32>
    %250 = arith.addf %248, %249 : vector<2x32xf32>
    %251 = arith.negf %250 : vector<2x32xf32>
    %252 = math.exp %251 : vector<2x32xf32>
    %cst_82 = arith.constant 1.000000e+00 : f32
    %253 = vector.broadcast %cst_82 : f32 to vector<2x32xf32>
    %254 = arith.addf %253, %252 : vector<2x32xf32>
    %255 = arith.divf %253, %254 : vector<2x32xf32>
    %256 = vector.extract_strided_slice %244 {offsets = [0, 32], sizes = [2, 32], strides = [1, 1]} : vector<2x96xf32> to vector<2x32xf32>
    %257 = vector.extract_strided_slice %247 {offsets = [0, 32], sizes = [2, 32], strides = [1, 1]} : vector<2x96xf32> to vector<2x32xf32>
    %258 = arith.addf %256, %257 : vector<2x32xf32>
    %259 = arith.negf %258 : vector<2x32xf32>
    %260 = math.exp %259 : vector<2x32xf32>
    %cst_83 = arith.constant 1.000000e+00 : f32
    %261 = vector.broadcast %cst_83 : f32 to vector<2x32xf32>
    %262 = arith.addf %261, %260 : vector<2x32xf32>
    %263 = arith.divf %261, %262 : vector<2x32xf32>
    %264 = vector.extract_strided_slice %244 {offsets = [0, 64], sizes = [2, 32], strides = [1, 1]} : vector<2x96xf32> to vector<2x32xf32>
    %265 = vector.extract_strided_slice %247 {offsets = [0, 64], sizes = [2, 32], strides = [1, 1]} : vector<2x96xf32> to vector<2x32xf32>
    %266 = arith.mulf %255, %265 : vector<2x32xf32>
    %267 = arith.addf %264, %266 : vector<2x32xf32>
    %268 = math.tanh %267 : vector<2x32xf32>
    %cst_84 = arith.constant 1.000000e+00 : f32
    %269 = vector.broadcast %cst_84 : f32 to vector<2x32xf32>
    %270 = arith.subf %269, %263 : vector<2x32xf32>
    %271 = arith.mulf %270, %268 : vector<2x32xf32>
    %272 = arith.mulf %263, %234 : vector<2x32xf32>
    %273 = arith.addf %271, %272 : vector<2x32xf32>
    %c0_85 = arith.constant 0 : index
    %274 = arith.index_cast %241 : i32 to index
    %c0_86 = arith.constant 0 : index
    %c0_87 = arith.constant 0 : index
    %275 = vector.load %arg4[%c0_85, %274, %c0_86, %c0_87] : memref<1x8x2x32xf32, #tpu.memory_space<vmem>>, vector<1x1x2x32xf32>
    %276 = vector.shape_cast %275 : vector<1x1x2x32xf32> to vector<2x32xf32>
    %277 = vector.shape_cast %273 : vector<2x32xf32> to vector<1x1x2x32xf32>
    tpu.vector_store %arg4[%c0_85, %274, %c0_86, %c0_87], %277 {strides = array<i32>} : memref<1x8x2x32xf32, #tpu.memory_space<vmem>>, vector<1x1x2x32xf32>,
    %c7_i32_88 = arith.constant 7 : i32
    %c1_i32_89 = arith.constant 1 : i32
    %278 = arith.cmpi eq, %arg0, %c1_i32_89 : i32
    %c7_i32_90 = arith.constant 7 : i32
    %279 = arith.subi %c7_i32_90, %c7_i32_88 : i32
    %280 = arith.select %278, %279, %c7_i32_88 : i32
    %c0_91 = arith.constant 0 : index
    %281 = arith.index_cast %280 : i32 to index
    %c0_92 = arith.constant 0 : index
    %c0_93 = arith.constant 0 : index
    %282 = vector.load %arg1[%c0_91, %281, %c0_92, %c0_93] : memref<1x8x2x96xf32, #tpu.memory_space<vmem>>, vector<1x1x2x96xf32>
    %283 = vector.shape_cast %282 : vector<1x1x2x96xf32> to vector<2x96xf32>
    %cst_94 = arith.constant dense<0.000000e+00> : vector<2x96xf32>
    %284 = tpu.matmul %273, %1, %cst_94 {dimension_numbers = #tpu.dot_dimension_numbers<[1], [0], [0], [1], [0, 0, 1, 1], [], []>} : vector<2x32xf32>, vector<32x96xf32>, vector<2x96xf32> -> vector<2x96xf32>
    %285 = vector.broadcast %3 : vector<1x96xf32> to vector<2x96xf32>
    %286 = arith.addf %284, %285 : vector<2x96xf32>
    %287 = vector.extract_strided_slice %283 {offsets = [0, 0], sizes = [2, 32], strides = [1, 1]} : vector<2x96xf32> to vector<2x32xf32>
    %288 = vector.extract_strided_slice %286 {offsets = [0, 0], sizes = [2, 32], strides = [1, 1]} : vector<2x96xf32> to vector<2x32xf32>
    %289 = arith.addf %287, %288 : vector<2x32xf32>
    %290 = arith.negf %289 : vector<2x32xf32>
    %291 = math.exp %290 : vector<2x32xf32>
    %cst_95 = arith.constant 1.000000e+00 : f32
    %292 = vector.broadcast %cst_95 : f32 to vector<2x32xf32>
    %293 = arith.addf %292, %291 : vector<2x32xf32>
    %294 = arith.divf %292, %293 : vector<2x32xf32>
    %295 = vector.extract_strided_slice %283 {offsets = [0, 32], sizes = [2, 32], strides = [1, 1]} : vector<2x96xf32> to vector<2x32xf32>
    %296 = vector.extract_strided_slice %286 {offsets = [0, 32], sizes = [2, 32], strides = [1, 1]} : vector<2x96xf32> to vector<2x32xf32>
    %297 = arith.addf %295, %296 : vector<2x32xf32>
    %298 = arith.negf %297 : vector<2x32xf32>
    %299 = math.exp %298 : vector<2x32xf32>
    %cst_96 = arith.constant 1.000000e+00 : f32
    %300 = vector.broadcast %cst_96 : f32 to vector<2x32xf32>
    %301 = arith.addf %300, %299 : vector<2x32xf32>
    %302 = arith.divf %300, %301 : vector<2x32xf32>
    %303 = vector.extract_strided_slice %283 {offsets = [0, 64], sizes = [2, 32], strides = [1, 1]} : vector<2x96xf32> to vector<2x32xf32>
    %304 = vector.extract_strided_slice %286 {offsets = [0, 64], sizes = [2, 32], strides = [1, 1]} : vector<2x96xf32> to vector<2x32xf32>
    %305 = arith.mulf %294, %304 : vector<2x32xf32>
    %306 = arith.addf %303, %305 : vector<2x32xf32>
    %307 = math.tanh %306 : vector<2x32xf32>
    %cst_97 = arith.constant 1.000000e+00 : f32
    %308 = vector.broadcast %cst_97 : f32 to vector<2x32xf32>
    %309 = arith.subf %308, %302 : vector<2x32xf32>
    %310 = arith.mulf %309, %307 : vector<2x32xf32>
    %311 = arith.mulf %302, %273 : vector<2x32xf32>
    %312 = arith.addf %310, %311 : vector<2x32xf32>
    %c0_98 = arith.constant 0 : index
    %313 = arith.index_cast %280 : i32 to index
    %c0_99 = arith.constant 0 : index
    %c0_100 = arith.constant 0 : index
    %314 = vector.load %arg4[%c0_98, %313, %c0_99, %c0_100] : memref<1x8x2x32xf32, #tpu.memory_space<vmem>>, vector<1x1x2x32xf32>
    %315 = vector.shape_cast %314 : vector<1x1x2x32xf32> to vector<2x32xf32>
    %316 = vector.shape_cast %312 : vector<2x32xf32> to vector<1x1x2x32xf32>
    tpu.vector_store %arg4[%c0_98, %313, %c0_99, %c0_100], %316 {strides = array<i32>} : memref<1x8x2x32xf32, #tpu.memory_space<vmem>>, vector<1x1x2x32xf32>,
    %c8_i32 = arith.constant 8 : i32
    return
  }
  func.func @transform_0(%arg0: i32) -> (i32, i32, i32, i32) {
    %c0_i32 = arith.constant 0 : i32
    %c0_i32_0 = arith.constant 0 : i32
    %c0_i32_1 = arith.constant 0 : i32
    %c0_i32_2 = arith.constant 0 : i32
    return %arg0, %c0_i32, %c0_i32_0, %c0_i32_1 : i32, i32, i32, i32
  }
  func.func @transform_1(%arg0: i32) -> (i32, i32, i32) {
    %c0_i32 = arith.constant 0 : i32
    %c0_i32_0 = arith.constant 0 : i32
    %c0_i32_1 = arith.constant 0 : i32
    return %arg0, %c0_i32, %c0_i32_0 : i32, i32, i32
  }
  func.func @transform_2(%arg0: i32) -> (i32, i32, i32) {
    %c0_i32 = arith.constant 0 : i32
    %c0_i32_0 = arith.constant 0 : i32
    %c0_i32_1 = arith.constant 0 : i32
    return %arg0, %c0_i32, %c0_i32_0 : i32, i32, i32
  }
  func.func @transform_3(%arg0: i32) -> (i32, i32, i32, i32) {
    %c0_i32 = arith.constant 0 : i32
    %c0_i32_0 = arith.constant 0 : i32
    %c0_i32_1 = arith.constant 0 : i32
    %c0_i32_2 = arith.constant 0 : i32
    return %arg0, %c0_i32, %c0_i32_0, %c0_i32_1 : i32, i32, i32, i32
  }
}

module attributes {stable_mosaic.version = 11 : i64} {
  func.func @_bilstm_seq_kernel(%arg0: i32, %arg1: memref<1x8x2x128xf32, #tpu.memory_space<vmem>>, %arg2: memref<1x32x128xf32, #tpu.memory_space<vmem>>, %arg3: memref<1x2x32xf32, #tpu.memory_space<vmem>>, %arg4: memref<1x8x2x32xf32, #tpu.memory_space<vmem>>, %arg5: memref<1x2x32xf32, #tpu.memory_space<vmem>>) attributes {dimension_semantics = [#tpu.dimension_semantics<parallel>], iteration_bounds = array<i64: 2>, scalar_prefetch = 0 : i64, scratch_operands = 0 : i64, tpu.core_type = #tpu.core_type<tc>, window_params = [{transform_indices = @transform_0, window_bounds = array<i64: 1, 8, 2, 128>}, {transform_indices = @transform_1, window_bounds = array<i64: 1, 32, 128>}, {transform_indices = @transform_2, window_bounds = array<i64: 1, 2, 32>}, {transform_indices = @transform_3, window_bounds = array<i64: 1, 8, 2, 32>}, {transform_indices = @transform_4, window_bounds = array<i64: 1, 2, 32>}]} {
    %c0 = arith.constant 0 : index
    %c0_0 = arith.constant 0 : index
    %c0_1 = arith.constant 0 : index
    %0 = vector.load %arg2[%c0, %c0_0, %c0_1] : memref<1x32x128xf32, #tpu.memory_space<vmem>>, vector<1x32x128xf32>
    %1 = vector.shape_cast %0 : vector<1x32x128xf32> to vector<32x128xf32>
    %c0_2 = arith.constant 0 : index
    %c0_3 = arith.constant 0 : index
    %c0_4 = arith.constant 0 : index
    %2 = vector.load %arg3[%c0_2, %c0_3, %c0_4] : memref<1x2x32xf32, #tpu.memory_space<vmem>>, vector<1x2x32xf32>
    %3 = vector.shape_cast %2 : vector<1x2x32xf32> to vector<2x32xf32>
    %cst = arith.constant 0.000000e+00 : f32
    %4 = vector.broadcast %cst : f32 to vector<2x32xf32>
    %c0_i32 = arith.constant 0 : i32
    %c1_i32 = arith.constant 1 : i32
    %5 = arith.cmpi eq, %arg0, %c1_i32 : i32
    %c7_i32 = arith.constant 7 : i32
    %6 = arith.subi %c7_i32, %c0_i32 : i32
    %7 = arith.select %5, %6, %c0_i32 : i32
    %c0_5 = arith.constant 0 : index
    %8 = arith.index_cast %7 : i32 to index
    %c0_6 = arith.constant 0 : index
    %c0_7 = arith.constant 0 : index
    %9 = vector.load %arg1[%c0_5, %8, %c0_6, %c0_7] : memref<1x8x2x128xf32, #tpu.memory_space<vmem>>, vector<1x1x2x128xf32>
    %10 = vector.shape_cast %9 : vector<1x1x2x128xf32> to vector<2x128xf32>
    %cst_8 = arith.constant dense<0.000000e+00> : vector<2x128xf32>
    %11 = tpu.matmul %3, %1, %cst_8 {dimension_numbers = #tpu.dot_dimension_numbers<[1], [0], [0], [1], [0, 0, 1, 1], [], []>} : vector<2x32xf32>, vector<32x128xf32>, vector<2x128xf32> -> vector<2x128xf32>
    %12 = arith.addf %10, %11 : vector<2x128xf32>
    %13 = vector.extract_strided_slice %12 {offsets = [0, 0], sizes = [2, 32], strides = [1, 1]} : vector<2x128xf32> to vector<2x32xf32>
    %14 = arith.negf %13 : vector<2x32xf32>
    %15 = math.exp %14 : vector<2x32xf32>
    %cst_9 = arith.constant 1.000000e+00 : f32
    %16 = vector.broadcast %cst_9 : f32 to vector<2x32xf32>
    %17 = arith.addf %16, %15 : vector<2x32xf32>
    %18 = arith.divf %16, %17 : vector<2x32xf32>
    %19 = vector.extract_strided_slice %12 {offsets = [0, 32], sizes = [2, 32], strides = [1, 1]} : vector<2x128xf32> to vector<2x32xf32>
    %20 = arith.negf %19 : vector<2x32xf32>
    %21 = math.exp %20 : vector<2x32xf32>
    %cst_10 = arith.constant 1.000000e+00 : f32
    %22 = vector.broadcast %cst_10 : f32 to vector<2x32xf32>
    %23 = arith.addf %22, %21 : vector<2x32xf32>
    %24 = arith.divf %22, %23 : vector<2x32xf32>
    %25 = vector.extract_strided_slice %12 {offsets = [0, 64], sizes = [2, 32], strides = [1, 1]} : vector<2x128xf32> to vector<2x32xf32>
    %26 = math.tanh %25 : vector<2x32xf32>
    %27 = vector.extract_strided_slice %12 {offsets = [0, 96], sizes = [2, 32], strides = [1, 1]} : vector<2x128xf32> to vector<2x32xf32>
    %28 = arith.negf %27 : vector<2x32xf32>
    %29 = math.exp %28 : vector<2x32xf32>
    %cst_11 = arith.constant 1.000000e+00 : f32
    %30 = vector.broadcast %cst_11 : f32 to vector<2x32xf32>
    %31 = arith.addf %30, %29 : vector<2x32xf32>
    %32 = arith.divf %30, %31 : vector<2x32xf32>
    %33 = arith.mulf %24, %4 : vector<2x32xf32>
    %34 = arith.mulf %18, %26 : vector<2x32xf32>
    %35 = arith.addf %33, %34 : vector<2x32xf32>
    %36 = math.tanh %35 : vector<2x32xf32>
    %37 = arith.mulf %32, %36 : vector<2x32xf32>
    %c0_12 = arith.constant 0 : index
    %38 = arith.index_cast %7 : i32 to index
    %c0_13 = arith.constant 0 : index
    %c0_14 = arith.constant 0 : index
    %39 = vector.load %arg4[%c0_12, %38, %c0_13, %c0_14] : memref<1x8x2x32xf32, #tpu.memory_space<vmem>>, vector<1x1x2x32xf32>
    %40 = vector.shape_cast %39 : vector<1x1x2x32xf32> to vector<2x32xf32>
    %41 = vector.shape_cast %37 : vector<2x32xf32> to vector<1x1x2x32xf32>
    tpu.vector_store %arg4[%c0_12, %38, %c0_13, %c0_14], %41 {strides = array<i32>} : memref<1x8x2x32xf32, #tpu.memory_space<vmem>>, vector<1x1x2x32xf32>,
    %c1_i32_15 = arith.constant 1 : i32
    %c1_i32_16 = arith.constant 1 : i32
    %42 = arith.cmpi eq, %arg0, %c1_i32_16 : i32
    %c7_i32_17 = arith.constant 7 : i32
    %43 = arith.subi %c7_i32_17, %c1_i32_15 : i32
    %44 = arith.select %42, %43, %c1_i32_15 : i32
    %c0_18 = arith.constant 0 : index
    %45 = arith.index_cast %44 : i32 to index
    %c0_19 = arith.constant 0 : index
    %c0_20 = arith.constant 0 : index
    %46 = vector.load %arg1[%c0_18, %45, %c0_19, %c0_20] : memref<1x8x2x128xf32, #tpu.memory_space<vmem>>, vector<1x1x2x128xf32>
    %47 = vector.shape_cast %46 : vector<1x1x2x128xf32> to vector<2x128xf32>
    %cst_21 = arith.constant dense<0.000000e+00> : vector<2x128xf32>
    %48 = tpu.matmul %37, %1, %cst_21 {dimension_numbers = #tpu.dot_dimension_numbers<[1], [0], [0], [1], [0, 0, 1, 1], [], []>} : vector<2x32xf32>, vector<32x128xf32>, vector<2x128xf32> -> vector<2x128xf32>
    %49 = arith.addf %47, %48 : vector<2x128xf32>
    %50 = vector.extract_strided_slice %49 {offsets = [0, 0], sizes = [2, 32], strides = [1, 1]} : vector<2x128xf32> to vector<2x32xf32>
    %51 = arith.negf %50 : vector<2x32xf32>
    %52 = math.exp %51 : vector<2x32xf32>
    %cst_22 = arith.constant 1.000000e+00 : f32
    %53 = vector.broadcast %cst_22 : f32 to vector<2x32xf32>
    %54 = arith.addf %53, %52 : vector<2x32xf32>
    %55 = arith.divf %53, %54 : vector<2x32xf32>
    %56 = vector.extract_strided_slice %49 {offsets = [0, 32], sizes = [2, 32], strides = [1, 1]} : vector<2x128xf32> to vector<2x32xf32>
    %57 = arith.negf %56 : vector<2x32xf32>
    %58 = math.exp %57 : vector<2x32xf32>
    %cst_23 = arith.constant 1.000000e+00 : f32
    %59 = vector.broadcast %cst_23 : f32 to vector<2x32xf32>
    %60 = arith.addf %59, %58 : vector<2x32xf32>
    %61 = arith.divf %59, %60 : vector<2x32xf32>
    %62 = vector.extract_strided_slice %49 {offsets = [0, 64], sizes = [2, 32], strides = [1, 1]} : vector<2x128xf32> to vector<2x32xf32>
    %63 = math.tanh %62 : vector<2x32xf32>
    %64 = vector.extract_strided_slice %49 {offsets = [0, 96], sizes = [2, 32], strides = [1, 1]} : vector<2x128xf32> to vector<2x32xf32>
    %65 = arith.negf %64 : vector<2x32xf32>
    %66 = math.exp %65 : vector<2x32xf32>
    %cst_24 = arith.constant 1.000000e+00 : f32
    %67 = vector.broadcast %cst_24 : f32 to vector<2x32xf32>
    %68 = arith.addf %67, %66 : vector<2x32xf32>
    %69 = arith.divf %67, %68 : vector<2x32xf32>
    %70 = arith.mulf %61, %35 : vector<2x32xf32>
    %71 = arith.mulf %55, %63 : vector<2x32xf32>
    %72 = arith.addf %70, %71 : vector<2x32xf32>
    %73 = math.tanh %72 : vector<2x32xf32>
    %74 = arith.mulf %69, %73 : vector<2x32xf32>
    %c0_25 = arith.constant 0 : index
    %75 = arith.index_cast %44 : i32 to index
    %c0_26 = arith.constant 0 : index
    %c0_27 = arith.constant 0 : index
    %76 = vector.load %arg4[%c0_25, %75, %c0_26, %c0_27] : memref<1x8x2x32xf32, #tpu.memory_space<vmem>>, vector<1x1x2x32xf32>
    %77 = vector.shape_cast %76 : vector<1x1x2x32xf32> to vector<2x32xf32>
    %78 = vector.shape_cast %74 : vector<2x32xf32> to vector<1x1x2x32xf32>
    tpu.vector_store %arg4[%c0_25, %75, %c0_26, %c0_27], %78 {strides = array<i32>} : memref<1x8x2x32xf32, #tpu.memory_space<vmem>>, vector<1x1x2x32xf32>,
    %c2_i32 = arith.constant 2 : i32
    %c1_i32_28 = arith.constant 1 : i32
    %79 = arith.cmpi eq, %arg0, %c1_i32_28 : i32
    %c7_i32_29 = arith.constant 7 : i32
    %80 = arith.subi %c7_i32_29, %c2_i32 : i32
    %81 = arith.select %79, %80, %c2_i32 : i32
    %c0_30 = arith.constant 0 : index
    %82 = arith.index_cast %81 : i32 to index
    %c0_31 = arith.constant 0 : index
    %c0_32 = arith.constant 0 : index
    %83 = vector.load %arg1[%c0_30, %82, %c0_31, %c0_32] : memref<1x8x2x128xf32, #tpu.memory_space<vmem>>, vector<1x1x2x128xf32>
    %84 = vector.shape_cast %83 : vector<1x1x2x128xf32> to vector<2x128xf32>
    %cst_33 = arith.constant dense<0.000000e+00> : vector<2x128xf32>
    %85 = tpu.matmul %74, %1, %cst_33 {dimension_numbers = #tpu.dot_dimension_numbers<[1], [0], [0], [1], [0, 0, 1, 1], [], []>} : vector<2x32xf32>, vector<32x128xf32>, vector<2x128xf32> -> vector<2x128xf32>
    %86 = arith.addf %84, %85 : vector<2x128xf32>
    %87 = vector.extract_strided_slice %86 {offsets = [0, 0], sizes = [2, 32], strides = [1, 1]} : vector<2x128xf32> to vector<2x32xf32>
    %88 = arith.negf %87 : vector<2x32xf32>
    %89 = math.exp %88 : vector<2x32xf32>
    %cst_34 = arith.constant 1.000000e+00 : f32
    %90 = vector.broadcast %cst_34 : f32 to vector<2x32xf32>
    %91 = arith.addf %90, %89 : vector<2x32xf32>
    %92 = arith.divf %90, %91 : vector<2x32xf32>
    %93 = vector.extract_strided_slice %86 {offsets = [0, 32], sizes = [2, 32], strides = [1, 1]} : vector<2x128xf32> to vector<2x32xf32>
    %94 = arith.negf %93 : vector<2x32xf32>
    %95 = math.exp %94 : vector<2x32xf32>
    %cst_35 = arith.constant 1.000000e+00 : f32
    %96 = vector.broadcast %cst_35 : f32 to vector<2x32xf32>
    %97 = arith.addf %96, %95 : vector<2x32xf32>
    %98 = arith.divf %96, %97 : vector<2x32xf32>
    %99 = vector.extract_strided_slice %86 {offsets = [0, 64], sizes = [2, 32], strides = [1, 1]} : vector<2x128xf32> to vector<2x32xf32>
    %100 = math.tanh %99 : vector<2x32xf32>
    %101 = vector.extract_strided_slice %86 {offsets = [0, 96], sizes = [2, 32], strides = [1, 1]} : vector<2x128xf32> to vector<2x32xf32>
    %102 = arith.negf %101 : vector<2x32xf32>
    %103 = math.exp %102 : vector<2x32xf32>
    %cst_36 = arith.constant 1.000000e+00 : f32
    %104 = vector.broadcast %cst_36 : f32 to vector<2x32xf32>
    %105 = arith.addf %104, %103 : vector<2x32xf32>
    %106 = arith.divf %104, %105 : vector<2x32xf32>
    %107 = arith.mulf %98, %72 : vector<2x32xf32>
    %108 = arith.mulf %92, %100 : vector<2x32xf32>
    %109 = arith.addf %107, %108 : vector<2x32xf32>
    %110 = math.tanh %109 : vector<2x32xf32>
    %111 = arith.mulf %106, %110 : vector<2x32xf32>
    %c0_37 = arith.constant 0 : index
    %112 = arith.index_cast %81 : i32 to index
    %c0_38 = arith.constant 0 : index
    %c0_39 = arith.constant 0 : index
    %113 = vector.load %arg4[%c0_37, %112, %c0_38, %c0_39] : memref<1x8x2x32xf32, #tpu.memory_space<vmem>>, vector<1x1x2x32xf32>
    %114 = vector.shape_cast %113 : vector<1x1x2x32xf32> to vector<2x32xf32>
    %115 = vector.shape_cast %111 : vector<2x32xf32> to vector<1x1x2x32xf32>
    tpu.vector_store %arg4[%c0_37, %112, %c0_38, %c0_39], %115 {strides = array<i32>} : memref<1x8x2x32xf32, #tpu.memory_space<vmem>>, vector<1x1x2x32xf32>,
    %c3_i32 = arith.constant 3 : i32
    %c1_i32_40 = arith.constant 1 : i32
    %116 = arith.cmpi eq, %arg0, %c1_i32_40 : i32
    %c7_i32_41 = arith.constant 7 : i32
    %117 = arith.subi %c7_i32_41, %c3_i32 : i32
    %118 = arith.select %116, %117, %c3_i32 : i32
    %c0_42 = arith.constant 0 : index
    %119 = arith.index_cast %118 : i32 to index
    %c0_43 = arith.constant 0 : index
    %c0_44 = arith.constant 0 : index
    %120 = vector.load %arg1[%c0_42, %119, %c0_43, %c0_44] : memref<1x8x2x128xf32, #tpu.memory_space<vmem>>, vector<1x1x2x128xf32>
    %121 = vector.shape_cast %120 : vector<1x1x2x128xf32> to vector<2x128xf32>
    %cst_45 = arith.constant dense<0.000000e+00> : vector<2x128xf32>
    %122 = tpu.matmul %111, %1, %cst_45 {dimension_numbers = #tpu.dot_dimension_numbers<[1], [0], [0], [1], [0, 0, 1, 1], [], []>} : vector<2x32xf32>, vector<32x128xf32>, vector<2x128xf32> -> vector<2x128xf32>
    %123 = arith.addf %121, %122 : vector<2x128xf32>
    %124 = vector.extract_strided_slice %123 {offsets = [0, 0], sizes = [2, 32], strides = [1, 1]} : vector<2x128xf32> to vector<2x32xf32>
    %125 = arith.negf %124 : vector<2x32xf32>
    %126 = math.exp %125 : vector<2x32xf32>
    %cst_46 = arith.constant 1.000000e+00 : f32
    %127 = vector.broadcast %cst_46 : f32 to vector<2x32xf32>
    %128 = arith.addf %127, %126 : vector<2x32xf32>
    %129 = arith.divf %127, %128 : vector<2x32xf32>
    %130 = vector.extract_strided_slice %123 {offsets = [0, 32], sizes = [2, 32], strides = [1, 1]} : vector<2x128xf32> to vector<2x32xf32>
    %131 = arith.negf %130 : vector<2x32xf32>
    %132 = math.exp %131 : vector<2x32xf32>
    %cst_47 = arith.constant 1.000000e+00 : f32
    %133 = vector.broadcast %cst_47 : f32 to vector<2x32xf32>
    %134 = arith.addf %133, %132 : vector<2x32xf32>
    %135 = arith.divf %133, %134 : vector<2x32xf32>
    %136 = vector.extract_strided_slice %123 {offsets = [0, 64], sizes = [2, 32], strides = [1, 1]} : vector<2x128xf32> to vector<2x32xf32>
    %137 = math.tanh %136 : vector<2x32xf32>
    %138 = vector.extract_strided_slice %123 {offsets = [0, 96], sizes = [2, 32], strides = [1, 1]} : vector<2x128xf32> to vector<2x32xf32>
    %139 = arith.negf %138 : vector<2x32xf32>
    %140 = math.exp %139 : vector<2x32xf32>
    %cst_48 = arith.constant 1.000000e+00 : f32
    %141 = vector.broadcast %cst_48 : f32 to vector<2x32xf32>
    %142 = arith.addf %141, %140 : vector<2x32xf32>
    %143 = arith.divf %141, %142 : vector<2x32xf32>
    %144 = arith.mulf %135, %109 : vector<2x32xf32>
    %145 = arith.mulf %129, %137 : vector<2x32xf32>
    %146 = arith.addf %144, %145 : vector<2x32xf32>
    %147 = math.tanh %146 : vector<2x32xf32>
    %148 = arith.mulf %143, %147 : vector<2x32xf32>
    %c0_49 = arith.constant 0 : index
    %149 = arith.index_cast %118 : i32 to index
    %c0_50 = arith.constant 0 : index
    %c0_51 = arith.constant 0 : index
    %150 = vector.load %arg4[%c0_49, %149, %c0_50, %c0_51] : memref<1x8x2x32xf32, #tpu.memory_space<vmem>>, vector<1x1x2x32xf32>
    %151 = vector.shape_cast %150 : vector<1x1x2x32xf32> to vector<2x32xf32>
    %152 = vector.shape_cast %148 : vector<2x32xf32> to vector<1x1x2x32xf32>
    tpu.vector_store %arg4[%c0_49, %149, %c0_50, %c0_51], %152 {strides = array<i32>} : memref<1x8x2x32xf32, #tpu.memory_space<vmem>>, vector<1x1x2x32xf32>,
    %c4_i32 = arith.constant 4 : i32
    %c1_i32_52 = arith.constant 1 : i32
    %153 = arith.cmpi eq, %arg0, %c1_i32_52 : i32
    %c7_i32_53 = arith.constant 7 : i32
    %154 = arith.subi %c7_i32_53, %c4_i32 : i32
    %155 = arith.select %153, %154, %c4_i32 : i32
    %c0_54 = arith.constant 0 : index
    %156 = arith.index_cast %155 : i32 to index
    %c0_55 = arith.constant 0 : index
    %c0_56 = arith.constant 0 : index
    %157 = vector.load %arg1[%c0_54, %156, %c0_55, %c0_56] : memref<1x8x2x128xf32, #tpu.memory_space<vmem>>, vector<1x1x2x128xf32>
    %158 = vector.shape_cast %157 : vector<1x1x2x128xf32> to vector<2x128xf32>
    %cst_57 = arith.constant dense<0.000000e+00> : vector<2x128xf32>
    %159 = tpu.matmul %148, %1, %cst_57 {dimension_numbers = #tpu.dot_dimension_numbers<[1], [0], [0], [1], [0, 0, 1, 1], [], []>} : vector<2x32xf32>, vector<32x128xf32>, vector<2x128xf32> -> vector<2x128xf32>
    %160 = arith.addf %158, %159 : vector<2x128xf32>
    %161 = vector.extract_strided_slice %160 {offsets = [0, 0], sizes = [2, 32], strides = [1, 1]} : vector<2x128xf32> to vector<2x32xf32>
    %162 = arith.negf %161 : vector<2x32xf32>
    %163 = math.exp %162 : vector<2x32xf32>
    %cst_58 = arith.constant 1.000000e+00 : f32
    %164 = vector.broadcast %cst_58 : f32 to vector<2x32xf32>
    %165 = arith.addf %164, %163 : vector<2x32xf32>
    %166 = arith.divf %164, %165 : vector<2x32xf32>
    %167 = vector.extract_strided_slice %160 {offsets = [0, 32], sizes = [2, 32], strides = [1, 1]} : vector<2x128xf32> to vector<2x32xf32>
    %168 = arith.negf %167 : vector<2x32xf32>
    %169 = math.exp %168 : vector<2x32xf32>
    %cst_59 = arith.constant 1.000000e+00 : f32
    %170 = vector.broadcast %cst_59 : f32 to vector<2x32xf32>
    %171 = arith.addf %170, %169 : vector<2x32xf32>
    %172 = arith.divf %170, %171 : vector<2x32xf32>
    %173 = vector.extract_strided_slice %160 {offsets = [0, 64], sizes = [2, 32], strides = [1, 1]} : vector<2x128xf32> to vector<2x32xf32>
    %174 = math.tanh %173 : vector<2x32xf32>
    %175 = vector.extract_strided_slice %160 {offsets = [0, 96], sizes = [2, 32], strides = [1, 1]} : vector<2x128xf32> to vector<2x32xf32>
    %176 = arith.negf %175 : vector<2x32xf32>
    %177 = math.exp %176 : vector<2x32xf32>
    %cst_60 = arith.constant 1.000000e+00 : f32
    %178 = vector.broadcast %cst_60 : f32 to vector<2x32xf32>
    %179 = arith.addf %178, %177 : vector<2x32xf32>
    %180 = arith.divf %178, %179 : vector<2x32xf32>
    %181 = arith.mulf %172, %146 : vector<2x32xf32>
    %182 = arith.mulf %166, %174 : vector<2x32xf32>
    %183 = arith.addf %181, %182 : vector<2x32xf32>
    %184 = math.tanh %183 : vector<2x32xf32>
    %185 = arith.mulf %180, %184 : vector<2x32xf32>
    %c0_61 = arith.constant 0 : index
    %186 = arith.index_cast %155 : i32 to index
    %c0_62 = arith.constant 0 : index
    %c0_63 = arith.constant 0 : index
    %187 = vector.load %arg4[%c0_61, %186, %c0_62, %c0_63] : memref<1x8x2x32xf32, #tpu.memory_space<vmem>>, vector<1x1x2x32xf32>
    %188 = vector.shape_cast %187 : vector<1x1x2x32xf32> to vector<2x32xf32>
    %189 = vector.shape_cast %185 : vector<2x32xf32> to vector<1x1x2x32xf32>
    tpu.vector_store %arg4[%c0_61, %186, %c0_62, %c0_63], %189 {strides = array<i32>} : memref<1x8x2x32xf32, #tpu.memory_space<vmem>>, vector<1x1x2x32xf32>,
    %c5_i32 = arith.constant 5 : i32
    %c1_i32_64 = arith.constant 1 : i32
    %190 = arith.cmpi eq, %arg0, %c1_i32_64 : i32
    %c7_i32_65 = arith.constant 7 : i32
    %191 = arith.subi %c7_i32_65, %c5_i32 : i32
    %192 = arith.select %190, %191, %c5_i32 : i32
    %c0_66 = arith.constant 0 : index
    %193 = arith.index_cast %192 : i32 to index
    %c0_67 = arith.constant 0 : index
    %c0_68 = arith.constant 0 : index
    %194 = vector.load %arg1[%c0_66, %193, %c0_67, %c0_68] : memref<1x8x2x128xf32, #tpu.memory_space<vmem>>, vector<1x1x2x128xf32>
    %195 = vector.shape_cast %194 : vector<1x1x2x128xf32> to vector<2x128xf32>
    %cst_69 = arith.constant dense<0.000000e+00> : vector<2x128xf32>
    %196 = tpu.matmul %185, %1, %cst_69 {dimension_numbers = #tpu.dot_dimension_numbers<[1], [0], [0], [1], [0, 0, 1, 1], [], []>} : vector<2x32xf32>, vector<32x128xf32>, vector<2x128xf32> -> vector<2x128xf32>
    %197 = arith.addf %195, %196 : vector<2x128xf32>
    %198 = vector.extract_strided_slice %197 {offsets = [0, 0], sizes = [2, 32], strides = [1, 1]} : vector<2x128xf32> to vector<2x32xf32>
    %199 = arith.negf %198 : vector<2x32xf32>
    %200 = math.exp %199 : vector<2x32xf32>
    %cst_70 = arith.constant 1.000000e+00 : f32
    %201 = vector.broadcast %cst_70 : f32 to vector<2x32xf32>
    %202 = arith.addf %201, %200 : vector<2x32xf32>
    %203 = arith.divf %201, %202 : vector<2x32xf32>
    %204 = vector.extract_strided_slice %197 {offsets = [0, 32], sizes = [2, 32], strides = [1, 1]} : vector<2x128xf32> to vector<2x32xf32>
    %205 = arith.negf %204 : vector<2x32xf32>
    %206 = math.exp %205 : vector<2x32xf32>
    %cst_71 = arith.constant 1.000000e+00 : f32
    %207 = vector.broadcast %cst_71 : f32 to vector<2x32xf32>
    %208 = arith.addf %207, %206 : vector<2x32xf32>
    %209 = arith.divf %207, %208 : vector<2x32xf32>
    %210 = vector.extract_strided_slice %197 {offsets = [0, 64], sizes = [2, 32], strides = [1, 1]} : vector<2x128xf32> to vector<2x32xf32>
    %211 = math.tanh %210 : vector<2x32xf32>
    %212 = vector.extract_strided_slice %197 {offsets = [0, 96], sizes = [2, 32], strides = [1, 1]} : vector<2x128xf32> to vector<2x32xf32>
    %213 = arith.negf %212 : vector<2x32xf32>
    %214 = math.exp %213 : vector<2x32xf32>
    %cst_72 = arith.constant 1.000000e+00 : f32
    %215 = vector.broadcast %cst_72 : f32 to vector<2x32xf32>
    %216 = arith.addf %215, %214 : vector<2x32xf32>
    %217 = arith.divf %215, %216 : vector<2x32xf32>
    %218 = arith.mulf %209, %183 : vector<2x32xf32>
    %219 = arith.mulf %203, %211 : vector<2x32xf32>
    %220 = arith.addf %218, %219 : vector<2x32xf32>
    %221 = math.tanh %220 : vector<2x32xf32>
    %222 = arith.mulf %217, %221 : vector<2x32xf32>
    %c0_73 = arith.constant 0 : index
    %223 = arith.index_cast %192 : i32 to index
    %c0_74 = arith.constant 0 : index
    %c0_75 = arith.constant 0 : index
    %224 = vector.load %arg4[%c0_73, %223, %c0_74, %c0_75] : memref<1x8x2x32xf32, #tpu.memory_space<vmem>>, vector<1x1x2x32xf32>
    %225 = vector.shape_cast %224 : vector<1x1x2x32xf32> to vector<2x32xf32>
    %226 = vector.shape_cast %222 : vector<2x32xf32> to vector<1x1x2x32xf32>
    tpu.vector_store %arg4[%c0_73, %223, %c0_74, %c0_75], %226 {strides = array<i32>} : memref<1x8x2x32xf32, #tpu.memory_space<vmem>>, vector<1x1x2x32xf32>,
    %c6_i32 = arith.constant 6 : i32
    %c1_i32_76 = arith.constant 1 : i32
    %227 = arith.cmpi eq, %arg0, %c1_i32_76 : i32
    %c7_i32_77 = arith.constant 7 : i32
    %228 = arith.subi %c7_i32_77, %c6_i32 : i32
    %229 = arith.select %227, %228, %c6_i32 : i32
    %c0_78 = arith.constant 0 : index
    %230 = arith.index_cast %229 : i32 to index
    %c0_79 = arith.constant 0 : index
    %c0_80 = arith.constant 0 : index
    %231 = vector.load %arg1[%c0_78, %230, %c0_79, %c0_80] : memref<1x8x2x128xf32, #tpu.memory_space<vmem>>, vector<1x1x2x128xf32>
    %232 = vector.shape_cast %231 : vector<1x1x2x128xf32> to vector<2x128xf32>
    %cst_81 = arith.constant dense<0.000000e+00> : vector<2x128xf32>
    %233 = tpu.matmul %222, %1, %cst_81 {dimension_numbers = #tpu.dot_dimension_numbers<[1], [0], [0], [1], [0, 0, 1, 1], [], []>} : vector<2x32xf32>, vector<32x128xf32>, vector<2x128xf32> -> vector<2x128xf32>
    %234 = arith.addf %232, %233 : vector<2x128xf32>
    %235 = vector.extract_strided_slice %234 {offsets = [0, 0], sizes = [2, 32], strides = [1, 1]} : vector<2x128xf32> to vector<2x32xf32>
    %236 = arith.negf %235 : vector<2x32xf32>
    %237 = math.exp %236 : vector<2x32xf32>
    %cst_82 = arith.constant 1.000000e+00 : f32
    %238 = vector.broadcast %cst_82 : f32 to vector<2x32xf32>
    %239 = arith.addf %238, %237 : vector<2x32xf32>
    %240 = arith.divf %238, %239 : vector<2x32xf32>
    %241 = vector.extract_strided_slice %234 {offsets = [0, 32], sizes = [2, 32], strides = [1, 1]} : vector<2x128xf32> to vector<2x32xf32>
    %242 = arith.negf %241 : vector<2x32xf32>
    %243 = math.exp %242 : vector<2x32xf32>
    %cst_83 = arith.constant 1.000000e+00 : f32
    %244 = vector.broadcast %cst_83 : f32 to vector<2x32xf32>
    %245 = arith.addf %244, %243 : vector<2x32xf32>
    %246 = arith.divf %244, %245 : vector<2x32xf32>
    %247 = vector.extract_strided_slice %234 {offsets = [0, 64], sizes = [2, 32], strides = [1, 1]} : vector<2x128xf32> to vector<2x32xf32>
    %248 = math.tanh %247 : vector<2x32xf32>
    %249 = vector.extract_strided_slice %234 {offsets = [0, 96], sizes = [2, 32], strides = [1, 1]} : vector<2x128xf32> to vector<2x32xf32>
    %250 = arith.negf %249 : vector<2x32xf32>
    %251 = math.exp %250 : vector<2x32xf32>
    %cst_84 = arith.constant 1.000000e+00 : f32
    %252 = vector.broadcast %cst_84 : f32 to vector<2x32xf32>
    %253 = arith.addf %252, %251 : vector<2x32xf32>
    %254 = arith.divf %252, %253 : vector<2x32xf32>
    %255 = arith.mulf %246, %220 : vector<2x32xf32>
    %256 = arith.mulf %240, %248 : vector<2x32xf32>
    %257 = arith.addf %255, %256 : vector<2x32xf32>
    %258 = math.tanh %257 : vector<2x32xf32>
    %259 = arith.mulf %254, %258 : vector<2x32xf32>
    %c0_85 = arith.constant 0 : index
    %260 = arith.index_cast %229 : i32 to index
    %c0_86 = arith.constant 0 : index
    %c0_87 = arith.constant 0 : index
    %261 = vector.load %arg4[%c0_85, %260, %c0_86, %c0_87] : memref<1x8x2x32xf32, #tpu.memory_space<vmem>>, vector<1x1x2x32xf32>
    %262 = vector.shape_cast %261 : vector<1x1x2x32xf32> to vector<2x32xf32>
    %263 = vector.shape_cast %259 : vector<2x32xf32> to vector<1x1x2x32xf32>
    tpu.vector_store %arg4[%c0_85, %260, %c0_86, %c0_87], %263 {strides = array<i32>} : memref<1x8x2x32xf32, #tpu.memory_space<vmem>>, vector<1x1x2x32xf32>,
    %c7_i32_88 = arith.constant 7 : i32
    %c1_i32_89 = arith.constant 1 : i32
    %264 = arith.cmpi eq, %arg0, %c1_i32_89 : i32
    %c7_i32_90 = arith.constant 7 : i32
    %265 = arith.subi %c7_i32_90, %c7_i32_88 : i32
    %266 = arith.select %264, %265, %c7_i32_88 : i32
    %c0_91 = arith.constant 0 : index
    %267 = arith.index_cast %266 : i32 to index
    %c0_92 = arith.constant 0 : index
    %c0_93 = arith.constant 0 : index
    %268 = vector.load %arg1[%c0_91, %267, %c0_92, %c0_93] : memref<1x8x2x128xf32, #tpu.memory_space<vmem>>, vector<1x1x2x128xf32>
    %269 = vector.shape_cast %268 : vector<1x1x2x128xf32> to vector<2x128xf32>
    %cst_94 = arith.constant dense<0.000000e+00> : vector<2x128xf32>
    %270 = tpu.matmul %259, %1, %cst_94 {dimension_numbers = #tpu.dot_dimension_numbers<[1], [0], [0], [1], [0, 0, 1, 1], [], []>} : vector<2x32xf32>, vector<32x128xf32>, vector<2x128xf32> -> vector<2x128xf32>
    %271 = arith.addf %269, %270 : vector<2x128xf32>
    %272 = vector.extract_strided_slice %271 {offsets = [0, 0], sizes = [2, 32], strides = [1, 1]} : vector<2x128xf32> to vector<2x32xf32>
    %273 = arith.negf %272 : vector<2x32xf32>
    %274 = math.exp %273 : vector<2x32xf32>
    %cst_95 = arith.constant 1.000000e+00 : f32
    %275 = vector.broadcast %cst_95 : f32 to vector<2x32xf32>
    %276 = arith.addf %275, %274 : vector<2x32xf32>
    %277 = arith.divf %275, %276 : vector<2x32xf32>
    %278 = vector.extract_strided_slice %271 {offsets = [0, 32], sizes = [2, 32], strides = [1, 1]} : vector<2x128xf32> to vector<2x32xf32>
    %279 = arith.negf %278 : vector<2x32xf32>
    %280 = math.exp %279 : vector<2x32xf32>
    %cst_96 = arith.constant 1.000000e+00 : f32
    %281 = vector.broadcast %cst_96 : f32 to vector<2x32xf32>
    %282 = arith.addf %281, %280 : vector<2x32xf32>
    %283 = arith.divf %281, %282 : vector<2x32xf32>
    %284 = vector.extract_strided_slice %271 {offsets = [0, 64], sizes = [2, 32], strides = [1, 1]} : vector<2x128xf32> to vector<2x32xf32>
    %285 = math.tanh %284 : vector<2x32xf32>
    %286 = vector.extract_strided_slice %271 {offsets = [0, 96], sizes = [2, 32], strides = [1, 1]} : vector<2x128xf32> to vector<2x32xf32>
    %287 = arith.negf %286 : vector<2x32xf32>
    %288 = math.exp %287 : vector<2x32xf32>
    %cst_97 = arith.constant 1.000000e+00 : f32
    %289 = vector.broadcast %cst_97 : f32 to vector<2x32xf32>
    %290 = arith.addf %289, %288 : vector<2x32xf32>
    %291 = arith.divf %289, %290 : vector<2x32xf32>
    %292 = arith.mulf %283, %257 : vector<2x32xf32>
    %293 = arith.mulf %277, %285 : vector<2x32xf32>
    %294 = arith.addf %292, %293 : vector<2x32xf32>
    %295 = math.tanh %294 : vector<2x32xf32>
    %296 = arith.mulf %291, %295 : vector<2x32xf32>
    %c0_98 = arith.constant 0 : index
    %297 = arith.index_cast %266 : i32 to index
    %c0_99 = arith.constant 0 : index
    %c0_100 = arith.constant 0 : index
    %298 = vector.load %arg4[%c0_98, %297, %c0_99, %c0_100] : memref<1x8x2x32xf32, #tpu.memory_space<vmem>>, vector<1x1x2x32xf32>
    %299 = vector.shape_cast %298 : vector<1x1x2x32xf32> to vector<2x32xf32>
    %300 = vector.shape_cast %296 : vector<2x32xf32> to vector<1x1x2x32xf32>
    tpu.vector_store %arg4[%c0_98, %297, %c0_99, %c0_100], %300 {strides = array<i32>} : memref<1x8x2x32xf32, #tpu.memory_space<vmem>>, vector<1x1x2x32xf32>,
    %c8_i32 = arith.constant 8 : i32
    %c0_101 = arith.constant 0 : index
    %c0_102 = arith.constant 0 : index
    %c0_103 = arith.constant 0 : index
    %301 = vector.load %arg5[%c0_101, %c0_102, %c0_103] : memref<1x2x32xf32, #tpu.memory_space<vmem>>, vector<1x2x32xf32>
    %302 = vector.shape_cast %301 : vector<1x2x32xf32> to vector<2x32xf32>
    %303 = vector.shape_cast %296 : vector<2x32xf32> to vector<1x2x32xf32>
    tpu.vector_store %arg5[%c0_101, %c0_102, %c0_103], %303 {strides = array<i32>} : memref<1x2x32xf32, #tpu.memory_space<vmem>>, vector<1x2x32xf32>,
    return
  }
  func.func @transform_0(%arg0: i32) -> (i32, i32, i32, i32) {
    %c0_i32 = arith.constant 0 : i32
    %c0_i32_0 = arith.constant 0 : i32
    %c0_i32_1 = arith.constant 0 : i32
    %c0_i32_2 = arith.constant 0 : i32
    return %arg0, %c0_i32, %c0_i32_0, %c0_i32_1 : i32, i32, i32, i32
  }
  func.func @transform_1(%arg0: i32) -> (i32, i32, i32) {
    %c0_i32 = arith.constant 0 : i32
    %c0_i32_0 = arith.constant 0 : i32
    %c0_i32_1 = arith.constant 0 : i32
    return %arg0, %c0_i32, %c0_i32_0 : i32, i32, i32
  }
  func.func @transform_2(%arg0: i32) -> (i32, i32, i32) {
    %c0_i32 = arith.constant 0 : i32
    %c0_i32_0 = arith.constant 0 : i32
    %c0_i32_1 = arith.constant 0 : i32
    return %arg0, %c0_i32, %c0_i32_0 : i32, i32, i32
  }
  func.func @transform_3(%arg0: i32) -> (i32, i32, i32, i32) {
    %c0_i32 = arith.constant 0 : i32
    %c0_i32_0 = arith.constant 0 : i32
    %c0_i32_1 = arith.constant 0 : i32
    %c0_i32_2 = arith.constant 0 : i32
    return %arg0, %c0_i32, %c0_i32_0, %c0_i32_1 : i32, i32, i32, i32
  }
  func.func @transform_4(%arg0: i32) -> (i32, i32, i32) {
    %c0_i32 = arith.constant 0 : i32
    %c0_i32_0 = arith.constant 0 : i32
    %c0_i32_1 = arith.constant 0 : i32
    return %arg0, %c0_i32, %c0_i32_0 : i32, i32, i32
  }
}

module attributes {stable_mosaic.version = 11 : i64} {
  func.func @_linear_kernel(%arg0: memref<16x64xf32, #tpu.memory_space<vmem>>, %arg1: memref<64x256xbf16, #tpu.memory_space<vmem>>, %arg2: memref<1x256xf32, #tpu.memory_space<vmem>>, %arg3: memref<16x256xf32, #tpu.memory_space<vmem>>) attributes {dimension_semantics = [], scalar_prefetch = 0 : i64, scratch_operands = 0 : i64, tpu.core_type = #tpu.core_type<tc>} {
    %c0 = arith.constant 0 : index
    %c0_0 = arith.constant 0 : index
    %0 = vector.load %arg0[%c0, %c0_0] : memref<16x64xf32, #tpu.memory_space<vmem>>, vector<16x64xf32>
    %1 = arith.truncf %0 : vector<16x64xf32> to vector<16x64xbf16>
    %c0_1 = arith.constant 0 : index
    %c0_2 = arith.constant 0 : index
    %2 = vector.load %arg1[%c0_1, %c0_2] : memref<64x256xbf16, #tpu.memory_space<vmem>>, vector<64x256xbf16>
    %cst = arith.constant dense<0.000000e+00> : vector<16x256xf32>
    %3 = tpu.matmul %1, %2, %cst {dimension_numbers = #tpu.dot_dimension_numbers<[1], [0], [0], [1], [0, 0, 1, 1], [], []>} : vector<16x64xbf16>, vector<64x256xbf16>, vector<16x256xf32> -> vector<16x256xf32>
    %c0_3 = arith.constant 0 : index
    %c0_4 = arith.constant 0 : index
    %4 = vector.load %arg2[%c0_3, %c0_4] : memref<1x256xf32, #tpu.memory_space<vmem>>, vector<1x256xf32>
    %5 = vector.broadcast %4 : vector<1x256xf32> to vector<16x256xf32>
    %6 = arith.addf %3, %5 : vector<16x256xf32>
    %c0_5 = arith.constant 0 : index
    %c0_6 = arith.constant 0 : index
    %7 = vector.load %arg3[%c0_5, %c0_6] : memref<16x256xf32, #tpu.memory_space<vmem>>, vector<16x256xf32>
    tpu.vector_store %arg3[%c0_5, %c0_6], %6 {strides = array<i32>} : memref<16x256xf32, #tpu.memory_space<vmem>>, vector<16x256xf32>,
    return
  }
}

module attributes {stable_mosaic.version = 11 : i64} {
  func.func @_linear_kernel(%arg0: memref<2x64xf32, #tpu.memory_space<vmem>>, %arg1: memref<64x5xbf16, #tpu.memory_space<vmem>>, %arg2: memref<1x5xf32, #tpu.memory_space<vmem>>, %arg3: memref<2x5xf32, #tpu.memory_space<vmem>>) attributes {dimension_semantics = [], scalar_prefetch = 0 : i64, scratch_operands = 0 : i64, tpu.core_type = #tpu.core_type<tc>} {
    %c0 = arith.constant 0 : index
    %c0_0 = arith.constant 0 : index
    %0 = vector.load %arg0[%c0, %c0_0] : memref<2x64xf32, #tpu.memory_space<vmem>>, vector<2x64xf32>
    %1 = arith.truncf %0 : vector<2x64xf32> to vector<2x64xbf16>
    %c0_1 = arith.constant 0 : index
    %c0_2 = arith.constant 0 : index
    %2 = vector.load %arg1[%c0_1, %c0_2] : memref<64x5xbf16, #tpu.memory_space<vmem>>, vector<64x5xbf16>
    %cst = arith.constant dense<0.000000e+00> : vector<2x5xf32>
    %3 = tpu.matmul %1, %2, %cst {dimension_numbers = #tpu.dot_dimension_numbers<[1], [0], [0], [1], [0, 0, 1, 1], [], []>} : vector<2x64xbf16>, vector<64x5xbf16>, vector<2x5xf32> -> vector<2x5xf32>
    %c0_3 = arith.constant 0 : index
    %c0_4 = arith.constant 0 : index
    %4 = vector.load %arg2[%c0_3, %c0_4] : memref<1x5xf32, #tpu.memory_space<vmem>>, vector<1x5xf32>
    %5 = vector.broadcast %4 : vector<1x5xf32> to vector<2x5xf32>
    %6 = arith.addf %3, %5 : vector<2x5xf32>
    %c0_5 = arith.constant 0 : index
    %c0_6 = arith.constant 0 : index
    %7 = vector.load %arg3[%c0_5, %c0_6] : memref<2x5xf32, #tpu.memory_space<vmem>>, vector<2x5xf32>
    tpu.vector_store %arg3[%c0_5, %c0_6], %6 {strides = array<i32>} : memref<2x5xf32, #tpu.memory_space<vmem>>, vector<2x5xf32>,
    return
  }
}

module attributes {stable_mosaic.version = 11 : i64} {
  func.func @_linear_kernel(%arg0: memref<16x64xf32, #tpu.memory_space<vmem>>, %arg1: memref<64x10xbf16, #tpu.memory_space<vmem>>, %arg2: memref<1x10xf32, #tpu.memory_space<vmem>>, %arg3: memref<16x10xf32, #tpu.memory_space<vmem>>) attributes {dimension_semantics = [], scalar_prefetch = 0 : i64, scratch_operands = 0 : i64, tpu.core_type = #tpu.core_type<tc>} {
    %c0 = arith.constant 0 : index
    %c0_0 = arith.constant 0 : index
    %0 = vector.load %arg0[%c0, %c0_0] : memref<16x64xf32, #tpu.memory_space<vmem>>, vector<16x64xf32>
    %1 = arith.truncf %0 : vector<16x64xf32> to vector<16x64xbf16>
    %c0_1 = arith.constant 0 : index
    %c0_2 = arith.constant 0 : index
    %2 = vector.load %arg1[%c0_1, %c0_2] : memref<64x10xbf16, #tpu.memory_space<vmem>>, vector<64x10xbf16>
    %cst = arith.constant dense<0.000000e+00> : vector<16x10xf32>
    %3 = tpu.matmul %1, %2, %cst {dimension_numbers = #tpu.dot_dimension_numbers<[1], [0], [0], [1], [0, 0, 1, 1], [], []>} : vector<16x64xbf16>, vector<64x10xbf16>, vector<16x10xf32> -> vector<16x10xf32>
    %c0_3 = arith.constant 0 : index
    %c0_4 = arith.constant 0 : index
    %4 = vector.load %arg2[%c0_3, %c0_4] : memref<1x10xf32, #tpu.memory_space<vmem>>, vector<1x10xf32>
    %5 = vector.broadcast %4 : vector<1x10xf32> to vector<16x10xf32>
    %6 = arith.addf %3, %5 : vector<16x10xf32>
    %c0_5 = arith.constant 0 : index
    %c0_6 = arith.constant 0 : index
    %7 = vector.load %arg3[%c0_5, %c0_6] : memref<16x10xf32, #tpu.memory_space<vmem>>, vector<16x10xf32>
    tpu.vector_store %arg3[%c0_5, %c0_6], %6 {strides = array<i32>} : memref<16x10xf32, #tpu.memory_space<vmem>>, vector<16x10xf32>,
    return
  }
}

</mosaic_0001>

<llo_original>
// kernel: sden_forward.14
$region0: #{sden_forward.14}
  #allocation0 [shape = 'u32[]', space=smem, size = 0x4, offset = 0x4, fixed_abs, tag = 'smem constant byte address 0x4 - core index']
  #allocation1 [shape = 'u32[144,128]{1,0:T(1,128)}', space=vmem, size = 0x12000, scoped, tag = 'internal scratch']
  %s0 = inlined_call_operand.vmem [shape: f32[16,16], index: 0, kind: input, shape index: {}]
  %s1 = inlined_call_operand.vmem [shape: bf16[16,96], index: 1, kind: input, shape index: {}]
  %s2 = inlined_call_operand.vmem [shape: f32[1,96], index: 2, kind: input, shape index: {}]
  %s3 = inlined_call_operand.vmem [shape: f32[16,96], index: 3, kind: output, shape index: {}]
  %s4 = sld [smem:[#allocation0]]
  $region22: #{sden_forward.14} parent=0
    _
  %s6 = ssub.s32 1, %s4
  %s7 = scalar_select 0, %s6, %s4
  // Predicated region
  $region2: #{sden_forward.14} parent=0 // pred_check
    _
  $region3: #{sden_forward.14} parent=0 // pred_check_branch
    %9 = sbr.rel (0) target = $region5
  $region4: #{sden_forward.14} parent=0 // pred_region
    _
  $region5: #{sden_forward.14} parent=0 // pred_fallthru
    _
  // Predicated region
  $region6: #{sden_forward.14} parent=0 // pred_check
    _
  $region7: #{sden_forward.14} parent=0 // pred_check_branch
    %11 = sbr.rel (0) target = $region9
  $region8: #{sden_forward.14} parent=0 // pred_region
    _
  $region9: #{sden_forward.14} parent=0 // pred_fallthru
    _
  // Predicated region
  $region10: #{sden_forward.14} parent=0 // pred_check
    _
  $region11: #{sden_forward.14} parent=0 // pred_check_branch
    %13 = sbr.rel (0) target = $region13
  $region12: #{sden_forward.14} parent=0 // pred_region
    _
  $region13: #{sden_forward.14} parent=0 // pred_fallthru
    _
  %v15 = vld [vmem:[%s0] sm:$0xff]
  %v16 = vld [vmem:[%s0 + $0x8] sm:$0xff]
  %v17 = vpack.c.bf16 %v16, %v15
  %v18 = vld [vmem:[%s1] sm:$0xf]
  %v19 = vld [vmem:[%s1 + $0x4] sm:$0xf]
  %v20 = vld [vmem:[%s2] sm:$0x1]
  %v22 = vlaneseq
  %v23 = vshrl.u32 %v22, 7
  %v24 = vsub.s32 0, %v23
  %v25 = vrot.slane %v20, %v24
  %v29 = vunpack.c.l.b16 %v18
  %v30 = vunpack.c.l.b16 %v19
  %v31 = vpack.c.b16 %v30, %v29
  %vm33 = vcmask 130048
  %v35 = vsel %vm33, %v17, 0
  %37 = vmatprep.subr.bf16.mxu0 0
  %38 = vmatpush1.bf16.msra.mxu0 %v31
  %39 = vmatprep.subr.bf16.mxu0 0
  %40 = vmatpush1.bf16.msra.mxu0 0
  %41 = vmatprep.subr.bf16.mxu0 0
  %42 = vmatpush1.bf16.msra.mxu0 0
  %43 = vmatprep.subr.bf16.mxu0 0
  %44 = vmatpush1.bf16.msra.mxu0 0
  %45 = vmatprep.subr.bf16.mxu0 0
  %46 = vmatpush1.bf16.msra.mxu0 0
  %47 = vmatprep.subr.bf16.mxu0 0
  %48 = vmatpush1.bf16.msra.mxu0 0
  %49 = vmatprep.subr.bf16.mxu0 0
  %50 = vmatpush1.bf16.msra.mxu0 0
  %51 = vmatprep.subr.bf16.mxu0 0
  %52 = vmatpush1.bf16.msra.mxu0 0
  %53 = vmatprep.subr.bf16.mxu0 0
  %54 = vmatpush1.bf16.msra.mxu0 0
  %55 = vmatprep.subr.bf16.mxu0 0
  %56 = vmatpush1.bf16.msra.mxu0 0
  %57 = vmatprep.subr.bf16.mxu0 0
  %58 = vmatpush1.bf16.msra.mxu0 0
  %59 = vmatprep.subr.bf16.mxu0 0
  %60 = vmatpush1.bf16.msra.mxu0 0
  %61 = vmatprep.subr.bf16.mxu0 0
  %62 = vmatpush1.bf16.msra.mxu0 0
  %63 = vmatprep.subr.bf16.mxu0 0
  %64 = vmatpush1.bf16.msra.mxu0 0
  %65 = vmatprep.subr.bf16.mxu0 0
  %66 = vmatpush1.bf16.msra.mxu0 0
  %67 = vmatprep.subr.bf16.mxu0 0
  %68 = vmatpush1.bf16.msra.mxu0 0
  %69 = vmatprep.mubr.bf16.mxu0 0
  %70 = vmatmul.mubr.bf16.gmra.mrb[0].mxu0 %v35
  %v71 = vpop.f32.mrb[0].mxu0
  %v72 = vadd.f32 %v25, %v71
  %v73 = vpop.f32.mrb[0].mxu0
  %v74 = vpop.f32.mrb[0].mxu0
  %v75 = vadd.f32 %v25, %v74
  %v76 = vpop.f32.mrb[0].mxu0
  %77 = vdwg.mxu0
  %vm78 = vcmask 785408
  %79 = vst.msk [vmem:[%s3] sm:$0xff] %vm78, %v72
  %80 = vst.msk [vmem:[%s3 + $0x8] sm:$0xff] %vm78, %v75
  // Predicated region
  $region14: #{sden_forward.14} parent=0 // pred_check
    _
  $region15: #{sden_forward.14} parent=0 // pred_check_branch
    %82 = sbr.rel (0) target = $region17
  $region16: #{sden_forward.14} parent=0 // pred_region
    _
  $region17: #{sden_forward.14} parent=0 // pred_fallthru
    _
  // Predicated region
  $region18: #{sden_forward.14} parent=0 // pred_check
    _
  $region19: #{sden_forward.14} parent=0 // pred_check_branch
    %84 = sbr.rel (0) target = $region21
  $region20: #{sden_forward.14} parent=0 // pred_region
    _
  $region21: #{sden_forward.14} parent=0 // pred_fallthru
    _

// kernel: sden_forward.12
$region0: #{sden_forward.12}
  #allocation0 [shape = 'u32[]', space=smem, size = 0x4, offset = 0x4, fixed_abs, tag = 'smem constant byte address 0x4 - core index']
  #allocation1 [shape = 'u32[144,128]{1,0:T(1,128)}', space=vmem, size = 0x12000, scoped, tag = 'internal scratch']
  %s0 = inlined_call_operand.vmem [shape: f32[48,16], index: 0, kind: input, shape index: {}]
  %s1 = inlined_call_operand.vmem [shape: bf16[16,96], index: 1, kind: input, shape index: {}]
  %s2 = inlined_call_operand.vmem [shape: f32[1,96], index: 2, kind: input, shape index: {}]
  %s3 = inlined_call_operand.vmem [shape: f32[48,96], index: 3, kind: output, shape index: {}]
  %s4 = sld [smem:[#allocation0]]
  $region22: #{sden_forward.12} parent=0
    _
  %s6 = ssub.s32 1, %s4
  %s7 = scalar_select 0, %s6, %s4
  // Predicated region
  $region2: #{sden_forward.12} parent=0 // pred_check
    _
  $region3: #{sden_forward.12} parent=0 // pred_check_branch
    %9 = sbr.rel (0) target = $region5
  $region4: #{sden_forward.12} parent=0 // pred_region
    _
  $region5: #{sden_forward.12} parent=0 // pred_fallthru
    _
  // Predicated region
  $region6: #{sden_forward.12} parent=0 // pred_check
    _
  $region7: #{sden_forward.12} parent=0 // pred_check_branch
    %11 = sbr.rel (0) target = $region9
  $region8: #{sden_forward.12} parent=0 // pred_region
    _
  $region9: #{sden_forward.12} parent=0 // pred_fallthru
    _
  // Predicated region
  $region10: #{sden_forward.12} parent=0 // pred_check
    _
  $region11: #{sden_forward.12} parent=0 // pred_check_branch
    %13 = sbr.rel (0) target = $region13
  $region12: #{sden_forward.12} parent=0 // pred_region
    _
  $region13: #{sden_forward.12} parent=0 // pred_fallthru
    _
  %v15 = vld [vmem:[%s0] sm:$0xff]
  %v16 = vld [vmem:[%s0 + $0x8] sm:$0xff]
  %v17 = vld [vmem:[%s0 + $0x10] sm:$0xff]
  %v18 = vld [vmem:[%s0 + $0x18] sm:$0xff]
  %v19 = vld [vmem:[%s0 + $0x20] sm:$0xff]
  %v20 = vld [vmem:[%s0 + $0x28] sm:$0xff]
  %v21 = vpack.c.bf16 %v16, %v15
  %v22 = vpack.c.bf16 %v18, %v17
  %v23 = vpack.c.bf16 %v20, %v19
  %v24 = vld [vmem:[%s1] sm:$0xf]
  %v25 = vld [vmem:[%s1 + $0x4] sm:$0xf]
  %v26 = vld [vmem:[%s2] sm:$0x1]
  %v28 = vlaneseq
  %v29 = vshrl.u32 %v28, 7
  %v30 = vsub.s32 0, %v29
  %v31 = vrot.slane %v26, %v30
  %v35 = vunpack.c.l.b16 %v24
  %v36 = vunpack.c.l.b16 %v25
  %v37 = vpack.c.b16 %v36, %v35
  %vm39 = vcmask 130048
  %v41 = vsel %vm39, %v21, 0
  %v44 = vsel %vm39, %v22, 0
  %v47 = vsel %vm39, %v23, 0
  %49 = vmatprep.subr.bf16.mxu0 0
  %50 = vmatpush1.bf16.msra.mxu0 %v37
  %51 = vmatprep.subr.bf16.mxu0 0
  %52 = vmatpush1.bf16.msra.mxu0 0
  %53 = vmatprep.subr.bf16.mxu0 0
  %54 = vmatpush1.bf16.msra.mxu0 0
  %55 = vmatprep.subr.bf16.mxu0 0
  %56 = vmatpush1.bf16.msra.mxu0 0
  %57 = vmatprep.subr.bf16.mxu0 0
  %58 = vmatpush1.bf16.msra.mxu0 0
  %59 = vmatprep.subr.bf16.mxu0 0
  %60 = vmatpush1.bf16.msra.mxu0 0
  %61 = vmatprep.subr.bf16.mxu0 0
  %62 = vmatpush1.bf16.msra.mxu0 0
  %63 = vmatprep.subr.bf16.mxu0 0
  %64 = vmatpush1.bf16.msra.mxu0 0
  %65 = vmatprep.subr.bf16.mxu0 0
  %66 = vmatpush1.bf16.msra.mxu0 0
  %67 = vmatprep.subr.bf16.mxu0 0
  %68 = vmatpush1.bf16.msra.mxu0 0
  %69 = vmatprep.subr.bf16.mxu0 0
  %70 = vmatpush1.bf16.msra.mxu0 0
  %71 = vmatprep.subr.bf16.mxu0 0
  %72 = vmatpush1.bf16.msra.mxu0 0
  %73 = vmatprep.subr.bf16.mxu0 0
  %74 = vmatpush1.bf16.msra.mxu0 0
  %75 = vmatprep.subr.bf16.mxu0 0
  %76 = vmatpush1.bf16.msra.mxu0 0
  %77 = vmatprep.subr.bf16.mxu0 0
  %78 = vmatpush1.bf16.msra.mxu0 0
  %79 = vmatprep.subr.bf16.mxu0 0
  %80 = vmatpush1.bf16.msra.mxu0 0
  %81 = vmatprep.mubr.bf16.mxu0 0
  %82 = vmatmul.mubr.bf16.gmra.mrb[0].mxu0 %v41
  %v83 = vpop.f32.mrb[0].mxu0
  %v84 = vadd.f32 %v31, %v83
  %v85 = vpop.f32.mrb[0].mxu0
  %v86 = vpop.f32.mrb[0].mxu0
  %v87 = vadd.f32 %v31, %v86
  %v88 = vpop.f32.mrb[0].mxu0
  %89 = vmatprep.mubr.bf16.mxu0 0
  %90 = vmatmul.mubr.bf16.gmra.mrb[0].mxu0 %v44
  %v91 = vpop.f32.mrb[0].mxu0
  %v92 = vadd.f32 %v31, %v91
  %v93 = vpop.f32.mrb[0].mxu0
  %v94 = vpop.f32.mrb[0].mxu0
  %v95 = vadd.f32 %v31, %v94
  %v96 = vpop.f32.mrb[0].mxu0
  %97 = vmatprep.mubr.bf16.mxu0 0
  %98 = vmatmul.mubr.bf16.gmra.mrb[0].mxu0 %v47
  %v99 = vpop.f32.mrb[0].mxu0
  %v100 = vadd.f32 %v31, %v99
  %v101 = vpop.f32.mrb[0].mxu0
  %v102 = vpop.f32.mrb[0].mxu0
  %v103 = vadd.f32 %v31, %v102
  %v104 = vpop.f32.mrb[0].mxu0
  %105 = vdwg.mxu0
  %vm106 = vcmask 785408
  %107 = vst.msk [vmem:[%s3] sm:$0xff] %vm106, %v84
  %108 = vst.msk [vmem:[%s3 + $0x8] sm:$0xff] %vm106, %v87
  %109 = vst.msk [vmem:[%s3 + $0x10] sm:$0xff] %vm106, %v92
  %110 = vst.msk [vmem:[%s3 + $0x18] sm:$0xff] %vm106, %v95
  %111 = vst.msk [vmem:[%s3 + $0x20] sm:$0xff] %vm106, %v100
  %112 = vst.msk [vmem:[%s3 + $0x28] sm:$0xff] %vm106, %v103
  // Predicated region
  $region14: #{sden_forward.12} parent=0 // pred_check
    _
  $region15: #{sden_forward.12} parent=0 // pred_check_branch
    %114 = sbr.rel (0) target = $region17
  $region16: #{sden_forward.12} parent=0 // pred_region
    _
  $region17: #{sden_forward.12} parent=0 // pred_fallthru
    _
  // Predicated region
  $region18: #{sden_forward.12} parent=0 // pred_check
    _
  $region19: #{sden_forward.12} parent=0 // pred_check_branch
    %116 = sbr.rel (0) target = $region21
  $region20: #{sden_forward.12} parent=0 // pred_region
    _
  $region21: #{sden_forward.12} parent=0 // pred_fallthru
    _

// kernel: sden_forward.15
$region0: #{sden_forward.15}
  #allocation0 [shape = 'u32[]', space=smem, size = 0x4, offset = 0x4, fixed_abs, tag = 'smem constant byte address 0x4 - core index']
  #allocation1 [shape = 'u32[144,128]{1,0:T(1,128)}', space=vmem, size = 0x12000, scoped, tag = 'internal scratch']
  %s0 = inlined_call_operand.vmem [shape: f32[2,8,2,48], index: 0, kind: input, shape index: {}]
  %s1 = inlined_call_operand.vmem [shape: f32[2,16,48], index: 1, kind: input, shape index: {}]
  %s2 = inlined_call_operand.vmem [shape: f32[2,1,48], index: 2, kind: input, shape index: {}]
  %s3 = inlined_call_operand.vmem [shape: s32[2,1], index: 3, kind: input, shape index: {}]
  %s4 = inlined_call_operand.vmem [shape: f32[2,2,16], index: 4, kind: output, shape index: {}]
  %s5 = sld [smem:[#allocation0]]
  $region49: #{sden_forward.15} parent=0
    _
  %s7 = ssub.s32 1, %s5
  %s8 = scalar_select 0, %s7, %s5
  loop: start=0, step=1, limit=4
  $region2: #{sden_forward.15} parent=0 // loop_pre_header
    _
  $region3: #{sden_forward.15} parent=0 // loop_header
    %s10 = sphi 0, %s14
    %p11 = scmp.ge.s32.totalorder %s10, 4
    %s20 = sphi 0, %s22
    %s23 = sphi 0, %s20
    %s24 = sphi 0, %s23
    %s40 = sphi 0, %s24
    %s46 = sphi 0, %s48
    %s49 = sphi 0, %s46
    %s50 = sphi 0, %s49
    %s66 = sphi 0, %s50
    %s72 = sphi 0, %s74
    %s75 = sphi 0, %s72
    %s76 = sphi 0, %s75
    %s92 = sphi 0, %s76
    %s96 = sphi 0, %s96
    %s98 = sphi 0, %s96
    %s99 = sphi 0, %s98
    %s113 = sphi 0, %s99
    %s119 = sphi 0, %s121
    %s122 = sphi 0, %s119
    %s123 = sphi 0, %s122
    %s139 = sphi 0, %s123
  $region4: #{sden_forward.15} parent=0 // loop_header_branch
    %13 = sbr.rel (%p11) target = $region8
  $region5: #{sden_forward.15} parent=0 // loop_body
    %s15 = ssub.s32 %s10, 1
    %s16 = ssub.s32 %s10, 2
    %s17 = sadd.s32 %s10, 1
    %s18 = ssub.s32 %s10, %s17
    %p19 = scmp.eq.s32.totalorder %s18, 0
    %s21 = sadd.s32 %s20, 1
    %s22 = scalar_select %p19, %s20, %s21
    %p25 = pneg %p19
    %p26 = scmp.eq.s32.totalorder %s10, 1
    %p27 = por %p25, %p26
    %p28 = scmp.ne.s32.totalorder %s20, %s23
    %p29 = scmp.eq.s32.totalorder %s10, 0
    %p30 = por %p28, %p29
    %p31 = scmp.ne.s32.totalorder %s20, %s23
    %p32 = scmp.eq.s32.totalorder %s15, 1
    %p33 = por %p31, %p32
    %p34 = scmp.ne.s32.totalorder %s23, %s24
    %p35 = scmp.eq.s32.totalorder %s15, 0
    %p36 = por %p34, %p35
    %p37 = scmp.ne.s32.totalorder %s23, %s24
    %p38 = scmp.eq.s32.totalorder %s16, 1
    %p39 = por %p37, %p38
    %p41 = scmp.ne.s32.totalorder %s24, %s40
    %p42 = scmp.eq.s32.totalorder %s16, 0
    %p43 = por %p41, %p42
    %s44 = ssub.s32 %s10, %s17
    %p45 = scmp.eq.s32.totalorder %s44, 0
    %s47 = sadd.s32 %s46, 1
    %s48 = scalar_select %p45, %s46, %s47
    %p51 = pneg %p45
    %p52 = scmp.eq.s32.totalorder %s10, 1
    %p53 = por %p51, %p52
    %p54 = scmp.ne.s32.totalorder %s46, %s49
    %p55 = scmp.eq.s32.totalorder %s10, 0
    %p56 = por %p54, %p55
    %p57 = scmp.ne.s32.totalorder %s46, %s49
    %p58 = scmp.eq.s32.totalorder %s15, 1
    %p59 = por %p57, %p58
    %p60 = scmp.ne.s32.totalorder %s49, %s50
    %p61 = scmp.eq.s32.totalorder %s15, 0
    %p62 = por %p60, %p61
    %p63 = scmp.ne.s32.totalorder %s49, %s50
    %p64 = scmp.eq.s32.totalorder %s16, 1
    %p65 = por %p63, %p64
    %p67 = scmp.ne.s32.totalorder %s50, %s66
    %p68 = scmp.eq.s32.totalorder %s16, 0
    %p69 = por %p67, %p68
    %s70 = ssub.s32 %s10, %s17
    %p71 = scmp.eq.s32.totalorder %s70, 0
    %s73 = sadd.s32 %s72, 1
    %s74 = scalar_select %p71, %s72, %s73
    %p77 = pneg %p71
    %p78 = scmp.eq.s32.totalorder %s10, 1
    %p79 = por %p77, %p78
    %p80 = scmp.ne.s32.totalorder %s72, %s75
    %p81 = scmp.eq.s32.totalorder %s10, 0
    %p82 = por %p80, %p81
    %p83 = scmp.ne.s32.totalorder %s72, %s75
    %p84 = scmp.eq.s32.totalorder %s15, 1
    %p85 = por %p83, %p84
    %p86 = scmp.ne.s32.totalorder %s75, %s76
    %p87 = scmp.eq.s32.totalorder %s15, 0
    %p88 = por %p86, %p87
    %p89 = scmp.ne.s32.totalorder %s75, %s76
    %p90 = scmp.eq.s32.totalorder %s16, 1
    %p91 = por %p89, %p90
    %p93 = scmp.ne.s32.totalorder %s76, %s92
    %p94 = scmp.eq.s32.totalorder %s16, 0
    %p95 = por %p93, %p94
    %s97 = sadd.s32 %s96, 1
    %p100 = scmp.eq.s32.totalorder %s10, 1
    %p101 = scmp.ne.s32.totalorder %s96, %s98
    %p102 = scmp.eq.s32.totalorder %s10, 0
    %p103 = por %p101, %p102
    %p104 = scmp.ne.s32.totalorder %s96, %s98
    %p105 = scmp.eq.s32.totalorder %s15, 1
    %p106 = por %p104, %p105
    %p107 = scmp.ne.s32.totalorder %s98, %s99
    %p108 = scmp.eq.s32.totalorder %s15, 0
    %p109 = por %p107, %p108
    %p110 = scmp.ne.s32.totalorder %s98, %s99
    %p111 = scmp.eq.s32.totalorder %s16, 1
    %p112 = por %p110, %p111
    %p114 = scmp.ne.s32.totalorder %s99, %s113
    %p115 = scmp.eq.s32.totalorder %s16, 0
    %p116 = por %p114, %p115
    %s117 = ssub.s32 %s10, %s17
    %p118 = scmp.eq.s32.totalorder %s117, 0
    %s120 = sadd.s32 %s119, 1
    %s121 = scalar_select %p118, %s119, %s120
    %p124 = pneg %p118
    %p125 = scmp.eq.s32.totalorder %s10, 1
    %p126 = por %p124, %p125
    %p127 = scmp.ne.s32.totalorder %s119, %s122
    %p128 = scmp.eq.s32.totalorder %s10, 0
    %p129 = por %p127, %p128
    %p130 = scmp.ne.s32.totalorder %s119, %s122
    %p131 = scmp.eq.s32.totalorder %s15, 1
    %p132 = por %p130, %p131
    %p133 = scmp.ne.s32.totalorder %s122, %s123
    %p134 = scmp.eq.s32.totalorder %s15, 0
    %p135 = por %p133, %p134
    %p136 = scmp.ne.s32.totalorder %s122, %s123
    %p137 = scmp.eq.s32.totalorder %s16, 1
    %p138 = por %p136, %p137
    %p140 = scmp.ne.s32.totalorder %s123, %s139
    %p141 = scmp.eq.s32.totalorder %s16, 0
    %p142 = por %p140, %p141
    %p143 = scmp.le.s32.totalorder 1, %s10
    %p144 = scmp.lt.s32.totalorder %s10, 3
    %p145 = pnand %p143, %p144
    %p146 = pneg %p145
    // Predicated region
    $region9: #{sden_forward.15} parent=5 // pred_check
      _
    $region10: #{sden_forward.15} parent=5 // pred_check_branch
      %148 = sbr.rel (%p145) target = $region12
    $region11: #{sden_forward.15} parent=5 // pred_region
      %s149 = ssub.s32 %s10, 1
      // Predicated region
      $region13: #{sden_forward.15} parent=11 // pred_check
        %p150 = pneg %p109
      $region14: #{sden_forward.15} parent=11 // pred_check_branch
        %152 = sbr.rel (%p150) target = $region16
      $region15: #{sden_forward.15} parent=11 // pred_region
        _
      $region16: #{sden_forward.15} parent=11 // pred_fallthru
        _
    $region12: #{sden_forward.15} parent=5 // pred_fallthru
      _
    %p153 = scmp.lt.s32.totalorder %s10, 2
    // Predicated region
    $region17: #{sden_forward.15} parent=5 // pred_check
      %p154 = pneg %p153
    $region18: #{sden_forward.15} parent=5 // pred_check_branch
      %156 = sbr.rel (%p154) target = $region20
    $region19: #{sden_forward.15} parent=5 // pred_region
      // Predicated region
      $region21: #{sden_forward.15} parent=19 // pred_check
        %p157 = pneg %p30
      $region22: #{sden_forward.15} parent=19 // pred_check_branch
        %159 = sbr.rel (%p157) target = $region24
      $region23: #{sden_forward.15} parent=19 // pred_region
        %p160 = scmp.lt.s32.totalorder %s10, 1
        %s161 = scalar_select %p160, %s10, 1
        %s162 = smul.addr %s161, 8
        %s163 = smul.addr %s162, 2
        %s164 = scalar_lea.vmem %s0, %s163
      $region24: #{sden_forward.15} parent=19 // pred_fallthru
        _
      // Predicated region
      $region25: #{sden_forward.15} parent=19 // pred_check
        %p165 = pneg %p56
      $region26: #{sden_forward.15} parent=19 // pred_check_branch
        %167 = sbr.rel (%p165) target = $region28
      $region27: #{sden_forward.15} parent=19 // pred_region
        %p168 = scmp.lt.s32.totalorder %s10, 1
        %s169 = scalar_select %p168, %s10, 1
        %s170 = smul.addr %s169, 2
        %s171 = smul.addr %s170, 8
        %s172 = scalar_lea.vmem %s1, %s171
      $region28: #{sden_forward.15} parent=19 // pred_fallthru
        _
      // Predicated region
      $region29: #{sden_forward.15} parent=19 // pred_check
        %p173 = pneg %p82
      $region30: #{sden_forward.15} parent=19 // pred_check_branch
        %175 = sbr.rel (%p173) target = $region32
      $region31: #{sden_forward.15} parent=19 // pred_region
        %p176 = scmp.lt.s32.totalorder %s10, 1
        %s177 = scalar_select %p176, %s10, 1
        %s178 = scalar_lea.vmem %s2, %s177
      $region32: #{sden_forward.15} parent=19 // pred_fallthru
        _
    $region20: #{sden_forward.15} parent=5 // pred_fallthru
      _
    %p179 = scmp.le.s32.totalorder 1, %s10
    %p180 = scmp.lt.s32.totalorder %s10, 3
    %p181 = pnand %p179, %p180
    %p182 = pneg %p181
    // Predicated region
    $region33: #{sden_forward.15} parent=5 // pred_check
      _
    $region34: #{sden_forward.15} parent=5 // pred_check_branch
      %184 = sbr.rel (%p181) target = $region36
    $region35: #{sden_forward.15} parent=5 // pred_region
      %s185 = ssub.s32 %s10, 1
      %p186 = scmp.lt.s32.totalorder %s15, 1
      %s187 = scalar_select %p186, %s15, 1
      %s188 = smul.addr %s187, 8
      %s189 = smul.addr %s188, 2
      %s190 = scalar_lea.vmem %s0, %s189
      %p191 = pneg %p36
      %p192 = pneg %p33
      %p193 = scmp.lt.s32.totalorder %s15, 1
      %s194 = scalar_select %p193, %s15, 1
      %s195 = smul.addr %s194, 2
      %s196 = smul.addr %s195, 8
      %s197 = scalar_lea.vmem %s1, %s196
      %p198 = pneg %p62
      %p199 = pneg %p59
      %p200 = scmp.lt.s32.totalorder %s15, 1
      %s201 = scalar_select %p200, %s15, 1
      %s202 = scalar_lea.vmem %s2, %s201
      %p203 = pneg %p88
      %p204 = pneg %p85
      %p205 = pneg %p109
      %p206 = pneg %p106
      %p207 = pneg %p135
      %p208 = pneg %p132
      %p209 = scmp.lt.s32.totalorder %s15, 1
      %s210 = scalar_select %p209, %s15, 1
      %s211 = smul.addr %s210, 2
      %s212 = scalar_lea.vmem %s4, %s211
      %p213 = scmp.lt.s32.totalorder %s15, 1
      %s214 = scalar_select %p213, %s15, 1
      %s215 = smul.addr %s214, 8
      %s216 = smul.addr %s215, 2
      %s217 = scalar_lea.vmem %s0, %s216
      %p218 = scmp.lt.s32.totalorder %s15, 1
      %s219 = scalar_select %p218, %s15, 1
      %s220 = smul.addr %s219, 2
      %s221 = smul.addr %s220, 8
      %s222 = scalar_lea.vmem %s1, %s221
      %p223 = scmp.lt.s32.totalorder %s15, 1
      %s224 = scalar_select %p223, %s15, 1
      %s225 = scalar_lea.vmem %s2, %s224
      %p226 = scmp.lt.s32.totalorder %s15, 1
      %s227 = scalar_select %p226, %s15, 1
      %s228 = smul.addr %s227, 2
      %s229 = scalar_lea.vmem %s4, %s228
      %v230 = vld [vmem:[%s222] sm:$0xff]
      %v231 = vld [vmem:[%s222 + $0x8] sm:$0xff]
      %v232 = vld [vmem:[%s225] sm:$0x1]
      %v233 = vld [vmem:[%s3] sm:$0x3]
      %p234 = scmp.eq.s32.totalorder %s15, 1
      %s235 = scalar_select %p234, 7, 0
      %s236 = smul.u32 %s235, 2
      %s237 = scalar_lea.vmem %s217, %s236
      %v238 = vld [vmem:[%s237] sm:$0x3]
      %v240 = vlaneseq
      %v241 = vshrl.u32 %v240, 7
      %v242 = vsub.s32 0, %v241
      %v243 = vrot.slane %v232, %v242
      %vm245 = vcmask 130048
      %v247 = vsel %vm245, 0.0, 0
      %249 = vmatprep.subr.mxu0 0.0
      %250 = vmatpush1.msra.mxu0 %v230
      %251 = vmatprep.subr.mxu0 0.0
      %252 = vmatpush1.msra.mxu0 %v231
      %253 = vmatprep.subr.mxu0 0.0
      %254 = vmatpush1.msra.mxu0 0.0
      %255 = vmatprep.subr.mxu0 0.0
      %256 = vmatpush1.msra.mxu0 0.0
      %257 = vmatprep.subr.mxu0 0.0
      %258 = vmatpush1.msra.mxu0 0.0
      %259 = vmatprep.subr.mxu0 0.0
      %260 = vmatpush1.msra.mxu0 0.0
      %261 = vmatprep.subr.mxu0 0.0
      %262 = vmatpush1.msra.mxu0 0.0
      %263 = vmatprep.subr.mxu0 0.0
      %264 = vmatpush1.msra.mxu0 0.0
      %265 = vmatprep.subr.mxu0 0.0
      %266 = vmatpush1.msra.mxu0 0.0
      %267 = vmatprep.subr.mxu0 0.0
      %268 = vmatpush1.msra.mxu0 0.0
      %269 = vmatprep.subr.mxu0 0.0
      %270 = vmatpush1.msra.mxu0 0.0
      %271 = vmatprep.subr.mxu0 0.0
      %272 = vmatpush1.msra.mxu0 0.0
      %273 = vmatprep.subr.mxu0 0.0
      %274 = vmatpush1.msra.mxu0 0.0
      %275 = vmatprep.subr.mxu0 0.0
      %276 = vmatpush1.msra.mxu0 0.0
      %277 = vmatprep.subr.mxu0 0.0
      %278 = vmatpush1.msra.mxu0 0.0
      %279 = vmatprep.subr.mxu0 0.0
      %280 = vmatpush1.msra.mxu0 0.0
      %281 = vmatprep.subr.mxu0 0.0
      %282 = vmatpush1.msra.mxu0 0.0
      %283 = vmatprep.subr.mxu0 0.0
      %284 = vmatpush1.msra.mxu0 0.0
      %285 = vmatprep.subr.mxu0 0.0
      %286 = vmatpush1.msra.mxu0 0.0
      %287 = vmatprep.subr.mxu0 0.0
      %288 = vmatpush1.msra.mxu0 0.0
      %289 = vmatprep.subr.mxu0 0.0
      %290 = vmatpush1.msra.mxu0 0.0
      %291 = vmatprep.subr.mxu0 0.0
      %292 = vmatpush1.msra.mxu0 0.0
      %293 = vmatprep.subr.mxu0 0.0
      %294 = vmatpush1.msra.mxu0 0.0
      %295 = vmatprep.subr.mxu0 0.0
      %296 = vmatpush1.msra.mxu0 0.0
      %297 = vmatprep.subr.mxu0 0.0
      %298 = vmatpush1.msra.mxu0 0.0
      %299 = vmatprep.subr.mxu0 0.0
      %300 = vmatpush1.msra.mxu0 0.0
      %301 = vmatprep.subr.mxu0 0.0
      %302 = vmatpush1.msra.mxu0 0.0
      %303 = vmatprep.subr.mxu0 0.0
      %304 = vmatpush1.msra.mxu0 0.0
      %305 = vmatprep.subr.mxu0 0.0
      %306 = vmatpush1.msra.mxu0 0.0
      %307 = vmatprep.subr.mxu0 0.0
      %308 = vmatpush1.msra.mxu0 0.0
      %309 = vmatprep.subr.mxu0 0.0
      %310 = vmatpush1.msra.mxu0 0.0
      %311 = vmatprep.subr.mxu0 0.0
      %312 = vmatpush1.msra.mxu0 0.0
      %313 = vmatprep.mubr.f32.mxu0 0.0
      %314 = vmatmul.mubr.f32.gmra.mrb[0].mxu0 %v247
      %v315 = vpop.f32.mrb[0].mxu0
      %v316 = vadd.f32 %v243, %v315
      %v317 = vpop.f32.mrb[0].mxu0
      %318 = vdwg.mxu0
      %v319 = vadd.f32 %v238, %v316
      %v320 = vxor.u32 %v319, 2147483648
      %v321 = vmul.f32 %v320, 1.442695
      %v322 = vpow.pop %v321
      %v323 = vadd.f32 %v322, 1.0
      %v324 = vrcp.pop %v323
      %v325 = vmul.f32 1.0, %v324
      %327 = vrot.lane.b32.xlu0 %v316, 96
      %v328 = vpop.permute.xlu0 %327
      %v330 = vmul.f32 %v325, %v328
      %332 = vrot.lane.b32.xlu0 %v330, 32
      %v333 = vpop.permute.xlu0 %332
      %v335 = vadd.f32 %v238, %v333
      %v336 = vtanh.pop %v335
      %v337 = vsub.f32 1.0, %v325
      %339 = vrot.lane.b32.xlu0 %v336, 112
      %v340 = vpop.permute.xlu0 %339
      %v342 = vmul.f32 %v337, %v340
      %v343 = vmul.f32 %v325, 0.0
      %v344 = vadd.f32 %v342, %v343
      %v345 = vstv %s235
      %vm346 = vcmp.lt.s32.totalorder %v345, %v233
      %v347 = vsel %vm346, 1, 0
      %348 = vset.pattern.permute.xlu0 0
      %349 = vperm.xlu0 %348, %v347
      %v350 = vpop.permute.xlu0 %349
      %vm351 = vcmp.eq.s32.totalorder %v350, 1
      %v352 = vsel %vm351, %v344, 0.0
      %s353 = scalar_select %p234, 6, 1
      %s354 = smul.u32 %s353, 2
      %s355 = scalar_lea.vmem %s217, %s354
      %v356 = vld [vmem:[%s355] sm:$0x3]
      %358 = vrot.lane.b32.xlu0 %v352, 112
      %v359 = vpop.permute.xlu0 %358
      %v360 = vsel %vm245, %v359, 0
      %362 = vmatprep.subr.mxu0 0.0
      %363 = vmatpush1.msra.mxu0 %v230
      %364 = vmatprep.subr.mxu0 0.0
      %365 = vmatpush1.msra.mxu0 %v231
      %366 = vmatprep.subr.mxu0 0.0
      %367 = vmatpush1.msra.mxu0 0.0
      %368 = vmatprep.subr.mxu0 0.0
      %369 = vmatpush1.msra.mxu0 0.0
      %370 = vmatprep.subr.mxu0 0.0
      %371 = vmatpush1.msra.mxu0 0.0
      %372 = vmatprep.subr.mxu0 0.0
      %373 = vmatpush1.msra.mxu0 0.0
      %374 = vmatprep.subr.mxu0 0.0
      %375 = vmatpush1.msra.mxu0 0.0
      %376 = vmatprep.subr.mxu0 0.0
      %377 = vmatpush1.msra.mxu0 0.0
      %378 = vmatprep.subr.mxu0 0.0
      %379 = vmatpush1.msra.mxu0 0.0
      %380 = vmatprep.subr.mxu0 0.0
      %381 = vmatpush1.msra.mxu0 0.0
      %382 = vmatprep.subr.mxu0 0.0
      %383 = vmatpush1.msra.mxu0 0.0
      %384 = vmatprep.subr.mxu0 0.0
      %385 = vmatpush1.msra.mxu0 0.0
      %386 = vmatprep.subr.mxu0 0.0
      %387 = vmatpush1.msra.mxu0 0.0
      %388 = vmatprep.subr.mxu0 0.0
      %389 = vmatpush1.msra.mxu0 0.0
      %390 = vmatprep.subr.mxu0 0.0
      %391 = vmatpush1.msra.mxu0 0.0
      %392 = vmatprep.subr.mxu0 0.0
      %393 = vmatpush1.msra.mxu0 0.0
      %394 = vmatprep.subr.mxu0 0.0
      %395 = vmatpush1.msra.mxu0 0.0
      %396 = vmatprep.subr.mxu0 0.0
      %397 = vmatpush1.msra.mxu0 0.0
      %398 = vmatprep.subr.mxu0 0.0
      %399 = vmatpush1.msra.mxu0 0.0
      %400 = vmatprep.subr.mxu0 0.0
      %401 = vmatpush1.msra.mxu0 0.0
      %402 = vmatprep.subr.mxu0 0.0
      %403 = vmatpush1.msra.mxu0 0.0
      %404 = vmatprep.subr.mxu0 0.0
      %405 = vmatpush1.msra.mxu0 0.0
      %406 = vmatprep.subr.mxu0 0.0
      %407 = vmatpush1.msra.mxu0 0.0
      %408 = vmatprep.subr.mxu0 0.0
      %409 = vmatpush1.msra.mxu0 0.0
      %410 = vmatprep.subr.mxu0 0.0
      %411 = vmatpush1.msra.mxu0 0.0
      %412 = vmatprep.subr.mxu0 0.0
      %413 = vmatpush1.msra.mxu0 0.0
      %414 = vmatprep.subr.mxu0 0.0
      %415 = vmatpush1.msra.mxu0 0.0
      %416 = vmatprep.subr.mxu0 0.0
      %417 = vmatpush1.msra.mxu0 0.0
      %418 = vmatprep.subr.mxu0 0.0
      %419 = vmatpush1.msra.mxu0 0.0
      %420 = vmatprep.subr.mxu0 0.0
      %421 = vmatpush1.msra.mxu0 0.0
      %422 = vmatprep.subr.mxu0 0.0
      %423 = vmatpush1.msra.mxu0 0.0
      %424 = vmatprep.subr.mxu0 0.0
      %425 = vmatpush1.msra.mxu0 0.0
      %426 = vmatprep.mubr.f32.mxu0 0.0
      %427 = vmatmul.mubr.f32.gmra.mrb[0].mxu0 %v360
      %v428 = vpop.f32.mrb[0].mxu0
      %v429 = vadd.f32 %v243, %v428
      %v430 = vpop.f32.mrb[0].mxu0
      %431 = vdwg.mxu0
      %v432 = vadd.f32 %v356, %v429
      %v433 = vxor.u32 %v432, 2147483648
      %v434 = vmul.f32 %v433, 1.442695
      %v435 = vpow.pop %v434
      %v436 = vadd.f32 %v435, 1.0
      %v437 = vrcp.pop %v436
      %v438 = vmul.f32 1.0, %v437
      %440 = vrot.lane.b32.xlu0 %v429, 96
      %v441 = vpop.permute.xlu0 %440
      %v443 = vmul.f32 %v438, %v441
      %445 = vrot.lane.b32.xlu0 %v443, 32
      %v446 = vpop.permute.xlu0 %445
      %v448 = vadd.f32 %v356, %v446
      %v449 = vtanh.pop %v448
      %v450 = vsub.f32 1.0, %v438
      %452 = vrot.lane.b32.xlu0 %v449, 112
      %v453 = vpop.permute.xlu0 %452
      %v455 = vmul.f32 %v450, %v453
      %v456 = vmul.f32 %v438, %v352
      %v457 = vadd.f32 %v455, %v456
      %v458 = vstv %s353
      %vm459 = vcmp.lt.s32.totalorder %v458, %v233
      %v460 = vsel %vm459, 1, 0
      %461 = vset.pattern.permute.xlu0 0
      %462 = vperm.xlu0 %461, %v460
      %v463 = vpop.permute.xlu0 %462
      %vm464 = vcmp.eq.s32.totalorder %v463, 1
      %v465 = vsel %vm464, %v457, %v352
      %s466 = scalar_select %p234, 5, 2
      %s467 = smul.u32 %s466, 2
      %s468 = scalar_lea.vmem %s217, %s467
      %v469 = vld [vmem:[%s468] sm:$0x3]
      %471 = vrot.lane.b32.xlu0 %v465, 112
      %v472 = vpop.permute.xlu0 %471
      %v473 = vsel %vm245, %v472, 0
      %475 = vmatprep.subr.mxu0 0.0
      %476 = vmatpush1.msra.mxu0 %v230
      %477 = vmatprep.subr.mxu0 0.0
      %478 = vmatpush1.msra.mxu0 %v231
      %479 = vmatprep.subr.mxu0 0.0
      %480 = vmatpush1.msra.mxu0 0.0
      %481 = vmatprep.subr.mxu0 0.0
      %482 = vmatpush1.msra.mxu0 0.0
      %483 = vmatprep.subr.mxu0 0.0
      %484 = vmatpush1.msra.mxu0 0.0
      %485 = vmatprep.subr.mxu0 0.0
      %486 = vmatpush1.msra.mxu0 0.0
      %487 = vmatprep.subr.mxu0 0.0
      %488 = vmatpush1.msra.mxu0 0.0
      %489 = vmatprep.subr.mxu0 0.0
      %490 = vmatpush1.msra.mxu0 0.0
      %491 = vmatprep.subr.mxu0 0.0
      %492 = vmatpush1.msra.mxu0 0.0
      %493 = vmatprep.subr.mxu0 0.0
      %494 = vmatpush1.msra.mxu0 0.0
      %495 = vmatprep.subr.mxu0 0.0
      %496 = vmatpush1.msra.mxu0 0.0
      %497 = vmatprep.subr.mxu0 0.0
      %498 = vmatpush1.msra.mxu0 0.0
      %499 = vmatprep.subr.mxu0 0.0
      %500 = vmatpush1.msra.mxu0 0.0
      %501 = vmatprep.subr.mxu0 0.0
      %502 = vmatpush1.msra.mxu0 0.0
      %503 = vmatprep.subr.mxu0 0.0
      %504 = vmatpush1.msra.mxu0 0.0
      %505 = vmatprep.subr.mxu0 0.0
      %506 = vmatpush1.msra.mxu0 0.0
      %507 = vmatprep.subr.mxu0 0.0
      %508 = vmatpush1.msra.mxu0 0.0
      %509 = vmatprep.subr.mxu0 0.0
      %510 = vmatpush1.msra.mxu0 0.0
      %511 = vmatprep.subr.mxu0 0.0
      %512 = vmatpush1.msra.mxu0 0.0
      %513 = vmatprep.subr.mxu0 0.0
      %514 = vmatpush1.msra.mxu0 0.0
      %515 = vmatprep.subr.mxu0 0.0
      %516 = vmatpush1.msra.mxu0 0.0
      %517 = vmatprep.subr.mxu0 0.0
      %518 = vmatpush1.msra.mxu0 0.0
      %519 = vmatprep.subr.mxu0 0.0
      %520 = vmatpush1.msra.mxu0 0.0
      %521 = vmatprep.subr.mxu0 0.0
      %522 = vmatpush1.msra.mxu0 0.0
      %523 = vmatprep.subr.mxu0 0.0
      %524 = vmatpush1.msra.mxu0 0.0
      %525 = vmatprep.subr.mxu0 0.0
      %526 = vmatpush1.msra.mxu0 0.0
      %527 = vmatprep.subr.mxu0 0.0
      %528 = vmatpush1.msra.mxu0 0.0
      %529 = vmatprep.subr.mxu0 0.0
      %530 = vmatpush1.msra.mxu0 0.0
      %531 = vmatprep.subr.mxu0 0.0
      %532 = vmatpush1.msra.mxu0 0.0
      %533 = vmatprep.subr.mxu0 0.0
      %534 = vmatpush1.msra.mxu0 0.0
      %535 = vmatprep.subr.mxu0 0.0
      %536 = vmatpush1.msra.mxu0 0.0
      %537 = vmatprep.subr.mxu0 0.0
      %538 = vmatpush1.msra.mxu0 0.0
      %539 = vmatprep.mubr.f32.mxu0 0.0
      %540 = vmatmul.mubr.f32.gmra.mrb[0].mxu0 %v473
      %v541 = vpop.f32.mrb[0].mxu0
      %v542 = vadd.f32 %v243, %v541
      %v543 = vpop.f32.mrb[0].mxu0
      %544 = vdwg.mxu0
      %v545 = vadd.f32 %v469, %v542
      %v546 = vxor.u32 %v545, 2147483648
      %v547 = vmul.f32 %v546, 1.442695
      %v548 = vpow.pop %v547
      %v549 = vadd.f32 %v548, 1.0
      %v550 = vrcp.pop %v549
      %v551 = vmul.f32 1.0, %v550
      %553 = vrot.lane.b32.xlu0 %v542, 96
      %v554 = vpop.permute.xlu0 %553
      %v556 = vmul.f32 %v551, %v554
      %558 = vrot.lane.b32.xlu0 %v556, 32
      %v559 = vpop.permute.xlu0 %558
      %v561 = vadd.f32 %v469, %v559
      %v562 = vtanh.pop %v561
      %v563 = vsub.f32 1.0, %v551
      %565 = vrot.lane.b32.xlu0 %v562, 112
      %v566 = vpop.permute.xlu0 %565
      %v568 = vmul.f32 %v563, %v566
      %v569 = vmul.f32 %v551, %v465
      %v570 = vadd.f32 %v568, %v569
      %v571 = vstv %s466
      %vm572 = vcmp.lt.s32.totalorder %v571, %v233
      %v573 = vsel %vm572, 1, 0
      %574 = vset.pattern.permute.xlu0 0
      %575 = vperm.xlu0 %574, %v573
      %v576 = vpop.permute.xlu0 %575
      %vm577 = vcmp.eq.s32.totalorder %v576, 1
      %v578 = vsel %vm577, %v570, %v465
      %s579 = scalar_select %p234, 4, 3
      %s580 = smul.u32 %s579, 2
      %s581 = scalar_lea.vmem %s217, %s580
      %v582 = vld [vmem:[%s581] sm:$0x3]
      %584 = vrot.lane.b32.xlu0 %v578, 112
      %v585 = vpop.permute.xlu0 %584
      %v586 = vsel %vm245, %v585, 0
      %588 = vmatprep.subr.mxu0 0.0
      %589 = vmatpush1.msra.mxu0 %v230
      %590 = vmatprep.subr.mxu0 0.0
      %591 = vmatpush1.msra.mxu0 %v231
      %592 = vmatprep.subr.mxu0 0.0
      %593 = vmatpush1.msra.mxu0 0.0
      %594 = vmatprep.subr.mxu0 0.0
      %595 = vmatpush1.msra.mxu0 0.0
      %596 = vmatprep.subr.mxu0 0.0
      %597 = vmatpush1.msra.mxu0 0.0
      %598 = vmatprep.subr.mxu0 0.0
      %599 = vmatpush1.msra.mxu0 0.0
      %600 = vmatprep.subr.mxu0 0.0
      %601 = vmatpush1.msra.mxu0 0.0
      %602 = vmatprep.subr.mxu0 0.0
      %603 = vmatpush1.msra.mxu0 0.0
      %604 = vmatprep.subr.mxu0 0.0
      %605 = vmatpush1.msra.mxu0 0.0
      %606 = vmatprep.subr.mxu0 0.0
      %607 = vmatpush1.msra.mxu0 0.0
      %608 = vmatprep.subr.mxu0 0.0
      %609 = vmatpush1.msra.mxu0 0.0
      %610 = vmatprep.subr.mxu0 0.0
      %611 = vmatpush1.msra.mxu0 0.0
      %612 = vmatprep.subr.mxu0 0.0
      %613 = vmatpush1.msra.mxu0 0.0
      %614 = vmatprep.subr.mxu0 0.0
      %615 = vmatpush1.msra.mxu0 0.0
      %616 = vmatprep.subr.mxu0 0.0
      %617 = vmatpush1.msra.mxu0 0.0
      %618 = vmatprep.subr.mxu0 0.0
      %619 = vmatpush1.msra.mxu0 0.0
      %620 = vmatprep.subr.mxu0 0.0
      %621 = vmatpush1.msra.mxu0 0.0
      %622 = vmatprep.subr.mxu0 0.0
      %623 = vmatpush1.msra.mxu0 0.0
      %624 = vmatprep.subr.mxu0 0.0
      %625 = vmatpush1.msra.mxu0 0.0
      %626 = vmatprep.subr.mxu0 0.0
      %627 = vmatpush1.msra.mxu0 0.0
      %628 = vmatprep.subr.mxu0 0.0
      %629 = vmatpush1.msra.mxu0 0.0
      %630 = vmatprep.subr.mxu0 0.0
      %631 = vmatpush1.msra.mxu0 0.0
      %632 = vmatprep.subr.mxu0 0.0
      %633 = vmatpush1.msra.mxu0 0.0
      %634 = vmatprep.subr.mxu0 0.0
      %635 = vmatpush1.msra.mxu0 0.0
      %636 = vmatprep.subr.mxu0 0.0
      %637 = vmatpush1.msra.mxu0 0.0
      %638 = vmatprep.subr.mxu0 0.0
      %639 = vmatpush1.msra.mxu0 0.0
      %640 = vmatprep.subr.mxu0 0.0
      %641 = vmatpush1.msra.mxu0 0.0
      %642 = vmatprep.subr.mxu0 0.0
      %643 = vmatpush1.msra.mxu0 0.0
      %644 = vmatprep.subr.mxu0 0.0
      %645 = vmatpush1.msra.mxu0 0.0
      %646 = vmatprep.subr.mxu0 0.0
      %647 = vmatpush1.msra.mxu0 0.0
      %648 = vmatprep.subr.mxu0 0.0
      %649 = vmatpush1.msra.mxu0 0.0
      %650 = vmatprep.subr.mxu0 0.0
      %651 = vmatpush1.msra.mxu0 0.0
      %652 = vmatprep.mubr.f32.mxu0 0.0
      %653 = vmatmul.mubr.f32.gmra.mrb[0].mxu0 %v586
      %v654 = vpop.f32.mrb[0].mxu0
      %v655 = vadd.f32 %v243, %v654
      %v656 = vpop.f32.mrb[0].mxu0
      %657 = vdwg.mxu0
      %v658 = vadd.f32 %v582, %v655
      %v659 = vxor.u32 %v658, 2147483648
      %v660 = vmul.f32 %v659, 1.442695
      %v661 = vpow.pop %v660
      %v662 = vadd.f32 %v661, 1.0
      %v663 = vrcp.pop %v662
      %v664 = vmul.f32 1.0, %v663
      %666 = vrot.lane.b32.xlu0 %v655, 96
      %v667 = vpop.permute.xlu0 %666
      %v669 = vmul.f32 %v664, %v667
      %671 = vrot.lane.b32.xlu0 %v669, 32
      %v672 = vpop.permute.xlu0 %671
      %v674 = vadd.f32 %v582, %v672
      %v675 = vtanh.pop %v674
      %v676 = vsub.f32 1.0, %v664
      %678 = vrot.lane.b32.xlu0 %v675, 112
      %v679 = vpop.permute.xlu0 %678
      %v681 = vmul.f32 %v676, %v679
      %v682 = vmul.f32 %v664, %v578
      %v683 = vadd.f32 %v681, %v682
      %v684 = vstv %s579
      %vm685 = vcmp.lt.s32.totalorder %v684, %v233
      %v686 = vsel %vm685, 1, 0
      %687 = vset.pattern.permute.xlu0 0
      %688 = vperm.xlu0 %687, %v686
      %v689 = vpop.permute.xlu0 %688
      %vm690 = vcmp.eq.s32.totalorder %v689, 1
      %v691 = vsel %vm690, %v683, %v578
      %s692 = scalar_select %p234, 3, 4
      %s693 = smul.u32 %s692, 2
      %s694 = scalar_lea.vmem %s217, %s693
      %v695 = vld [vmem:[%s694] sm:$0x3]
      %697 = vrot.lane.b32.xlu0 %v691, 112
      %v698 = vpop.permute.xlu0 %697
      %v699 = vsel %vm245, %v698, 0
      %701 = vmatprep.subr.mxu0 0.0
      %702 = vmatpush1.msra.mxu0 %v230
      %703 = vmatprep.subr.mxu0 0.0
      %704 = vmatpush1.msra.mxu0 %v231
      %705 = vmatprep.subr.mxu0 0.0
      %706 = vmatpush1.msra.mxu0 0.0
      %707 = vmatprep.subr.mxu0 0.0
      %708 = vmatpush1.msra.mxu0 0.0
      %709 = vmatprep.subr.mxu0 0.0
      %710 = vmatpush1.msra.mxu0 0.0
      %711 = vmatprep.subr.mxu0 0.0
      %712 = vmatpush1.msra.mxu0 0.0
      %713 = vmatprep.subr.mxu0 0.0
      %714 = vmatpush1.msra.mxu0 0.0
      %715 = vmatprep.subr.mxu0 0.0
      %716 = vmatpush1.msra.mxu0 0.0
      %717 = vmatprep.subr.mxu0 0.0
      %718 = vmatpush1.msra.mxu0 0.0
      %719 = vmatprep.subr.mxu0 0.0
      %720 = vmatpush1.msra.mxu0 0.0
      %721 = vmatprep.subr.mxu0 0.0
      %722 = vmatpush1.msra.mxu0 0.0
      %723 = vmatprep.subr.mxu0 0.0
      %724 = vmatpush1.msra.mxu0 0.0
      %725 = vmatprep.subr.mxu0 0.0
      %726 = vmatpush1.msra.mxu0 0.0
      %727 = vmatprep.subr.mxu0 0.0
      %728 = vmatpush1.msra.mxu0 0.0
      %729 = vmatprep.subr.mxu0 0.0
      %730 = vmatpush1.msra.mxu0 0.0
      %731 = vmatprep.subr.mxu0 0.0
      %732 = vmatpush1.msra.mxu0 0.0
      %733 = vmatprep.subr.mxu0 0.0
      %734 = vmatpush1.msra.mxu0 0.0
      %735 = vmatprep.subr.mxu0 0.0
      %736 = vmatpush1.msra.mxu0 0.0
      %737 = vmatprep.subr.mxu0 0.0
      %738 = vmatpush1.msra.mxu0 0.0
      %739 = vmatprep.subr.mxu0 0.0
      %740 = vmatpush1.msra.mxu0 0.0
      %741 = vmatprep.subr.mxu0 0.0
      %742 = vmatpush1.msra.mxu0 0.0
      %743 = vmatprep.subr.mxu0 0.0
      %744 = vmatpush1.msra.mxu0 0.0
      %745 = vmatprep.subr.mxu0 0.0
      %746 = vmatpush1.msra.mxu0 0.0
      %747 = vmatprep.subr.mxu0 0.0
      %748 = vmatpush1.msra.mxu0 0.0
      %749 = vmatprep.subr.mxu0 0.0
      %750 = vmatpush1.msra.mxu0 0.0
      %751 = vmatprep.subr.mxu0 0.0
      %752 = vmatpush1.msra.mxu0 0.0
      %753 = vmatprep.subr.mxu0 0.0
      %754 = vmatpush1.msra.mxu0 0.0
      %755 = vmatprep.subr.mxu0 0.0
      %756 = vmatpush1.msra.mxu0 0.0
      %757 = vmatprep.subr.mxu0 0.0
      %758 = vmatpush1.msra.mxu0 0.0
      %759 = vmatprep.subr.mxu0 0.0
      %760 = vmatpush1.msra.mxu0 0.0
      %761 = vmatprep.subr.mxu0 0.0
      %762 = vmatpush1.msra.mxu0 0.0
      %763 = vmatprep.subr.mxu0 0.0
      %764 = vmatpush1.msra.mxu0 0.0
      %765 = vmatprep.mubr.f32.mxu0 0.0
      %766 = vmatmul.mubr.f32.gmra.mrb[0].mxu0 %v699
      %v767 = vpop.f32.mrb[0].mxu0
      %v768 = vadd.f32 %v243, %v767
      %v769 = vpop.f32.mrb[0].mxu0
      %770 = vdwg.mxu0
      %v771 = vadd.f32 %v695, %v768
      %v772 = vxor.u32 %v771, 2147483648
      %v773 = vmul.f32 %v772, 1.442695
      %v774 = vpow.pop %v773
      %v775 = vadd.f32 %v774, 1.0
      %v776 = vrcp.pop %v775
      %v777 = vmul.f32 1.0, %v776
      %779 = vrot.lane.b32.xlu0 %v768, 96
      %v780 = vpop.permute.xlu0 %779
      %v782 = vmul.f32 %v777, %v780
      %784 = vrot.lane.b32.xlu0 %v782, 32
      %v785 = vpop.permute.xlu0 %784
      %v787 = vadd.f32 %v695, %v785
      %v788 = vtanh.pop %v787
      %v789 = vsub.f32 1.0, %v777
      %791 = vrot.lane.b32.xlu0 %v788, 112
      %v792 = vpop.permute.xlu0 %791
      %v794 = vmul.f32 %v789, %v792
      %v795 = vmul.f32 %v777, %v691
      %v796 = vadd.f32 %v794, %v795
      %v797 = vstv %s692
      %vm798 = vcmp.lt.s32.totalorder %v797, %v233
      %v799 = vsel %vm798, 1, 0
      %800 = vset.pattern.permute.xlu0 0
      %801 = vperm.xlu0 %800, %v799
      %v802 = vpop.permute.xlu0 %801
      %vm803 = vcmp.eq.s32.totalorder %v802, 1
      %v804 = vsel %vm803, %v796, %v691
      %s805 = scalar_select %p234, 2, 5
      %s806 = smul.u32 %s805, 2
      %s807 = scalar_lea.vmem %s217, %s806
      %v808 = vld [vmem:[%s807] sm:$0x3]
      %810 = vrot.lane.b32.xlu0 %v804, 112
      %v811 = vpop.permute.xlu0 %810
      %v812 = vsel %vm245, %v811, 0
      %814 = vmatprep.subr.mxu0 0.0
      %815 = vmatpush1.msra.mxu0 %v230
      %816 = vmatprep.subr.mxu0 0.0
      %817 = vmatpush1.msra.mxu0 %v231
      %818 = vmatprep.subr.mxu0 0.0
      %819 = vmatpush1.msra.mxu0 0.0
      %820 = vmatprep.subr.mxu0 0.0
      %821 = vmatpush1.msra.mxu0 0.0
      %822 = vmatprep.subr.mxu0 0.0
      %823 = vmatpush1.msra.mxu0 0.0
      %824 = vmatprep.subr.mxu0 0.0
      %825 = vmatpush1.msra.mxu0 0.0
      %826 = vmatprep.subr.mxu0 0.0
      %827 = vmatpush1.msra.mxu0 0.0
      %828 = vmatprep.subr.mxu0 0.0
      %829 = vmatpush1.msra.mxu0 0.0
      %830 = vmatprep.subr.mxu0 0.0
      %831 = vmatpush1.msra.mxu0 0.0
      %832 = vmatprep.subr.mxu0 0.0
      %833 = vmatpush1.msra.mxu0 0.0
      %834 = vmatprep.subr.mxu0 0.0
      %835 = vmatpush1.msra.mxu0 0.0
      %836 = vmatprep.subr.mxu0 0.0
      %837 = vmatpush1.msra.mxu0 0.0
      %838 = vmatprep.subr.mxu0 0.0
      %839 = vmatpush1.msra.mxu0 0.0
      %840 = vmatprep.subr.mxu0 0.0
      %841 = vmatpush1.msra.mxu0 0.0
      %842 = vmatprep.subr.mxu0 0.0
      %843 = vmatpush1.msra.mxu0 0.0
      %844 = vmatprep.subr.mxu0 0.0
      %845 = vmatpush1.msra.mxu0 0.0
      %846 = vmatprep.subr.mxu0 0.0
      %847 = vmatpush1.msra.mxu0 0.0
      %848 = vmatprep.subr.mxu0 0.0
      %849 = vmatpush1.msra.mxu0 0.0
      %850 = vmatprep.subr.mxu0 0.0
      %851 = vmatpush1.msra.mxu0 0.0
      %852 = vmatprep.subr.mxu0 0.0
      %853 = vmatpush1.msra.mxu0 0.0
      %854 = vmatprep.subr.mxu0 0.0
      %855 = vmatpush1.msra.mxu0 0.0
      %856 = vmatprep.subr.mxu0 0.0
      %857 = vmatpush1.msra.mxu0 0.0
      %858 = vmatprep.subr.mxu0 0.0
      %859 = vmatpush1.msra.mxu0 0.0
      %860 = vmatprep.subr.mxu0 0.0
      %861 = vmatpush1.msra.mxu0 0.0
      %862 = vmatprep.subr.mxu0 0.0
      %863 = vmatpush1.msra.mxu0 0.0
      %864 = vmatprep.subr.mxu0 0.0
      %865 = vmatpush1.msra.mxu0 0.0
      %866 = vmatprep.subr.mxu0 0.0
      %867 = vmatpush1.msra.mxu0 0.0
      %868 = vmatprep.subr.mxu0 0.0
      %869 = vmatpush1.msra.mxu0 0.0
      %870 = vmatprep.subr.mxu0 0.0
      %871 = vmatpush1.msra.mxu0 0.0
      %872 = vmatprep.subr.mxu0 0.0
      %873 = vmatpush1.msra.mxu0 0.0
      %874 = vmatprep.subr.mxu0 0.0
      %875 = vmatpush1.msra.mxu0 0.0
      %876 = vmatprep.subr.mxu0 0.0
      %877 = vmatpush1.msra.mxu0 0.0
      %878 = vmatprep.mubr.f32.mxu0 0.0
      %879 = vmatmul.mubr.f32.gmra.mrb[0].mxu0 %v812
      %v880 = vpop.f32.mrb[0].mxu0
      %v881 = vadd.f32 %v243, %v880
      %v882 = vpop.f32.mrb[0].mxu0
      %883 = vdwg.mxu0
      %v884 = vadd.f32 %v808, %v881
      %v885 = vxor.u32 %v884, 2147483648
      %v886 = vmul.f32 %v885, 1.442695
      %v887 = vpow.pop %v886
      %v888 = vadd.f32 %v887, 1.0
      %v889 = vrcp.pop %v888
      %v890 = vmul.f32 1.0, %v889
      %892 = vrot.lane.b32.xlu0 %v881, 96
      %v893 = vpop.permute.xlu0 %892
      %v895 = vmul.f32 %v890, %v893
      %897 = vrot.lane.b32.xlu0 %v895, 32
      %v898 = vpop.permute.xlu0 %897
      %v900 = vadd.f32 %v808, %v898
      %v901 = vtanh.pop %v900
      %v902 = vsub.f32 1.0, %v890
      %904 = vrot.lane.b32.xlu0 %v901, 112
      %v905 = vpop.permute.xlu0 %904
      %v907 = vmul.f32 %v902, %v905
      %v908 = vmul.f32 %v890, %v804
      %v909 = vadd.f32 %v907, %v908
      %v910 = vstv %s805
      %vm911 = vcmp.lt.s32.totalorder %v910, %v233
      %v912 = vsel %vm911, 1, 0
      %913 = vset.pattern.permute.xlu0 0
      %914 = vperm.xlu0 %913, %v912
      %v915 = vpop.permute.xlu0 %914
      %vm916 = vcmp.eq.s32.totalorder %v915, 1
      %v917 = vsel %vm916, %v909, %v804
      %s918 = scalar_select %p234, 1, 6
      %s919 = smul.u32 %s918, 2
      %s920 = scalar_lea.vmem %s217, %s919
      %v921 = vld [vmem:[%s920] sm:$0x3]
      %923 = vrot.lane.b32.xlu0 %v917, 112
      %v924 = vpop.permute.xlu0 %923
      %v925 = vsel %vm245, %v924, 0
      %927 = vmatprep.subr.mxu0 0.0
      %928 = vmatpush1.msra.mxu0 %v230
      %929 = vmatprep.subr.mxu0 0.0
      %930 = vmatpush1.msra.mxu0 %v231
      %931 = vmatprep.subr.mxu0 0.0
      %932 = vmatpush1.msra.mxu0 0.0
      %933 = vmatprep.subr.mxu0 0.0
      %934 = vmatpush1.msra.mxu0 0.0
      %935 = vmatprep.subr.mxu0 0.0
      %936 = vmatpush1.msra.mxu0 0.0
      %937 = vmatprep.subr.mxu0 0.0
      %938 = vmatpush1.msra.mxu0 0.0
      %939 = vmatprep.subr.mxu0 0.0
      %940 = vmatpush1.msra.mxu0 0.0
      %941 = vmatprep.subr.mxu0 0.0
      %942 = vmatpush1.msra.mxu0 0.0
      %943 = vmatprep.subr.mxu0 0.0
      %944 = vmatpush1.msra.mxu0 0.0
      %945 = vmatprep.subr.mxu0 0.0
      %946 = vmatpush1.msra.mxu0 0.0
      %947 = vmatprep.subr.mxu0 0.0
      %948 = vmatpush1.msra.mxu0 0.0
      %949 = vmatprep.subr.mxu0 0.0
      %950 = vmatpush1.msra.mxu0 0.0
      %951 = vmatprep.subr.mxu0 0.0
      %952 = vmatpush1.msra.mxu0 0.0
      %953 = vmatprep.subr.mxu0 0.0
      %954 = vmatpush1.msra.mxu0 0.0
      %955 = vmatprep.subr.mxu0 0.0
      %956 = vmatpush1.msra.mxu0 0.0
      %957 = vmatprep.subr.mxu0 0.0
      %958 = vmatpush1.msra.mxu0 0.0
      %959 = vmatprep.subr.mxu0 0.0
      %960 = vmatpush1.msra.mxu0 0.0
      %961 = vmatprep.subr.mxu0 0.0
      %962 = vmatpush1.msra.mxu0 0.0
      %963 = vmatprep.subr.mxu0 0.0
      %964 = vmatpush1.msra.mxu0 0.0
      %965 = vmatprep.subr.mxu0 0.0
      %966 = vmatpush1.msra.mxu0 0.0
      %967 = vmatprep.subr.mxu0 0.0
      %968 = vmatpush1.msra.mxu0 0.0
      %969 = vmatprep.subr.mxu0 0.0
      %970 = vmatpush1.msra.mxu0 0.0
      %971 = vmatprep.subr.mxu0 0.0
      %972 = vmatpush1.msra.mxu0 0.0
      %973 = vmatprep.subr.mxu0 0.0
      %974 = vmatpush1.msra.mxu0 0.0
      %975 = vmatprep.subr.mxu0 0.0
      %976 = vmatpush1.msra.mxu0 0.0
      %977 = vmatprep.subr.mxu0 0.0
      %978 = vmatpush1.msra.mxu0 0.0
      %979 = vmatprep.subr.mxu0 0.0
      %980 = vmatpush1.msra.mxu0 0.0
      %981 = vmatprep.subr.mxu0 0.0
      %982 = vmatpush1.msra.mxu0 0.0
      %983 = vmatprep.subr.mxu0 0.0
      %984 = vmatpush1.msra.mxu0 0.0
      %985 = vmatprep.subr.mxu0 0.0
      %986 = vmatpush1.msra.mxu0 0.0
      %987 = vmatprep.subr.mxu0 0.0
      %988 = vmatpush1.msra.mxu0 0.0
      %989 = vmatprep.subr.mxu0 0.0
      %990 = vmatpush1.msra.mxu0 0.0
      %991 = vmatprep.mubr.f32.mxu0 0.0
      %992 = vmatmul.mubr.f32.gmra.mrb[0].mxu0 %v925
      %v993 = vpop.f32.mrb[0].mxu0
      %v994 = vadd.f32 %v243, %v993
      %v995 = vpop.f32.mrb[0].mxu0
      %996 = vdwg.mxu0
      %v997 = vadd.f32 %v921, %v994
      %v998 = vxor.u32 %v997, 2147483648
      %v999 = vmul.f32 %v998, 1.442695
      %v1000 = vpow.pop %v999
      %v1001 = vadd.f32 %v1000, 1.0
      %v1002 = vrcp.pop %v1001
      %v1003 = vmul.f32 1.0, %v1002
      %1005 = vrot.lane.b32.xlu0 %v994, 96
      %v1006 = vpop.permute.xlu0 %1005
      %v1008 = vmul.f32 %v1003, %v1006
      %1010 = vrot.lane.b32.xlu0 %v1008, 32
      %v1011 = vpop.permute.xlu0 %1010
      %v1013 = vadd.f32 %v921, %v1011
      %v1014 = vtanh.pop %v1013
      %v1015 = vsub.f32 1.0, %v1003
      %1017 = vrot.lane.b32.xlu0 %v1014, 112
      %v1018 = vpop.permute.xlu0 %1017
      %v1020 = vmul.f32 %v1015, %v1018
      %v1021 = vmul.f32 %v1003, %v917
      %v1022 = vadd.f32 %v1020, %v1021
      %v1023 = vstv %s918
      %vm1024 = vcmp.lt.s32.totalorder %v1023, %v233
      %v1025 = vsel %vm1024, 1, 0
      %1026 = vset.pattern.permute.xlu0 0
      %1027 = vperm.xlu0 %1026, %v1025
      %v1028 = vpop.permute.xlu0 %1027
      %vm1029 = vcmp.eq.s32.totalorder %v1028, 1
      %v1030 = vsel %vm1029, %v1022, %v917
      %s1031 = scalar_select %p234, 0, 7
      %s1032 = smul.u32 %s1031, 2
      %s1033 = scalar_lea.vmem %s217, %s1032
      %v1034 = vld [vmem:[%s1033] sm:$0x3]
      %1036 = vrot.lane.b32.xlu0 %v1030, 112
      %v1037 = vpop.permute.xlu0 %1036
      %v1038 = vsel %vm245, %v1037, 0
      %1040 = vmatprep.subr.mxu0 0.0
      %1041 = vmatpush1.msra.mxu0 %v230
      %1042 = vmatprep.subr.mxu0 0.0
      %1043 = vmatpush1.msra.mxu0 %v231
      %1044 = vmatprep.subr.mxu0 0.0
      %1045 = vmatpush1.msra.mxu0 0.0
      %1046 = vmatprep.subr.mxu0 0.0
      %1047 = vmatpush1.msra.mxu0 0.0
      %1048 = vmatprep.subr.mxu0 0.0
      %1049 = vmatpush1.msra.mxu0 0.0
      %1050 = vmatprep.subr.mxu0 0.0
      %1051 = vmatpush1.msra.mxu0 0.0
      %1052 = vmatprep.subr.mxu0 0.0
      %1053 = vmatpush1.msra.mxu0 0.0
      %1054 = vmatprep.subr.mxu0 0.0
      %1055 = vmatpush1.msra.mxu0 0.0
      %1056 = vmatprep.subr.mxu0 0.0
      %1057 = vmatpush1.msra.mxu0 0.0
      %1058 = vmatprep.subr.mxu0 0.0
      %1059 = vmatpush1.msra.mxu0 0.0
      %1060 = vmatprep.subr.mxu0 0.0
      %1061 = vmatpush1.msra.mxu0 0.0
      %1062 = vmatprep.subr.mxu0 0.0
      %1063 = vmatpush1.msra.mxu0 0.0
      %1064 = vmatprep.subr.mxu0 0.0
      %1065 = vmatpush1.msra.mxu0 0.0
      %1066 = vmatprep.subr.mxu0 0.0
      %1067 = vmatpush1.msra.mxu0 0.0
      %1068 = vmatprep.subr.mxu0 0.0
      %1069 = vmatpush1.msra.mxu0 0.0
      %1070 = vmatprep.subr.mxu0 0.0
      %1071 = vmatpush1.msra.mxu0 0.0
      %1072 = vmatprep.subr.mxu0 0.0
      %1073 = vmatpush1.msra.mxu0 0.0
      %1074 = vmatprep.subr.mxu0 0.0
      %1075 = vmatpush1.msra.mxu0 0.0
      %1076 = vmatprep.subr.mxu0 0.0
      %1077 = vmatpush1.msra.mxu0 0.0
      %1078 = vmatprep.subr.mxu0 0.0
      %1079 = vmatpush1.msra.mxu0 0.0
      %1080 = vmatprep.subr.mxu0 0.0
      %1081 = vmatpush1.msra.mxu0 0.0
      %1082 = vmatprep.subr.mxu0 0.0
      %1083 = vmatpush1.msra.mxu0 0.0
      %1084 = vmatprep.subr.mxu0 0.0
      %1085 = vmatpush1.msra.mxu0 0.0
      %1086 = vmatprep.subr.mxu0 0.0
      %1087 = vmatpush1.msra.mxu0 0.0
      %1088 = vmatprep.subr.mxu0 0.0
      %1089 = vmatpush1.msra.mxu0 0.0
      %1090 = vmatprep.subr.mxu0 0.0
      %1091 = vmatpush1.msra.mxu0 0.0
      %1092 = vmatprep.subr.mxu0 0.0
      %1093 = vmatpush1.msra.mxu0 0.0
      %1094 = vmatprep.subr.mxu0 0.0
      %1095 = vmatpush1.msra.mxu0 0.0
      %1096 = vmatprep.subr.mxu0 0.0
      %1097 = vmatpush1.msra.mxu0 0.0
      %1098 = vmatprep.subr.mxu0 0.0
      %1099 = vmatpush1.msra.mxu0 0.0
      %1100 = vmatprep.subr.mxu0 0.0
      %1101 = vmatpush1.msra.mxu0 0.0
      %1102 = vmatprep.subr.mxu0 0.0
      %1103 = vmatpush1.msra.mxu0 0.0
      %1104 = vmatprep.mubr.f32.mxu0 0.0
      %1105 = vmatmul.mubr.f32.gmra.mrb[0].mxu0 %v1038
      %v1106 = vpop.f32.mrb[0].mxu0
      %v1107 = vadd.f32 %v243, %v1106
      %v1108 = vpop.f32.mrb[0].mxu0
      %1109 = vdwg.mxu0
      %v1110 = vadd.f32 %v1034, %v1107
      %v1111 = vxor.u32 %v1110, 2147483648
      %v1112 = vmul.f32 %v1111, 1.442695
      %v1113 = vpow.pop %v1112
      %v1114 = vadd.f32 %v1113, 1.0
      %v1115 = vrcp.pop %v1114
      %v1116 = vmul.f32 1.0, %v1115
      %1118 = vrot.lane.b32.xlu0 %v1107, 96
      %v1119 = vpop.permute.xlu0 %1118
      %v1121 = vmul.f32 %v1116, %v1119
      %1123 = vrot.lane.b32.xlu0 %v1121, 32
      %v1124 = vpop.permute.xlu0 %1123
      %v1126 = vadd.f32 %v1034, %v1124
      %v1127 = vtanh.pop %v1126
      %v1128 = vsub.f32 1.0, %v1116
      %1130 = vrot.lane.b32.xlu0 %v1127, 112
      %v1131 = vpop.permute.xlu0 %1130
      %v1133 = vmul.f32 %v1128, %v1131
      %v1134 = vmul.f32 %v1116, %v1030
      %v1135 = vadd.f32 %v1133, %v1134
      %v1136 = vstv %s1031
      %vm1137 = vcmp.lt.s32.totalorder %v1136, %v233
      %v1138 = vsel %vm1137, 1, 0
      %1139 = vset.pattern.permute.xlu0 0
      %1140 = vperm.xlu0 %1139, %v1138
      %v1141 = vpop.permute.xlu0 %1140
      %vm1142 = vcmp.eq.s32.totalorder %v1141, 1
      %v1143 = vsel %vm1142, %v1135, %v1030
      %1145 = vrot.lane.b32.xlu0 %v1143, 112
      %v1146 = vpop.permute.xlu0 %1145
      %vm1148 = vcmask 123904
      %1149 = vst.msk [vmem:[%s229] sm:$0x3] %vm1148, %v1146
      %p1150 = scmp.lt.s32.totalorder %s15, 1
      %s1151 = scalar_select %p1150, %s15, 1
      %s1152 = smul.addr %s1151, 2
      %s1153 = scalar_lea.vmem %s4, %s1152
      // Predicated region
      $region37: #{sden_forward.15} parent=35 // pred_check
        %p1154 = pneg %p132
      $region38: #{sden_forward.15} parent=35 // pred_check_branch
        %1156 = sbr.rel (%p1154) target = $region40
      $region39: #{sden_forward.15} parent=35 // pred_region
        _
      $region40: #{sden_forward.15} parent=35 // pred_fallthru
        _
    $region36: #{sden_forward.15} parent=5 // pred_fallthru
      _
    %p1157 = scmp.le.s32.totalorder 2, %s10
    // Predicated region
    $region41: #{sden_forward.15} parent=5 // pred_check
      %p1158 = pneg %p1157
    $region42: #{sden_forward.15} parent=5 // pred_check_branch
      %1160 = sbr.rel (%p1158) target = $region44
    $region43: #{sden_forward.15} parent=5 // pred_region
      %s1161 = ssub.s32 %s10, 2
      // Predicated region
      $region45: #{sden_forward.15} parent=43 // pred_check
        %p1162 = pneg %p138
      $region46: #{sden_forward.15} parent=43 // pred_check_branch
        %1164 = sbr.rel (%p1162) target = $region48
      $region47: #{sden_forward.15} parent=43 // pred_region
        %p1165 = scmp.lt.s32.totalorder %s16, 1
        %s1166 = scalar_select %p1165, %s16, 1
        %s1167 = smul.addr %s1166, 2
        %s1168 = scalar_lea.vmem %s4, %s1167
      $region48: #{sden_forward.15} parent=43 // pred_fallthru
        _
    $region44: #{sden_forward.15} parent=5 // pred_fallthru
      _
  $region6: #{sden_forward.15} parent=0 // loop_footer
    %s14 = sadd.s32 1, %s10
  $region7: #{sden_forward.15} parent=0 // loop_footer_branch
    %9 = sbr.rel target = $region3
  $region8: #{sden_forward.15} parent=0 // loop_exit
    _

// kernel: sden_forward.16
$region0: #{sden_forward.16}
  #allocation0 [shape = 'u32[]', space=smem, size = 0x4, offset = 0x4, fixed_abs, tag = 'smem constant byte address 0x4 - core index']
  #allocation1 [shape = 'u32[144,128]{1,0:T(1,128)}', space=vmem, size = 0x12000, scoped, tag = 'internal scratch']
  %s0 = inlined_call_operand.vmem [shape: f32[6,64], index: 0, kind: input, shape index: {}]
  %s1 = inlined_call_operand.vmem [shape: bf16[64,32], index: 1, kind: input, shape index: {}]
  %s2 = inlined_call_operand.vmem [shape: f32[1,32], index: 2, kind: input, shape index: {}]
  %s3 = inlined_call_operand.vmem [shape: bf16[32,192], index: 3, kind: input, shape index: {}]
  %s4 = inlined_call_operand.vmem [shape: f32[1,192], index: 4, kind: input, shape index: {}]
  %s5 = inlined_call_operand.vmem [shape: f32[6,192], index: 5, kind: output, shape index: {}]
  %s6 = sld [smem:[#allocation0]]
  $region30: #{sden_forward.16} parent=0
    _
  %s8 = ssub.s32 1, %s6
  %s9 = scalar_select 0, %s8, %s6
  // Predicated region
  $region2: #{sden_forward.16} parent=0 // pred_check
    _
  $region3: #{sden_forward.16} parent=0 // pred_check_branch
    %11 = sbr.rel (0) target = $region5
  $region4: #{sden_forward.16} parent=0 // pred_region
    _
  $region5: #{sden_forward.16} parent=0 // pred_fallthru
    _
  // Predicated region
  $region6: #{sden_forward.16} parent=0 // pred_check
    _
  $region7: #{sden_forward.16} parent=0 // pred_check_branch
    %13 = sbr.rel (0) target = $region9
  $region8: #{sden_forward.16} parent=0 // pred_region
    _
  $region9: #{sden_forward.16} parent=0 // pred_fallthru
    _
  // Predicated region
  $region10: #{sden_forward.16} parent=0 // pred_check
    _
  $region11: #{sden_forward.16} parent=0 // pred_check_branch
    %15 = sbr.rel (0) target = $region13
  $region12: #{sden_forward.16} parent=0 // pred_region
    _
  $region13: #{sden_forward.16} parent=0 // pred_fallthru
    _
  // Predicated region
  $region14: #{sden_forward.16} parent=0 // pred_check
    _
  $region15: #{sden_forward.16} parent=0 // pred_check_branch
    %17 = sbr.rel (0) target = $region17
  $region16: #{sden_forward.16} parent=0 // pred_region
    _
  $region17: #{sden_forward.16} parent=0 // pred_fallthru
    _
  // Predicated region
  $region18: #{sden_forward.16} parent=0 // pred_check
    _
  $region19: #{sden_forward.16} parent=0 // pred_check_branch
    %19 = sbr.rel (0) target = $region21
  $region20: #{sden_forward.16} parent=0 // pred_region
    _
  $region21: #{sden_forward.16} parent=0 // pred_fallthru
    _
  %v21 = vld [vmem:[%s0] sm:$0x3f]
  %v22 = vpack.c.bf16 %v21, %v21
  %v23 = vld [vmem:[%s1] sm:$0xf]
  %v24 = vld [vmem:[%s1 + $0x4] sm:$0xf]
  %v25 = vld [vmem:[%s1 + $0x8] sm:$0xf]
  %v26 = vld [vmem:[%s1 + $0xc] sm:$0xf]
  %v27 = vld [vmem:[%s1 + $0x10] sm:$0xf]
  %v28 = vld [vmem:[%s1 + $0x14] sm:$0xf]
  %v29 = vld [vmem:[%s1 + $0x18] sm:$0xf]
  %v30 = vld [vmem:[%s1 + $0x1c] sm:$0xf]
  %v31 = vld [vmem:[%s2] sm:$0x1]
  %v33 = vlaneseq
  %v34 = vshrl.u32 %v33, 7
  %v35 = vsub.s32 0, %v34
  %v36 = vrot.slane %v31, %v35
  %v46 = vunpack.c.l.b16 %v23
  %v47 = vunpack.c.l.b16 %v24
  %v48 = vunpack.c.l.b16 %v25
  %v49 = vunpack.c.l.b16 %v26
  %v50 = vunpack.c.l.b16 %v27
  %v51 = vunpack.c.l.b16 %v28
  %v52 = vunpack.c.l.b16 %v29
  %v53 = vunpack.c.l.b16 %v30
  %v54 = vpack.c.b16 %v47, %v46
  %v55 = vpack.c.b16 %v49, %v48
  %v56 = vpack.c.b16 %v51, %v50
  %v57 = vpack.c.b16 %v53, %v52
  %vm62 = vcmask 523264
  %v64 = vsel %vm62, %v22, 0
  %66 = vmatprep.subr.bf16.mxu0 0
  %67 = vmatpush1.bf16.msra.mxu0 %v54
  %68 = vmatprep.subr.bf16.mxu0 0
  %69 = vmatpush1.bf16.msra.mxu0 %v55
  %70 = vmatprep.subr.bf16.mxu0 0
  %71 = vmatpush1.bf16.msra.mxu0 %v56
  %72 = vmatprep.subr.bf16.mxu0 0
  %73 = vmatpush1.bf16.msra.mxu0 %v57
  %74 = vmatprep.subr.bf16.mxu0 0
  %75 = vmatpush1.bf16.msra.mxu0 0
  %76 = vmatprep.subr.bf16.mxu0 0
  %77 = vmatpush1.bf16.msra.mxu0 0
  %78 = vmatprep.subr.bf16.mxu0 0
  %79 = vmatpush1.bf16.msra.mxu0 0
  %80 = vmatprep.subr.bf16.mxu0 0
  %81 = vmatpush1.bf16.msra.mxu0 0
  %82 = vmatprep.subr.bf16.mxu0 0
  %83 = vmatpush1.bf16.msra.mxu0 0
  %84 = vmatprep.subr.bf16.mxu0 0
  %85 = vmatpush1.bf16.msra.mxu0 0
  %86 = vmatprep.subr.bf16.mxu0 0
  %87 = vmatpush1.bf16.msra.mxu0 0
  %88 = vmatprep.subr.bf16.mxu0 0
  %89 = vmatpush1.bf16.msra.mxu0 0
  %90 = vmatprep.subr.bf16.mxu0 0
  %91 = vmatpush1.bf16.msra.mxu0 0
  %92 = vmatprep.subr.bf16.mxu0 0
  %93 = vmatpush1.bf16.msra.mxu0 0
  %94 = vmatprep.subr.bf16.mxu0 0
  %95 = vmatpush1.bf16.msra.mxu0 0
  %96 = vmatprep.subr.bf16.mxu0 0
  %97 = vmatpush1.bf16.msra.mxu0 0
  %98 = vmatprep.mubr.bf16.mxu0 0
  %99 = vmatmul.mubr.bf16.gmra.mrb[0].mxu0 %v64
  %v100 = vpop.f32.mrb[0].mxu0
  %v101 = vadd.f32 %v36, %v100
  %v102 = vpop.f32.mrb[0].mxu0
  %v103 = vpop.f32.mrb[0].mxu0
  %v104 = vpop.f32.mrb[0].mxu0
  %105 = vdwg.mxu0
  %v106 = vxor.u32 %v101, 2147483648
  %v107 = vmul.f32 %v106, 1.442695
  %v108 = vpow.pop %v107
  %v109 = vadd.f32 %v108, 1.0
  %v110 = vrcp.pop %v109
  %v111 = vmul.f32 1.0, %v110
  %v112 = vpack.c.bf16 %v111, %v111
  %v113 = vld [vmem:[%s3] sm:$0xff]
  %v114 = vld [vmem:[%s3 + $0x8] sm:$0xff]
  %v115 = vld [vmem:[%s3 + $0x10] sm:$0xff]
  %v116 = vld [vmem:[%s3 + $0x18] sm:$0xff]
  %v117 = vld [vmem:[%s4] sm:$0x3]
  %v119 = vlaneseq
  %v120 = vshrl.u32 %v119, 7
  %v121 = vsub.s32 0, %v120
  %v122 = vrot.slane %v117, %v121
  %v123 = vlaneseq
  %v124 = vshrl.u32 %v123, 7
  %v125 = vsub.s32 1, %v124
  %v126 = vrot.slane %v117, %v125
  %v133 = vunpack.c.l.b16 %v113
  %v134 = vunpack.c.h.b16 %v113
  %v135 = vunpack.c.l.b16 %v114
  %v136 = vunpack.c.h.b16 %v114
  %v137 = vunpack.c.l.b16 %v115
  %v138 = vunpack.c.h.b16 %v115
  %v139 = vunpack.c.l.b16 %v116
  %v140 = vunpack.c.h.b16 %v116
  %v141 = vpack.c.b16 %v135, %v133
  %v142 = vpack.c.b16 %v136, %v134
  %v143 = vpack.c.b16 %v139, %v137
  %v144 = vpack.c.b16 %v140, %v138
  %vm149 = vcmask 261120
  %v151 = vsel %vm149, %v112, 0
  %153 = vmatprep.subr.bf16.mxu0 %v142
  %154 = vmatpush1.bf16.msra.mxu0 %v141
  %155 = vmatprep.subr.bf16.mxu0 %v144
  %156 = vmatpush1.bf16.msra.mxu0 %v143
  %157 = vmatprep.subr.bf16.mxu0 0
  %158 = vmatpush1.bf16.msra.mxu0 0
  %159 = vmatprep.subr.bf16.mxu0 0
  %160 = vmatpush1.bf16.msra.mxu0 0
  %161 = vmatprep.subr.bf16.mxu0 0
  %162 = vmatpush1.bf16.msra.mxu0 0
  %163 = vmatprep.subr.bf16.mxu0 0
  %164 = vmatpush1.bf16.msra.mxu0 0
  %165 = vmatprep.subr.bf16.mxu0 0
  %166 = vmatpush1.bf16.msra.mxu0 0
  %167 = vmatprep.subr.bf16.mxu0 0
  %168 = vmatpush1.bf16.msra.mxu0 0
  %169 = vmatprep.subr.bf16.mxu0 0
  %170 = vmatpush1.bf16.msra.mxu0 0
  %171 = vmatprep.subr.bf16.mxu0 0
  %172 = vmatpush1.bf16.msra.mxu0 0
  %173 = vmatprep.subr.bf16.mxu0 0
  %174 = vmatpush1.bf16.msra.mxu0 0
  %175 = vmatprep.subr.bf16.mxu0 0
  %176 = vmatpush1.bf16.msra.mxu0 0
  %177 = vmatprep.subr.bf16.mxu0 0
  %178 = vmatpush1.bf16.msra.mxu0 0
  %179 = vmatprep.subr.bf16.mxu0 0
  %180 = vmatpush1.bf16.msra.mxu0 0
  %181 = vmatprep.subr.bf16.mxu0 0
  %182 = vmatpush1.bf16.msra.mxu0 0
  %183 = vmatprep.subr.bf16.mxu0 0
  %184 = vmatpush1.bf16.msra.mxu0 0
  %185 = vmatprep.mubr.bf16.mxu0 0
  %186 = vmatmul.mubr.bf16.gmra.mrb[0].mxu0 %v151
  %v187 = vpop.f32.mrb[0].mxu0
  %v188 = vadd.f32 %v122, %v187
  %v189 = vpop.f32.mrb[0].mxu0
  %v190 = vadd.f32 %v126, %v189
  %v191 = vpop.f32.mrb[0].mxu0
  %v192 = vpop.f32.mrb[0].mxu0
  %193 = vdwg.mxu0
  %194 = vst [vmem:[%s5] sm:$0x3f] %v188
  %vm195 = vcmask 521216
  %196 = vst.msk [vmem:[%s5 + $0x8] sm:$0x3f] %vm195, %v190
  // Predicated region
  $region22: #{sden_forward.16} parent=0 // pred_check
    _
  $region23: #{sden_forward.16} parent=0 // pred_check_branch
    %198 = sbr.rel (0) target = $region25
  $region24: #{sden_forward.16} parent=0 // pred_region
    _
  $region25: #{sden_forward.16} parent=0 // pred_fallthru
    _
  // Predicated region
  $region26: #{sden_forward.16} parent=0 // pred_check
    _
  $region27: #{sden_forward.16} parent=0 // pred_check_branch
    %200 = sbr.rel (0) target = $region29
  $region28: #{sden_forward.16} parent=0 // pred_region
    _
  $region29: #{sden_forward.16} parent=0 // pred_fallthru
    _

// kernel: sden_forward.13
$region0: #{sden_forward.13}
  #allocation0 [shape = 'u32[]', space=smem, size = 0x4, offset = 0x4, fixed_abs, tag = 'smem constant byte address 0x4 - core index']
  #allocation1 [shape = 'u32[144,128]{1,0:T(1,128)}', space=vmem, size = 0x12000, scoped, tag = 'internal scratch']
  %s0 = inlined_call_operand.vmem [shape: f32[2,8,6,48], index: 0, kind: input, shape index: {}]
  %s1 = inlined_call_operand.vmem [shape: f32[2,16,48], index: 1, kind: input, shape index: {}]
  %s2 = inlined_call_operand.vmem [shape: f32[2,1,48], index: 2, kind: input, shape index: {}]
  %s3 = inlined_call_operand.vmem [shape: s32[6,1], index: 3, kind: input, shape index: {}]
  %s4 = inlined_call_operand.vmem [shape: f32[2,6,16], index: 4, kind: output, shape index: {}]
  %s5 = sld [smem:[#allocation0]]
  $region49: #{sden_forward.13} parent=0
    _
  %s7 = ssub.s32 1, %s5
  %s8 = scalar_select 0, %s7, %s5
  loop: start=0, step=1, limit=4
  $region2: #{sden_forward.13} parent=0 // loop_pre_header
    _
  $region3: #{sden_forward.13} parent=0 // loop_header
    %s10 = sphi 0, %s14
    %p11 = scmp.ge.s32.totalorder %s10, 4
    %s20 = sphi 0, %s22
    %s23 = sphi 0, %s20
    %s24 = sphi 0, %s23
    %s40 = sphi 0, %s24
    %s46 = sphi 0, %s48
    %s49 = sphi 0, %s46
    %s50 = sphi 0, %s49
    %s66 = sphi 0, %s50
    %s72 = sphi 0, %s74
    %s75 = sphi 0, %s72
    %s76 = sphi 0, %s75
    %s92 = sphi 0, %s76
    %s96 = sphi 0, %s96
    %s98 = sphi 0, %s96
    %s99 = sphi 0, %s98
    %s113 = sphi 0, %s99
    %s119 = sphi 0, %s121
    %s122 = sphi 0, %s119
    %s123 = sphi 0, %s122
    %s139 = sphi 0, %s123
  $region4: #{sden_forward.13} parent=0 // loop_header_branch
    %13 = sbr.rel (%p11) target = $region8
  $region5: #{sden_forward.13} parent=0 // loop_body
    %s15 = ssub.s32 %s10, 1
    %s16 = ssub.s32 %s10, 2
    %s17 = sadd.s32 %s10, 1
    %s18 = ssub.s32 %s10, %s17
    %p19 = scmp.eq.s32.totalorder %s18, 0
    %s21 = sadd.s32 %s20, 1
    %s22 = scalar_select %p19, %s20, %s21
    %p25 = pneg %p19
    %p26 = scmp.eq.s32.totalorder %s10, 1
    %p27 = por %p25, %p26
    %p28 = scmp.ne.s32.totalorder %s20, %s23
    %p29 = scmp.eq.s32.totalorder %s10, 0
    %p30 = por %p28, %p29
    %p31 = scmp.ne.s32.totalorder %s20, %s23
    %p32 = scmp.eq.s32.totalorder %s15, 1
    %p33 = por %p31, %p32
    %p34 = scmp.ne.s32.totalorder %s23, %s24
    %p35 = scmp.eq.s32.totalorder %s15, 0
    %p36 = por %p34, %p35
    %p37 = scmp.ne.s32.totalorder %s23, %s24
    %p38 = scmp.eq.s32.totalorder %s16, 1
    %p39 = por %p37, %p38
    %p41 = scmp.ne.s32.totalorder %s24, %s40
    %p42 = scmp.eq.s32.totalorder %s16, 0
    %p43 = por %p41, %p42
    %s44 = ssub.s32 %s10, %s17
    %p45 = scmp.eq.s32.totalorder %s44, 0
    %s47 = sadd.s32 %s46, 1
    %s48 = scalar_select %p45, %s46, %s47
    %p51 = pneg %p45
    %p52 = scmp.eq.s32.totalorder %s10, 1
    %p53 = por %p51, %p52
    %p54 = scmp.ne.s32.totalorder %s46, %s49
    %p55 = scmp.eq.s32.totalorder %s10, 0
    %p56 = por %p54, %p55
    %p57 = scmp.ne.s32.totalorder %s46, %s49
    %p58 = scmp.eq.s32.totalorder %s15, 1
    %p59 = por %p57, %p58
    %p60 = scmp.ne.s32.totalorder %s49, %s50
    %p61 = scmp.eq.s32.totalorder %s15, 0
    %p62 = por %p60, %p61
    %p63 = scmp.ne.s32.totalorder %s49, %s50
    %p64 = scmp.eq.s32.totalorder %s16, 1
    %p65 = por %p63, %p64
    %p67 = scmp.ne.s32.totalorder %s50, %s66
    %p68 = scmp.eq.s32.totalorder %s16, 0
    %p69 = por %p67, %p68
    %s70 = ssub.s32 %s10, %s17
    %p71 = scmp.eq.s32.totalorder %s70, 0
    %s73 = sadd.s32 %s72, 1
    %s74 = scalar_select %p71, %s72, %s73
    %p77 = pneg %p71
    %p78 = scmp.eq.s32.totalorder %s10, 1
    %p79 = por %p77, %p78
    %p80 = scmp.ne.s32.totalorder %s72, %s75
    %p81 = scmp.eq.s32.totalorder %s10, 0
    %p82 = por %p80, %p81
    %p83 = scmp.ne.s32.totalorder %s72, %s75
    %p84 = scmp.eq.s32.totalorder %s15, 1
    %p85 = por %p83, %p84
    %p86 = scmp.ne.s32.totalorder %s75, %s76
    %p87 = scmp.eq.s32.totalorder %s15, 0
    %p88 = por %p86, %p87
    %p89 = scmp.ne.s32.totalorder %s75, %s76
    %p90 = scmp.eq.s32.totalorder %s16, 1
    %p91 = por %p89, %p90
    %p93 = scmp.ne.s32.totalorder %s76, %s92
    %p94 = scmp.eq.s32.totalorder %s16, 0
    %p95 = por %p93, %p94
    %s97 = sadd.s32 %s96, 1
    %p100 = scmp.eq.s32.totalorder %s10, 1
    %p101 = scmp.ne.s32.totalorder %s96, %s98
    %p102 = scmp.eq.s32.totalorder %s10, 0
    %p103 = por %p101, %p102
    %p104 = scmp.ne.s32.totalorder %s96, %s98
    %p105 = scmp.eq.s32.totalorder %s15, 1
    %p106 = por %p104, %p105
    %p107 = scmp.ne.s32.totalorder %s98, %s99
    %p108 = scmp.eq.s32.totalorder %s15, 0
    %p109 = por %p107, %p108
    %p110 = scmp.ne.s32.totalorder %s98, %s99
    %p111 = scmp.eq.s32.totalorder %s16, 1
    %p112 = por %p110, %p111
    %p114 = scmp.ne.s32.totalorder %s99, %s113
    %p115 = scmp.eq.s32.totalorder %s16, 0
    %p116 = por %p114, %p115
    %s117 = ssub.s32 %s10, %s17
    %p118 = scmp.eq.s32.totalorder %s117, 0
    %s120 = sadd.s32 %s119, 1
    %s121 = scalar_select %p118, %s119, %s120
    %p124 = pneg %p118
    %p125 = scmp.eq.s32.totalorder %s10, 1
    %p126 = por %p124, %p125
    %p127 = scmp.ne.s32.totalorder %s119, %s122
    %p128 = scmp.eq.s32.totalorder %s10, 0
    %p129 = por %p127, %p128
    %p130 = scmp.ne.s32.totalorder %s119, %s122
    %p131 = scmp.eq.s32.totalorder %s15, 1
    %p132 = por %p130, %p131
    %p133 = scmp.ne.s32.totalorder %s122, %s123
    %p134 = scmp.eq.s32.totalorder %s15, 0
    %p135 = por %p133, %p134
    %p136 = scmp.ne.s32.totalorder %s122, %s123
    %p137 = scmp.eq.s32.totalorder %s16, 1
    %p138 = por %p136, %p137
    %p140 = scmp.ne.s32.totalorder %s123, %s139
    %p141 = scmp.eq.s32.totalorder %s16, 0
    %p142 = por %p140, %p141
    %p143 = scmp.le.s32.totalorder 1, %s10
    %p144 = scmp.lt.s32.totalorder %s10, 3
    %p145 = pnand %p143, %p144
    %p146 = pneg %p145
    // Predicated region
    $region9: #{sden_forward.13} parent=5 // pred_check
      _
    $region10: #{sden_forward.13} parent=5 // pred_check_branch
      %148 = sbr.rel (%p145) target = $region12
    $region11: #{sden_forward.13} parent=5 // pred_region
      %s149 = ssub.s32 %s10, 1
      // Predicated region
      $region13: #{sden_forward.13} parent=11 // pred_check
        %p150 = pneg %p109
      $region14: #{sden_forward.13} parent=11 // pred_check_branch
        %152 = sbr.rel (%p150) target = $region16
      $region15: #{sden_forward.13} parent=11 // pred_region
        _
      $region16: #{sden_forward.13} parent=11 // pred_fallthru
        _
    $region12: #{sden_forward.13} parent=5 // pred_fallthru
      _
    %p153 = scmp.lt.s32.totalorder %s10, 2
    // Predicated region
    $region17: #{sden_forward.13} parent=5 // pred_check
      %p154 = pneg %p153
    $region18: #{sden_forward.13} parent=5 // pred_check_branch
      %156 = sbr.rel (%p154) target = $region20
    $region19: #{sden_forward.13} parent=5 // pred_region
      // Predicated region
      $region21: #{sden_forward.13} parent=19 // pred_check
        %p157 = pneg %p30
      $region22: #{sden_forward.13} parent=19 // pred_check_branch
        %159 = sbr.rel (%p157) target = $region24
      $region23: #{sden_forward.13} parent=19 // pred_region
        %p160 = scmp.lt.s32.totalorder %s10, 1
        %s161 = scalar_select %p160, %s10, 1
        %s162 = smul.addr %s161, 8
        %s163 = smul.addr %s162, 8
        %s164 = scalar_lea.vmem %s0, %s163
      $region24: #{sden_forward.13} parent=19 // pred_fallthru
        _
      // Predicated region
      $region25: #{sden_forward.13} parent=19 // pred_check
        %p165 = pneg %p56
      $region26: #{sden_forward.13} parent=19 // pred_check_branch
        %167 = sbr.rel (%p165) target = $region28
      $region27: #{sden_forward.13} parent=19 // pred_region
        %p168 = scmp.lt.s32.totalorder %s10, 1
        %s169 = scalar_select %p168, %s10, 1
        %s170 = smul.addr %s169, 2
        %s171 = smul.addr %s170, 8
        %s172 = scalar_lea.vmem %s1, %s171
      $region28: #{sden_forward.13} parent=19 // pred_fallthru
        _
      // Predicated region
      $region29: #{sden_forward.13} parent=19 // pred_check
        %p173 = pneg %p82
      $region30: #{sden_forward.13} parent=19 // pred_check_branch
        %175 = sbr.rel (%p173) target = $region32
      $region31: #{sden_forward.13} parent=19 // pred_region
        %p176 = scmp.lt.s32.totalorder %s10, 1
        %s177 = scalar_select %p176, %s10, 1
        %s178 = scalar_lea.vmem %s2, %s177
      $region32: #{sden_forward.13} parent=19 // pred_fallthru
        _
    $region20: #{sden_forward.13} parent=5 // pred_fallthru
      _
    %p179 = scmp.le.s32.totalorder 1, %s10
    %p180 = scmp.lt.s32.totalorder %s10, 3
    %p181 = pnand %p179, %p180
    %p182 = pneg %p181
    // Predicated region
    $region33: #{sden_forward.13} parent=5 // pred_check
      _
    $region34: #{sden_forward.13} parent=5 // pred_check_branch
      %184 = sbr.rel (%p181) target = $region36
    $region35: #{sden_forward.13} parent=5 // pred_region
      %s185 = ssub.s32 %s10, 1
      %p186 = scmp.lt.s32.totalorder %s15, 1
      %s187 = scalar_select %p186, %s15, 1
      %s188 = smul.addr %s187, 8
      %s189 = smul.addr %s188, 8
      %s190 = scalar_lea.vmem %s0, %s189
      %p191 = pneg %p36
      %p192 = pneg %p33
      %p193 = scmp.lt.s32.totalorder %s15, 1
      %s194 = scalar_select %p193, %s15, 1
      %s195 = smul.addr %s194, 2
      %s196 = smul.addr %s195, 8
      %s197 = scalar_lea.vmem %s1, %s196
      %p198 = pneg %p62
      %p199 = pneg %p59
      %p200 = scmp.lt.s32.totalorder %s15, 1
      %s201 = scalar_select %p200, %s15, 1
      %s202 = scalar_lea.vmem %s2, %s201
      %p203 = pneg %p88
      %p204 = pneg %p85
      %p205 = pneg %p109
      %p206 = pneg %p106
      %p207 = pneg %p135
      %p208 = pneg %p132
      %p209 = scmp.lt.s32.totalorder %s15, 1
      %s210 = scalar_select %p209, %s15, 1
      %s211 = smul.addr %s210, 8
      %s212 = scalar_lea.vmem %s4, %s211
      %p213 = scmp.lt.s32.totalorder %s15, 1
      %s214 = scalar_select %p213, %s15, 1
      %s215 = smul.addr %s214, 8
      %s216 = smul.addr %s215, 8
      %s217 = scalar_lea.vmem %s0, %s216
      %p218 = scmp.lt.s32.totalorder %s15, 1
      %s219 = scalar_select %p218, %s15, 1
      %s220 = smul.addr %s219, 2
      %s221 = smul.addr %s220, 8
      %s222 = scalar_lea.vmem %s1, %s221
      %p223 = scmp.lt.s32.totalorder %s15, 1
      %s224 = scalar_select %p223, %s15, 1
      %s225 = scalar_lea.vmem %s2, %s224
      %p226 = scmp.lt.s32.totalorder %s15, 1
      %s227 = scalar_select %p226, %s15, 1
      %s228 = smul.addr %s227, 8
      %s229 = scalar_lea.vmem %s4, %s228
      %v230 = vld [vmem:[%s222] sm:$0xff]
      %v231 = vld [vmem:[%s222 + $0x8] sm:$0xff]
      %v232 = vld [vmem:[%s225] sm:$0x1]
      %v233 = vld [vmem:[%s3] sm:$0x3f]
      %p234 = scmp.eq.s32.totalorder %s15, 1
      %s235 = scalar_select %p234, 7, 0
      %s236 = smul.u32 %s235, 8
      %s237 = scalar_lea.vmem %s217, %s236
      %v238 = vld [vmem:[%s237] sm:$0x3f]
      %v240 = vlaneseq
      %v241 = vshrl.u32 %v240, 7
      %v242 = vsub.s32 0, %v241
      %v243 = vrot.slane %v232, %v242
      %vm245 = vcmask 130048
      %v247 = vsel %vm245, 0.0, 0
      %249 = vmatprep.subr.mxu0 0.0
      %250 = vmatpush1.msra.mxu0 %v230
      %251 = vmatprep.subr.mxu0 0.0
      %252 = vmatpush1.msra.mxu0 %v231
      %253 = vmatprep.subr.mxu0 0.0
      %254 = vmatpush1.msra.mxu0 0.0
      %255 = vmatprep.subr.mxu0 0.0
      %256 = vmatpush1.msra.mxu0 0.0
      %257 = vmatprep.subr.mxu0 0.0
      %258 = vmatpush1.msra.mxu0 0.0
      %259 = vmatprep.subr.mxu0 0.0
      %260 = vmatpush1.msra.mxu0 0.0
      %261 = vmatprep.subr.mxu0 0.0
      %262 = vmatpush1.msra.mxu0 0.0
      %263 = vmatprep.subr.mxu0 0.0
      %264 = vmatpush1.msra.mxu0 0.0
      %265 = vmatprep.subr.mxu0 0.0
      %266 = vmatpush1.msra.mxu0 0.0
      %267 = vmatprep.subr.mxu0 0.0
      %268 = vmatpush1.msra.mxu0 0.0
      %269 = vmatprep.subr.mxu0 0.0
      %270 = vmatpush1.msra.mxu0 0.0
      %271 = vmatprep.subr.mxu0 0.0
      %272 = vmatpush1.msra.mxu0 0.0
      %273 = vmatprep.subr.mxu0 0.0
      %274 = vmatpush1.msra.mxu0 0.0
      %275 = vmatprep.subr.mxu0 0.0
      %276 = vmatpush1.msra.mxu0 0.0
      %277 = vmatprep.subr.mxu0 0.0
      %278 = vmatpush1.msra.mxu0 0.0
      %279 = vmatprep.subr.mxu0 0.0
      %280 = vmatpush1.msra.mxu0 0.0
      %281 = vmatprep.subr.mxu0 0.0
      %282 = vmatpush1.msra.mxu0 0.0
      %283 = vmatprep.subr.mxu0 0.0
      %284 = vmatpush1.msra.mxu0 0.0
      %285 = vmatprep.subr.mxu0 0.0
      %286 = vmatpush1.msra.mxu0 0.0
      %287 = vmatprep.subr.mxu0 0.0
      %288 = vmatpush1.msra.mxu0 0.0
      %289 = vmatprep.subr.mxu0 0.0
      %290 = vmatpush1.msra.mxu0 0.0
      %291 = vmatprep.subr.mxu0 0.0
      %292 = vmatpush1.msra.mxu0 0.0
      %293 = vmatprep.subr.mxu0 0.0
      %294 = vmatpush1.msra.mxu0 0.0
      %295 = vmatprep.subr.mxu0 0.0
      %296 = vmatpush1.msra.mxu0 0.0
      %297 = vmatprep.subr.mxu0 0.0
      %298 = vmatpush1.msra.mxu0 0.0
      %299 = vmatprep.subr.mxu0 0.0
      %300 = vmatpush1.msra.mxu0 0.0
      %301 = vmatprep.subr.mxu0 0.0
      %302 = vmatpush1.msra.mxu0 0.0
      %303 = vmatprep.subr.mxu0 0.0
      %304 = vmatpush1.msra.mxu0 0.0
      %305 = vmatprep.subr.mxu0 0.0
      %306 = vmatpush1.msra.mxu0 0.0
      %307 = vmatprep.subr.mxu0 0.0
      %308 = vmatpush1.msra.mxu0 0.0
      %309 = vmatprep.subr.mxu0 0.0
      %310 = vmatpush1.msra.mxu0 0.0
      %311 = vmatprep.subr.mxu0 0.0
      %312 = vmatpush1.msra.mxu0 0.0
      %313 = vmatprep.mubr.f32.mxu0 0.0
      %314 = vmatmul.mubr.f32.gmra.mrb[0].mxu0 %v247
      %v315 = vpop.f32.mrb[0].mxu0
      %v316 = vadd.f32 %v243, %v315
      %v317 = vpop.f32.mrb[0].mxu0
      %318 = vdwg.mxu0
      %v319 = vadd.f32 %v238, %v316
      %v320 = vxor.u32 %v319, 2147483648
      %v321 = vmul.f32 %v320, 1.442695
      %v322 = vpow.pop %v321
      %v323 = vadd.f32 %v322, 1.0
      %v324 = vrcp.pop %v323
      %v325 = vmul.f32 1.0, %v324
      %327 = vrot.lane.b32.xlu0 %v316, 96
      %v328 = vpop.permute.xlu0 %327
      %v330 = vmul.f32 %v325, %v328
      %332 = vrot.lane.b32.xlu0 %v330, 32
      %v333 = vpop.permute.xlu0 %332
      %v335 = vadd.f32 %v238, %v333
      %v336 = vtanh.pop %v335
      %v337 = vsub.f32 1.0, %v325
      %339 = vrot.lane.b32.xlu0 %v336, 112
      %v340 = vpop.permute.xlu0 %339
      %v342 = vmul.f32 %v337, %v340
      %v343 = vmul.f32 %v325, 0.0
      %v344 = vadd.f32 %v342, %v343
      %v345 = vstv %s235
      %vm346 = vcmp.lt.s32.totalorder %v345, %v233
      %v347 = vsel %vm346, 1, 0
      %348 = vset.pattern.permute.xlu0 0
      %349 = vperm.xlu0 %348, %v347
      %v350 = vpop.permute.xlu0 %349
      %vm351 = vcmp.eq.s32.totalorder %v350, 1
      %v352 = vsel %vm351, %v344, 0.0
      %s353 = scalar_select %p234, 6, 1
      %s354 = smul.u32 %s353, 8
      %s355 = scalar_lea.vmem %s217, %s354
      %v356 = vld [vmem:[%s355] sm:$0x3f]
      %358 = vrot.lane.b32.xlu0 %v352, 112
      %v359 = vpop.permute.xlu0 %358
      %v360 = vsel %vm245, %v359, 0
      %362 = vmatprep.subr.mxu0 0.0
      %363 = vmatpush1.msra.mxu0 %v230
      %364 = vmatprep.subr.mxu0 0.0
      %365 = vmatpush1.msra.mxu0 %v231
      %366 = vmatprep.subr.mxu0 0.0
      %367 = vmatpush1.msra.mxu0 0.0
      %368 = vmatprep.subr.mxu0 0.0
      %369 = vmatpush1.msra.mxu0 0.0
      %370 = vmatprep.subr.mxu0 0.0
      %371 = vmatpush1.msra.mxu0 0.0
      %372 = vmatprep.subr.mxu0 0.0
      %373 = vmatpush1.msra.mxu0 0.0
      %374 = vmatprep.subr.mxu0 0.0
      %375 = vmatpush1.msra.mxu0 0.0
      %376 = vmatprep.subr.mxu0 0.0
      %377 = vmatpush1.msra.mxu0 0.0
      %378 = vmatprep.subr.mxu0 0.0
      %379 = vmatpush1.msra.mxu0 0.0
      %380 = vmatprep.subr.mxu0 0.0
      %381 = vmatpush1.msra.mxu0 0.0
      %382 = vmatprep.subr.mxu0 0.0
      %383 = vmatpush1.msra.mxu0 0.0
      %384 = vmatprep.subr.mxu0 0.0
      %385 = vmatpush1.msra.mxu0 0.0
      %386 = vmatprep.subr.mxu0 0.0
      %387 = vmatpush1.msra.mxu0 0.0
      %388 = vmatprep.subr.mxu0 0.0
      %389 = vmatpush1.msra.mxu0 0.0
      %390 = vmatprep.subr.mxu0 0.0
      %391 = vmatpush1.msra.mxu0 0.0
      %392 = vmatprep.subr.mxu0 0.0
      %393 = vmatpush1.msra.mxu0 0.0
      %394 = vmatprep.subr.mxu0 0.0
      %395 = vmatpush1.msra.mxu0 0.0
      %396 = vmatprep.subr.mxu0 0.0
      %397 = vmatpush1.msra.mxu0 0.0
      %398 = vmatprep.subr.mxu0 0.0
      %399 = vmatpush1.msra.mxu0 0.0
      %400 = vmatprep.subr.mxu0 0.0
      %401 = vmatpush1.msra.mxu0 0.0
      %402 = vmatprep.subr.mxu0 0.0
      %403 = vmatpush1.msra.mxu0 0.0
      %404 = vmatprep.subr.mxu0 0.0
      %405 = vmatpush1.msra.mxu0 0.0
      %406 = vmatprep.subr.mxu0 0.0
      %407 = vmatpush1.msra.mxu0 0.0
      %408 = vmatprep.subr.mxu0 0.0
      %409 = vmatpush1.msra.mxu0 0.0
      %410 = vmatprep.subr.mxu0 0.0
      %411 = vmatpush1.msra.mxu0 0.0
      %412 = vmatprep.subr.mxu0 0.0
      %413 = vmatpush1.msra.mxu0 0.0
      %414 = vmatprep.subr.mxu0 0.0
      %415 = vmatpush1.msra.mxu0 0.0
      %416 = vmatprep.subr.mxu0 0.0
      %417 = vmatpush1.msra.mxu0 0.0
      %418 = vmatprep.subr.mxu0 0.0
      %419 = vmatpush1.msra.mxu0 0.0
      %420 = vmatprep.subr.mxu0 0.0
      %421 = vmatpush1.msra.mxu0 0.0
      %422 = vmatprep.subr.mxu0 0.0
      %423 = vmatpush1.msra.mxu0 0.0
      %424 = vmatprep.subr.mxu0 0.0
      %425 = vmatpush1.msra.mxu0 0.0
      %426 = vmatprep.mubr.f32.mxu0 0.0
      %427 = vmatmul.mubr.f32.gmra.mrb[0].mxu0 %v360
      %v428 = vpop.f32.mrb[0].mxu0
      %v429 = vadd.f32 %v243, %v428
      %v430 = vpop.f32.mrb[0].mxu0
      %431 = vdwg.mxu0
      %v432 = vadd.f32 %v356, %v429
      %v433 = vxor.u32 %v432, 2147483648
      %v434 = vmul.f32 %v433, 1.442695
      %v435 = vpow.pop %v434
      %v436 = vadd.f32 %v435, 1.0
      %v437 = vrcp.pop %v436
      %v438 = vmul.f32 1.0, %v437
      %440 = vrot.lane.b32.xlu0 %v429, 96
      %v441 = vpop.permute.xlu0 %440
      %v443 = vmul.f32 %v438, %v441
      %445 = vrot.lane.b32.xlu0 %v443, 32
      %v446 = vpop.permute.xlu0 %445
      %v448 = vadd.f32 %v356, %v446
      %v449 = vtanh.pop %v448
      %v450 = vsub.f32 1.0, %v438
      %452 = vrot.lane.b32.xlu0 %v449, 112
      %v453 = vpop.permute.xlu0 %452
      %v455 = vmul.f32 %v450, %v453
      %v456 = vmul.f32 %v438, %v352
      %v457 = vadd.f32 %v455, %v456
      %v458 = vstv %s353
      %vm459 = vcmp.lt.s32.totalorder %v458, %v233
      %v460 = vsel %vm459, 1, 0
      %461 = vset.pattern.permute.xlu0 0
      %462 = vperm.xlu0 %461, %v460
      %v463 = vpop.permute.xlu0 %462
      %vm464 = vcmp.eq.s32.totalorder %v463, 1
      %v465 = vsel %vm464, %v457, %v352
      %s466 = scalar_select %p234, 5, 2
      %s467 = smul.u32 %s466, 8
      %s468 = scalar_lea.vmem %s217, %s467
      %v469 = vld [vmem:[%s468] sm:$0x3f]
      %471 = vrot.lane.b32.xlu0 %v465, 112
      %v472 = vpop.permute.xlu0 %471
      %v473 = vsel %vm245, %v472, 0
      %475 = vmatprep.subr.mxu0 0.0
      %476 = vmatpush1.msra.mxu0 %v230
      %477 = vmatprep.subr.mxu0 0.0
      %478 = vmatpush1.msra.mxu0 %v231
      %479 = vmatprep.subr.mxu0 0.0
      %480 = vmatpush1.msra.mxu0 0.0
      %481 = vmatprep.subr.mxu0 0.0
      %482 = vmatpush1.msra.mxu0 0.0
      %483 = vmatprep.subr.mxu0 0.0
      %484 = vmatpush1.msra.mxu0 0.0
      %485 = vmatprep.subr.mxu0 0.0
      %486 = vmatpush1.msra.mxu0 0.0
      %487 = vmatprep.subr.mxu0 0.0
      %488 = vmatpush1.msra.mxu0 0.0
      %489 = vmatprep.subr.mxu0 0.0
      %490 = vmatpush1.msra.mxu0 0.0
      %491 = vmatprep.subr.mxu0 0.0
      %492 = vmatpush1.msra.mxu0 0.0
      %493 = vmatprep.subr.mxu0 0.0
      %494 = vmatpush1.msra.mxu0 0.0
      %495 = vmatprep.subr.mxu0 0.0
      %496 = vmatpush1.msra.mxu0 0.0
      %497 = vmatprep.subr.mxu0 0.0
      %498 = vmatpush1.msra.mxu0 0.0
      %499 = vmatprep.subr.mxu0 0.0
      %500 = vmatpush1.msra.mxu0 0.0
      %501 = vmatprep.subr.mxu0 0.0
      %502 = vmatpush1.msra.mxu0 0.0
      %503 = vmatprep.subr.mxu0 0.0
      %504 = vmatpush1.msra.mxu0 0.0
      %505 = vmatprep.subr.mxu0 0.0
      %506 = vmatpush1.msra.mxu0 0.0
      %507 = vmatprep.subr.mxu0 0.0
      %508 = vmatpush1.msra.mxu0 0.0
      %509 = vmatprep.subr.mxu0 0.0
      %510 = vmatpush1.msra.mxu0 0.0
      %511 = vmatprep.subr.mxu0 0.0
      %512 = vmatpush1.msra.mxu0 0.0
      %513 = vmatprep.subr.mxu0 0.0
      %514 = vmatpush1.msra.mxu0 0.0
      %515 = vmatprep.subr.mxu0 0.0
      %516 = vmatpush1.msra.mxu0 0.0
      %517 = vmatprep.subr.mxu0 0.0
      %518 = vmatpush1.msra.mxu0 0.0
      %519 = vmatprep.subr.mxu0 0.0
      %520 = vmatpush1.msra.mxu0 0.0
      %521 = vmatprep.subr.mxu0 0.0
      %522 = vmatpush1.msra.mxu0 0.0
      %523 = vmatprep.subr.mxu0 0.0
      %524 = vmatpush1.msra.mxu0 0.0
      %525 = vmatprep.subr.mxu0 0.0
      %526 = vmatpush1.msra.mxu0 0.0
      %527 = vmatprep.subr.mxu0 0.0
      %528 = vmatpush1.msra.mxu0 0.0
      %529 = vmatprep.subr.mxu0 0.0
      %530 = vmatpush1.msra.mxu0 0.0
      %531 = vmatprep.subr.mxu0 0.0
      %532 = vmatpush1.msra.mxu0 0.0
      %533 = vmatprep.subr.mxu0 0.0
      %534 = vmatpush1.msra.mxu0 0.0
      %535 = vmatprep.subr.mxu0 0.0
      %536 = vmatpush1.msra.mxu0 0.0
      %537 = vmatprep.subr.mxu0 0.0
      %538 = vmatpush1.msra.mxu0 0.0
      %539 = vmatprep.mubr.f32.mxu0 0.0
      %540 = vmatmul.mubr.f32.gmra.mrb[0].mxu0 %v473
      %v541 = vpop.f32.mrb[0].mxu0
      %v542 = vadd.f32 %v243, %v541
      %v543 = vpop.f32.mrb[0].mxu0
      %544 = vdwg.mxu0
      %v545 = vadd.f32 %v469, %v542
      %v546 = vxor.u32 %v545, 2147483648
      %v547 = vmul.f32 %v546, 1.442695
      %v548 = vpow.pop %v547
      %v549 = vadd.f32 %v548, 1.0
      %v550 = vrcp.pop %v549
      %v551 = vmul.f32 1.0, %v550
      %553 = vrot.lane.b32.xlu0 %v542, 96
      %v554 = vpop.permute.xlu0 %553
      %v556 = vmul.f32 %v551, %v554
      %558 = vrot.lane.b32.xlu0 %v556, 32
      %v559 = vpop.permute.xlu0 %558
      %v561 = vadd.f32 %v469, %v559
      %v562 = vtanh.pop %v561
      %v563 = vsub.f32 1.0, %v551
      %565 = vrot.lane.b32.xlu0 %v562, 112
      %v566 = vpop.permute.xlu0 %565
      %v568 = vmul.f32 %v563, %v566
      %v569 = vmul.f32 %v551, %v465
      %v570 = vadd.f32 %v568, %v569
      %v571 = vstv %s466
      %vm572 = vcmp.lt.s32.totalorder %v571, %v233
      %v573 = vsel %vm572, 1, 0
      %574 = vset.pattern.permute.xlu0 0
      %575 = vperm.xlu0 %574, %v573
      %v576 = vpop.permute.xlu0 %575
      %vm577 = vcmp.eq.s32.totalorder %v576, 1
      %v578 = vsel %vm577, %v570, %v465
      %s579 = scalar_select %p234, 4, 3
      %s580 = smul.u32 %s579, 8
      %s581 = scalar_lea.vmem %s217, %s580
      %v582 = vld [vmem:[%s581] sm:$0x3f]
      %584 = vrot.lane.b32.xlu0 %v578, 112
      %v585 = vpop.permute.xlu0 %584
      %v586 = vsel %vm245, %v585, 0
      %588 = vmatprep.subr.mxu0 0.0
      %589 = vmatpush1.msra.mxu0 %v230
      %590 = vmatprep.subr.mxu0 0.0
      %591 = vmatpush1.msra.mxu0 %v231
      %592 = vmatprep.subr.mxu0 0.0
      %593 = vmatpush1.msra.mxu0 0.0
      %594 = vmatprep.subr.mxu0 0.0
      %595 = vmatpush1.msra.mxu0 0.0
      %596 = vmatprep.subr.mxu0 0.0
      %597 = vmatpush1.msra.mxu0 0.0
      %598 = vmatprep.subr.mxu0 0.0
      %599 = vmatpush1.msra.mxu0 0.0
      %600 = vmatprep.subr.mxu0 0.0
      %601 = vmatpush1.msra.mxu0 0.0
      %602 = vmatprep.subr.mxu0 0.0
      %603 = vmatpush1.msra.mxu0 0.0
      %604 = vmatprep.subr.mxu0 0.0
      %605 = vmatpush1.msra.mxu0 0.0
      %606 = vmatprep.subr.mxu0 0.0
      %607 = vmatpush1.msra.mxu0 0.0
      %608 = vmatprep.subr.mxu0 0.0
      %609 = vmatpush1.msra.mxu0 0.0
      %610 = vmatprep.subr.mxu0 0.0
      %611 = vmatpush1.msra.mxu0 0.0
      %612 = vmatprep.subr.mxu0 0.0
      %613 = vmatpush1.msra.mxu0 0.0
      %614 = vmatprep.subr.mxu0 0.0
      %615 = vmatpush1.msra.mxu0 0.0
      %616 = vmatprep.subr.mxu0 0.0
      %617 = vmatpush1.msra.mxu0 0.0
      %618 = vmatprep.subr.mxu0 0.0
      %619 = vmatpush1.msra.mxu0 0.0
      %620 = vmatprep.subr.mxu0 0.0
      %621 = vmatpush1.msra.mxu0 0.0
      %622 = vmatprep.subr.mxu0 0.0
      %623 = vmatpush1.msra.mxu0 0.0
      %624 = vmatprep.subr.mxu0 0.0
      %625 = vmatpush1.msra.mxu0 0.0
      %626 = vmatprep.subr.mxu0 0.0
      %627 = vmatpush1.msra.mxu0 0.0
      %628 = vmatprep.subr.mxu0 0.0
      %629 = vmatpush1.msra.mxu0 0.0
      %630 = vmatprep.subr.mxu0 0.0
      %631 = vmatpush1.msra.mxu0 0.0
      %632 = vmatprep.subr.mxu0 0.0
      %633 = vmatpush1.msra.mxu0 0.0
      %634 = vmatprep.subr.mxu0 0.0
      %635 = vmatpush1.msra.mxu0 0.0
      %636 = vmatprep.subr.mxu0 0.0
      %637 = vmatpush1.msra.mxu0 0.0
      %638 = vmatprep.subr.mxu0 0.0
      %639 = vmatpush1.msra.mxu0 0.0
      %640 = vmatprep.subr.mxu0 0.0
      %641 = vmatpush1.msra.mxu0 0.0
      %642 = vmatprep.subr.mxu0 0.0
      %643 = vmatpush1.msra.mxu0 0.0
      %644 = vmatprep.subr.mxu0 0.0
      %645 = vmatpush1.msra.mxu0 0.0
      %646 = vmatprep.subr.mxu0 0.0
      %647 = vmatpush1.msra.mxu0 0.0
      %648 = vmatprep.subr.mxu0 0.0
      %649 = vmatpush1.msra.mxu0 0.0
      %650 = vmatprep.subr.mxu0 0.0
      %651 = vmatpush1.msra.mxu0 0.0
      %652 = vmatprep.mubr.f32.mxu0 0.0
      %653 = vmatmul.mubr.f32.gmra.mrb[0].mxu0 %v586
      %v654 = vpop.f32.mrb[0].mxu0
      %v655 = vadd.f32 %v243, %v654
      %v656 = vpop.f32.mrb[0].mxu0
      %657 = vdwg.mxu0
      %v658 = vadd.f32 %v582, %v655
      %v659 = vxor.u32 %v658, 2147483648
      %v660 = vmul.f32 %v659, 1.442695
      %v661 = vpow.pop %v660
      %v662 = vadd.f32 %v661, 1.0
      %v663 = vrcp.pop %v662
      %v664 = vmul.f32 1.0, %v663
      %666 = vrot.lane.b32.xlu0 %v655, 96
      %v667 = vpop.permute.xlu0 %666
      %v669 = vmul.f32 %v664, %v667
      %671 = vrot.lane.b32.xlu0 %v669, 32
      %v672 = vpop.permute.xlu0 %671
      %v674 = vadd.f32 %v582, %v672
      %v675 = vtanh.pop %v674
      %v676 = vsub.f32 1.0, %v664
      %678 = vrot.lane.b32.xlu0 %v675, 112
      %v679 = vpop.permute.xlu0 %678
      %v681 = vmul.f32 %v676, %v679
      %v682 = vmul.f32 %v664, %v578
      %v683 = vadd.f32 %v681, %v682
      %v684 = vstv %s579
      %vm685 = vcmp.lt.s32.totalorder %v684, %v233
      %v686 = vsel %vm685, 1, 0
      %687 = vset.pattern.permute.xlu0 0
      %688 = vperm.xlu0 %687, %v686
      %v689 = vpop.permute.xlu0 %688
      %vm690 = vcmp.eq.s32.totalorder %v689, 1
      %v691 = vsel %vm690, %v683, %v578
      %s692 = scalar_select %p234, 3, 4
      %s693 = smul.u32 %s692, 8
      %s694 = scalar_lea.vmem %s217, %s693
      %v695 = vld [vmem:[%s694] sm:$0x3f]
      %697 = vrot.lane.b32.xlu0 %v691, 112
      %v698 = vpop.permute.xlu0 %697
      %v699 = vsel %vm245, %v698, 0
      %701 = vmatprep.subr.mxu0 0.0
      %702 = vmatpush1.msra.mxu0 %v230
      %703 = vmatprep.subr.mxu0 0.0
      %704 = vmatpush1.msra.mxu0 %v231
      %705 = vmatprep.subr.mxu0 0.0
      %706 = vmatpush1.msra.mxu0 0.0
      %707 = vmatprep.subr.mxu0 0.0
      %708 = vmatpush1.msra.mxu0 0.0
      %709 = vmatprep.subr.mxu0 0.0
      %710 = vmatpush1.msra.mxu0 0.0
      %711 = vmatprep.subr.mxu0 0.0
      %712 = vmatpush1.msra.mxu0 0.0
      %713 = vmatprep.subr.mxu0 0.0
      %714 = vmatpush1.msra.mxu0 0.0
      %715 = vmatprep.subr.mxu0 0.0
      %716 = vmatpush1.msra.mxu0 0.0
      %717 = vmatprep.subr.mxu0 0.0
      %718 = vmatpush1.msra.mxu0 0.0
      %719 = vmatprep.subr.mxu0 0.0
      %720 = vmatpush1.msra.mxu0 0.0
      %721 = vmatprep.subr.mxu0 0.0
      %722 = vmatpush1.msra.mxu0 0.0
      %723 = vmatprep.subr.mxu0 0.0
      %724 = vmatpush1.msra.mxu0 0.0
      %725 = vmatprep.subr.mxu0 0.0
      %726 = vmatpush1.msra.mxu0 0.0
      %727 = vmatprep.subr.mxu0 0.0
      %728 = vmatpush1.msra.mxu0 0.0
      %729 = vmatprep.subr.mxu0 0.0
      %730 = vmatpush1.msra.mxu0 0.0
      %731 = vmatprep.subr.mxu0 0.0
      %732 = vmatpush1.msra.mxu0 0.0
      %733 = vmatprep.subr.mxu0 0.0
      %734 = vmatpush1.msra.mxu0 0.0
      %735 = vmatprep.subr.mxu0 0.0
      %736 = vmatpush1.msra.mxu0 0.0
      %737 = vmatprep.subr.mxu0 0.0
      %738 = vmatpush1.msra.mxu0 0.0
      %739 = vmatprep.subr.mxu0 0.0
      %740 = vmatpush1.msra.mxu0 0.0
      %741 = vmatprep.subr.mxu0 0.0
      %742 = vmatpush1.msra.mxu0 0.0
      %743 = vmatprep.subr.mxu0 0.0
      %744 = vmatpush1.msra.mxu0 0.0
      %745 = vmatprep.subr.mxu0 0.0
      %746 = vmatpush1.msra.mxu0 0.0
      %747 = vmatprep.subr.mxu0 0.0
      %748 = vmatpush1.msra.mxu0 0.0
      %749 = vmatprep.subr.mxu0 0.0
      %750 = vmatpush1.msra.mxu0 0.0
      %751 = vmatprep.subr.mxu0 0.0
      %752 = vmatpush1.msra.mxu0 0.0
      %753 = vmatprep.subr.mxu0 0.0
      %754 = vmatpush1.msra.mxu0 0.0
      %755 = vmatprep.subr.mxu0 0.0
      %756 = vmatpush1.msra.mxu0 0.0
      %757 = vmatprep.subr.mxu0 0.0
      %758 = vmatpush1.msra.mxu0 0.0
      %759 = vmatprep.subr.mxu0 0.0
      %760 = vmatpush1.msra.mxu0 0.0
      %761 = vmatprep.subr.mxu0 0.0
      %762 = vmatpush1.msra.mxu0 0.0
      %763 = vmatprep.subr.mxu0 0.0
      %764 = vmatpush1.msra.mxu0 0.0
      %765 = vmatprep.mubr.f32.mxu0 0.0
      %766 = vmatmul.mubr.f32.gmra.mrb[0].mxu0 %v699
      %v767 = vpop.f32.mrb[0].mxu0
      %v768 = vadd.f32 %v243, %v767
      %v769 = vpop.f32.mrb[0].mxu0
      %770 = vdwg.mxu0
      %v771 = vadd.f32 %v695, %v768
      %v772 = vxor.u32 %v771, 2147483648
      %v773 = vmul.f32 %v772, 1.442695
      %v774 = vpow.pop %v773
      %v775 = vadd.f32 %v774, 1.0
      %v776 = vrcp.pop %v775
      %v777 = vmul.f32 1.0, %v776
      %779 = vrot.lane.b32.xlu0 %v768, 96
      %v780 = vpop.permute.xlu0 %779
      %v782 = vmul.f32 %v777, %v780
      %784 = vrot.lane.b32.xlu0 %v782, 32
      %v785 = vpop.permute.xlu0 %784
      %v787 = vadd.f32 %v695, %v785
      %v788 = vtanh.pop %v787
      %v789 = vsub.f32 1.0, %v777
      %791 = vrot.lane.b32.xlu0 %v788, 112
      %v792 = vpop.permute.xlu0 %791
      %v794 = vmul.f32 %v789, %v792
      %v795 = vmul.f32 %v777, %v691
      %v796 = vadd.f32 %v794, %v795
      %v797 = vstv %s692
      %vm798 = vcmp.lt.s32.totalorder %v797, %v233
      %v799 = vsel %vm798, 1, 0
      %800 = vset.pattern.permute.xlu0 0
      %801 = vperm.xlu0 %800, %v799
      %v802 = vpop.permute.xlu0 %801
      %vm803 = vcmp.eq.s32.totalorder %v802, 1
      %v804 = vsel %vm803, %v796, %v691
      %s805 = scalar_select %p234, 2, 5
      %s806 = smul.u32 %s805, 8
      %s807 = scalar_lea.vmem %s217, %s806
      %v808 = vld [vmem:[%s807] sm:$0x3f]
      %810 = vrot.lane.b32.xlu0 %v804, 112
      %v811 = vpop.permute.xlu0 %810
      %v812 = vsel %vm245, %v811, 0
      %814 = vmatprep.subr.mxu0 0.0
      %815 = vmatpush1.msra.mxu0 %v230
      %816 = vmatprep.subr.mxu0 0.0
      %817 = vmatpush1.msra.mxu0 %v231
      %818 = vmatprep.subr.mxu0 0.0
      %819 = vmatpush1.msra.mxu0 0.0
      %820 = vmatprep.subr.mxu0 0.0
      %821 = vmatpush1.msra.mxu0 0.0
      %822 = vmatprep.subr.mxu0 0.0
      %823 = vmatpush1.msra.mxu0 0.0
      %824 = vmatprep.subr.mxu0 0.0
      %825 = vmatpush1.msra.mxu0 0.0
      %826 = vmatprep.subr.mxu0 0.0
      %827 = vmatpush1.msra.mxu0 0.0
      %828 = vmatprep.subr.mxu0 0.0
      %829 = vmatpush1.msra.mxu0 0.0
      %830 = vmatprep.subr.mxu0 0.0
      %831 = vmatpush1.msra.mxu0 0.0
      %832 = vmatprep.subr.mxu0 0.0
      %833 = vmatpush1.msra.mxu0 0.0
      %834 = vmatprep.subr.mxu0 0.0
      %835 = vmatpush1.msra.mxu0 0.0
      %836 = vmatprep.subr.mxu0 0.0
      %837 = vmatpush1.msra.mxu0 0.0
      %838 = vmatprep.subr.mxu0 0.0
      %839 = vmatpush1.msra.mxu0 0.0
      %840 = vmatprep.subr.mxu0 0.0
      %841 = vmatpush1.msra.mxu0 0.0
      %842 = vmatprep.subr.mxu0 0.0
      %843 = vmatpush1.msra.mxu0 0.0
      %844 = vmatprep.subr.mxu0 0.0
      %845 = vmatpush1.msra.mxu0 0.0
      %846 = vmatprep.subr.mxu0 0.0
      %847 = vmatpush1.msra.mxu0 0.0
      %848 = vmatprep.subr.mxu0 0.0
      %849 = vmatpush1.msra.mxu0 0.0
      %850 = vmatprep.subr.mxu0 0.0
      %851 = vmatpush1.msra.mxu0 0.0
      %852 = vmatprep.subr.mxu0 0.0
      %853 = vmatpush1.msra.mxu0 0.0
      %854 = vmatprep.subr.mxu0 0.0
      %855 = vmatpush1.msra.mxu0 0.0
      %856 = vmatprep.subr.mxu0 0.0
      %857 = vmatpush1.msra.mxu0 0.0
      %858 = vmatprep.subr.mxu0 0.0
      %859 = vmatpush1.msra.mxu0 0.0
      %860 = vmatprep.subr.mxu0 0.0
      %861 = vmatpush1.msra.mxu0 0.0
      %862 = vmatprep.subr.mxu0 0.0
      %863 = vmatpush1.msra.mxu0 0.0
      %864 = vmatprep.subr.mxu0 0.0
      %865 = vmatpush1.msra.mxu0 0.0
      %866 = vmatprep.subr.mxu0 0.0
      %867 = vmatpush1.msra.mxu0 0.0
      %868 = vmatprep.subr.mxu0 0.0
      %869 = vmatpush1.msra.mxu0 0.0
      %870 = vmatprep.subr.mxu0 0.0
      %871 = vmatpush1.msra.mxu0 0.0
      %872 = vmatprep.subr.mxu0 0.0
      %873 = vmatpush1.msra.mxu0 0.0
      %874 = vmatprep.subr.mxu0 0.0
      %875 = vmatpush1.msra.mxu0 0.0
      %876 = vmatprep.subr.mxu0 0.0
      %877 = vmatpush1.msra.mxu0 0.0
      %878 = vmatprep.mubr.f32.mxu0 0.0
      %879 = vmatmul.mubr.f32.gmra.mrb[0].mxu0 %v812
      %v880 = vpop.f32.mrb[0].mxu0
      %v881 = vadd.f32 %v243, %v880
      %v882 = vpop.f32.mrb[0].mxu0
      %883 = vdwg.mxu0
      %v884 = vadd.f32 %v808, %v881
      %v885 = vxor.u32 %v884, 2147483648
      %v886 = vmul.f32 %v885, 1.442695
      %v887 = vpow.pop %v886
      %v888 = vadd.f32 %v887, 1.0
      %v889 = vrcp.pop %v888
      %v890 = vmul.f32 1.0, %v889
      %892 = vrot.lane.b32.xlu0 %v881, 96
      %v893 = vpop.permute.xlu0 %892
      %v895 = vmul.f32 %v890, %v893
      %897 = vrot.lane.b32.xlu0 %v895, 32
      %v898 = vpop.permute.xlu0 %897
      %v900 = vadd.f32 %v808, %v898
      %v901 = vtanh.pop %v900
      %v902 = vsub.f32 1.0, %v890
      %904 = vrot.lane.b32.xlu0 %v901, 112
      %v905 = vpop.permute.xlu0 %904
      %v907 = vmul.f32 %v902, %v905
      %v908 = vmul.f32 %v890, %v804
      %v909 = vadd.f32 %v907, %v908
      %v910 = vstv %s805
      %vm911 = vcmp.lt.s32.totalorder %v910, %v233
      %v912 = vsel %vm911, 1, 0
      %913 = vset.pattern.permute.xlu0 0
      %914 = vperm.xlu0 %913, %v912
      %v915 = vpop.permute.xlu0 %914
      %vm916 = vcmp.eq.s32.totalorder %v915, 1
      %v917 = vsel %vm916, %v909, %v804
      %s918 = scalar_select %p234, 1, 6
      %s919 = smul.u32 %s918, 8
      %s920 = scalar_lea.vmem %s217, %s919
      %v921 = vld [vmem:[%s920] sm:$0x3f]
      %923 = vrot.lane.b32.xlu0 %v917, 112
      %v924 = vpop.permute.xlu0 %923
      %v925 = vsel %vm245, %v924, 0
      %927 = vmatprep.subr.mxu0 0.0
      %928 = vmatpush1.msra.mxu0 %v230
      %929 = vmatprep.subr.mxu0 0.0
      %930 = vmatpush1.msra.mxu0 %v231
      %931 = vmatprep.subr.mxu0 0.0
      %932 = vmatpush1.msra.mxu0 0.0
      %933 = vmatprep.subr.mxu0 0.0
      %934 = vmatpush1.msra.mxu0 0.0
      %935 = vmatprep.subr.mxu0 0.0
      %936 = vmatpush1.msra.mxu0 0.0
      %937 = vmatprep.subr.mxu0 0.0
      %938 = vmatpush1.msra.mxu0 0.0
      %939 = vmatprep.subr.mxu0 0.0
      %940 = vmatpush1.msra.mxu0 0.0
      %941 = vmatprep.subr.mxu0 0.0
      %942 = vmatpush1.msra.mxu0 0.0
      %943 = vmatprep.subr.mxu0 0.0
      %944 = vmatpush1.msra.mxu0 0.0
      %945 = vmatprep.subr.mxu0 0.0
      %946 = vmatpush1.msra.mxu0 0.0
      %947 = vmatprep.subr.mxu0 0.0
      %948 = vmatpush1.msra.mxu0 0.0
      %949 = vmatprep.subr.mxu0 0.0
      %950 = vmatpush1.msra.mxu0 0.0
      %951 = vmatprep.subr.mxu0 0.0
      %952 = vmatpush1.msra.mxu0 0.0
      %953 = vmatprep.subr.mxu0 0.0
      %954 = vmatpush1.msra.mxu0 0.0
      %955 = vmatprep.subr.mxu0 0.0
      %956 = vmatpush1.msra.mxu0 0.0
      %957 = vmatprep.subr.mxu0 0.0
      %958 = vmatpush1.msra.mxu0 0.0
      %959 = vmatprep.subr.mxu0 0.0
      %960 = vmatpush1.msra.mxu0 0.0
      %961 = vmatprep.subr.mxu0 0.0
      %962 = vmatpush1.msra.mxu0 0.0
      %963 = vmatprep.subr.mxu0 0.0
      %964 = vmatpush1.msra.mxu0 0.0
      %965 = vmatprep.subr.mxu0 0.0
      %966 = vmatpush1.msra.mxu0 0.0
      %967 = vmatprep.subr.mxu0 0.0
      %968 = vmatpush1.msra.mxu0 0.0
      %969 = vmatprep.subr.mxu0 0.0
      %970 = vmatpush1.msra.mxu0 0.0
      %971 = vmatprep.subr.mxu0 0.0
      %972 = vmatpush1.msra.mxu0 0.0
      %973 = vmatprep.subr.mxu0 0.0
      %974 = vmatpush1.msra.mxu0 0.0
      %975 = vmatprep.subr.mxu0 0.0
      %976 = vmatpush1.msra.mxu0 0.0
      %977 = vmatprep.subr.mxu0 0.0
      %978 = vmatpush1.msra.mxu0 0.0
      %979 = vmatprep.subr.mxu0 0.0
      %980 = vmatpush1.msra.mxu0 0.0
      %981 = vmatprep.subr.mxu0 0.0
      %982 = vmatpush1.msra.mxu0 0.0
      %983 = vmatprep.subr.mxu0 0.0
      %984 = vmatpush1.msra.mxu0 0.0
      %985 = vmatprep.subr.mxu0 0.0
      %986 = vmatpush1.msra.mxu0 0.0
      %987 = vmatprep.subr.mxu0 0.0
      %988 = vmatpush1.msra.mxu0 0.0
      %989 = vmatprep.subr.mxu0 0.0
      %990 = vmatpush1.msra.mxu0 0.0
      %991 = vmatprep.mubr.f32.mxu0 0.0
      %992 = vmatmul.mubr.f32.gmra.mrb[0].mxu0 %v925
      %v993 = vpop.f32.mrb[0].mxu0
      %v994 = vadd.f32 %v243, %v993
      %v995 = vpop.f32.mrb[0].mxu0
      %996 = vdwg.mxu0
      %v997 = vadd.f32 %v921, %v994
      %v998 = vxor.u32 %v997, 2147483648
      %v999 = vmul.f32 %v998, 1.442695
      %v1000 = vpow.pop %v999
      %v1001 = vadd.f32 %v1000, 1.0
      %v1002 = vrcp.pop %v1001
      %v1003 = vmul.f32 1.0, %v1002
      %1005 = vrot.lane.b32.xlu0 %v994, 96
      %v1006 = vpop.permute.xlu0 %1005
      %v1008 = vmul.f32 %v1003, %v1006
      %1010 = vrot.lane.b32.xlu0 %v1008, 32
      %v1011 = vpop.permute.xlu0 %1010
      %v1013 = vadd.f32 %v921, %v1011
      %v1014 = vtanh.pop %v1013
      %v1015 = vsub.f32 1.0, %v1003
      %1017 = vrot.lane.b32.xlu0 %v1014, 112
      %v1018 = vpop.permute.xlu0 %1017
      %v1020 = vmul.f32 %v1015, %v1018
      %v1021 = vmul.f32 %v1003, %v917
      %v1022 = vadd.f32 %v1020, %v1021
      %v1023 = vstv %s918
      %vm1024 = vcmp.lt.s32.totalorder %v1023, %v233
      %v1025 = vsel %vm1024, 1, 0
      %1026 = vset.pattern.permute.xlu0 0
      %1027 = vperm.xlu0 %1026, %v1025
      %v1028 = vpop.permute.xlu0 %1027
      %vm1029 = vcmp.eq.s32.totalorder %v1028, 1
      %v1030 = vsel %vm1029, %v1022, %v917
      %s1031 = scalar_select %p234, 0, 7
      %s1032 = smul.u32 %s1031, 8
      %s1033 = scalar_lea.vmem %s217, %s1032
      %v1034 = vld [vmem:[%s1033] sm:$0x3f]
      %1036 = vrot.lane.b32.xlu0 %v1030, 112
      %v1037 = vpop.permute.xlu0 %1036
      %v1038 = vsel %vm245, %v1037, 0
      %1040 = vmatprep.subr.mxu0 0.0
      %1041 = vmatpush1.msra.mxu0 %v230
      %1042 = vmatprep.subr.mxu0 0.0
      %1043 = vmatpush1.msra.mxu0 %v231
      %1044 = vmatprep.subr.mxu0 0.0
      %1045 = vmatpush1.msra.mxu0 0.0
      %1046 = vmatprep.subr.mxu0 0.0
      %1047 = vmatpush1.msra.mxu0 0.0
      %1048 = vmatprep.subr.mxu0 0.0
      %1049 = vmatpush1.msra.mxu0 0.0
      %1050 = vmatprep.subr.mxu0 0.0
      %1051 = vmatpush1.msra.mxu0 0.0
      %1052 = vmatprep.subr.mxu0 0.0
      %1053 = vmatpush1.msra.mxu0 0.0
      %1054 = vmatprep.subr.mxu0 0.0
      %1055 = vmatpush1.msra.mxu0 0.0
      %1056 = vmatprep.subr.mxu0 0.0
      %1057 = vmatpush1.msra.mxu0 0.0
      %1058 = vmatprep.subr.mxu0 0.0
      %1059 = vmatpush1.msra.mxu0 0.0
      %1060 = vmatprep.subr.mxu0 0.0
      %1061 = vmatpush1.msra.mxu0 0.0
      %1062 = vmatprep.subr.mxu0 0.0
      %1063 = vmatpush1.msra.mxu0 0.0
      %1064 = vmatprep.subr.mxu0 0.0
      %1065 = vmatpush1.msra.mxu0 0.0
      %1066 = vmatprep.subr.mxu0 0.0
      %1067 = vmatpush1.msra.mxu0 0.0
      %1068 = vmatprep.subr.mxu0 0.0
      %1069 = vmatpush1.msra.mxu0 0.0
      %1070 = vmatprep.subr.mxu0 0.0
      %1071 = vmatpush1.msra.mxu0 0.0
      %1072 = vmatprep.subr.mxu0 0.0
      %1073 = vmatpush1.msra.mxu0 0.0
      %1074 = vmatprep.subr.mxu0 0.0
      %1075 = vmatpush1.msra.mxu0 0.0
      %1076 = vmatprep.subr.mxu0 0.0
      %1077 = vmatpush1.msra.mxu0 0.0
      %1078 = vmatprep.subr.mxu0 0.0
      %1079 = vmatpush1.msra.mxu0 0.0
      %1080 = vmatprep.subr.mxu0 0.0
      %1081 = vmatpush1.msra.mxu0 0.0
      %1082 = vmatprep.subr.mxu0 0.0
      %1083 = vmatpush1.msra.mxu0 0.0
      %1084 = vmatprep.subr.mxu0 0.0
      %1085 = vmatpush1.msra.mxu0 0.0
      %1086 = vmatprep.subr.mxu0 0.0
      %1087 = vmatpush1.msra.mxu0 0.0
      %1088 = vmatprep.subr.mxu0 0.0
      %1089 = vmatpush1.msra.mxu0 0.0
      %1090 = vmatprep.subr.mxu0 0.0
      %1091 = vmatpush1.msra.mxu0 0.0
      %1092 = vmatprep.subr.mxu0 0.0
      %1093 = vmatpush1.msra.mxu0 0.0
      %1094 = vmatprep.subr.mxu0 0.0
      %1095 = vmatpush1.msra.mxu0 0.0
      %1096 = vmatprep.subr.mxu0 0.0
      %1097 = vmatpush1.msra.mxu0 0.0
      %1098 = vmatprep.subr.mxu0 0.0
      %1099 = vmatpush1.msra.mxu0 0.0
      %1100 = vmatprep.subr.mxu0 0.0
      %1101 = vmatpush1.msra.mxu0 0.0
      %1102 = vmatprep.subr.mxu0 0.0
      %1103 = vmatpush1.msra.mxu0 0.0
      %1104 = vmatprep.mubr.f32.mxu0 0.0
      %1105 = vmatmul.mubr.f32.gmra.mrb[0].mxu0 %v1038
      %v1106 = vpop.f32.mrb[0].mxu0
      %v1107 = vadd.f32 %v243, %v1106
      %v1108 = vpop.f32.mrb[0].mxu0
      %1109 = vdwg.mxu0
      %v1110 = vadd.f32 %v1034, %v1107
      %v1111 = vxor.u32 %v1110, 2147483648
      %v1112 = vmul.f32 %v1111, 1.442695
      %v1113 = vpow.pop %v1112
      %v1114 = vadd.f32 %v1113, 1.0
      %v1115 = vrcp.pop %v1114
      %v1116 = vmul.f32 1.0, %v1115
      %1118 = vrot.lane.b32.xlu0 %v1107, 96
      %v1119 = vpop.permute.xlu0 %1118
      %v1121 = vmul.f32 %v1116, %v1119
      %1123 = vrot.lane.b32.xlu0 %v1121, 32
      %v1124 = vpop.permute.xlu0 %1123
      %v1126 = vadd.f32 %v1034, %v1124
      %v1127 = vtanh.pop %v1126
      %v1128 = vsub.f32 1.0, %v1116
      %1130 = vrot.lane.b32.xlu0 %v1127, 112
      %v1131 = vpop.permute.xlu0 %1130
      %v1133 = vmul.f32 %v1128, %v1131
      %v1134 = vmul.f32 %v1116, %v1030
      %v1135 = vadd.f32 %v1133, %v1134
      %v1136 = vstv %s1031
      %vm1137 = vcmp.lt.s32.totalorder %v1136, %v233
      %v1138 = vsel %vm1137, 1, 0
      %1139 = vset.pattern.permute.xlu0 0
      %1140 = vperm.xlu0 %1139, %v1138
      %v1141 = vpop.permute.xlu0 %1140
      %vm1142 = vcmp.eq.s32.totalorder %v1141, 1
      %v1143 = vsel %vm1142, %v1135, %v1030
      %1145 = vrot.lane.b32.xlu0 %v1143, 112
      %v1146 = vpop.permute.xlu0 %1145
      %vm1148 = vcmask 128000
      %1149 = vst.msk [vmem:[%s229] sm:$0x3f] %vm1148, %v1146
      %p1150 = scmp.lt.s32.totalorder %s15, 1
      %s1151 = scalar_select %p1150, %s15, 1
      %s1152 = smul.addr %s1151, 8
      %s1153 = scalar_lea.vmem %s4, %s1152
      // Predicated region
      $region37: #{sden_forward.13} parent=35 // pred_check
        %p1154 = pneg %p132
      $region38: #{sden_forward.13} parent=35 // pred_check_branch
        %1156 = sbr.rel (%p1154) target = $region40
      $region39: #{sden_forward.13} parent=35 // pred_region
        _
      $region40: #{sden_forward.13} parent=35 // pred_fallthru
        _
    $region36: #{sden_forward.13} parent=5 // pred_fallthru
      _
    %p1157 = scmp.le.s32.totalorder 2, %s10
    // Predicated region
    $region41: #{sden_forward.13} parent=5 // pred_check
      %p1158 = pneg %p1157
    $region42: #{sden_forward.13} parent=5 // pred_check_branch
      %1160 = sbr.rel (%p1158) target = $region44
    $region43: #{sden_forward.13} parent=5 // pred_region
      %s1161 = ssub.s32 %s10, 2
      // Predicated region
      $region45: #{sden_forward.13} parent=43 // pred_check
        %p1162 = pneg %p138
      $region46: #{sden_forward.13} parent=43 // pred_check_branch
        %1164 = sbr.rel (%p1162) target = $region48
      $region47: #{sden_forward.13} parent=43 // pred_region
        %p1165 = scmp.lt.s32.totalorder %s16, 1
        %s1166 = scalar_select %p1165, %s16, 1
        %s1167 = smul.addr %s1166, 8
        %s1168 = scalar_lea.vmem %s4, %s1167
      $region48: #{sden_forward.13} parent=43 // pred_fallthru
        _
    $region44: #{sden_forward.13} parent=5 // pred_fallthru
      _
  $region6: #{sden_forward.13} parent=0 // loop_footer
    %s14 = sadd.s32 1, %s10
  $region7: #{sden_forward.13} parent=0 // loop_footer_branch
    %9 = sbr.rel target = $region3
  $region8: #{sden_forward.13} parent=0 // loop_exit
    _

// kernel: sden_forward.17
$region0: #{sden_forward.17}
  #allocation0 [shape = 'u32[]', space=smem, size = 0x4, offset = 0x4, fixed_abs, tag = 'smem constant byte address 0x4 - core index']
  #allocation1 [shape = 'u32[144,128]{1,0:T(1,128)}', space=vmem, size = 0x12000, scoped, tag = 'internal scratch']
  %s0 = inlined_call_operand.vmem [shape: f32[2,3,2,96], index: 0, kind: input, shape index: {}]
  %s1 = inlined_call_operand.vmem [shape: f32[2,32,96], index: 1, kind: input, shape index: {}]
  %s2 = inlined_call_operand.vmem [shape: f32[2,1,96], index: 2, kind: input, shape index: {}]
  %s3 = inlined_call_operand.vmem [shape: s32[2,1], index: 3, kind: input, shape index: {}]
  %s4 = inlined_call_operand.vmem [shape: f32[2,2,32], index: 4, kind: output, shape index: {}]
  %s5 = sld [smem:[#allocation0]]
  $region49: #{sden_forward.17} parent=0
    _
  %s7 = ssub.s32 1, %s5
  %s8 = scalar_select 0, %s7, %s5
  loop: start=0, step=1, limit=4
  $region2: #{sden_forward.17} parent=0 // loop_pre_header
    _
  $region3: #{sden_forward.17} parent=0 // loop_header
    %s10 = sphi 0, %s14
    %p11 = scmp.ge.s32.totalorder %s10, 4
    %s20 = sphi 0, %s22
    %s23 = sphi 0, %s20
    %s24 = sphi 0, %s23
    %s40 = sphi 0, %s24
    %s46 = sphi 0, %s48
    %s49 = sphi 0, %s46
    %s50 = sphi 0, %s49
    %s66 = sphi 0, %s50
    %s72 = sphi 0, %s74
    %s75 = sphi 0, %s72
    %s76 = sphi 0, %s75
    %s92 = sphi 0, %s76
    %s96 = sphi 0, %s96
    %s98 = sphi 0, %s96
    %s99 = sphi 0, %s98
    %s113 = sphi 0, %s99
    %s119 = sphi 0, %s121
    %s122 = sphi 0, %s119
    %s123 = sphi 0, %s122
    %s139 = sphi 0, %s123
  $region4: #{sden_forward.17} parent=0 // loop_header_branch
    %13 = sbr.rel (%p11) target = $region8
  $region5: #{sden_forward.17} parent=0 // loop_body
    %s15 = ssub.s32 %s10, 1
    %s16 = ssub.s32 %s10, 2
    %s17 = sadd.s32 %s10, 1
    %s18 = ssub.s32 %s10, %s17
    %p19 = scmp.eq.s32.totalorder %s18, 0
    %s21 = sadd.s32 %s20, 1
    %s22 = scalar_select %p19, %s20, %s21
    %p25 = pneg %p19
    %p26 = scmp.eq.s32.totalorder %s10, 1
    %p27 = por %p25, %p26
    %p28 = scmp.ne.s32.totalorder %s20, %s23
    %p29 = scmp.eq.s32.totalorder %s10, 0
    %p30 = por %p28, %p29
    %p31 = scmp.ne.s32.totalorder %s20, %s23
    %p32 = scmp.eq.s32.totalorder %s15, 1
    %p33 = por %p31, %p32
    %p34 = scmp.ne.s32.totalorder %s23, %s24
    %p35 = scmp.eq.s32.totalorder %s15, 0
    %p36 = por %p34, %p35
    %p37 = scmp.ne.s32.totalorder %s23, %s24
    %p38 = scmp.eq.s32.totalorder %s16, 1
    %p39 = por %p37, %p38
    %p41 = scmp.ne.s32.totalorder %s24, %s40
    %p42 = scmp.eq.s32.totalorder %s16, 0
    %p43 = por %p41, %p42
    %s44 = ssub.s32 %s10, %s17
    %p45 = scmp.eq.s32.totalorder %s44, 0
    %s47 = sadd.s32 %s46, 1
    %s48 = scalar_select %p45, %s46, %s47
    %p51 = pneg %p45
    %p52 = scmp.eq.s32.totalorder %s10, 1
    %p53 = por %p51, %p52
    %p54 = scmp.ne.s32.totalorder %s46, %s49
    %p55 = scmp.eq.s32.totalorder %s10, 0
    %p56 = por %p54, %p55
    %p57 = scmp.ne.s32.totalorder %s46, %s49
    %p58 = scmp.eq.s32.totalorder %s15, 1
    %p59 = por %p57, %p58
    %p60 = scmp.ne.s32.totalorder %s49, %s50
    %p61 = scmp.eq.s32.totalorder %s15, 0
    %p62 = por %p60, %p61
    %p63 = scmp.ne.s32.totalorder %s49, %s50
    %p64 = scmp.eq.s32.totalorder %s16, 1
    %p65 = por %p63, %p64
    %p67 = scmp.ne.s32.totalorder %s50, %s66
    %p68 = scmp.eq.s32.totalorder %s16, 0
    %p69 = por %p67, %p68
    %s70 = ssub.s32 %s10, %s17
    %p71 = scmp.eq.s32.totalorder %s70, 0
    %s73 = sadd.s32 %s72, 1
    %s74 = scalar_select %p71, %s72, %s73
    %p77 = pneg %p71
    %p78 = scmp.eq.s32.totalorder %s10, 1
    %p79 = por %p77, %p78
    %p80 = scmp.ne.s32.totalorder %s72, %s75
    %p81 = scmp.eq.s32.totalorder %s10, 0
    %p82 = por %p80, %p81
    %p83 = scmp.ne.s32.totalorder %s72, %s75
    %p84 = scmp.eq.s32.totalorder %s15, 1
    %p85 = por %p83, %p84
    %p86 = scmp.ne.s32.totalorder %s75, %s76
    %p87 = scmp.eq.s32.totalorder %s15, 0
    %p88 = por %p86, %p87
    %p89 = scmp.ne.s32.totalorder %s75, %s76
    %p90 = scmp.eq.s32.totalorder %s16, 1
    %p91 = por %p89, %p90
    %p93 = scmp.ne.s32.totalorder %s76, %s92
    %p94 = scmp.eq.s32.totalorder %s16, 0
    %p95 = por %p93, %p94
    %s97 = sadd.s32 %s96, 1
    %p100 = scmp.eq.s32.totalorder %s10, 1
    %p101 = scmp.ne.s32.totalorder %s96, %s98
    %p102 = scmp.eq.s32.totalorder %s10, 0
    %p103 = por %p101, %p102
    %p104 = scmp.ne.s32.totalorder %s96, %s98
    %p105 = scmp.eq.s32.totalorder %s15, 1
    %p106 = por %p104, %p105
    %p107 = scmp.ne.s32.totalorder %s98, %s99
    %p108 = scmp.eq.s32.totalorder %s15, 0
    %p109 = por %p107, %p108
    %p110 = scmp.ne.s32.totalorder %s98, %s99
    %p111 = scmp.eq.s32.totalorder %s16, 1
    %p112 = por %p110, %p111
    %p114 = scmp.ne.s32.totalorder %s99, %s113
    %p115 = scmp.eq.s32.totalorder %s16, 0
    %p116 = por %p114, %p115
    %s117 = ssub.s32 %s10, %s17
    %p118 = scmp.eq.s32.totalorder %s117, 0
    %s120 = sadd.s32 %s119, 1
    %s121 = scalar_select %p118, %s119, %s120
    %p124 = pneg %p118
    %p125 = scmp.eq.s32.totalorder %s10, 1
    %p126 = por %p124, %p125
    %p127 = scmp.ne.s32.totalorder %s119, %s122
    %p128 = scmp.eq.s32.totalorder %s10, 0
    %p129 = por %p127, %p128
    %p130 = scmp.ne.s32.totalorder %s119, %s122
    %p131 = scmp.eq.s32.totalorder %s15, 1
    %p132 = por %p130, %p131
    %p133 = scmp.ne.s32.totalorder %s122, %s123
    %p134 = scmp.eq.s32.totalorder %s15, 0
    %p135 = por %p133, %p134
    %p136 = scmp.ne.s32.totalorder %s122, %s123
    %p137 = scmp.eq.s32.totalorder %s16, 1
    %p138 = por %p136, %p137
    %p140 = scmp.ne.s32.totalorder %s123, %s139
    %p141 = scmp.eq.s32.totalorder %s16, 0
    %p142 = por %p140, %p141
    %p143 = scmp.le.s32.totalorder 1, %s10
    %p144 = scmp.lt.s32.totalorder %s10, 3
    %p145 = pnand %p143, %p144
    %p146 = pneg %p145
    // Predicated region
    $region9: #{sden_forward.17} parent=5 // pred_check
      _
    $region10: #{sden_forward.17} parent=5 // pred_check_branch
      %148 = sbr.rel (%p145) target = $region12
    $region11: #{sden_forward.17} parent=5 // pred_region
      %s149 = ssub.s32 %s10, 1
      // Predicated region
      $region13: #{sden_forward.17} parent=11 // pred_check
        %p150 = pneg %p109
      $region14: #{sden_forward.17} parent=11 // pred_check_branch
        %152 = sbr.rel (%p150) target = $region16
      $region15: #{sden_forward.17} parent=11 // pred_region
        _
      $region16: #{sden_forward.17} parent=11 // pred_fallthru
        _
    $region12: #{sden_forward.17} parent=5 // pred_fallthru
      _
    %p153 = scmp.lt.s32.totalorder %s10, 2
    // Predicated region
    $region17: #{sden_forward.17} parent=5 // pred_check
      %p154 = pneg %p153
    $region18: #{sden_forward.17} parent=5 // pred_check_branch
      %156 = sbr.rel (%p154) target = $region20
    $region19: #{sden_forward.17} parent=5 // pred_region
      // Predicated region
      $region21: #{sden_forward.17} parent=19 // pred_check
        %p157 = pneg %p30
      $region22: #{sden_forward.17} parent=19 // pred_check_branch
        %159 = sbr.rel (%p157) target = $region24
      $region23: #{sden_forward.17} parent=19 // pred_region
        %p160 = scmp.lt.s32.totalorder %s10, 1
        %s161 = scalar_select %p160, %s10, 1
        %s162 = smul.addr %s161, 3
        %s163 = smul.addr %s162, 2
        %s164 = scalar_lea.vmem %s0, %s163
      $region24: #{sden_forward.17} parent=19 // pred_fallthru
        _
      // Predicated region
      $region25: #{sden_forward.17} parent=19 // pred_check
        %p165 = pneg %p56
      $region26: #{sden_forward.17} parent=19 // pred_check_branch
        %167 = sbr.rel (%p165) target = $region28
      $region27: #{sden_forward.17} parent=19 // pred_region
        %p168 = scmp.lt.s32.totalorder %s10, 1
        %s169 = scalar_select %p168, %s10, 1
        %s170 = smul.addr %s169, 4
        %s171 = smul.addr %s170, 8
        %s172 = scalar_lea.vmem %s1, %s171
      $region28: #{sden_forward.17} parent=19 // pred_fallthru
        _
      // Predicated region
      $region29: #{sden_forward.17} parent=19 // pred_check
        %p173 = pneg %p82
      $region30: #{sden_forward.17} parent=19 // pred_check_branch
        %175 = sbr.rel (%p173) target = $region32
      $region31: #{sden_forward.17} parent=19 // pred_region
        %p176 = scmp.lt.s32.totalorder %s10, 1
        %s177 = scalar_select %p176, %s10, 1
        %s178 = scalar_lea.vmem %s2, %s177
      $region32: #{sden_forward.17} parent=19 // pred_fallthru
        _
    $region20: #{sden_forward.17} parent=5 // pred_fallthru
      _
    %p179 = scmp.le.s32.totalorder 1, %s10
    %p180 = scmp.lt.s32.totalorder %s10, 3
    %p181 = pnand %p179, %p180
    %p182 = pneg %p181
    // Predicated region
    $region33: #{sden_forward.17} parent=5 // pred_check
      _
    $region34: #{sden_forward.17} parent=5 // pred_check_branch
      %184 = sbr.rel (%p181) target = $region36
    $region35: #{sden_forward.17} parent=5 // pred_region
      %s185 = ssub.s32 %s10, 1
      %p186 = scmp.lt.s32.totalorder %s15, 1
      %s187 = scalar_select %p186, %s15, 1
      %s188 = smul.addr %s187, 3
      %s189 = smul.addr %s188, 2
      %s190 = scalar_lea.vmem %s0, %s189
      %p191 = pneg %p36
      %p192 = pneg %p33
      %p193 = scmp.lt.s32.totalorder %s15, 1
      %s194 = scalar_select %p193, %s15, 1
      %s195 = smul.addr %s194, 4
      %s196 = smul.addr %s195, 8
      %s197 = scalar_lea.vmem %s1, %s196
      %p198 = pneg %p62
      %p199 = pneg %p59
      %p200 = scmp.lt.s32.totalorder %s15, 1
      %s201 = scalar_select %p200, %s15, 1
      %s202 = scalar_lea.vmem %s2, %s201
      %p203 = pneg %p88
      %p204 = pneg %p85
      %p205 = pneg %p109
      %p206 = pneg %p106
      %p207 = pneg %p135
      %p208 = pneg %p132
      %p209 = scmp.lt.s32.totalorder %s15, 1
      %s210 = scalar_select %p209, %s15, 1
      %s211 = smul.addr %s210, 2
      %s212 = scalar_lea.vmem %s4, %s211
      %p213 = scmp.lt.s32.totalorder %s15, 1
      %s214 = scalar_select %p213, %s15, 1
      %s215 = smul.addr %s214, 3
      %s216 = smul.addr %s215, 2
      %s217 = scalar_lea.vmem %s0, %s216
      %p218 = scmp.lt.s32.totalorder %s15, 1
      %s219 = scalar_select %p218, %s15, 1
      %s220 = smul.addr %s219, 4
      %s221 = smul.addr %s220, 8
      %s222 = scalar_lea.vmem %s1, %s221
      %p223 = scmp.lt.s32.totalorder %s15, 1
      %s224 = scalar_select %p223, %s15, 1
      %s225 = scalar_lea.vmem %s2, %s224
      %p226 = scmp.lt.s32.totalorder %s15, 1
      %s227 = scalar_select %p226, %s15, 1
      %s228 = smul.addr %s227, 2
      %s229 = scalar_lea.vmem %s4, %s228
      %v230 = vld [vmem:[%s222] sm:$0xff]
      %v231 = vld [vmem:[%s222 + $0x8] sm:$0xff]
      %v232 = vld [vmem:[%s222 + $0x10] sm:$0xff]
      %v233 = vld [vmem:[%s222 + $0x18] sm:$0xff]
      %v234 = vld [vmem:[%s225] sm:$0x1]
      %v235 = vld [vmem:[%s3] sm:$0x3]
      %p236 = scmp.eq.s32.totalorder %s15, 1
      %s237 = scalar_select %p236, 2, 0
      %s238 = smul.u32 %s237, 2
      %s239 = scalar_lea.vmem %s217, %s238
      %v240 = vld [vmem:[%s239] sm:$0x3]
      %v242 = vlaneseq
      %v243 = vshrl.u32 %v242, 7
      %v244 = vsub.s32 0, %v243
      %v245 = vrot.slane %v234, %v244
      %vm247 = vcmask 261120
      %v249 = vsel %vm247, 0.0, 0
      %251 = vmatprep.subr.mxu0 0.0
      %252 = vmatpush1.msra.mxu0 %v230
      %253 = vmatprep.subr.mxu0 0.0
      %254 = vmatpush1.msra.mxu0 %v231
      %255 = vmatprep.subr.mxu0 0.0
      %256 = vmatpush1.msra.mxu0 %v232
      %257 = vmatprep.subr.mxu0 0.0
      %258 = vmatpush1.msra.mxu0 %v233
      %259 = vmatprep.subr.mxu0 0.0
      %260 = vmatpush1.msra.mxu0 0.0
      %261 = vmatprep.subr.mxu0 0.0
      %262 = vmatpush1.msra.mxu0 0.0
      %263 = vmatprep.subr.mxu0 0.0
      %264 = vmatpush1.msra.mxu0 0.0
      %265 = vmatprep.subr.mxu0 0.0
      %266 = vmatpush1.msra.mxu0 0.0
      %267 = vmatprep.subr.mxu0 0.0
      %268 = vmatpush1.msra.mxu0 0.0
      %269 = vmatprep.subr.mxu0 0.0
      %270 = vmatpush1.msra.mxu0 0.0
      %271 = vmatprep.subr.mxu0 0.0
      %272 = vmatpush1.msra.mxu0 0.0
      %273 = vmatprep.subr.mxu0 0.0
      %274 = vmatpush1.msra.mxu0 0.0
      %275 = vmatprep.subr.mxu0 0.0
      %276 = vmatpush1.msra.mxu0 0.0
      %277 = vmatprep.subr.mxu0 0.0
      %278 = vmatpush1.msra.mxu0 0.0
      %279 = vmatprep.subr.mxu0 0.0
      %280 = vmatpush1.msra.mxu0 0.0
      %281 = vmatprep.subr.mxu0 0.0
      %282 = vmatpush1.msra.mxu0 0.0
      %283 = vmatprep.subr.mxu0 0.0
      %284 = vmatpush1.msra.mxu0 0.0
      %285 = vmatprep.subr.mxu0 0.0
      %286 = vmatpush1.msra.mxu0 0.0
      %287 = vmatprep.subr.mxu0 0.0
      %288 = vmatpush1.msra.mxu0 0.0
      %289 = vmatprep.subr.mxu0 0.0
      %290 = vmatpush1.msra.mxu0 0.0
      %291 = vmatprep.subr.mxu0 0.0
      %292 = vmatpush1.msra.mxu0 0.0
      %293 = vmatprep.subr.mxu0 0.0
      %294 = vmatpush1.msra.mxu0 0.0
      %295 = vmatprep.subr.mxu0 0.0
      %296 = vmatpush1.msra.mxu0 0.0
      %297 = vmatprep.subr.mxu0 0.0
      %298 = vmatpush1.msra.mxu0 0.0
      %299 = vmatprep.subr.mxu0 0.0
      %300 = vmatpush1.msra.mxu0 0.0
      %301 = vmatprep.subr.mxu0 0.0
      %302 = vmatpush1.msra.mxu0 0.0
      %303 = vmatprep.subr.mxu0 0.0
      %304 = vmatpush1.msra.mxu0 0.0
      %305 = vmatprep.subr.mxu0 0.0
      %306 = vmatpush1.msra.mxu0 0.0
      %307 = vmatprep.subr.mxu0 0.0
      %308 = vmatpush1.msra.mxu0 0.0
      %309 = vmatprep.subr.mxu0 0.0
      %310 = vmatpush1.msra.mxu0 0.0
      %311 = vmatprep.subr.mxu0 0.0
      %312 = vmatpush1.msra.mxu0 0.0
      %313 = vmatprep.subr.mxu0 0.0
      %314 = vmatpush1.msra.mxu0 0.0
      %315 = vmatprep.mubr.f32.mxu0 0.0
      %316 = vmatmul.mubr.f32.gmra.mrb[0].mxu0 %v249
      %v317 = vpop.f32.mrb[0].mxu0
      %v318 = vadd.f32 %v245, %v317
      %v319 = vpop.f32.mrb[0].mxu0
      %320 = vdwg.mxu0
      %v321 = vadd.f32 %v240, %v318
      %v322 = vxor.u32 %v321, 2147483648
      %v323 = vmul.f32 %v322, 1.442695
      %v324 = vpow.pop %v323
      %v325 = vadd.f32 %v324, 1.0
      %v326 = vrcp.pop %v325
      %v327 = vmul.f32 1.0, %v326
      %329 = vrot.lane.b32.xlu0 %v318, 64
      %v330 = vpop.permute.xlu0 %329
      %v332 = vmul.f32 %v327, %v330
      %334 = vrot.lane.b32.xlu0 %v332, 64
      %v335 = vpop.permute.xlu0 %334
      %v337 = vadd.f32 %v240, %v335
      %v338 = vtanh.pop %v337
      %v339 = vsub.f32 1.0, %v327
      %341 = vrot.lane.b32.xlu0 %v338, 96
      %v342 = vpop.permute.xlu0 %341
      %v344 = vmul.f32 %v339, %v342
      %v345 = vmul.f32 %v327, 0.0
      %v346 = vadd.f32 %v344, %v345
      %v347 = vstv %s237
      %vm348 = vcmp.lt.s32.totalorder %v347, %v235
      %v349 = vsel %vm348, 1, 0
      %350 = vset.pattern.permute.xlu0 0
      %351 = vperm.xlu0 %350, %v349
      %v352 = vpop.permute.xlu0 %351
      %vm353 = vcmp.eq.s32.totalorder %v352, 1
      %v354 = vsel %vm353, %v346, 0.0
      %s355 = scalar_lea.vmem %s217, 2
      %v356 = vld [vmem:[%s355] sm:$0x3]
      %358 = vrot.lane.b32.xlu0 %v354, 96
      %v359 = vpop.permute.xlu0 %358
      %v360 = vsel %vm247, %v359, 0
      %362 = vmatprep.subr.mxu0 0.0
      %363 = vmatpush1.msra.mxu0 %v230
      %364 = vmatprep.subr.mxu0 0.0
      %365 = vmatpush1.msra.mxu0 %v231
      %366 = vmatprep.subr.mxu0 0.0
      %367 = vmatpush1.msra.mxu0 %v232
      %368 = vmatprep.subr.mxu0 0.0
      %369 = vmatpush1.msra.mxu0 %v233
      %370 = vmatprep.subr.mxu0 0.0
      %371 = vmatpush1.msra.mxu0 0.0
      %372 = vmatprep.subr.mxu0 0.0
      %373 = vmatpush1.msra.mxu0 0.0
      %374 = vmatprep.subr.mxu0 0.0
      %375 = vmatpush1.msra.mxu0 0.0
      %376 = vmatprep.subr.mxu0 0.0
      %377 = vmatpush1.msra.mxu0 0.0
      %378 = vmatprep.subr.mxu0 0.0
      %379 = vmatpush1.msra.mxu0 0.0
      %380 = vmatprep.subr.mxu0 0.0
      %381 = vmatpush1.msra.mxu0 0.0
      %382 = vmatprep.subr.mxu0 0.0
      %383 = vmatpush1.msra.mxu0 0.0
      %384 = vmatprep.subr.mxu0 0.0
      %385 = vmatpush1.msra.mxu0 0.0
      %386 = vmatprep.subr.mxu0 0.0
      %387 = vmatpush1.msra.mxu0 0.0
      %388 = vmatprep.subr.mxu0 0.0
      %389 = vmatpush1.msra.mxu0 0.0
      %390 = vmatprep.subr.mxu0 0.0
      %391 = vmatpush1.msra.mxu0 0.0
      %392 = vmatprep.subr.mxu0 0.0
      %393 = vmatpush1.msra.mxu0 0.0
      %394 = vmatprep.subr.mxu0 0.0
      %395 = vmatpush1.msra.mxu0 0.0
      %396 = vmatprep.subr.mxu0 0.0
      %397 = vmatpush1.msra.mxu0 0.0
      %398 = vmatprep.subr.mxu0 0.0
      %399 = vmatpush1.msra.mxu0 0.0
      %400 = vmatprep.subr.mxu0 0.0
      %401 = vmatpush1.msra.mxu0 0.0
      %402 = vmatprep.subr.mxu0 0.0
      %403 = vmatpush1.msra.mxu0 0.0
      %404 = vmatprep.subr.mxu0 0.0
      %405 = vmatpush1.msra.mxu0 0.0
      %406 = vmatprep.subr.mxu0 0.0
      %407 = vmatpush1.msra.mxu0 0.0
      %408 = vmatprep.subr.mxu0 0.0
      %409 = vmatpush1.msra.mxu0 0.0
      %410 = vmatprep.subr.mxu0 0.0
      %411 = vmatpush1.msra.mxu0 0.0
      %412 = vmatprep.subr.mxu0 0.0
      %413 = vmatpush1.msra.mxu0 0.0
      %414 = vmatprep.subr.mxu0 0.0
      %415 = vmatpush1.msra.mxu0 0.0
      %416 = vmatprep.subr.mxu0 0.0
      %417 = vmatpush1.msra.mxu0 0.0
      %418 = vmatprep.subr.mxu0 0.0
      %419 = vmatpush1.msra.mxu0 0.0
      %420 = vmatprep.subr.mxu0 0.0
      %421 = vmatpush1.msra.mxu0 0.0
      %422 = vmatprep.subr.mxu0 0.0
      %423 = vmatpush1.msra.mxu0 0.0
      %424 = vmatprep.subr.mxu0 0.0
      %425 = vmatpush1.msra.mxu0 0.0
      %426 = vmatprep.mubr.f32.mxu0 0.0
      %427 = vmatmul.mubr.f32.gmra.mrb[0].mxu0 %v360
      %v428 = vpop.f32.mrb[0].mxu0
      %v429 = vadd.f32 %v245, %v428
      %v430 = vpop.f32.mrb[0].mxu0
      %431 = vdwg.mxu0
      %v432 = vadd.f32 %v356, %v429
      %v433 = vxor.u32 %v432, 2147483648
      %v434 = vmul.f32 %v433, 1.442695
      %v435 = vpow.pop %v434
      %v436 = vadd.f32 %v435, 1.0
      %v437 = vrcp.pop %v436
      %v438 = vmul.f32 1.0, %v437
      %440 = vrot.lane.b32.xlu0 %v429, 64
      %v441 = vpop.permute.xlu0 %440
      %v443 = vmul.f32 %v438, %v441
      %445 = vrot.lane.b32.xlu0 %v443, 64
      %v446 = vpop.permute.xlu0 %445
      %v448 = vadd.f32 %v356, %v446
      %v449 = vtanh.pop %v448
      %v450 = vsub.f32 1.0, %v438
      %452 = vrot.lane.b32.xlu0 %v449, 96
      %v453 = vpop.permute.xlu0 %452
      %v455 = vmul.f32 %v450, %v453
      %v456 = vmul.f32 %v438, %v354
      %v457 = vadd.f32 %v455, %v456
      %vm458 = vcmp.gt.s32.totalorder %v235, 1
      %v459 = vsel %vm458, 1, 0
      %460 = vset.pattern.permute.xlu0 0
      %461 = vperm.xlu0 %460, %v459
      %v462 = vpop.permute.xlu0 %461
      %vm463 = vcmp.eq.s32.totalorder %v462, 1
      %v464 = vsel %vm463, %v457, %v354
      %s465 = scalar_select %p236, 0, 2
      %s466 = smul.u32 %s465, 2
      %s467 = scalar_lea.vmem %s217, %s466
      %v468 = vld [vmem:[%s467] sm:$0x3]
      %470 = vrot.lane.b32.xlu0 %v464, 96
      %v471 = vpop.permute.xlu0 %470
      %v472 = vsel %vm247, %v471, 0
      %474 = vmatprep.subr.mxu0 0.0
      %475 = vmatpush1.msra.mxu0 %v230
      %476 = vmatprep.subr.mxu0 0.0
      %477 = vmatpush1.msra.mxu0 %v231
      %478 = vmatprep.subr.mxu0 0.0
      %479 = vmatpush1.msra.mxu0 %v232
      %480 = vmatprep.subr.mxu0 0.0
      %481 = vmatpush1.msra.mxu0 %v233
      %482 = vmatprep.subr.mxu0 0.0
      %483 = vmatpush1.msra.mxu0 0.0
      %484 = vmatprep.subr.mxu0 0.0
      %485 = vmatpush1.msra.mxu0 0.0
      %486 = vmatprep.subr.mxu0 0.0
      %487 = vmatpush1.msra.mxu0 0.0
      %488 = vmatprep.subr.mxu0 0.0
      %489 = vmatpush1.msra.mxu0 0.0
      %490 = vmatprep.subr.mxu0 0.0
      %491 = vmatpush1.msra.mxu0 0.0
      %492 = vmatprep.subr.mxu0 0.0
      %493 = vmatpush1.msra.mxu0 0.0
      %494 = vmatprep.subr.mxu0 0.0
      %495 = vmatpush1.msra.mxu0 0.0
      %496 = vmatprep.subr.mxu0 0.0
      %497 = vmatpush1.msra.mxu0 0.0
      %498 = vmatprep.subr.mxu0 0.0
      %499 = vmatpush1.msra.mxu0 0.0
      %500 = vmatprep.subr.mxu0 0.0
      %501 = vmatpush1.msra.mxu0 0.0
      %502 = vmatprep.subr.mxu0 0.0
      %503 = vmatpush1.msra.mxu0 0.0
      %504 = vmatprep.subr.mxu0 0.0
      %505 = vmatpush1.msra.mxu0 0.0
      %506 = vmatprep.subr.mxu0 0.0
      %507 = vmatpush1.msra.mxu0 0.0
      %508 = vmatprep.subr.mxu0 0.0
      %509 = vmatpush1.msra.mxu0 0.0
      %510 = vmatprep.subr.mxu0 0.0
      %511 = vmatpush1.msra.mxu0 0.0
      %512 = vmatprep.subr.mxu0 0.0
      %513 = vmatpush1.msra.mxu0 0.0
      %514 = vmatprep.subr.mxu0 0.0
      %515 = vmatpush1.msra.mxu0 0.0
      %516 = vmatprep.subr.mxu0 0.0
      %517 = vmatpush1.msra.mxu0 0.0
      %518 = vmatprep.subr.mxu0 0.0
      %519 = vmatpush1.msra.mxu0 0.0
      %520 = vmatprep.subr.mxu0 0.0
      %521 = vmatpush1.msra.mxu0 0.0
      %522 = vmatprep.subr.mxu0 0.0
      %523 = vmatpush1.msra.mxu0 0.0
      %524 = vmatprep.subr.mxu0 0.0
      %525 = vmatpush1.msra.mxu0 0.0
      %526 = vmatprep.subr.mxu0 0.0
      %527 = vmatpush1.msra.mxu0 0.0
      %528 = vmatprep.subr.mxu0 0.0
      %529 = vmatpush1.msra.mxu0 0.0
      %530 = vmatprep.subr.mxu0 0.0
      %531 = vmatpush1.msra.mxu0 0.0
      %532 = vmatprep.subr.mxu0 0.0
      %533 = vmatpush1.msra.mxu0 0.0
      %534 = vmatprep.subr.mxu0 0.0
      %535 = vmatpush1.msra.mxu0 0.0
      %536 = vmatprep.subr.mxu0 0.0
      %537 = vmatpush1.msra.mxu0 0.0
      %538 = vmatprep.mubr.f32.mxu0 0.0
      %539 = vmatmul.mubr.f32.gmra.mrb[0].mxu0 %v472
      %v540 = vpop.f32.mrb[0].mxu0
      %v541 = vadd.f32 %v245, %v540
      %v542 = vpop.f32.mrb[0].mxu0
      %543 = vdwg.mxu0
      %v544 = vadd.f32 %v468, %v541
      %v545 = vxor.u32 %v544, 2147483648
      %v546 = vmul.f32 %v545, 1.442695
      %v547 = vpow.pop %v546
      %v548 = vadd.f32 %v547, 1.0
      %v549 = vrcp.pop %v548
      %v550 = vmul.f32 1.0, %v549
      %552 = vrot.lane.b32.xlu0 %v541, 64
      %v553 = vpop.permute.xlu0 %552
      %v555 = vmul.f32 %v550, %v553
      %557 = vrot.lane.b32.xlu0 %v555, 64
      %v558 = vpop.permute.xlu0 %557
      %v560 = vadd.f32 %v468, %v558
      %v561 = vtanh.pop %v560
      %v562 = vsub.f32 1.0, %v550
      %564 = vrot.lane.b32.xlu0 %v561, 96
      %v565 = vpop.permute.xlu0 %564
      %v567 = vmul.f32 %v562, %v565
      %v568 = vmul.f32 %v550, %v464
      %v569 = vadd.f32 %v567, %v568
      %v570 = vstv %s465
      %vm571 = vcmp.lt.s32.totalorder %v570, %v235
      %v572 = vsel %vm571, 1, 0
      %573 = vset.pattern.permute.xlu0 0
      %574 = vperm.xlu0 %573, %v572
      %v575 = vpop.permute.xlu0 %574
      %vm576 = vcmp.eq.s32.totalorder %v575, 1
      %v577 = vsel %vm576, %v569, %v464
      %579 = vrot.lane.b32.xlu0 %v577, 96
      %v580 = vpop.permute.xlu0 %579
      %vm582 = vcmask 254976
      %583 = vst.msk [vmem:[%s229] sm:$0x3] %vm582, %v580
      %p584 = scmp.lt.s32.totalorder %s15, 1
      %s585 = scalar_select %p584, %s15, 1
      %s586 = smul.addr %s585, 2
      %s587 = scalar_lea.vmem %s4, %s586
      // Predicated region
      $region37: #{sden_forward.17} parent=35 // pred_check
        %p588 = pneg %p132
      $region38: #{sden_forward.17} parent=35 // pred_check_branch
        %590 = sbr.rel (%p588) target = $region40
      $region39: #{sden_forward.17} parent=35 // pred_region
        _
      $region40: #{sden_forward.17} parent=35 // pred_fallthru
        _
    $region36: #{sden_forward.17} parent=5 // pred_fallthru
      _
    %p591 = scmp.le.s32.totalorder 2, %s10
    // Predicated region
    $region41: #{sden_forward.17} parent=5 // pred_check
      %p592 = pneg %p591
    $region42: #{sden_forward.17} parent=5 // pred_check_branch
      %594 = sbr.rel (%p592) target = $region44
    $region43: #{sden_forward.17} parent=5 // pred_region
      %s595 = ssub.s32 %s10, 2
      // Predicated region
      $region45: #{sden_forward.17} parent=43 // pred_check
        %p596 = pneg %p138
      $region46: #{sden_forward.17} parent=43 // pred_check_branch
        %598 = sbr.rel (%p596) target = $region48
      $region47: #{sden_forward.17} parent=43 // pred_region
        %p599 = scmp.lt.s32.totalorder %s16, 1
        %s600 = scalar_select %p599, %s16, 1
        %s601 = smul.addr %s600, 2
        %s602 = scalar_lea.vmem %s4, %s601
      $region48: #{sden_forward.17} parent=43 // pred_fallthru
        _
    $region44: #{sden_forward.17} parent=5 // pred_fallthru
      _
  $region6: #{sden_forward.17} parent=0 // loop_footer
    %s14 = sadd.s32 1, %s10
  $region7: #{sden_forward.17} parent=0 // loop_footer_branch
    %9 = sbr.rel target = $region3
  $region8: #{sden_forward.17} parent=0 // loop_exit
    _

// kernel: sden_forward.18
$region0: #{sden_forward.18}
  #allocation0 [shape = 'u32[]', space=smem, size = 0x4, offset = 0x4, fixed_abs, tag = 'smem constant byte address 0x4 - core index']
  #allocation1 [shape = 'u32[144,128]{1,0:T(1,128)}', space=vmem, size = 0x12000, scoped, tag = 'internal scratch']
  %s0 = inlined_call_operand.vmem [shape: f32[16,16], index: 0, kind: input, shape index: {}]
  %s1 = inlined_call_operand.vmem [shape: bf16[16,192], index: 1, kind: input, shape index: {}]
  %s2 = inlined_call_operand.vmem [shape: f32[1,192], index: 2, kind: input, shape index: {}]
  %s3 = inlined_call_operand.vmem [shape: f32[16,192], index: 3, kind: output, shape index: {}]
  %s4 = sld [smem:[#allocation0]]
  $region22: #{sden_forward.18} parent=0
    _
  %s6 = ssub.s32 1, %s4
  %s7 = scalar_select 0, %s6, %s4
  // Predicated region
  $region2: #{sden_forward.18} parent=0 // pred_check
    _
  $region3: #{sden_forward.18} parent=0 // pred_check_branch
    %9 = sbr.rel (0) target = $region5
  $region4: #{sden_forward.18} parent=0 // pred_region
    _
  $region5: #{sden_forward.18} parent=0 // pred_fallthru
    _
  // Predicated region
  $region6: #{sden_forward.18} parent=0 // pred_check
    _
  $region7: #{sden_forward.18} parent=0 // pred_check_branch
    %11 = sbr.rel (0) target = $region9
  $region8: #{sden_forward.18} parent=0 // pred_region
    _
  $region9: #{sden_forward.18} parent=0 // pred_fallthru
    _
  // Predicated region
  $region10: #{sden_forward.18} parent=0 // pred_check
    _
  $region11: #{sden_forward.18} parent=0 // pred_check_branch
    %13 = sbr.rel (0) target = $region13
  $region12: #{sden_forward.18} parent=0 // pred_region
    _
  $region13: #{sden_forward.18} parent=0 // pred_fallthru
    _
  %v15 = vld [vmem:[%s0] sm:$0xff]
  %v16 = vld [vmem:[%s0 + $0x8] sm:$0xff]
  %v17 = vpack.c.bf16 %v16, %v15
  %v18 = vld [vmem:[%s1] sm:$0xff]
  %v19 = vld [vmem:[%s1 + $0x8] sm:$0xff]
  %v20 = vld [vmem:[%s2] sm:$0x3]
  %v22 = vlaneseq
  %v23 = vshrl.u32 %v22, 7
  %v24 = vsub.s32 0, %v23
  %v25 = vrot.slane %v20, %v24
  %v26 = vlaneseq
  %v27 = vshrl.u32 %v26, 7
  %v28 = vsub.s32 1, %v27
  %v29 = vrot.slane %v20, %v28
  %v34 = vunpack.c.l.b16 %v18
  %v35 = vunpack.c.h.b16 %v18
  %v36 = vunpack.c.l.b16 %v19
  %v37 = vunpack.c.h.b16 %v19
  %v38 = vpack.c.b16 %v36, %v34
  %v39 = vpack.c.b16 %v37, %v35
  %vm42 = vcmask 130048
  %v44 = vsel %vm42, %v17, 0
  %46 = vmatprep.subr.bf16.mxu0 %v39
  %47 = vmatpush1.bf16.msra.mxu0 %v38
  %48 = vmatprep.subr.bf16.mxu0 0
  %49 = vmatpush1.bf16.msra.mxu0 0
  %50 = vmatprep.subr.bf16.mxu0 0
  %51 = vmatpush1.bf16.msra.mxu0 0
  %52 = vmatprep.subr.bf16.mxu0 0
  %53 = vmatpush1.bf16.msra.mxu0 0
  %54 = vmatprep.subr.bf16.mxu0 0
  %55 = vmatpush1.bf16.msra.mxu0 0
  %56 = vmatprep.subr.bf16.mxu0 0
  %57 = vmatpush1.bf16.msra.mxu0 0
  %58 = vmatprep.subr.bf16.mxu0 0
  %59 = vmatpush1.bf16.msra.mxu0 0
  %60 = vmatprep.subr.bf16.mxu0 0
  %61 = vmatpush1.bf16.msra.mxu0 0
  %62 = vmatprep.subr.bf16.mxu0 0
  %63 = vmatpush1.bf16.msra.mxu0 0
  %64 = vmatprep.subr.bf16.mxu0 0
  %65 = vmatpush1.bf16.msra.mxu0 0
  %66 = vmatprep.subr.bf16.mxu0 0
  %67 = vmatpush1.bf16.msra.mxu0 0
  %68 = vmatprep.subr.bf16.mxu0 0
  %69 = vmatpush1.bf16.msra.mxu0 0
  %70 = vmatprep.subr.bf16.mxu0 0
  %71 = vmatpush1.bf16.msra.mxu0 0
  %72 = vmatprep.subr.bf16.mxu0 0
  %73 = vmatpush1.bf16.msra.mxu0 0
  %74 = vmatprep.subr.bf16.mxu0 0
  %75 = vmatpush1.bf16.msra.mxu0 0
  %76 = vmatprep.subr.bf16.mxu0 0
  %77 = vmatpush1.bf16.msra.mxu0 0
  %78 = vmatprep.mubr.bf16.mxu0 0
  %79 = vmatmul.mubr.bf16.gmra.mrb[0].mxu0 %v44
  %v80 = vpop.f32.mrb[0].mxu0
  %v81 = vadd.f32 %v25, %v80
  %v82 = vpop.f32.mrb[0].mxu0
  %v83 = vadd.f32 %v29, %v82
  %v84 = vpop.f32.mrb[0].mxu0
  %v85 = vadd.f32 %v25, %v84
  %v86 = vpop.f32.mrb[0].mxu0
  %v87 = vadd.f32 %v29, %v86
  %88 = vdwg.mxu0
  %89 = vst [vmem:[%s3] sm:$0xff] %v81
  %vm90 = vcmask 523264
  %91 = vst.msk [vmem:[%s3 + $0x8] sm:$0xff] %vm90, %v83
  %92 = vst [vmem:[%s3 + $0x10] sm:$0xff] %v85
  %93 = vst.msk [vmem:[%s3 + $0x18] sm:$0xff] %vm90, %v87
  // Predicated region
  $region14: #{sden_forward.18} parent=0 // pred_check
    _
  $region15: #{sden_forward.18} parent=0 // pred_check_branch
    %95 = sbr.rel (0) target = $region17
  $region16: #{sden_forward.18} parent=0 // pred_region
    _
  $region17: #{sden_forward.18} parent=0 // pred_fallthru
    _
  // Predicated region
  $region18: #{sden_forward.18} parent=0 // pred_check
    _
  $region19: #{sden_forward.18} parent=0 // pred_check_branch
    %97 = sbr.rel (0) target = $region21
  $region20: #{sden_forward.18} parent=0 // pred_region
    _
  $region21: #{sden_forward.18} parent=0 // pred_fallthru
    _

// kernel: sden_forward.19
$region0: #{sden_forward.19}
  #allocation0 [shape = 'u32[]', space=smem, size = 0x4, offset = 0x4, fixed_abs, tag = 'smem constant byte address 0x4 - core index']
  #allocation1 [shape = 'u32[144,128]{1,0:T(1,128)}', space=vmem, size = 0x12000, scoped, tag = 'internal scratch']
  %s0 = inlined_call_operand.vmem [shape: f32[2,8,2,96], index: 0, kind: input, shape index: {}]
  %s1 = inlined_call_operand.vmem [shape: f32[2,32,96], index: 1, kind: input, shape index: {}]
  %s2 = inlined_call_operand.vmem [shape: f32[2,1,96], index: 2, kind: input, shape index: {}]
  %s3 = inlined_call_operand.vmem [shape: f32[2,8,2,32], index: 3, kind: output, shape index: {}]
  %s4 = sld [smem:[#allocation0]]
  $region45: #{sden_forward.19} parent=0
    _
  %s6 = ssub.s32 1, %s4
  %s7 = scalar_select 0, %s6, %s4
  loop: start=0, step=1, limit=4
  $region2: #{sden_forward.19} parent=0 // loop_pre_header
    _
  $region3: #{sden_forward.19} parent=0 // loop_header
    %s9 = sphi 0, %s13
    %p10 = scmp.ge.s32.totalorder %s9, 4
    %s19 = sphi 0, %s21
    %s22 = sphi 0, %s19
    %s23 = sphi 0, %s22
    %s39 = sphi 0, %s23
    %s45 = sphi 0, %s47
    %s48 = sphi 0, %s45
    %s49 = sphi 0, %s48
    %s65 = sphi 0, %s49
    %s71 = sphi 0, %s73
    %s74 = sphi 0, %s71
    %s75 = sphi 0, %s74
    %s91 = sphi 0, %s75
    %s97 = sphi 0, %s99
    %s100 = sphi 0, %s97
    %s101 = sphi 0, %s100
    %s117 = sphi 0, %s101
  $region4: #{sden_forward.19} parent=0 // loop_header_branch
    %12 = sbr.rel (%p10) target = $region8
  $region5: #{sden_forward.19} parent=0 // loop_body
    %s14 = ssub.s32 %s9, 1
    %s15 = ssub.s32 %s9, 2
    %s16 = sadd.s32 %s9, 1
    %s17 = ssub.s32 %s9, %s16
    %p18 = scmp.eq.s32.totalorder %s17, 0
    %s20 = sadd.s32 %s19, 1
    %s21 = scalar_select %p18, %s19, %s20
    %p24 = pneg %p18
    %p25 = scmp.eq.s32.totalorder %s9, 1
    %p26 = por %p24, %p25
    %p27 = scmp.ne.s32.totalorder %s19, %s22
    %p28 = scmp.eq.s32.totalorder %s9, 0
    %p29 = por %p27, %p28
    %p30 = scmp.ne.s32.totalorder %s19, %s22
    %p31 = scmp.eq.s32.totalorder %s14, 1
    %p32 = por %p30, %p31
    %p33 = scmp.ne.s32.totalorder %s22, %s23
    %p34 = scmp.eq.s32.totalorder %s14, 0
    %p35 = por %p33, %p34
    %p36 = scmp.ne.s32.totalorder %s22, %s23
    %p37 = scmp.eq.s32.totalorder %s15, 1
    %p38 = por %p36, %p37
    %p40 = scmp.ne.s32.totalorder %s23, %s39
    %p41 = scmp.eq.s32.totalorder %s15, 0
    %p42 = por %p40, %p41
    %s43 = ssub.s32 %s9, %s16
    %p44 = scmp.eq.s32.totalorder %s43, 0
    %s46 = sadd.s32 %s45, 1
    %s47 = scalar_select %p44, %s45, %s46
    %p50 = pneg %p44
    %p51 = scmp.eq.s32.totalorder %s9, 1
    %p52 = por %p50, %p51
    %p53 = scmp.ne.s32.totalorder %s45, %s48
    %p54 = scmp.eq.s32.totalorder %s9, 0
    %p55 = por %p53, %p54
    %p56 = scmp.ne.s32.totalorder %s45, %s48
    %p57 = scmp.eq.s32.totalorder %s14, 1
    %p58 = por %p56, %p57
    %p59 = scmp.ne.s32.totalorder %s48, %s49
    %p60 = scmp.eq.s32.totalorder %s14, 0
    %p61 = por %p59, %p60
    %p62 = scmp.ne.s32.totalorder %s48, %s49
    %p63 = scmp.eq.s32.totalorder %s15, 1
    %p64 = por %p62, %p63
    %p66 = scmp.ne.s32.totalorder %s49, %s65
    %p67 = scmp.eq.s32.totalorder %s15, 0
    %p68 = por %p66, %p67
    %s69 = ssub.s32 %s9, %s16
    %p70 = scmp.eq.s32.totalorder %s69, 0
    %s72 = sadd.s32 %s71, 1
    %s73 = scalar_select %p70, %s71, %s72
    %p76 = pneg %p70
    %p77 = scmp.eq.s32.totalorder %s9, 1
    %p78 = por %p76, %p77
    %p79 = scmp.ne.s32.totalorder %s71, %s74
    %p80 = scmp.eq.s32.totalorder %s9, 0
    %p81 = por %p79, %p80
    %p82 = scmp.ne.s32.totalorder %s71, %s74
    %p83 = scmp.eq.s32.totalorder %s14, 1
    %p84 = por %p82, %p83
    %p85 = scmp.ne.s32.totalorder %s74, %s75
    %p86 = scmp.eq.s32.totalorder %s14, 0
    %p87 = por %p85, %p86
    %p88 = scmp.ne.s32.totalorder %s74, %s75
    %p89 = scmp.eq.s32.totalorder %s15, 1
    %p90 = por %p88, %p89
    %p92 = scmp.ne.s32.totalorder %s75, %s91
    %p93 = scmp.eq.s32.totalorder %s15, 0
    %p94 = por %p92, %p93
    %s95 = ssub.s32 %s9, %s16
    %p96 = scmp.eq.s32.totalorder %s95, 0
    %s98 = sadd.s32 %s97, 1
    %s99 = scalar_select %p96, %s97, %s98
    %p102 = pneg %p96
    %p103 = scmp.eq.s32.totalorder %s9, 1
    %p104 = por %p102, %p103
    %p105 = scmp.ne.s32.totalorder %s97, %s100
    %p106 = scmp.eq.s32.totalorder %s9, 0
    %p107 = por %p105, %p106
    %p108 = scmp.ne.s32.totalorder %s97, %s100
    %p109 = scmp.eq.s32.totalorder %s14, 1
    %p110 = por %p108, %p109
    %p111 = scmp.ne.s32.totalorder %s100, %s101
    %p112 = scmp.eq.s32.totalorder %s14, 0
    %p113 = por %p111, %p112
    %p114 = scmp.ne.s32.totalorder %s100, %s101
    %p115 = scmp.eq.s32.totalorder %s15, 1
    %p116 = por %p114, %p115
    %p118 = scmp.ne.s32.totalorder %s101, %s117
    %p119 = scmp.eq.s32.totalorder %s15, 0
    %p120 = por %p118, %p119
    %p121 = scmp.le.s32.totalorder 1, %s9
    %p122 = scmp.lt.s32.totalorder %s9, 3
    %p123 = pnand %p121, %p122
    %p124 = pneg %p123
    // Predicated region
    $region9: #{sden_forward.19} parent=5 // pred_check
      _
    $region10: #{sden_forward.19} parent=5 // pred_check_branch
      %126 = sbr.rel (%p123) target = $region12
    $region11: #{sden_forward.19} parent=5 // pred_region
      %s127 = ssub.s32 %s9, 1
    $region12: #{sden_forward.19} parent=5 // pred_fallthru
      _
    %p128 = scmp.lt.s32.totalorder %s9, 2
    // Predicated region
    $region13: #{sden_forward.19} parent=5 // pred_check
      %p129 = pneg %p128
    $region14: #{sden_forward.19} parent=5 // pred_check_branch
      %131 = sbr.rel (%p129) target = $region16
    $region15: #{sden_forward.19} parent=5 // pred_region
      // Predicated region
      $region17: #{sden_forward.19} parent=15 // pred_check
        %p132 = pneg %p29
      $region18: #{sden_forward.19} parent=15 // pred_check_branch
        %134 = sbr.rel (%p132) target = $region20
      $region19: #{sden_forward.19} parent=15 // pred_region
        %p135 = scmp.lt.s32.totalorder %s9, 1
        %s136 = scalar_select %p135, %s9, 1
        %s137 = smul.addr %s136, 8
        %s138 = smul.addr %s137, 2
        %s139 = scalar_lea.vmem %s0, %s138
      $region20: #{sden_forward.19} parent=15 // pred_fallthru
        _
      // Predicated region
      $region21: #{sden_forward.19} parent=15 // pred_check
        %p140 = pneg %p55
      $region22: #{sden_forward.19} parent=15 // pred_check_branch
        %142 = sbr.rel (%p140) target = $region24
      $region23: #{sden_forward.19} parent=15 // pred_region
        %p143 = scmp.lt.s32.totalorder %s9, 1
        %s144 = scalar_select %p143, %s9, 1
        %s145 = smul.addr %s144, 4
        %s146 = smul.addr %s145, 8
        %s147 = scalar_lea.vmem %s1, %s146
      $region24: #{sden_forward.19} parent=15 // pred_fallthru
        _
      // Predicated region
      $region25: #{sden_forward.19} parent=15 // pred_check
        %p148 = pneg %p81
      $region26: #{sden_forward.19} parent=15 // pred_check_branch
        %150 = sbr.rel (%p148) target = $region28
      $region27: #{sden_forward.19} parent=15 // pred_region
        %p151 = scmp.lt.s32.totalorder %s9, 1
        %s152 = scalar_select %p151, %s9, 1
        %s153 = scalar_lea.vmem %s2, %s152
      $region28: #{sden_forward.19} parent=15 // pred_fallthru
        _
    $region16: #{sden_forward.19} parent=5 // pred_fallthru
      _
    %p154 = scmp.le.s32.totalorder 1, %s9
    %p155 = scmp.lt.s32.totalorder %s9, 3
    %p156 = pnand %p154, %p155
    %p157 = pneg %p156
    // Predicated region
    $region29: #{sden_forward.19} parent=5 // pred_check
      _
    $region30: #{sden_forward.19} parent=5 // pred_check_branch
      %159 = sbr.rel (%p156) target = $region32
    $region31: #{sden_forward.19} parent=5 // pred_region
      %s160 = ssub.s32 %s9, 1
      %p161 = scmp.lt.s32.totalorder %s14, 1
      %s162 = scalar_select %p161, %s14, 1
      %s163 = smul.addr %s162, 8
      %s164 = smul.addr %s163, 2
      %s165 = scalar_lea.vmem %s0, %s164
      %p166 = pneg %p35
      %p167 = pneg %p32
      %p168 = scmp.lt.s32.totalorder %s14, 1
      %s169 = scalar_select %p168, %s14, 1
      %s170 = smul.addr %s169, 4
      %s171 = smul.addr %s170, 8
      %s172 = scalar_lea.vmem %s1, %s171
      %p173 = pneg %p61
      %p174 = pneg %p58
      %p175 = scmp.lt.s32.totalorder %s14, 1
      %s176 = scalar_select %p175, %s14, 1
      %s177 = scalar_lea.vmem %s2, %s176
      %p178 = pneg %p87
      %p179 = pneg %p84
      %p180 = pneg %p113
      %p181 = pneg %p110
      %p182 = scmp.lt.s32.totalorder %s14, 1
      %s183 = scalar_select %p182, %s14, 1
      %s184 = smul.addr %s183, 8
      %s185 = smul.addr %s184, 2
      %s186 = scalar_lea.vmem %s3, %s185
      %p187 = scmp.lt.s32.totalorder %s14, 1
      %s188 = scalar_select %p187, %s14, 1
      %s189 = smul.addr %s188, 8
      %s190 = smul.addr %s189, 2
      %s191 = scalar_lea.vmem %s0, %s190
      %p192 = scmp.lt.s32.totalorder %s14, 1
      %s193 = scalar_select %p192, %s14, 1
      %s194 = smul.addr %s193, 4
      %s195 = smul.addr %s194, 8
      %s196 = scalar_lea.vmem %s1, %s195
      %p197 = scmp.lt.s32.totalorder %s14, 1
      %s198 = scalar_select %p197, %s14, 1
      %s199 = scalar_lea.vmem %s2, %s198
      %p200 = scmp.lt.s32.totalorder %s14, 1
      %s201 = scalar_select %p200, %s14, 1
      %s202 = smul.addr %s201, 8
      %s203 = smul.addr %s202, 2
      %s204 = scalar_lea.vmem %s3, %s203
      %v205 = vld [vmem:[%s196] sm:$0xff]
      %v206 = vld [vmem:[%s196 + $0x8] sm:$0xff]
      %v207 = vld [vmem:[%s196 + $0x10] sm:$0xff]
      %v208 = vld [vmem:[%s196 + $0x18] sm:$0xff]
      %v209 = vld [vmem:[%s199] sm:$0x1]
      %p210 = scmp.eq.s32.totalorder %s14, 1
      %s211 = scalar_select %p210, 7, 0
      %s212 = smul.u32 %s211, 2
      %s213 = scalar_lea.vmem %s191, %s212
      %v214 = vld [vmem:[%s213] sm:$0x3]
      %v216 = vlaneseq
      %v217 = vshrl.u32 %v216, 7
      %v218 = vsub.s32 0, %v217
      %v219 = vrot.slane %v209, %v218
      %vm221 = vcmask 261120
      %v223 = vsel %vm221, 0.0, 0
      %225 = vmatprep.subr.mxu0 0.0
      %226 = vmatpush1.msra.mxu0 %v205
      %227 = vmatprep.subr.mxu0 0.0
      %228 = vmatpush1.msra.mxu0 %v206
      %229 = vmatprep.subr.mxu0 0.0
      %230 = vmatpush1.msra.mxu0 %v207
      %231 = vmatprep.subr.mxu0 0.0
      %232 = vmatpush1.msra.mxu0 %v208
      %233 = vmatprep.subr.mxu0 0.0
      %234 = vmatpush1.msra.mxu0 0.0
      %235 = vmatprep.subr.mxu0 0.0
      %236 = vmatpush1.msra.mxu0 0.0
      %237 = vmatprep.subr.mxu0 0.0
      %238 = vmatpush1.msra.mxu0 0.0
      %239 = vmatprep.subr.mxu0 0.0
      %240 = vmatpush1.msra.mxu0 0.0
      %241 = vmatprep.subr.mxu0 0.0
      %242 = vmatpush1.msra.mxu0 0.0
      %243 = vmatprep.subr.mxu0 0.0
      %244 = vmatpush1.msra.mxu0 0.0
      %245 = vmatprep.subr.mxu0 0.0
      %246 = vmatpush1.msra.mxu0 0.0
      %247 = vmatprep.subr.mxu0 0.0
      %248 = vmatpush1.msra.mxu0 0.0
      %249 = vmatprep.subr.mxu0 0.0
      %250 = vmatpush1.msra.mxu0 0.0
      %251 = vmatprep.subr.mxu0 0.0
      %252 = vmatpush1.msra.mxu0 0.0
      %253 = vmatprep.subr.mxu0 0.0
      %254 = vmatpush1.msra.mxu0 0.0
      %255 = vmatprep.subr.mxu0 0.0
      %256 = vmatpush1.msra.mxu0 0.0
      %257 = vmatprep.subr.mxu0 0.0
      %258 = vmatpush1.msra.mxu0 0.0
      %259 = vmatprep.subr.mxu0 0.0
      %260 = vmatpush1.msra.mxu0 0.0
      %261 = vmatprep.subr.mxu0 0.0
      %262 = vmatpush1.msra.mxu0 0.0
      %263 = vmatprep.subr.mxu0 0.0
      %264 = vmatpush1.msra.mxu0 0.0
      %265 = vmatprep.subr.mxu0 0.0
      %266 = vmatpush1.msra.mxu0 0.0
      %267 = vmatprep.subr.mxu0 0.0
      %268 = vmatpush1.msra.mxu0 0.0
      %269 = vmatprep.subr.mxu0 0.0
      %270 = vmatpush1.msra.mxu0 0.0
      %271 = vmatprep.subr.mxu0 0.0
      %272 = vmatpush1.msra.mxu0 0.0
      %273 = vmatprep.subr.mxu0 0.0
      %274 = vmatpush1.msra.mxu0 0.0
      %275 = vmatprep.subr.mxu0 0.0
      %276 = vmatpush1.msra.mxu0 0.0
      %277 = vmatprep.subr.mxu0 0.0
      %278 = vmatpush1.msra.mxu0 0.0
      %279 = vmatprep.subr.mxu0 0.0
      %280 = vmatpush1.msra.mxu0 0.0
      %281 = vmatprep.subr.mxu0 0.0
      %282 = vmatpush1.msra.mxu0 0.0
      %283 = vmatprep.subr.mxu0 0.0
      %284 = vmatpush1.msra.mxu0 0.0
      %285 = vmatprep.subr.mxu0 0.0
      %286 = vmatpush1.msra.mxu0 0.0
      %287 = vmatprep.subr.mxu0 0.0
      %288 = vmatpush1.msra.mxu0 0.0
      %289 = vmatprep.mubr.f32.mxu0 0.0
      %290 = vmatmul.mubr.f32.gmra.mrb[0].mxu0 %v223
      %v291 = vpop.f32.mrb[0].mxu0
      %v292 = vadd.f32 %v219, %v291
      %v293 = vpop.f32.mrb[0].mxu0
      %294 = vdwg.mxu0
      %v295 = vadd.f32 %v214, %v292
      %v296 = vxor.u32 %v295, 2147483648
      %v297 = vmul.f32 %v296, 1.442695
      %v298 = vpow.pop %v297
      %v299 = vadd.f32 %v298, 1.0
      %v300 = vrcp.pop %v299
      %v301 = vmul.f32 1.0, %v300
      %303 = vrot.lane.b32.xlu0 %v292, 64
      %v304 = vpop.permute.xlu0 %303
      %v306 = vmul.f32 %v301, %v304
      %308 = vrot.lane.b32.xlu0 %v306, 64
      %v309 = vpop.permute.xlu0 %308
      %v311 = vadd.f32 %v214, %v309
      %v312 = vtanh.pop %v311
      %v313 = vsub.f32 1.0, %v301
      %315 = vrot.lane.b32.xlu0 %v312, 96
      %v316 = vpop.permute.xlu0 %315
      %v318 = vmul.f32 %v313, %v316
      %v319 = vmul.f32 %v301, 0.0
      %v320 = vadd.f32 %v318, %v319
      %322 = vrot.lane.b32.xlu0 %v320, 96
      %v323 = vpop.permute.xlu0 %322
      %s325 = scalar_lea.vmem %s204, %s212
      %vm326 = vcmask 254976
      %327 = vst.msk [vmem:[%s325] sm:$0x3] %vm326, %v323
      %s328 = scalar_select %p210, 6, 1
      %s329 = smul.u32 %s328, 2
      %s330 = scalar_lea.vmem %s191, %s329
      %v331 = vld [vmem:[%s330] sm:$0x3]
      %v332 = vsel %vm221, %v323, 0
      %334 = vmatprep.subr.mxu0 0.0
      %335 = vmatpush1.msra.mxu0 %v205
      %336 = vmatprep.subr.mxu0 0.0
      %337 = vmatpush1.msra.mxu0 %v206
      %338 = vmatprep.subr.mxu0 0.0
      %339 = vmatpush1.msra.mxu0 %v207
      %340 = vmatprep.subr.mxu0 0.0
      %341 = vmatpush1.msra.mxu0 %v208
      %342 = vmatprep.subr.mxu0 0.0
      %343 = vmatpush1.msra.mxu0 0.0
      %344 = vmatprep.subr.mxu0 0.0
      %345 = vmatpush1.msra.mxu0 0.0
      %346 = vmatprep.subr.mxu0 0.0
      %347 = vmatpush1.msra.mxu0 0.0
      %348 = vmatprep.subr.mxu0 0.0
      %349 = vmatpush1.msra.mxu0 0.0
      %350 = vmatprep.subr.mxu0 0.0
      %351 = vmatpush1.msra.mxu0 0.0
      %352 = vmatprep.subr.mxu0 0.0
      %353 = vmatpush1.msra.mxu0 0.0
      %354 = vmatprep.subr.mxu0 0.0
      %355 = vmatpush1.msra.mxu0 0.0
      %356 = vmatprep.subr.mxu0 0.0
      %357 = vmatpush1.msra.mxu0 0.0
      %358 = vmatprep.subr.mxu0 0.0
      %359 = vmatpush1.msra.mxu0 0.0
      %360 = vmatprep.subr.mxu0 0.0
      %361 = vmatpush1.msra.mxu0 0.0
      %362 = vmatprep.subr.mxu0 0.0
      %363 = vmatpush1.msra.mxu0 0.0
      %364 = vmatprep.subr.mxu0 0.0
      %365 = vmatpush1.msra.mxu0 0.0
      %366 = vmatprep.subr.mxu0 0.0
      %367 = vmatpush1.msra.mxu0 0.0
      %368 = vmatprep.subr.mxu0 0.0
      %369 = vmatpush1.msra.mxu0 0.0
      %370 = vmatprep.subr.mxu0 0.0
      %371 = vmatpush1.msra.mxu0 0.0
      %372 = vmatprep.subr.mxu0 0.0
      %373 = vmatpush1.msra.mxu0 0.0
      %374 = vmatprep.subr.mxu0 0.0
      %375 = vmatpush1.msra.mxu0 0.0
      %376 = vmatprep.subr.mxu0 0.0
      %377 = vmatpush1.msra.mxu0 0.0
      %378 = vmatprep.subr.mxu0 0.0
      %379 = vmatpush1.msra.mxu0 0.0
      %380 = vmatprep.subr.mxu0 0.0
      %381 = vmatpush1.msra.mxu0 0.0
      %382 = vmatprep.subr.mxu0 0.0
      %383 = vmatpush1.msra.mxu0 0.0
      %384 = vmatprep.subr.mxu0 0.0
      %385 = vmatpush1.msra.mxu0 0.0
      %386 = vmatprep.subr.mxu0 0.0
      %387 = vmatpush1.msra.mxu0 0.0
      %388 = vmatprep.subr.mxu0 0.0
      %389 = vmatpush1.msra.mxu0 0.0
      %390 = vmatprep.subr.mxu0 0.0
      %391 = vmatpush1.msra.mxu0 0.0
      %392 = vmatprep.subr.mxu0 0.0
      %393 = vmatpush1.msra.mxu0 0.0
      %394 = vmatprep.subr.mxu0 0.0
      %395 = vmatpush1.msra.mxu0 0.0
      %396 = vmatprep.subr.mxu0 0.0
      %397 = vmatpush1.msra.mxu0 0.0
      %398 = vmatprep.mubr.f32.mxu0 0.0
      %399 = vmatmul.mubr.f32.gmra.mrb[0].mxu0 %v332
      %v400 = vpop.f32.mrb[0].mxu0
      %v401 = vadd.f32 %v219, %v400
      %v402 = vpop.f32.mrb[0].mxu0
      %403 = vdwg.mxu0
      %v404 = vadd.f32 %v331, %v401
      %v405 = vxor.u32 %v404, 2147483648
      %v406 = vmul.f32 %v405, 1.442695
      %v407 = vpow.pop %v406
      %v408 = vadd.f32 %v407, 1.0
      %v409 = vrcp.pop %v408
      %v410 = vmul.f32 1.0, %v409
      %412 = vrot.lane.b32.xlu0 %v401, 64
      %v413 = vpop.permute.xlu0 %412
      %v415 = vmul.f32 %v410, %v413
      %417 = vrot.lane.b32.xlu0 %v415, 64
      %v418 = vpop.permute.xlu0 %417
      %v420 = vadd.f32 %v331, %v418
      %v421 = vtanh.pop %v420
      %v422 = vsub.f32 1.0, %v410
      %424 = vrot.lane.b32.xlu0 %v421, 96
      %v425 = vpop.permute.xlu0 %424
      %v427 = vmul.f32 %v422, %v425
      %v428 = vmul.f32 %v410, %v320
      %v429 = vadd.f32 %v427, %v428
      %431 = vrot.lane.b32.xlu0 %v429, 96
      %v432 = vpop.permute.xlu0 %431
      %s434 = scalar_lea.vmem %s204, %s329
      %435 = vst.msk [vmem:[%s434] sm:$0x3] %vm326, %v432
      %s436 = scalar_select %p210, 5, 2
      %s437 = smul.u32 %s436, 2
      %s438 = scalar_lea.vmem %s191, %s437
      %v439 = vld [vmem:[%s438] sm:$0x3]
      %v440 = vsel %vm221, %v432, 0
      %442 = vmatprep.subr.mxu0 0.0
      %443 = vmatpush1.msra.mxu0 %v205
      %444 = vmatprep.subr.mxu0 0.0
      %445 = vmatpush1.msra.mxu0 %v206
      %446 = vmatprep.subr.mxu0 0.0
      %447 = vmatpush1.msra.mxu0 %v207
      %448 = vmatprep.subr.mxu0 0.0
      %449 = vmatpush1.msra.mxu0 %v208
      %450 = vmatprep.subr.mxu0 0.0
      %451 = vmatpush1.msra.mxu0 0.0
      %452 = vmatprep.subr.mxu0 0.0
      %453 = vmatpush1.msra.mxu0 0.0
      %454 = vmatprep.subr.mxu0 0.0
      %455 = vmatpush1.msra.mxu0 0.0
      %456 = vmatprep.subr.mxu0 0.0
      %457 = vmatpush1.msra.mxu0 0.0
      %458 = vmatprep.subr.mxu0 0.0
      %459 = vmatpush1.msra.mxu0 0.0
      %460 = vmatprep.subr.mxu0 0.0
      %461 = vmatpush1.msra.mxu0 0.0
      %462 = vmatprep.subr.mxu0 0.0
      %463 = vmatpush1.msra.mxu0 0.0
      %464 = vmatprep.subr.mxu0 0.0
      %465 = vmatpush1.msra.mxu0 0.0
      %466 = vmatprep.subr.mxu0 0.0
      %467 = vmatpush1.msra.mxu0 0.0
      %468 = vmatprep.subr.mxu0 0.0
      %469 = vmatpush1.msra.mxu0 0.0
      %470 = vmatprep.subr.mxu0 0.0
      %471 = vmatpush1.msra.mxu0 0.0
      %472 = vmatprep.subr.mxu0 0.0
      %473 = vmatpush1.msra.mxu0 0.0
      %474 = vmatprep.subr.mxu0 0.0
      %475 = vmatpush1.msra.mxu0 0.0
      %476 = vmatprep.subr.mxu0 0.0
      %477 = vmatpush1.msra.mxu0 0.0
      %478 = vmatprep.subr.mxu0 0.0
      %479 = vmatpush1.msra.mxu0 0.0
      %480 = vmatprep.subr.mxu0 0.0
      %481 = vmatpush1.msra.mxu0 0.0
      %482 = vmatprep.subr.mxu0 0.0
      %483 = vmatpush1.msra.mxu0 0.0
      %484 = vmatprep.subr.mxu0 0.0
      %485 = vmatpush1.msra.mxu0 0.0
      %486 = vmatprep.subr.mxu0 0.0
      %487 = vmatpush1.msra.mxu0 0.0
      %488 = vmatprep.subr.mxu0 0.0
      %489 = vmatpush1.msra.mxu0 0.0
      %490 = vmatprep.subr.mxu0 0.0
      %491 = vmatpush1.msra.mxu0 0.0
      %492 = vmatprep.subr.mxu0 0.0
      %493 = vmatpush1.msra.mxu0 0.0
      %494 = vmatprep.subr.mxu0 0.0
      %495 = vmatpush1.msra.mxu0 0.0
      %496 = vmatprep.subr.mxu0 0.0
      %497 = vmatpush1.msra.mxu0 0.0
      %498 = vmatprep.subr.mxu0 0.0
      %499 = vmatpush1.msra.mxu0 0.0
      %500 = vmatprep.subr.mxu0 0.0
      %501 = vmatpush1.msra.mxu0 0.0
      %502 = vmatprep.subr.mxu0 0.0
      %503 = vmatpush1.msra.mxu0 0.0
      %504 = vmatprep.subr.mxu0 0.0
      %505 = vmatpush1.msra.mxu0 0.0
      %506 = vmatprep.mubr.f32.mxu0 0.0
      %507 = vmatmul.mubr.f32.gmra.mrb[0].mxu0 %v440
      %v508 = vpop.f32.mrb[0].mxu0
      %v509 = vadd.f32 %v219, %v508
      %v510 = vpop.f32.mrb[0].mxu0
      %511 = vdwg.mxu0
      %v512 = vadd.f32 %v439, %v509
      %v513 = vxor.u32 %v512, 2147483648
      %v514 = vmul.f32 %v513, 1.442695
      %v515 = vpow.pop %v514
      %v516 = vadd.f32 %v515, 1.0
      %v517 = vrcp.pop %v516
      %v518 = vmul.f32 1.0, %v517
      %520 = vrot.lane.b32.xlu0 %v509, 64
      %v521 = vpop.permute.xlu0 %520
      %v523 = vmul.f32 %v518, %v521
      %525 = vrot.lane.b32.xlu0 %v523, 64
      %v526 = vpop.permute.xlu0 %525
      %v528 = vadd.f32 %v439, %v526
      %v529 = vtanh.pop %v528
      %v530 = vsub.f32 1.0, %v518
      %532 = vrot.lane.b32.xlu0 %v529, 96
      %v533 = vpop.permute.xlu0 %532
      %v535 = vmul.f32 %v530, %v533
      %v536 = vmul.f32 %v518, %v429
      %v537 = vadd.f32 %v535, %v536
      %539 = vrot.lane.b32.xlu0 %v537, 96
      %v540 = vpop.permute.xlu0 %539
      %s542 = scalar_lea.vmem %s204, %s437
      %543 = vst.msk [vmem:[%s542] sm:$0x3] %vm326, %v540
      %s544 = scalar_select %p210, 4, 3
      %s545 = smul.u32 %s544, 2
      %s546 = scalar_lea.vmem %s191, %s545
      %v547 = vld [vmem:[%s546] sm:$0x3]
      %v548 = vsel %vm221, %v540, 0
      %550 = vmatprep.subr.mxu0 0.0
      %551 = vmatpush1.msra.mxu0 %v205
      %552 = vmatprep.subr.mxu0 0.0
      %553 = vmatpush1.msra.mxu0 %v206
      %554 = vmatprep.subr.mxu0 0.0
      %555 = vmatpush1.msra.mxu0 %v207
      %556 = vmatprep.subr.mxu0 0.0
      %557 = vmatpush1.msra.mxu0 %v208
      %558 = vmatprep.subr.mxu0 0.0
      %559 = vmatpush1.msra.mxu0 0.0
      %560 = vmatprep.subr.mxu0 0.0
      %561 = vmatpush1.msra.mxu0 0.0
      %562 = vmatprep.subr.mxu0 0.0
      %563 = vmatpush1.msra.mxu0 0.0
      %564 = vmatprep.subr.mxu0 0.0
      %565 = vmatpush1.msra.mxu0 0.0
      %566 = vmatprep.subr.mxu0 0.0
      %567 = vmatpush1.msra.mxu0 0.0
      %568 = vmatprep.subr.mxu0 0.0
      %569 = vmatpush1.msra.mxu0 0.0
      %570 = vmatprep.subr.mxu0 0.0
      %571 = vmatpush1.msra.mxu0 0.0
      %572 = vmatprep.subr.mxu0 0.0
      %573 = vmatpush1.msra.mxu0 0.0
      %574 = vmatprep.subr.mxu0 0.0
      %575 = vmatpush1.msra.mxu0 0.0
      %576 = vmatprep.subr.mxu0 0.0
      %577 = vmatpush1.msra.mxu0 0.0
      %578 = vmatprep.subr.mxu0 0.0
      %579 = vmatpush1.msra.mxu0 0.0
      %580 = vmatprep.subr.mxu0 0.0
      %581 = vmatpush1.msra.mxu0 0.0
      %582 = vmatprep.subr.mxu0 0.0
      %583 = vmatpush1.msra.mxu0 0.0
      %584 = vmatprep.subr.mxu0 0.0
      %585 = vmatpush1.msra.mxu0 0.0
      %586 = vmatprep.subr.mxu0 0.0
      %587 = vmatpush1.msra.mxu0 0.0
      %588 = vmatprep.subr.mxu0 0.0
      %589 = vmatpush1.msra.mxu0 0.0
      %590 = vmatprep.subr.mxu0 0.0
      %591 = vmatpush1.msra.mxu0 0.0
      %592 = vmatprep.subr.mxu0 0.0
      %593 = vmatpush1.msra.mxu0 0.0
      %594 = vmatprep.subr.mxu0 0.0
      %595 = vmatpush1.msra.mxu0 0.0
      %596 = vmatprep.subr.mxu0 0.0
      %597 = vmatpush1.msra.mxu0 0.0
      %598 = vmatprep.subr.mxu0 0.0
      %599 = vmatpush1.msra.mxu0 0.0
      %600 = vmatprep.subr.mxu0 0.0
      %601 = vmatpush1.msra.mxu0 0.0
      %602 = vmatprep.subr.mxu0 0.0
      %603 = vmatpush1.msra.mxu0 0.0
      %604 = vmatprep.subr.mxu0 0.0
      %605 = vmatpush1.msra.mxu0 0.0
      %606 = vmatprep.subr.mxu0 0.0
      %607 = vmatpush1.msra.mxu0 0.0
      %608 = vmatprep.subr.mxu0 0.0
      %609 = vmatpush1.msra.mxu0 0.0
      %610 = vmatprep.subr.mxu0 0.0
      %611 = vmatpush1.msra.mxu0 0.0
      %612 = vmatprep.subr.mxu0 0.0
      %613 = vmatpush1.msra.mxu0 0.0
      %614 = vmatprep.mubr.f32.mxu0 0.0
      %615 = vmatmul.mubr.f32.gmra.mrb[0].mxu0 %v548
      %v616 = vpop.f32.mrb[0].mxu0
      %v617 = vadd.f32 %v219, %v616
      %v618 = vpop.f32.mrb[0].mxu0
      %619 = vdwg.mxu0
      %v620 = vadd.f32 %v547, %v617
      %v621 = vxor.u32 %v620, 2147483648
      %v622 = vmul.f32 %v621, 1.442695
      %v623 = vpow.pop %v622
      %v624 = vadd.f32 %v623, 1.0
      %v625 = vrcp.pop %v624
      %v626 = vmul.f32 1.0, %v625
      %628 = vrot.lane.b32.xlu0 %v617, 64
      %v629 = vpop.permute.xlu0 %628
      %v631 = vmul.f32 %v626, %v629
      %633 = vrot.lane.b32.xlu0 %v631, 64
      %v634 = vpop.permute.xlu0 %633
      %v636 = vadd.f32 %v547, %v634
      %v637 = vtanh.pop %v636
      %v638 = vsub.f32 1.0, %v626
      %640 = vrot.lane.b32.xlu0 %v637, 96
      %v641 = vpop.permute.xlu0 %640
      %v643 = vmul.f32 %v638, %v641
      %v644 = vmul.f32 %v626, %v537
      %v645 = vadd.f32 %v643, %v644
      %647 = vrot.lane.b32.xlu0 %v645, 96
      %v648 = vpop.permute.xlu0 %647
      %s650 = scalar_lea.vmem %s204, %s545
      %651 = vst.msk [vmem:[%s650] sm:$0x3] %vm326, %v648
      %s652 = scalar_select %p210, 3, 4
      %s653 = smul.u32 %s652, 2
      %s654 = scalar_lea.vmem %s191, %s653
      %v655 = vld [vmem:[%s654] sm:$0x3]
      %v656 = vsel %vm221, %v648, 0
      %658 = vmatprep.subr.mxu0 0.0
      %659 = vmatpush1.msra.mxu0 %v205
      %660 = vmatprep.subr.mxu0 0.0
      %661 = vmatpush1.msra.mxu0 %v206
      %662 = vmatprep.subr.mxu0 0.0
      %663 = vmatpush1.msra.mxu0 %v207
      %664 = vmatprep.subr.mxu0 0.0
      %665 = vmatpush1.msra.mxu0 %v208
      %666 = vmatprep.subr.mxu0 0.0
      %667 = vmatpush1.msra.mxu0 0.0
      %668 = vmatprep.subr.mxu0 0.0
      %669 = vmatpush1.msra.mxu0 0.0
      %670 = vmatprep.subr.mxu0 0.0
      %671 = vmatpush1.msra.mxu0 0.0
      %672 = vmatprep.subr.mxu0 0.0
      %673 = vmatpush1.msra.mxu0 0.0
      %674 = vmatprep.subr.mxu0 0.0
      %675 = vmatpush1.msra.mxu0 0.0
      %676 = vmatprep.subr.mxu0 0.0
      %677 = vmatpush1.msra.mxu0 0.0
      %678 = vmatprep.subr.mxu0 0.0
      %679 = vmatpush1.msra.mxu0 0.0
      %680 = vmatprep.subr.mxu0 0.0
      %681 = vmatpush1.msra.mxu0 0.0
      %682 = vmatprep.subr.mxu0 0.0
      %683 = vmatpush1.msra.mxu0 0.0
      %684 = vmatprep.subr.mxu0 0.0
      %685 = vmatpush1.msra.mxu0 0.0
      %686 = vmatprep.subr.mxu0 0.0
      %687 = vmatpush1.msra.mxu0 0.0
      %688 = vmatprep.subr.mxu0 0.0
      %689 = vmatpush1.msra.mxu0 0.0
      %690 = vmatprep.subr.mxu0 0.0
      %691 = vmatpush1.msra.mxu0 0.0
      %692 = vmatprep.subr.mxu0 0.0
      %693 = vmatpush1.msra.mxu0 0.0
      %694 = vmatprep.subr.mxu0 0.0
      %695 = vmatpush1.msra.mxu0 0.0
      %696 = vmatprep.subr.mxu0 0.0
      %697 = vmatpush1.msra.mxu0 0.0
      %698 = vmatprep.subr.mxu0 0.0
      %699 = vmatpush1.msra.mxu0 0.0
      %700 = vmatprep.subr.mxu0 0.0
      %701 = vmatpush1.msra.mxu0 0.0
      %702 = vmatprep.subr.mxu0 0.0
      %703 = vmatpush1.msra.mxu0 0.0
      %704 = vmatprep.subr.mxu0 0.0
      %705 = vmatpush1.msra.mxu0 0.0
      %706 = vmatprep.subr.mxu0 0.0
      %707 = vmatpush1.msra.mxu0 0.0
      %708 = vmatprep.subr.mxu0 0.0
      %709 = vmatpush1.msra.mxu0 0.0
      %710 = vmatprep.subr.mxu0 0.0
      %711 = vmatpush1.msra.mxu0 0.0
      %712 = vmatprep.subr.mxu0 0.0
      %713 = vmatpush1.msra.mxu0 0.0
      %714 = vmatprep.subr.mxu0 0.0
      %715 = vmatpush1.msra.mxu0 0.0
      %716 = vmatprep.subr.mxu0 0.0
      %717 = vmatpush1.msra.mxu0 0.0
      %718 = vmatprep.subr.mxu0 0.0
      %719 = vmatpush1.msra.mxu0 0.0
      %720 = vmatprep.subr.mxu0 0.0
      %721 = vmatpush1.msra.mxu0 0.0
      %722 = vmatprep.mubr.f32.mxu0 0.0
      %723 = vmatmul.mubr.f32.gmra.mrb[0].mxu0 %v656
      %v724 = vpop.f32.mrb[0].mxu0
      %v725 = vadd.f32 %v219, %v724
      %v726 = vpop.f32.mrb[0].mxu0
      %727 = vdwg.mxu0
      %v728 = vadd.f32 %v655, %v725
      %v729 = vxor.u32 %v728, 2147483648
      %v730 = vmul.f32 %v729, 1.442695
      %v731 = vpow.pop %v730
      %v732 = vadd.f32 %v731, 1.0
      %v733 = vrcp.pop %v732
      %v734 = vmul.f32 1.0, %v733
      %736 = vrot.lane.b32.xlu0 %v725, 64
      %v737 = vpop.permute.xlu0 %736
      %v739 = vmul.f32 %v734, %v737
      %741 = vrot.lane.b32.xlu0 %v739, 64
      %v742 = vpop.permute.xlu0 %741
      %v744 = vadd.f32 %v655, %v742
      %v745 = vtanh.pop %v744
      %v746 = vsub.f32 1.0, %v734
      %748 = vrot.lane.b32.xlu0 %v745, 96
      %v749 = vpop.permute.xlu0 %748
      %v751 = vmul.f32 %v746, %v749
      %v752 = vmul.f32 %v734, %v645
      %v753 = vadd.f32 %v751, %v752
      %755 = vrot.lane.b32.xlu0 %v753, 96
      %v756 = vpop.permute.xlu0 %755
      %s758 = scalar_lea.vmem %s204, %s653
      %759 = vst.msk [vmem:[%s758] sm:$0x3] %vm326, %v756
      %s760 = scalar_select %p210, 2, 5
      %s761 = smul.u32 %s760, 2
      %s762 = scalar_lea.vmem %s191, %s761
      %v763 = vld [vmem:[%s762] sm:$0x3]
      %v764 = vsel %vm221, %v756, 0
      %766 = vmatprep.subr.mxu0 0.0
      %767 = vmatpush1.msra.mxu0 %v205
      %768 = vmatprep.subr.mxu0 0.0
      %769 = vmatpush1.msra.mxu0 %v206
      %770 = vmatprep.subr.mxu0 0.0
      %771 = vmatpush1.msra.mxu0 %v207
      %772 = vmatprep.subr.mxu0 0.0
      %773 = vmatpush1.msra.mxu0 %v208
      %774 = vmatprep.subr.mxu0 0.0
      %775 = vmatpush1.msra.mxu0 0.0
      %776 = vmatprep.subr.mxu0 0.0
      %777 = vmatpush1.msra.mxu0 0.0
      %778 = vmatprep.subr.mxu0 0.0
      %779 = vmatpush1.msra.mxu0 0.0
      %780 = vmatprep.subr.mxu0 0.0
      %781 = vmatpush1.msra.mxu0 0.0
      %782 = vmatprep.subr.mxu0 0.0
      %783 = vmatpush1.msra.mxu0 0.0
      %784 = vmatprep.subr.mxu0 0.0
      %785 = vmatpush1.msra.mxu0 0.0
      %786 = vmatprep.subr.mxu0 0.0
      %787 = vmatpush1.msra.mxu0 0.0
      %788 = vmatprep.subr.mxu0 0.0
      %789 = vmatpush1.msra.mxu0 0.0
      %790 = vmatprep.subr.mxu0 0.0
      %791 = vmatpush1.msra.mxu0 0.0
      %792 = vmatprep.subr.mxu0 0.0
      %793 = vmatpush1.msra.mxu0 0.0
      %794 = vmatprep.subr.mxu0 0.0
      %795 = vmatpush1.msra.mxu0 0.0
      %796 = vmatprep.subr.mxu0 0.0
      %797 = vmatpush1.msra.mxu0 0.0
      %798 = vmatprep.subr.mxu0 0.0
      %799 = vmatpush1.msra.mxu0 0.0
      %800 = vmatprep.subr.mxu0 0.0
      %801 = vmatpush1.msra.mxu0 0.0
      %802 = vmatprep.subr.mxu0 0.0
      %803 = vmatpush1.msra.mxu0 0.0
      %804 = vmatprep.subr.mxu0 0.0
      %805 = vmatpush1.msra.mxu0 0.0
      %806 = vmatprep.subr.mxu0 0.0
      %807 = vmatpush1.msra.mxu0 0.0
      %808 = vmatprep.subr.mxu0 0.0
      %809 = vmatpush1.msra.mxu0 0.0
      %810 = vmatprep.subr.mxu0 0.0
      %811 = vmatpush1.msra.mxu0 0.0
      %812 = vmatprep.subr.mxu0 0.0
      %813 = vmatpush1.msra.mxu0 0.0
      %814 = vmatprep.subr.mxu0 0.0
      %815 = vmatpush1.msra.mxu0 0.0
      %816 = vmatprep.subr.mxu0 0.0
      %817 = vmatpush1.msra.mxu0 0.0
      %818 = vmatprep.subr.mxu0 0.0
      %819 = vmatpush1.msra.mxu0 0.0
      %820 = vmatprep.subr.mxu0 0.0
      %821 = vmatpush1.msra.mxu0 0.0
      %822 = vmatprep.subr.mxu0 0.0
      %823 = vmatpush1.msra.mxu0 0.0
      %824 = vmatprep.subr.mxu0 0.0
      %825 = vmatpush1.msra.mxu0 0.0
      %826 = vmatprep.subr.mxu0 0.0
      %827 = vmatpush1.msra.mxu0 0.0
      %828 = vmatprep.subr.mxu0 0.0
      %829 = vmatpush1.msra.mxu0 0.0
      %830 = vmatprep.mubr.f32.mxu0 0.0
      %831 = vmatmul.mubr.f32.gmra.mrb[0].mxu0 %v764
      %v832 = vpop.f32.mrb[0].mxu0
      %v833 = vadd.f32 %v219, %v832
      %v834 = vpop.f32.mrb[0].mxu0
      %835 = vdwg.mxu0
      %v836 = vadd.f32 %v763, %v833
      %v837 = vxor.u32 %v836, 2147483648
      %v838 = vmul.f32 %v837, 1.442695
      %v839 = vpow.pop %v838
      %v840 = vadd.f32 %v839, 1.0
      %v841 = vrcp.pop %v840
      %v842 = vmul.f32 1.0, %v841
      %844 = vrot.lane.b32.xlu0 %v833, 64
      %v845 = vpop.permute.xlu0 %844
      %v847 = vmul.f32 %v842, %v845
      %849 = vrot.lane.b32.xlu0 %v847, 64
      %v850 = vpop.permute.xlu0 %849
      %v852 = vadd.f32 %v763, %v850
      %v853 = vtanh.pop %v852
      %v854 = vsub.f32 1.0, %v842
      %856 = vrot.lane.b32.xlu0 %v853, 96
      %v857 = vpop.permute.xlu0 %856
      %v859 = vmul.f32 %v854, %v857
      %v860 = vmul.f32 %v842, %v753
      %v861 = vadd.f32 %v859, %v860
      %863 = vrot.lane.b32.xlu0 %v861, 96
      %v864 = vpop.permute.xlu0 %863
      %s866 = scalar_lea.vmem %s204, %s761
      %867 = vst.msk [vmem:[%s866] sm:$0x3] %vm326, %v864
      %s868 = scalar_select %p210, 1, 6
      %s869 = smul.u32 %s868, 2
      %s870 = scalar_lea.vmem %s191, %s869
      %v871 = vld [vmem:[%s870] sm:$0x3]
      %v872 = vsel %vm221, %v864, 0
      %874 = vmatprep.subr.mxu0 0.0
      %875 = vmatpush1.msra.mxu0 %v205
      %876 = vmatprep.subr.mxu0 0.0
      %877 = vmatpush1.msra.mxu0 %v206
      %878 = vmatprep.subr.mxu0 0.0
      %879 = vmatpush1.msra.mxu0 %v207
      %880 = vmatprep.subr.mxu0 0.0
      %881 = vmatpush1.msra.mxu0 %v208
      %882 = vmatprep.subr.mxu0 0.0
      %883 = vmatpush1.msra.mxu0 0.0
      %884 = vmatprep.subr.mxu0 0.0
      %885 = vmatpush1.msra.mxu0 0.0
      %886 = vmatprep.subr.mxu0 0.0
      %887 = vmatpush1.msra.mxu0 0.0
      %888 = vmatprep.subr.mxu0 0.0
      %889 = vmatpush1.msra.mxu0 0.0
      %890 = vmatprep.subr.mxu0 0.0
      %891 = vmatpush1.msra.mxu0 0.0
      %892 = vmatprep.subr.mxu0 0.0
      %893 = vmatpush1.msra.mxu0 0.0
      %894 = vmatprep.subr.mxu0 0.0
      %895 = vmatpush1.msra.mxu0 0.0
      %896 = vmatprep.subr.mxu0 0.0
      %897 = vmatpush1.msra.mxu0 0.0
      %898 = vmatprep.subr.mxu0 0.0
      %899 = vmatpush1.msra.mxu0 0.0
      %900 = vmatprep.subr.mxu0 0.0
      %901 = vmatpush1.msra.mxu0 0.0
      %902 = vmatprep.subr.mxu0 0.0
      %903 = vmatpush1.msra.mxu0 0.0
      %904 = vmatprep.subr.mxu0 0.0
      %905 = vmatpush1.msra.mxu0 0.0
      %906 = vmatprep.subr.mxu0 0.0
      %907 = vmatpush1.msra.mxu0 0.0
      %908 = vmatprep.subr.mxu0 0.0
      %909 = vmatpush1.msra.mxu0 0.0
      %910 = vmatprep.subr.mxu0 0.0
      %911 = vmatpush1.msra.mxu0 0.0
      %912 = vmatprep.subr.mxu0 0.0
      %913 = vmatpush1.msra.mxu0 0.0
      %914 = vmatprep.subr.mxu0 0.0
      %915 = vmatpush1.msra.mxu0 0.0
      %916 = vmatprep.subr.mxu0 0.0
      %917 = vmatpush1.msra.mxu0 0.0
      %918 = vmatprep.subr.mxu0 0.0
      %919 = vmatpush1.msra.mxu0 0.0
      %920 = vmatprep.subr.mxu0 0.0
      %921 = vmatpush1.msra.mxu0 0.0
      %922 = vmatprep.subr.mxu0 0.0
      %923 = vmatpush1.msra.mxu0 0.0
      %924 = vmatprep.subr.mxu0 0.0
      %925 = vmatpush1.msra.mxu0 0.0
      %926 = vmatprep.subr.mxu0 0.0
      %927 = vmatpush1.msra.mxu0 0.0
      %928 = vmatprep.subr.mxu0 0.0
      %929 = vmatpush1.msra.mxu0 0.0
      %930 = vmatprep.subr.mxu0 0.0
      %931 = vmatpush1.msra.mxu0 0.0
      %932 = vmatprep.subr.mxu0 0.0
      %933 = vmatpush1.msra.mxu0 0.0
      %934 = vmatprep.subr.mxu0 0.0
      %935 = vmatpush1.msra.mxu0 0.0
      %936 = vmatprep.subr.mxu0 0.0
      %937 = vmatpush1.msra.mxu0 0.0
      %938 = vmatprep.mubr.f32.mxu0 0.0
      %939 = vmatmul.mubr.f32.gmra.mrb[0].mxu0 %v872
      %v940 = vpop.f32.mrb[0].mxu0
      %v941 = vadd.f32 %v219, %v940
      %v942 = vpop.f32.mrb[0].mxu0
      %943 = vdwg.mxu0
      %v944 = vadd.f32 %v871, %v941
      %v945 = vxor.u32 %v944, 2147483648
      %v946 = vmul.f32 %v945, 1.442695
      %v947 = vpow.pop %v946
      %v948 = vadd.f32 %v947, 1.0
      %v949 = vrcp.pop %v948
      %v950 = vmul.f32 1.0, %v949
      %952 = vrot.lane.b32.xlu0 %v941, 64
      %v953 = vpop.permute.xlu0 %952
      %v955 = vmul.f32 %v950, %v953
      %957 = vrot.lane.b32.xlu0 %v955, 64
      %v958 = vpop.permute.xlu0 %957
      %v960 = vadd.f32 %v871, %v958
      %v961 = vtanh.pop %v960
      %v962 = vsub.f32 1.0, %v950
      %964 = vrot.lane.b32.xlu0 %v961, 96
      %v965 = vpop.permute.xlu0 %964
      %v967 = vmul.f32 %v962, %v965
      %v968 = vmul.f32 %v950, %v861
      %v969 = vadd.f32 %v967, %v968
      %971 = vrot.lane.b32.xlu0 %v969, 96
      %v972 = vpop.permute.xlu0 %971
      %s974 = scalar_lea.vmem %s204, %s869
      %975 = vst.msk [vmem:[%s974] sm:$0x3] %vm326, %v972
      %s976 = scalar_select %p210, 0, 7
      %s977 = smul.u32 %s976, 2
      %s978 = scalar_lea.vmem %s191, %s977
      %v979 = vld [vmem:[%s978] sm:$0x3]
      %v980 = vsel %vm221, %v972, 0
      %982 = vmatprep.subr.mxu0 0.0
      %983 = vmatpush1.msra.mxu0 %v205
      %984 = vmatprep.subr.mxu0 0.0
      %985 = vmatpush1.msra.mxu0 %v206
      %986 = vmatprep.subr.mxu0 0.0
      %987 = vmatpush1.msra.mxu0 %v207
      %988 = vmatprep.subr.mxu0 0.0
      %989 = vmatpush1.msra.mxu0 %v208
      %990 = vmatprep.subr.mxu0 0.0
      %991 = vmatpush1.msra.mxu0 0.0
      %992 = vmatprep.subr.mxu0 0.0
      %993 = vmatpush1.msra.mxu0 0.0
      %994 = vmatprep.subr.mxu0 0.0
      %995 = vmatpush1.msra.mxu0 0.0
      %996 = vmatprep.subr.mxu0 0.0
      %997 = vmatpush1.msra.mxu0 0.0
      %998 = vmatprep.subr.mxu0 0.0
      %999 = vmatpush1.msra.mxu0 0.0
      %1000 = vmatprep.subr.mxu0 0.0
      %1001 = vmatpush1.msra.mxu0 0.0
      %1002 = vmatprep.subr.mxu0 0.0
      %1003 = vmatpush1.msra.mxu0 0.0
      %1004 = vmatprep.subr.mxu0 0.0
      %1005 = vmatpush1.msra.mxu0 0.0
      %1006 = vmatprep.subr.mxu0 0.0
      %1007 = vmatpush1.msra.mxu0 0.0
      %1008 = vmatprep.subr.mxu0 0.0
      %1009 = vmatpush1.msra.mxu0 0.0
      %1010 = vmatprep.subr.mxu0 0.0
      %1011 = vmatpush1.msra.mxu0 0.0
      %1012 = vmatprep.subr.mxu0 0.0
      %1013 = vmatpush1.msra.mxu0 0.0
      %1014 = vmatprep.subr.mxu0 0.0
      %1015 = vmatpush1.msra.mxu0 0.0
      %1016 = vmatprep.subr.mxu0 0.0
      %1017 = vmatpush1.msra.mxu0 0.0
      %1018 = vmatprep.subr.mxu0 0.0
      %1019 = vmatpush1.msra.mxu0 0.0
      %1020 = vmatprep.subr.mxu0 0.0
      %1021 = vmatpush1.msra.mxu0 0.0
      %1022 = vmatprep.subr.mxu0 0.0
      %1023 = vmatpush1.msra.mxu0 0.0
      %1024 = vmatprep.subr.mxu0 0.0
      %1025 = vmatpush1.msra.mxu0 0.0
      %1026 = vmatprep.subr.mxu0 0.0
      %1027 = vmatpush1.msra.mxu0 0.0
      %1028 = vmatprep.subr.mxu0 0.0
      %1029 = vmatpush1.msra.mxu0 0.0
      %1030 = vmatprep.subr.mxu0 0.0
      %1031 = vmatpush1.msra.mxu0 0.0
      %1032 = vmatprep.subr.mxu0 0.0
      %1033 = vmatpush1.msra.mxu0 0.0
      %1034 = vmatprep.subr.mxu0 0.0
      %1035 = vmatpush1.msra.mxu0 0.0
      %1036 = vmatprep.subr.mxu0 0.0
      %1037 = vmatpush1.msra.mxu0 0.0
      %1038 = vmatprep.subr.mxu0 0.0
      %1039 = vmatpush1.msra.mxu0 0.0
      %1040 = vmatprep.subr.mxu0 0.0
      %1041 = vmatpush1.msra.mxu0 0.0
      %1042 = vmatprep.subr.mxu0 0.0
      %1043 = vmatpush1.msra.mxu0 0.0
      %1044 = vmatprep.subr.mxu0 0.0
      %1045 = vmatpush1.msra.mxu0 0.0
      %1046 = vmatprep.mubr.f32.mxu0 0.0
      %1047 = vmatmul.mubr.f32.gmra.mrb[0].mxu0 %v980
      %v1048 = vpop.f32.mrb[0].mxu0
      %v1049 = vadd.f32 %v219, %v1048
      %v1050 = vpop.f32.mrb[0].mxu0
      %1051 = vdwg.mxu0
      %v1052 = vadd.f32 %v979, %v1049
      %v1053 = vxor.u32 %v1052, 2147483648
      %v1054 = vmul.f32 %v1053, 1.442695
      %v1055 = vpow.pop %v1054
      %v1056 = vadd.f32 %v1055, 1.0
      %v1057 = vrcp.pop %v1056
      %v1058 = vmul.f32 1.0, %v1057
      %1060 = vrot.lane.b32.xlu0 %v1049, 64
      %v1061 = vpop.permute.xlu0 %1060
      %v1063 = vmul.f32 %v1058, %v1061
      %1065 = vrot.lane.b32.xlu0 %v1063, 64
      %v1066 = vpop.permute.xlu0 %1065
      %v1068 = vadd.f32 %v979, %v1066
      %v1069 = vtanh.pop %v1068
      %v1070 = vsub.f32 1.0, %v1058
      %1072 = vrot.lane.b32.xlu0 %v1069, 96
      %v1073 = vpop.permute.xlu0 %1072
      %v1075 = vmul.f32 %v1070, %v1073
      %v1076 = vmul.f32 %v1058, %v969
      %v1077 = vadd.f32 %v1075, %v1076
      %1079 = vrot.lane.b32.xlu0 %v1077, 96
      %v1080 = vpop.permute.xlu0 %1079
      %s1082 = scalar_lea.vmem %s204, %s977
      %1083 = vst.msk [vmem:[%s1082] sm:$0x3] %vm326, %v1080
      %p1084 = scmp.lt.s32.totalorder %s14, 1
      %s1085 = scalar_select %p1084, %s14, 1
      %s1086 = smul.addr %s1085, 8
      %s1087 = smul.addr %s1086, 2
      %s1088 = scalar_lea.vmem %s3, %s1087
      // Predicated region
      $region33: #{sden_forward.19} parent=31 // pred_check
        %p1089 = pneg %p110
      $region34: #{sden_forward.19} parent=31 // pred_check_branch
        %1091 = sbr.rel (%p1089) target = $region36
      $region35: #{sden_forward.19} parent=31 // pred_region
        _
      $region36: #{sden_forward.19} parent=31 // pred_fallthru
        _
    $region32: #{sden_forward.19} parent=5 // pred_fallthru
      _
    %p1092 = scmp.le.s32.totalorder 2, %s9
    // Predicated region
    $region37: #{sden_forward.19} parent=5 // pred_check
      %p1093 = pneg %p1092
    $region38: #{sden_forward.19} parent=5 // pred_check_branch
      %1095 = sbr.rel (%p1093) target = $region40
    $region39: #{sden_forward.19} parent=5 // pred_region
      %s1096 = ssub.s32 %s9, 2
      // Predicated region
      $region41: #{sden_forward.19} parent=39 // pred_check
        %p1097 = pneg %p116
      $region42: #{sden_forward.19} parent=39 // pred_check_branch
        %1099 = sbr.rel (%p1097) target = $region44
      $region43: #{sden_forward.19} parent=39 // pred_region
        %p1100 = scmp.lt.s32.totalorder %s15, 1
        %s1101 = scalar_select %p1100, %s15, 1
        %s1102 = smul.addr %s1101, 8
        %s1103 = smul.addr %s1102, 2
        %s1104 = scalar_lea.vmem %s3, %s1103
      $region44: #{sden_forward.19} parent=39 // pred_fallthru
        _
    $region40: #{sden_forward.19} parent=5 // pred_fallthru
      _
  $region6: #{sden_forward.19} parent=0 // loop_footer
    %s13 = sadd.s32 1, %s9
  $region7: #{sden_forward.19} parent=0 // loop_footer_branch
    %8 = sbr.rel target = $region3
  $region8: #{sden_forward.19} parent=0 // loop_exit
    _

// kernel: sden_forward.20
$region0: #{sden_forward.20}
  #allocation0 [shape = 'u32[]', space=smem, size = 0x4, offset = 0x4, fixed_abs, tag = 'smem constant byte address 0x4 - core index']
  #allocation1 [shape = 'u32[144,128]{1,0:T(1,128)}', space=vmem, size = 0x12000, scoped, tag = 'internal scratch']
  %s0 = inlined_call_operand.vmem [shape: f32[16,64], index: 0, kind: input, shape index: {}]
  %s1 = inlined_call_operand.vmem [shape: bf16[64,256], index: 1, kind: input, shape index: {}]
  %s2 = inlined_call_operand.vmem [shape: f32[1,256], index: 2, kind: input, shape index: {}]
  %s3 = inlined_call_operand.vmem [shape: f32[16,256], index: 3, kind: output, shape index: {}]
  %s4 = sld [smem:[#allocation0]]
  $region22: #{sden_forward.20} parent=0
    _
  %s6 = ssub.s32 1, %s4
  %s7 = scalar_select 0, %s6, %s4
  // Predicated region
  $region2: #{sden_forward.20} parent=0 // pred_check
    _
  $region3: #{sden_forward.20} parent=0 // pred_check_branch
    %9 = sbr.rel (0) target = $region5
  $region4: #{sden_forward.20} parent=0 // pred_region
    _
  $region5: #{sden_forward.20} parent=0 // pred_fallthru
    _
  // Predicated region
  $region6: #{sden_forward.20} parent=0 // pred_check
    _
  $region7: #{sden_forward.20} parent=0 // pred_check_branch
    %11 = sbr.rel (0) target = $region9
  $region8: #{sden_forward.20} parent=0 // pred_region
    _
  $region9: #{sden_forward.20} parent=0 // pred_fallthru
    _
  // Predicated region
  $region10: #{sden_forward.20} parent=0 // pred_check
    _
  $region11: #{sden_forward.20} parent=0 // pred_check_branch
    %13 = sbr.rel (0) target = $region13
  $region12: #{sden_forward.20} parent=0 // pred_region
    _
  $region13: #{sden_forward.20} parent=0 // pred_fallthru
    _
  %v15 = vld [vmem:[%s0] sm:$0xff]
  %v16 = vld [vmem:[%s0 + $0x8] sm:$0xff]
  %v17 = vpack.c.bf16 %v16, %v15
  %v18 = vld [vmem:[%s1] sm:$0xff]
  %v19 = vld [vmem:[%s1 + $0x8] sm:$0xff]
  %v20 = vld [vmem:[%s1 + $0x10] sm:$0xff]
  %v21 = vld [vmem:[%s1 + $0x18] sm:$0xff]
  %v22 = vld [vmem:[%s1 + $0x20] sm:$0xff]
  %v23 = vld [vmem:[%s1 + $0x28] sm:$0xff]
  %v24 = vld [vmem:[%s1 + $0x30] sm:$0xff]
  %v25 = vld [vmem:[%s1 + $0x38] sm:$0xff]
  %v26 = vld [vmem:[%s2] sm:$0x3]
  %v28 = vlaneseq
  %v29 = vshrl.u32 %v28, 7
  %v30 = vsub.s32 0, %v29
  %v31 = vrot.slane %v26, %v30
  %v32 = vlaneseq
  %v33 = vshrl.u32 %v32, 7
  %v34 = vsub.s32 1, %v33
  %v35 = vrot.slane %v26, %v34
  %v46 = vunpack.c.l.b16 %v18
  %v47 = vunpack.c.h.b16 %v18
  %v48 = vunpack.c.l.b16 %v19
  %v49 = vunpack.c.h.b16 %v19
  %v50 = vunpack.c.l.b16 %v20
  %v51 = vunpack.c.h.b16 %v20
  %v52 = vunpack.c.l.b16 %v21
  %v53 = vunpack.c.h.b16 %v21
  %v54 = vunpack.c.l.b16 %v22
  %v55 = vunpack.c.h.b16 %v22
  %v56 = vunpack.c.l.b16 %v23
  %v57 = vunpack.c.h.b16 %v23
  %v58 = vunpack.c.l.b16 %v24
  %v59 = vunpack.c.h.b16 %v24
  %v60 = vunpack.c.l.b16 %v25
  %v61 = vunpack.c.h.b16 %v25
  %v62 = vpack.c.b16 %v48, %v46
  %v63 = vpack.c.b16 %v49, %v47
  %v64 = vpack.c.b16 %v52, %v50
  %v65 = vpack.c.b16 %v53, %v51
  %v66 = vpack.c.b16 %v56, %v54
  %v67 = vpack.c.b16 %v57, %v55
  %v68 = vpack.c.b16 %v60, %v58
  %v69 = vpack.c.b16 %v61, %v59
  %vm78 = vcmask 523264
  %v80 = vsel %vm78, %v17, 0
  %82 = vmatprep.subr.bf16.mxu0 %v63
  %83 = vmatpush1.bf16.msra.mxu0 %v62
  %84 = vmatprep.subr.bf16.mxu0 %v65
  %85 = vmatpush1.bf16.msra.mxu0 %v64
  %86 = vmatprep.subr.bf16.mxu0 %v67
  %87 = vmatpush1.bf16.msra.mxu0 %v66
  %88 = vmatprep.subr.bf16.mxu0 %v69
  %89 = vmatpush1.bf16.msra.mxu0 %v68
  %90 = vmatprep.subr.bf16.mxu0 0
  %91 = vmatpush1.bf16.msra.mxu0 0
  %92 = vmatprep.subr.bf16.mxu0 0
  %93 = vmatpush1.bf16.msra.mxu0 0
  %94 = vmatprep.subr.bf16.mxu0 0
  %95 = vmatpush1.bf16.msra.mxu0 0
  %96 = vmatprep.subr.bf16.mxu0 0
  %97 = vmatpush1.bf16.msra.mxu0 0
  %98 = vmatprep.subr.bf16.mxu0 0
  %99 = vmatpush1.bf16.msra.mxu0 0
  %100 = vmatprep.subr.bf16.mxu0 0
  %101 = vmatpush1.bf16.msra.mxu0 0
  %102 = vmatprep.subr.bf16.mxu0 0
  %103 = vmatpush1.bf16.msra.mxu0 0
  %104 = vmatprep.subr.bf16.mxu0 0
  %105 = vmatpush1.bf16.msra.mxu0 0
  %106 = vmatprep.subr.bf16.mxu0 0
  %107 = vmatpush1.bf16.msra.mxu0 0
  %108 = vmatprep.subr.bf16.mxu0 0
  %109 = vmatpush1.bf16.msra.mxu0 0
  %110 = vmatprep.subr.bf16.mxu0 0
  %111 = vmatpush1.bf16.msra.mxu0 0
  %112 = vmatprep.subr.bf16.mxu0 0
  %113 = vmatpush1.bf16.msra.mxu0 0
  %114 = vmatprep.mubr.bf16.mxu0 0
  %115 = vmatmul.mubr.bf16.gmra.mrb[0].mxu0 %v80
  %v116 = vpop.f32.mrb[0].mxu0
  %v117 = vadd.f32 %v31, %v116
  %v118 = vpop.f32.mrb[0].mxu0
  %v119 = vadd.f32 %v35, %v118
  %v120 = vpop.f32.mrb[0].mxu0
  %v121 = vadd.f32 %v31, %v120
  %v122 = vpop.f32.mrb[0].mxu0
  %v123 = vadd.f32 %v35, %v122
  %124 = vdwg.mxu0
  %125 = vst [vmem:[%s3] sm:$0xff] %v117
  %126 = vst [vmem:[%s3 + $0x8] sm:$0xff] %v119
  %127 = vst [vmem:[%s3 + $0x10] sm:$0xff] %v121
  %128 = vst [vmem:[%s3 + $0x18] sm:$0xff] %v123
  // Predicated region
  $region14: #{sden_forward.20} parent=0 // pred_check
    _
  $region15: #{sden_forward.20} parent=0 // pred_check_branch
    %130 = sbr.rel (0) target = $region17
  $region16: #{sden_forward.20} parent=0 // pred_region
    _
  $region17: #{sden_forward.20} parent=0 // pred_fallthru
    _
  // Predicated region
  $region18: #{sden_forward.20} parent=0 // pred_check
    _
  $region19: #{sden_forward.20} parent=0 // pred_check_branch
    %132 = sbr.rel (0) target = $region21
  $region20: #{sden_forward.20} parent=0 // pred_region
    _
  $region21: #{sden_forward.20} parent=0 // pred_fallthru
    _

// kernel: sden_forward.22
$region0: #{sden_forward.22}
  #allocation0 [shape = 'u32[]', space=smem, size = 0x4, offset = 0x4, fixed_abs, tag = 'smem constant byte address 0x4 - core index']
  #allocation1 [shape = 'u32[144,128]{1,0:T(1,128)}', space=vmem, size = 0x12000, scoped, tag = 'internal scratch']
  %s0 = inlined_call_operand.vmem [shape: f32[2,64], index: 0, kind: input, shape index: {}]
  %s1 = inlined_call_operand.vmem [shape: bf16[64,5], index: 1, kind: input, shape index: {}]
  %s2 = inlined_call_operand.vmem [shape: f32[1,5], index: 2, kind: input, shape index: {}]
  %s3 = inlined_call_operand.hbm [shape: f32[2,5], index: 3, kind: output, shape index: {}]
  %s4 = sld [smem:[#allocation0]]
  $region22: #{sden_forward.22} parent=0
    _
  %s6 = ssub.s32 1, %s4
  %s7 = scalar_select 0, %s6, %s4
  $region1: #{sden_forward.22} parent=0
    #allocation2 [shape = 'u8[1024]{0}', space=vmem, size = 0x400, scoped, tag = 'output window, operand 0, single buffered']
    #allocation3 [shape = 's32[1]{0}', space=sflag, size = 0x4, scoped, tag = 'scoped memory for sden_forward.22']
    %8 = vsyncpa [#allocation3], 0
    // Predicated region
    $region2: #{sden_forward.22} parent=1 // pred_check
      _
    $region3: #{sden_forward.22} parent=1 // pred_check_branch
      %10 = sbr.rel (0) target = $region5
    $region4: #{sden_forward.22} parent=1 // pred_region
      _
    $region5: #{sden_forward.22} parent=1 // pred_fallthru
      _
    // Predicated region
    $region6: #{sden_forward.22} parent=1 // pred_check
      _
    $region7: #{sden_forward.22} parent=1 // pred_check_branch
      %12 = sbr.rel (0) target = $region9
    $region8: #{sden_forward.22} parent=1 // pred_region
      _
    $region9: #{sden_forward.22} parent=1 // pred_fallthru
      _
    // Predicated region
    $region10: #{sden_forward.22} parent=1 // pred_check
      _
    $region11: #{sden_forward.22} parent=1 // pred_check_branch
      %14 = sbr.rel (0) target = $region13
    $region12: #{sden_forward.22} parent=1 // pred_region
      _
    $region13: #{sden_forward.22} parent=1 // pred_fallthru
      _
    %v16 = vld [vmem:[%s0] sm:$0x3]
    %v17 = vpack.c.bf16 %v16, %v16
    %v18 = vld [vmem:[%s1] sm:$0xf]
    %v19 = vld [vmem:[%s1 + $0x4] sm:$0xf]
    %v20 = vld [vmem:[%s1 + $0x8] sm:$0xf]
    %v21 = vld [vmem:[%s1 + $0xc] sm:$0xf]
    %v22 = vld [vmem:[%s1 + $0x10] sm:$0xf]
    %v23 = vld [vmem:[%s1 + $0x14] sm:$0xf]
    %v24 = vld [vmem:[%s1 + $0x18] sm:$0xf]
    %v25 = vld [vmem:[%s1 + $0x1c] sm:$0xf]
    %v26 = vld [vmem:[%s2] sm:$0x1]
    %v28 = vlaneseq
    %v29 = vshrl.u32 %v28, 7
    %v30 = vsub.s32 0, %v29
    %v31 = vrot.slane %v26, %v30
    %v41 = vunpack.c.l.b16 %v18
    %v42 = vunpack.c.l.b16 %v19
    %v43 = vunpack.c.l.b16 %v20
    %v44 = vunpack.c.l.b16 %v21
    %v45 = vunpack.c.l.b16 %v22
    %v46 = vunpack.c.l.b16 %v23
    %v47 = vunpack.c.l.b16 %v24
    %v48 = vunpack.c.l.b16 %v25
    %v49 = vpack.c.b16 %v42, %v41
    %v50 = vpack.c.b16 %v44, %v43
    %v51 = vpack.c.b16 %v46, %v45
    %v52 = vpack.c.b16 %v48, %v47
    %vm57 = vcmask 523264
    %v59 = vsel %vm57, %v17, 0
    %61 = vmatprep.subr.bf16.mxu0 0
    %62 = vmatpush1.bf16.msra.mxu0 %v49
    %63 = vmatprep.subr.bf16.mxu0 0
    %64 = vmatpush1.bf16.msra.mxu0 %v50
    %65 = vmatprep.subr.bf16.mxu0 0
    %66 = vmatpush1.bf16.msra.mxu0 %v51
    %67 = vmatprep.subr.bf16.mxu0 0
    %68 = vmatpush1.bf16.msra.mxu0 %v52
    %69 = vmatprep.subr.bf16.mxu0 0
    %70 = vmatpush1.bf16.msra.mxu0 0
    %71 = vmatprep.subr.bf16.mxu0 0
    %72 = vmatpush1.bf16.msra.mxu0 0
    %73 = vmatprep.subr.bf16.mxu0 0
    %74 = vmatpush1.bf16.msra.mxu0 0
    %75 = vmatprep.subr.bf16.mxu0 0
    %76 = vmatpush1.bf16.msra.mxu0 0
    %77 = vmatprep.subr.bf16.mxu0 0
    %78 = vmatpush1.bf16.msra.mxu0 0
    %79 = vmatprep.subr.bf16.mxu0 0
    %80 = vmatpush1.bf16.msra.mxu0 0
    %81 = vmatprep.subr.bf16.mxu0 0
    %82 = vmatpush1.bf16.msra.mxu0 0
    %83 = vmatprep.subr.bf16.mxu0 0
    %84 = vmatpush1.bf16.msra.mxu0 0
    %85 = vmatprep.subr.bf16.mxu0 0
    %86 = vmatpush1.bf16.msra.mxu0 0
    %87 = vmatprep.subr.bf16.mxu0 0
    %88 = vmatpush1.bf16.msra.mxu0 0
    %89 = vmatprep.subr.bf16.mxu0 0
    %90 = vmatpush1.bf16.msra.mxu0 0
    %91 = vmatprep.subr.bf16.mxu0 0
    %92 = vmatpush1.bf16.msra.mxu0 0
    %93 = vmatprep.mubr.bf16.mxu0 0
    %94 = vmatmul.mubr.bf16.gmra.mrb[0].mxu0 %v59
    %v95 = vpop.f32.mrb[0].mxu0
    %v96 = vadd.f32 %v31, %v95
    %v97 = vpop.f32.mrb[0].mxu0
    %v98 = vpop.f32.mrb[0].mxu0
    %v99 = vpop.f32.mrb[0].mxu0
    %100 = vdwg.mxu0
    %vm101 = vcmask 33792
    %102 = vst.msk [vmem:[#allocation2] sm:$0x3] %vm101, %v96
    // Predicated region
    $region14: #{sden_forward.22} parent=1 // pred_check
      _
    $region15: #{sden_forward.22} parent=1 // pred_check_branch
      %104 = sbr.rel (0) target = $region17
    $region16: #{sden_forward.22} parent=1 // pred_region
      %s106 = ssub.s32 32, 32
      %107 = vsyncadd [#allocation3], %s106
      %s109 = sshll.u32 [#allocation2], 4
      %s110 = int_to_ptr.vmem [resolvable:$true] %s109
      %112 = dma.vmem_to_hbm [thread:$0]  %s110, 32, %s3, [#allocation3]
    $region17: #{sden_forward.22} parent=1 // pred_fallthru
      _
    // Predicated region
    $region18: #{sden_forward.22} parent=1 // pred_check
      _
    $region19: #{sden_forward.22} parent=1 // pred_check_branch
      %114 = sbr.rel (0) target = $region21
    $region20: #{sden_forward.22} parent=1 // pred_region
      %115 = dma.done [#allocation3], 32
    $region21: #{sden_forward.22} parent=1 // pred_fallthru
      _
    %116 = vsyncpa [#allocation3], 1

// kernel: sden_forward.21
$region0: #{sden_forward.21}
  #allocation0 [shape = 'u32[]', space=smem, size = 0x4, offset = 0x4, fixed_abs, tag = 'smem constant byte address 0x4 - core index']
  #allocation1 [shape = 'u32[144,128]{1,0:T(1,128)}', space=vmem, size = 0x12000, scoped, tag = 'internal scratch']
  %s0 = inlined_call_operand.vmem [shape: f32[2,8,2,128], index: 0, kind: input, shape index: {}]
  %s1 = inlined_call_operand.vmem [shape: f32[2,32,128], index: 1, kind: input, shape index: {}]
  %s2 = inlined_call_operand.vmem [shape: f32[2,2,32], index: 2, kind: input, shape index: {}]
  %s3 = inlined_call_operand.vmem [shape: f32[2,8,2,32], index: 3, kind: output, shape index: {0}]
  %s4 = inlined_call_operand.vmem [shape: f32[2,2,32], index: 4, kind: output, shape index: {1}]
  %5 = xla_tuple %s3, %s4
  %s6 = sld [smem:[#allocation0]]
  $region53: #{sden_forward.21} parent=0
    _
  %s8 = ssub.s32 1, %s6
  %s9 = scalar_select 0, %s8, %s6
  loop: start=0, step=1, limit=4
  $region2: #{sden_forward.21} parent=0 // loop_pre_header
    _
  $region3: #{sden_forward.21} parent=0 // loop_header
    %s11 = sphi 0, %s15
    %p12 = scmp.ge.s32.totalorder %s11, 4
    %s21 = sphi 0, %s23
    %s24 = sphi 0, %s21
    %s25 = sphi 0, %s24
    %s41 = sphi 0, %s25
    %s47 = sphi 0, %s49
    %s50 = sphi 0, %s47
    %s51 = sphi 0, %s50
    %s67 = sphi 0, %s51
    %s73 = sphi 0, %s75
    %s76 = sphi 0, %s73
    %s77 = sphi 0, %s76
    %s93 = sphi 0, %s77
    %s99 = sphi 0, %s101
    %s102 = sphi 0, %s99
    %s103 = sphi 0, %s102
    %s119 = sphi 0, %s103
    %s125 = sphi 0, %s127
    %s128 = sphi 0, %s125
    %s129 = sphi 0, %s128
    %s145 = sphi 0, %s129
  $region4: #{sden_forward.21} parent=0 // loop_header_branch
    %14 = sbr.rel (%p12) target = $region8
  $region5: #{sden_forward.21} parent=0 // loop_body
    %s16 = ssub.s32 %s11, 1
    %s17 = ssub.s32 %s11, 2
    %s18 = sadd.s32 %s11, 1
    %s19 = ssub.s32 %s11, %s18
    %p20 = scmp.eq.s32.totalorder %s19, 0
    %s22 = sadd.s32 %s21, 1
    %s23 = scalar_select %p20, %s21, %s22
    %p26 = pneg %p20
    %p27 = scmp.eq.s32.totalorder %s11, 1
    %p28 = por %p26, %p27
    %p29 = scmp.ne.s32.totalorder %s21, %s24
    %p30 = scmp.eq.s32.totalorder %s11, 0
    %p31 = por %p29, %p30
    %p32 = scmp.ne.s32.totalorder %s21, %s24
    %p33 = scmp.eq.s32.totalorder %s16, 1
    %p34 = por %p32, %p33
    %p35 = scmp.ne.s32.totalorder %s24, %s25
    %p36 = scmp.eq.s32.totalorder %s16, 0
    %p37 = por %p35, %p36
    %p38 = scmp.ne.s32.totalorder %s24, %s25
    %p39 = scmp.eq.s32.totalorder %s17, 1
    %p40 = por %p38, %p39
    %p42 = scmp.ne.s32.totalorder %s25, %s41
    %p43 = scmp.eq.s32.totalorder %s17, 0
    %p44 = por %p42, %p43
    %s45 = ssub.s32 %s11, %s18
    %p46 = scmp.eq.s32.totalorder %s45, 0
    %s48 = sadd.s32 %s47, 1
    %s49 = scalar_select %p46, %s47, %s48
    %p52 = pneg %p46
    %p53 = scmp.eq.s32.totalorder %s11, 1
    %p54 = por %p52, %p53
    %p55 = scmp.ne.s32.totalorder %s47, %s50
    %p56 = scmp.eq.s32.totalorder %s11, 0
    %p57 = por %p55, %p56
    %p58 = scmp.ne.s32.totalorder %s47, %s50
    %p59 = scmp.eq.s32.totalorder %s16, 1
    %p60 = por %p58, %p59
    %p61 = scmp.ne.s32.totalorder %s50, %s51
    %p62 = scmp.eq.s32.totalorder %s16, 0
    %p63 = por %p61, %p62
    %p64 = scmp.ne.s32.totalorder %s50, %s51
    %p65 = scmp.eq.s32.totalorder %s17, 1
    %p66 = por %p64, %p65
    %p68 = scmp.ne.s32.totalorder %s51, %s67
    %p69 = scmp.eq.s32.totalorder %s17, 0
    %p70 = por %p68, %p69
    %s71 = ssub.s32 %s11, %s18
    %p72 = scmp.eq.s32.totalorder %s71, 0
    %s74 = sadd.s32 %s73, 1
    %s75 = scalar_select %p72, %s73, %s74
    %p78 = pneg %p72
    %p79 = scmp.eq.s32.totalorder %s11, 1
    %p80 = por %p78, %p79
    %p81 = scmp.ne.s32.totalorder %s73, %s76
    %p82 = scmp.eq.s32.totalorder %s11, 0
    %p83 = por %p81, %p82
    %p84 = scmp.ne.s32.totalorder %s73, %s76
    %p85 = scmp.eq.s32.totalorder %s16, 1
    %p86 = por %p84, %p85
    %p87 = scmp.ne.s32.totalorder %s76, %s77
    %p88 = scmp.eq.s32.totalorder %s16, 0
    %p89 = por %p87, %p88
    %p90 = scmp.ne.s32.totalorder %s76, %s77
    %p91 = scmp.eq.s32.totalorder %s17, 1
    %p92 = por %p90, %p91
    %p94 = scmp.ne.s32.totalorder %s77, %s93
    %p95 = scmp.eq.s32.totalorder %s17, 0
    %p96 = por %p94, %p95
    %s97 = ssub.s32 %s11, %s18
    %p98 = scmp.eq.s32.totalorder %s97, 0
    %s100 = sadd.s32 %s99, 1
    %s101 = scalar_select %p98, %s99, %s100
    %p104 = pneg %p98
    %p105 = scmp.eq.s32.totalorder %s11, 1
    %p106 = por %p104, %p105
    %p107 = scmp.ne.s32.totalorder %s99, %s102
    %p108 = scmp.eq.s32.totalorder %s11, 0
    %p109 = por %p107, %p108
    %p110 = scmp.ne.s32.totalorder %s99, %s102
    %p111 = scmp.eq.s32.totalorder %s16, 1
    %p112 = por %p110, %p111
    %p113 = scmp.ne.s32.totalorder %s102, %s103
    %p114 = scmp.eq.s32.totalorder %s16, 0
    %p115 = por %p113, %p114
    %p116 = scmp.ne.s32.totalorder %s102, %s103
    %p117 = scmp.eq.s32.totalorder %s17, 1
    %p118 = por %p116, %p117
    %p120 = scmp.ne.s32.totalorder %s103, %s119
    %p121 = scmp.eq.s32.totalorder %s17, 0
    %p122 = por %p120, %p121
    %s123 = ssub.s32 %s11, %s18
    %p124 = scmp.eq.s32.totalorder %s123, 0
    %s126 = sadd.s32 %s125, 1
    %s127 = scalar_select %p124, %s125, %s126
    %p130 = pneg %p124
    %p131 = scmp.eq.s32.totalorder %s11, 1
    %p132 = por %p130, %p131
    %p133 = scmp.ne.s32.totalorder %s125, %s128
    %p134 = scmp.eq.s32.totalorder %s11, 0
    %p135 = por %p133, %p134
    %p136 = scmp.ne.s32.totalorder %s125, %s128
    %p137 = scmp.eq.s32.totalorder %s16, 1
    %p138 = por %p136, %p137
    %p139 = scmp.ne.s32.totalorder %s128, %s129
    %p140 = scmp.eq.s32.totalorder %s16, 0
    %p141 = por %p139, %p140
    %p142 = scmp.ne.s32.totalorder %s128, %s129
    %p143 = scmp.eq.s32.totalorder %s17, 1
    %p144 = por %p142, %p143
    %p146 = scmp.ne.s32.totalorder %s129, %s145
    %p147 = scmp.eq.s32.totalorder %s17, 0
    %p148 = por %p146, %p147
    %p149 = scmp.le.s32.totalorder 1, %s11
    %p150 = scmp.lt.s32.totalorder %s11, 3
    %p151 = pnand %p149, %p150
    %p152 = pneg %p151
    // Predicated region
    $region9: #{sden_forward.21} parent=5 // pred_check
      _
    $region10: #{sden_forward.21} parent=5 // pred_check_branch
      %154 = sbr.rel (%p151) target = $region12
    $region11: #{sden_forward.21} parent=5 // pred_region
      %s155 = ssub.s32 %s11, 1
    $region12: #{sden_forward.21} parent=5 // pred_fallthru
      _
    %p156 = scmp.lt.s32.totalorder %s11, 2
    // Predicated region
    $region13: #{sden_forward.21} parent=5 // pred_check
      %p157 = pneg %p156
    $region14: #{sden_forward.21} parent=5 // pred_check_branch
      %159 = sbr.rel (%p157) target = $region16
    $region15: #{sden_forward.21} parent=5 // pred_region
      // Predicated region
      $region17: #{sden_forward.21} parent=15 // pred_check
        %p160 = pneg %p31
      $region18: #{sden_forward.21} parent=15 // pred_check_branch
        %162 = sbr.rel (%p160) target = $region20
      $region19: #{sden_forward.21} parent=15 // pred_region
        %p163 = scmp.lt.s32.totalorder %s11, 1
        %s164 = scalar_select %p163, %s11, 1
        %s165 = smul.addr %s164, 8
        %s166 = smul.addr %s165, 2
        %s167 = scalar_lea.vmem %s0, %s166
      $region20: #{sden_forward.21} parent=15 // pred_fallthru
        _
      // Predicated region
      $region21: #{sden_forward.21} parent=15 // pred_check
        %p168 = pneg %p57
      $region22: #{sden_forward.21} parent=15 // pred_check_branch
        %170 = sbr.rel (%p168) target = $region24
      $region23: #{sden_forward.21} parent=15 // pred_region
        %p171 = scmp.lt.s32.totalorder %s11, 1
        %s172 = scalar_select %p171, %s11, 1
        %s173 = smul.addr %s172, 4
        %s174 = smul.addr %s173, 8
        %s175 = scalar_lea.vmem %s1, %s174
      $region24: #{sden_forward.21} parent=15 // pred_fallthru
        _
      // Predicated region
      $region25: #{sden_forward.21} parent=15 // pred_check
        %p176 = pneg %p83
      $region26: #{sden_forward.21} parent=15 // pred_check_branch
        %178 = sbr.rel (%p176) target = $region28
      $region27: #{sden_forward.21} parent=15 // pred_region
        %p179 = scmp.lt.s32.totalorder %s11, 1
        %s180 = scalar_select %p179, %s11, 1
        %s181 = smul.addr %s180, 2
        %s182 = scalar_lea.vmem %s2, %s181
      $region28: #{sden_forward.21} parent=15 // pred_fallthru
        _
    $region16: #{sden_forward.21} parent=5 // pred_fallthru
      _
    %p183 = scmp.le.s32.totalorder 1, %s11
    %p184 = scmp.lt.s32.totalorder %s11, 3
    %p185 = pnand %p183, %p184
    %p186 = pneg %p185
    // Predicated region
    $region29: #{sden_forward.21} parent=5 // pred_check
      _
    $region30: #{sden_forward.21} parent=5 // pred_check_branch
      %188 = sbr.rel (%p185) target = $region32
    $region31: #{sden_forward.21} parent=5 // pred_region
      %s189 = ssub.s32 %s11, 1
      %p190 = scmp.lt.s32.totalorder %s16, 1
      %s191 = scalar_select %p190, %s16, 1
      %s192 = smul.addr %s191, 8
      %s193 = smul.addr %s192, 2
      %s194 = scalar_lea.vmem %s0, %s193
      %p195 = pneg %p37
      %p196 = pneg %p34
      %p197 = scmp.lt.s32.totalorder %s16, 1
      %s198 = scalar_select %p197, %s16, 1
      %s199 = smul.addr %s198, 4
      %s200 = smul.addr %s199, 8
      %s201 = scalar_lea.vmem %s1, %s200
      %p202 = pneg %p63
      %p203 = pneg %p60
      %p204 = scmp.lt.s32.totalorder %s16, 1
      %s205 = scalar_select %p204, %s16, 1
      %s206 = smul.addr %s205, 2
      %s207 = scalar_lea.vmem %s2, %s206
      %p208 = pneg %p89
      %p209 = pneg %p86
      %p210 = pneg %p115
      %p211 = pneg %p112
      %p212 = scmp.lt.s32.totalorder %s16, 1
      %s213 = scalar_select %p212, %s16, 1
      %s214 = smul.addr %s213, 8
      %s215 = smul.addr %s214, 2
      %s216 = scalar_lea.vmem %s3, %s215
      %p217 = pneg %p141
      %p218 = pneg %p138
      %p219 = scmp.lt.s32.totalorder %s16, 1
      %s220 = scalar_select %p219, %s16, 1
      %s221 = smul.addr %s220, 2
      %s222 = scalar_lea.vmem %s4, %s221
      %p223 = scmp.lt.s32.totalorder %s16, 1
      %s224 = scalar_select %p223, %s16, 1
      %s225 = smul.addr %s224, 8
      %s226 = smul.addr %s225, 2
      %s227 = scalar_lea.vmem %s0, %s226
      %p228 = scmp.lt.s32.totalorder %s16, 1
      %s229 = scalar_select %p228, %s16, 1
      %s230 = smul.addr %s229, 4
      %s231 = smul.addr %s230, 8
      %s232 = scalar_lea.vmem %s1, %s231
      %p233 = scmp.lt.s32.totalorder %s16, 1
      %s234 = scalar_select %p233, %s16, 1
      %s235 = smul.addr %s234, 2
      %s236 = scalar_lea.vmem %s2, %s235
      %p237 = scmp.lt.s32.totalorder %s16, 1
      %s238 = scalar_select %p237, %s16, 1
      %s239 = smul.addr %s238, 8
      %s240 = smul.addr %s239, 2
      %s241 = scalar_lea.vmem %s3, %s240
      %p242 = scmp.lt.s32.totalorder %s16, 1
      %s243 = scalar_select %p242, %s16, 1
      %s244 = smul.addr %s243, 2
      %s245 = scalar_lea.vmem %s4, %s244
      %v246 = vld [vmem:[%s232] sm:$0xff]
      %v247 = vld [vmem:[%s232 + $0x8] sm:$0xff]
      %v248 = vld [vmem:[%s232 + $0x10] sm:$0xff]
      %v249 = vld [vmem:[%s232 + $0x18] sm:$0xff]
      %v250 = vld [vmem:[%s236] sm:$0x3]
      %p251 = scmp.eq.s32.totalorder %s16, 1
      %s252 = scalar_select %p251, 7, 0
      %s253 = smul.u32 %s252, 2
      %s254 = scalar_lea.vmem %s227, %s253
      %v255 = vld [vmem:[%s254] sm:$0x3]
      %vm256 = vcmask 261120
      %v258 = vsel %vm256, %v250, 0
      %260 = vmatprep.subr.mxu0 0.0
      %261 = vmatpush1.msra.mxu0 %v246
      %262 = vmatprep.subr.mxu0 0.0
      %263 = vmatpush1.msra.mxu0 %v247
      %264 = vmatprep.subr.mxu0 0.0
      %265 = vmatpush1.msra.mxu0 %v248
      %266 = vmatprep.subr.mxu0 0.0
      %267 = vmatpush1.msra.mxu0 %v249
      %268 = vmatprep.subr.mxu0 0.0
      %269 = vmatpush1.msra.mxu0 0.0
      %270 = vmatprep.subr.mxu0 0.0
      %271 = vmatpush1.msra.mxu0 0.0
      %272 = vmatprep.subr.mxu0 0.0
      %273 = vmatpush1.msra.mxu0 0.0
      %274 = vmatprep.subr.mxu0 0.0
      %275 = vmatpush1.msra.mxu0 0.0
      %276 = vmatprep.subr.mxu0 0.0
      %277 = vmatpush1.msra.mxu0 0.0
      %278 = vmatprep.subr.mxu0 0.0
      %279 = vmatpush1.msra.mxu0 0.0
      %280 = vmatprep.subr.mxu0 0.0
      %281 = vmatpush1.msra.mxu0 0.0
      %282 = vmatprep.subr.mxu0 0.0
      %283 = vmatpush1.msra.mxu0 0.0
      %284 = vmatprep.subr.mxu0 0.0
      %285 = vmatpush1.msra.mxu0 0.0
      %286 = vmatprep.subr.mxu0 0.0
      %287 = vmatpush1.msra.mxu0 0.0
      %288 = vmatprep.subr.mxu0 0.0
      %289 = vmatpush1.msra.mxu0 0.0
      %290 = vmatprep.subr.mxu0 0.0
      %291 = vmatpush1.msra.mxu0 0.0
      %292 = vmatprep.subr.mxu0 0.0
      %293 = vmatpush1.msra.mxu0 0.0
      %294 = vmatprep.subr.mxu0 0.0
      %295 = vmatpush1.msra.mxu0 0.0
      %296 = vmatprep.subr.mxu0 0.0
      %297 = vmatpush1.msra.mxu0 0.0
      %298 = vmatprep.subr.mxu0 0.0
      %299 = vmatpush1.msra.mxu0 0.0
      %300 = vmatprep.subr.mxu0 0.0
      %301 = vmatpush1.msra.mxu0 0.0
      %302 = vmatprep.subr.mxu0 0.0
      %303 = vmatpush1.msra.mxu0 0.0
      %304 = vmatprep.subr.mxu0 0.0
      %305 = vmatpush1.msra.mxu0 0.0
      %306 = vmatprep.subr.mxu0 0.0
      %307 = vmatpush1.msra.mxu0 0.0
      %308 = vmatprep.subr.mxu0 0.0
      %309 = vmatpush1.msra.mxu0 0.0
      %310 = vmatprep.subr.mxu0 0.0
      %311 = vmatpush1.msra.mxu0 0.0
      %312 = vmatprep.subr.mxu0 0.0
      %313 = vmatpush1.msra.mxu0 0.0
      %314 = vmatprep.subr.mxu0 0.0
      %315 = vmatpush1.msra.mxu0 0.0
      %316 = vmatprep.subr.mxu0 0.0
      %317 = vmatpush1.msra.mxu0 0.0
      %318 = vmatprep.subr.mxu0 0.0
      %319 = vmatpush1.msra.mxu0 0.0
      %320 = vmatprep.subr.mxu0 0.0
      %321 = vmatpush1.msra.mxu0 0.0
      %322 = vmatprep.subr.mxu0 0.0
      %323 = vmatpush1.msra.mxu0 0.0
      %324 = vmatprep.mubr.f32.mxu0 0.0
      %325 = vmatmul.mubr.f32.gmra.mrb[0].mxu0 %v258
      %v326 = vpop.f32.mrb[0].mxu0
      %v327 = vadd.f32 0.0, %v326
      %v328 = vpop.f32.mrb[0].mxu0
      %329 = vdwg.mxu0
      %v330 = vadd.f32 %v255, %v327
      %v331 = vxor.u32 %v330, 2147483648
      %v332 = vmul.f32 %v331, 1.442695
      %v333 = vpow.pop %v332
      %v334 = vadd.f32 %v333, 1.0
      %v335 = vrcp.pop %v334
      %v336 = vmul.f32 1.0, %v335
      %v337 = vtanh.pop %v330
      %v338 = vmul.f32 %v336, 0.0
      %340 = vrot.lane.b32.xlu0 %v337, 64
      %v341 = vpop.permute.xlu0 %340
      %v343 = vmul.f32 %v336, %v341
      %345 = vrot.lane.b32.xlu0 %v343, 32
      %v346 = vpop.permute.xlu0 %345
      %v348 = vadd.f32 %v338, %v346
      %v349 = vtanh.pop %v348
      %351 = vrot.lane.b32.xlu0 %v349, 64
      %v352 = vpop.permute.xlu0 %351
      %v354 = vmul.f32 %v336, %v352
      %356 = vrot.lane.b32.xlu0 %v354, 32
      %v357 = vpop.permute.xlu0 %356
      %s359 = scalar_lea.vmem %s241, %s253
      %vm360 = vcmask 254976
      %361 = vst.msk [vmem:[%s359] sm:$0x3] %vm360, %v357
      %s362 = scalar_select %p251, 6, 1
      %s363 = smul.u32 %s362, 2
      %s364 = scalar_lea.vmem %s227, %s363
      %v365 = vld [vmem:[%s364] sm:$0x3]
      %v366 = vsel %vm256, %v357, 0
      %368 = vmatprep.subr.mxu0 0.0
      %369 = vmatpush1.msra.mxu0 %v246
      %370 = vmatprep.subr.mxu0 0.0
      %371 = vmatpush1.msra.mxu0 %v247
      %372 = vmatprep.subr.mxu0 0.0
      %373 = vmatpush1.msra.mxu0 %v248
      %374 = vmatprep.subr.mxu0 0.0
      %375 = vmatpush1.msra.mxu0 %v249
      %376 = vmatprep.subr.mxu0 0.0
      %377 = vmatpush1.msra.mxu0 0.0
      %378 = vmatprep.subr.mxu0 0.0
      %379 = vmatpush1.msra.mxu0 0.0
      %380 = vmatprep.subr.mxu0 0.0
      %381 = vmatpush1.msra.mxu0 0.0
      %382 = vmatprep.subr.mxu0 0.0
      %383 = vmatpush1.msra.mxu0 0.0
      %384 = vmatprep.subr.mxu0 0.0
      %385 = vmatpush1.msra.mxu0 0.0
      %386 = vmatprep.subr.mxu0 0.0
      %387 = vmatpush1.msra.mxu0 0.0
      %388 = vmatprep.subr.mxu0 0.0
      %389 = vmatpush1.msra.mxu0 0.0
      %390 = vmatprep.subr.mxu0 0.0
      %391 = vmatpush1.msra.mxu0 0.0
      %392 = vmatprep.subr.mxu0 0.0
      %393 = vmatpush1.msra.mxu0 0.0
      %394 = vmatprep.subr.mxu0 0.0
      %395 = vmatpush1.msra.mxu0 0.0
      %396 = vmatprep.subr.mxu0 0.0
      %397 = vmatpush1.msra.mxu0 0.0
      %398 = vmatprep.subr.mxu0 0.0
      %399 = vmatpush1.msra.mxu0 0.0
      %400 = vmatprep.subr.mxu0 0.0
      %401 = vmatpush1.msra.mxu0 0.0
      %402 = vmatprep.subr.mxu0 0.0
      %403 = vmatpush1.msra.mxu0 0.0
      %404 = vmatprep.subr.mxu0 0.0
      %405 = vmatpush1.msra.mxu0 0.0
      %406 = vmatprep.subr.mxu0 0.0
      %407 = vmatpush1.msra.mxu0 0.0
      %408 = vmatprep.subr.mxu0 0.0
      %409 = vmatpush1.msra.mxu0 0.0
      %410 = vmatprep.subr.mxu0 0.0
      %411 = vmatpush1.msra.mxu0 0.0
      %412 = vmatprep.subr.mxu0 0.0
      %413 = vmatpush1.msra.mxu0 0.0
      %414 = vmatprep.subr.mxu0 0.0
      %415 = vmatpush1.msra.mxu0 0.0
      %416 = vmatprep.subr.mxu0 0.0
      %417 = vmatpush1.msra.mxu0 0.0
      %418 = vmatprep.subr.mxu0 0.0
      %419 = vmatpush1.msra.mxu0 0.0
      %420 = vmatprep.subr.mxu0 0.0
      %421 = vmatpush1.msra.mxu0 0.0
      %422 = vmatprep.subr.mxu0 0.0
      %423 = vmatpush1.msra.mxu0 0.0
      %424 = vmatprep.subr.mxu0 0.0
      %425 = vmatpush1.msra.mxu0 0.0
      %426 = vmatprep.subr.mxu0 0.0
      %427 = vmatpush1.msra.mxu0 0.0
      %428 = vmatprep.subr.mxu0 0.0
      %429 = vmatpush1.msra.mxu0 0.0
      %430 = vmatprep.subr.mxu0 0.0
      %431 = vmatpush1.msra.mxu0 0.0
      %432 = vmatprep.mubr.f32.mxu0 0.0
      %433 = vmatmul.mubr.f32.gmra.mrb[0].mxu0 %v366
      %v434 = vpop.f32.mrb[0].mxu0
      %v435 = vadd.f32 0.0, %v434
      %v436 = vpop.f32.mrb[0].mxu0
      %437 = vdwg.mxu0
      %v438 = vadd.f32 %v365, %v435
      %v439 = vxor.u32 %v438, 2147483648
      %v440 = vmul.f32 %v439, 1.442695
      %v441 = vpow.pop %v440
      %v442 = vadd.f32 %v441, 1.0
      %v443 = vrcp.pop %v442
      %v444 = vmul.f32 1.0, %v443
      %v445 = vtanh.pop %v438
      %v446 = vmul.f32 %v444, %v348
      %448 = vrot.lane.b32.xlu0 %v445, 64
      %v449 = vpop.permute.xlu0 %448
      %v451 = vmul.f32 %v444, %v449
      %453 = vrot.lane.b32.xlu0 %v451, 32
      %v454 = vpop.permute.xlu0 %453
      %v456 = vadd.f32 %v446, %v454
      %v457 = vtanh.pop %v456
      %459 = vrot.lane.b32.xlu0 %v457, 64
      %v460 = vpop.permute.xlu0 %459
      %v462 = vmul.f32 %v444, %v460
      %464 = vrot.lane.b32.xlu0 %v462, 32
      %v465 = vpop.permute.xlu0 %464
      %s467 = scalar_lea.vmem %s241, %s363
      %468 = vst.msk [vmem:[%s467] sm:$0x3] %vm360, %v465
      %s469 = scalar_select %p251, 5, 2
      %s470 = smul.u32 %s469, 2
      %s471 = scalar_lea.vmem %s227, %s470
      %v472 = vld [vmem:[%s471] sm:$0x3]
      %v473 = vsel %vm256, %v465, 0
      %475 = vmatprep.subr.mxu0 0.0
      %476 = vmatpush1.msra.mxu0 %v246
      %477 = vmatprep.subr.mxu0 0.0
      %478 = vmatpush1.msra.mxu0 %v247
      %479 = vmatprep.subr.mxu0 0.0
      %480 = vmatpush1.msra.mxu0 %v248
      %481 = vmatprep.subr.mxu0 0.0
      %482 = vmatpush1.msra.mxu0 %v249
      %483 = vmatprep.subr.mxu0 0.0
      %484 = vmatpush1.msra.mxu0 0.0
      %485 = vmatprep.subr.mxu0 0.0
      %486 = vmatpush1.msra.mxu0 0.0
      %487 = vmatprep.subr.mxu0 0.0
      %488 = vmatpush1.msra.mxu0 0.0
      %489 = vmatprep.subr.mxu0 0.0
      %490 = vmatpush1.msra.mxu0 0.0
      %491 = vmatprep.subr.mxu0 0.0
      %492 = vmatpush1.msra.mxu0 0.0
      %493 = vmatprep.subr.mxu0 0.0
      %494 = vmatpush1.msra.mxu0 0.0
      %495 = vmatprep.subr.mxu0 0.0
      %496 = vmatpush1.msra.mxu0 0.0
      %497 = vmatprep.subr.mxu0 0.0
      %498 = vmatpush1.msra.mxu0 0.0
      %499 = vmatprep.subr.mxu0 0.0
      %500 = vmatpush1.msra.mxu0 0.0
      %501 = vmatprep.subr.mxu0 0.0
      %502 = vmatpush1.msra.mxu0 0.0
      %503 = vmatprep.subr.mxu0 0.0
      %504 = vmatpush1.msra.mxu0 0.0
      %505 = vmatprep.subr.mxu0 0.0
      %506 = vmatpush1.msra.mxu0 0.0
      %507 = vmatprep.subr.mxu0 0.0
      %508 = vmatpush1.msra.mxu0 0.0
      %509 = vmatprep.subr.mxu0 0.0
      %510 = vmatpush1.msra.mxu0 0.0
      %511 = vmatprep.subr.mxu0 0.0
      %512 = vmatpush1.msra.mxu0 0.0
      %513 = vmatprep.subr.mxu0 0.0
      %514 = vmatpush1.msra.mxu0 0.0
      %515 = vmatprep.subr.mxu0 0.0
      %516 = vmatpush1.msra.mxu0 0.0
      %517 = vmatprep.subr.mxu0 0.0
      %518 = vmatpush1.msra.mxu0 0.0
      %519 = vmatprep.subr.mxu0 0.0
      %520 = vmatpush1.msra.mxu0 0.0
      %521 = vmatprep.subr.mxu0 0.0
      %522 = vmatpush1.msra.mxu0 0.0
      %523 = vmatprep.subr.mxu0 0.0
      %524 = vmatpush1.msra.mxu0 0.0
      %525 = vmatprep.subr.mxu0 0.0
      %526 = vmatpush1.msra.mxu0 0.0
      %527 = vmatprep.subr.mxu0 0.0
      %528 = vmatpush1.msra.mxu0 0.0
      %529 = vmatprep.subr.mxu0 0.0
      %530 = vmatpush1.msra.mxu0 0.0
      %531 = vmatprep.subr.mxu0 0.0
      %532 = vmatpush1.msra.mxu0 0.0
      %533 = vmatprep.subr.mxu0 0.0
      %534 = vmatpush1.msra.mxu0 0.0
      %535 = vmatprep.subr.mxu0 0.0
      %536 = vmatpush1.msra.mxu0 0.0
      %537 = vmatprep.subr.mxu0 0.0
      %538 = vmatpush1.msra.mxu0 0.0
      %539 = vmatprep.mubr.f32.mxu0 0.0
      %540 = vmatmul.mubr.f32.gmra.mrb[0].mxu0 %v473
      %v541 = vpop.f32.mrb[0].mxu0
      %v542 = vadd.f32 0.0, %v541
      %v543 = vpop.f32.mrb[0].mxu0
      %544 = vdwg.mxu0
      %v545 = vadd.f32 %v472, %v542
      %v546 = vxor.u32 %v545, 2147483648
      %v547 = vmul.f32 %v546, 1.442695
      %v548 = vpow.pop %v547
      %v549 = vadd.f32 %v548, 1.0
      %v550 = vrcp.pop %v549
      %v551 = vmul.f32 1.0, %v550
      %v552 = vtanh.pop %v545
      %v553 = vmul.f32 %v551, %v456
      %555 = vrot.lane.b32.xlu0 %v552, 64
      %v556 = vpop.permute.xlu0 %555
      %v558 = vmul.f32 %v551, %v556
      %560 = vrot.lane.b32.xlu0 %v558, 32
      %v561 = vpop.permute.xlu0 %560
      %v563 = vadd.f32 %v553, %v561
      %v564 = vtanh.pop %v563
      %566 = vrot.lane.b32.xlu0 %v564, 64
      %v567 = vpop.permute.xlu0 %566
      %v569 = vmul.f32 %v551, %v567
      %571 = vrot.lane.b32.xlu0 %v569, 32
      %v572 = vpop.permute.xlu0 %571
      %s574 = scalar_lea.vmem %s241, %s470
      %575 = vst.msk [vmem:[%s574] sm:$0x3] %vm360, %v572
      %s576 = scalar_select %p251, 4, 3
      %s577 = smul.u32 %s576, 2
      %s578 = scalar_lea.vmem %s227, %s577
      %v579 = vld [vmem:[%s578] sm:$0x3]
      %v580 = vsel %vm256, %v572, 0
      %582 = vmatprep.subr.mxu0 0.0
      %583 = vmatpush1.msra.mxu0 %v246
      %584 = vmatprep.subr.mxu0 0.0
      %585 = vmatpush1.msra.mxu0 %v247
      %586 = vmatprep.subr.mxu0 0.0
      %587 = vmatpush1.msra.mxu0 %v248
      %588 = vmatprep.subr.mxu0 0.0
      %589 = vmatpush1.msra.mxu0 %v249
      %590 = vmatprep.subr.mxu0 0.0
      %591 = vmatpush1.msra.mxu0 0.0
      %592 = vmatprep.subr.mxu0 0.0
      %593 = vmatpush1.msra.mxu0 0.0
      %594 = vmatprep.subr.mxu0 0.0
      %595 = vmatpush1.msra.mxu0 0.0
      %596 = vmatprep.subr.mxu0 0.0
      %597 = vmatpush1.msra.mxu0 0.0
      %598 = vmatprep.subr.mxu0 0.0
      %599 = vmatpush1.msra.mxu0 0.0
      %600 = vmatprep.subr.mxu0 0.0
      %601 = vmatpush1.msra.mxu0 0.0
      %602 = vmatprep.subr.mxu0 0.0
      %603 = vmatpush1.msra.mxu0 0.0
      %604 = vmatprep.subr.mxu0 0.0
      %605 = vmatpush1.msra.mxu0 0.0
      %606 = vmatprep.subr.mxu0 0.0
      %607 = vmatpush1.msra.mxu0 0.0
      %608 = vmatprep.subr.mxu0 0.0
      %609 = vmatpush1.msra.mxu0 0.0
      %610 = vmatprep.subr.mxu0 0.0
      %611 = vmatpush1.msra.mxu0 0.0
      %612 = vmatprep.subr.mxu0 0.0
      %613 = vmatpush1.msra.mxu0 0.0
      %614 = vmatprep.subr.mxu0 0.0
      %615 = vmatpush1.msra.mxu0 0.0
      %616 = vmatprep.subr.mxu0 0.0
      %617 = vmatpush1.msra.mxu0 0.0
      %618 = vmatprep.subr.mxu0 0.0
      %619 = vmatpush1.msra.mxu0 0.0
      %620 = vmatprep.subr.mxu0 0.0
      %621 = vmatpush1.msra.mxu0 0.0
      %622 = vmatprep.subr.mxu0 0.0
      %623 = vmatpush1.msra.mxu0 0.0
      %624 = vmatprep.subr.mxu0 0.0
      %625 = vmatpush1.msra.mxu0 0.0
      %626 = vmatprep.subr.mxu0 0.0
      %627 = vmatpush1.msra.mxu0 0.0
      %628 = vmatprep.subr.mxu0 0.0
      %629 = vmatpush1.msra.mxu0 0.0
      %630 = vmatprep.subr.mxu0 0.0
      %631 = vmatpush1.msra.mxu0 0.0
      %632 = vmatprep.subr.mxu0 0.0
      %633 = vmatpush1.msra.mxu0 0.0
      %634 = vmatprep.subr.mxu0 0.0
      %635 = vmatpush1.msra.mxu0 0.0
      %636 = vmatprep.subr.mxu0 0.0
      %637 = vmatpush1.msra.mxu0 0.0
      %638 = vmatprep.subr.mxu0 0.0
      %639 = vmatpush1.msra.mxu0 0.0
      %640 = vmatprep.subr.mxu0 0.0
      %641 = vmatpush1.msra.mxu0 0.0
      %642 = vmatprep.subr.mxu0 0.0
      %643 = vmatpush1.msra.mxu0 0.0
      %644 = vmatprep.subr.mxu0 0.0
      %645 = vmatpush1.msra.mxu0 0.0
      %646 = vmatprep.mubr.f32.mxu0 0.0
      %647 = vmatmul.mubr.f32.gmra.mrb[0].mxu0 %v580
      %v648 = vpop.f32.mrb[0].mxu0
      %v649 = vadd.f32 0.0, %v648
      %v650 = vpop.f32.mrb[0].mxu0
      %651 = vdwg.mxu0
      %v652 = vadd.f32 %v579, %v649
      %v653 = vxor.u32 %v652, 2147483648
      %v654 = vmul.f32 %v653, 1.442695
      %v655 = vpow.pop %v654
      %v656 = vadd.f32 %v655, 1.0
      %v657 = vrcp.pop %v656
      %v658 = vmul.f32 1.0, %v657
      %v659 = vtanh.pop %v652
      %v660 = vmul.f32 %v658, %v563
      %662 = vrot.lane.b32.xlu0 %v659, 64
      %v663 = vpop.permute.xlu0 %662
      %v665 = vmul.f32 %v658, %v663
      %667 = vrot.lane.b32.xlu0 %v665, 32
      %v668 = vpop.permute.xlu0 %667
      %v670 = vadd.f32 %v660, %v668
      %v671 = vtanh.pop %v670
      %673 = vrot.lane.b32.xlu0 %v671, 64
      %v674 = vpop.permute.xlu0 %673
      %v676 = vmul.f32 %v658, %v674
      %678 = vrot.lane.b32.xlu0 %v676, 32
      %v679 = vpop.permute.xlu0 %678
      %s681 = scalar_lea.vmem %s241, %s577
      %682 = vst.msk [vmem:[%s681] sm:$0x3] %vm360, %v679
      %s683 = scalar_select %p251, 3, 4
      %s684 = smul.u32 %s683, 2
      %s685 = scalar_lea.vmem %s227, %s684
      %v686 = vld [vmem:[%s685] sm:$0x3]
      %v687 = vsel %vm256, %v679, 0
      %689 = vmatprep.subr.mxu0 0.0
      %690 = vmatpush1.msra.mxu0 %v246
      %691 = vmatprep.subr.mxu0 0.0
      %692 = vmatpush1.msra.mxu0 %v247
      %693 = vmatprep.subr.mxu0 0.0
      %694 = vmatpush1.msra.mxu0 %v248
      %695 = vmatprep.subr.mxu0 0.0
      %696 = vmatpush1.msra.mxu0 %v249
      %697 = vmatprep.subr.mxu0 0.0
      %698 = vmatpush1.msra.mxu0 0.0
      %699 = vmatprep.subr.mxu0 0.0
      %700 = vmatpush1.msra.mxu0 0.0
      %701 = vmatprep.subr.mxu0 0.0
      %702 = vmatpush1.msra.mxu0 0.0
      %703 = vmatprep.subr.mxu0 0.0
      %704 = vmatpush1.msra.mxu0 0.0
      %705 = vmatprep.subr.mxu0 0.0
      %706 = vmatpush1.msra.mxu0 0.0
      %707 = vmatprep.subr.mxu0 0.0
      %708 = vmatpush1.msra.mxu0 0.0
      %709 = vmatprep.subr.mxu0 0.0
      %710 = vmatpush1.msra.mxu0 0.0
      %711 = vmatprep.subr.mxu0 0.0
      %712 = vmatpush1.msra.mxu0 0.0
      %713 = vmatprep.subr.mxu0 0.0
      %714 = vmatpush1.msra.mxu0 0.0
      %715 = vmatprep.subr.mxu0 0.0
      %716 = vmatpush1.msra.mxu0 0.0
      %717 = vmatprep.subr.mxu0 0.0
      %718 = vmatpush1.msra.mxu0 0.0
      %719 = vmatprep.subr.mxu0 0.0
      %720 = vmatpush1.msra.mxu0 0.0
      %721 = vmatprep.subr.mxu0 0.0
      %722 = vmatpush1.msra.mxu0 0.0
      %723 = vmatprep.subr.mxu0 0.0
      %724 = vmatpush1.msra.mxu0 0.0
      %725 = vmatprep.subr.mxu0 0.0
      %726 = vmatpush1.msra.mxu0 0.0
      %727 = vmatprep.subr.mxu0 0.0
      %728 = vmatpush1.msra.mxu0 0.0
      %729 = vmatprep.subr.mxu0 0.0
      %730 = vmatpush1.msra.mxu0 0.0
      %731 = vmatprep.subr.mxu0 0.0
      %732 = vmatpush1.msra.mxu0 0.0
      %733 = vmatprep.subr.mxu0 0.0
      %734 = vmatpush1.msra.mxu0 0.0
      %735 = vmatprep.subr.mxu0 0.0
      %736 = vmatpush1.msra.mxu0 0.0
      %737 = vmatprep.subr.mxu0 0.0
      %738 = vmatpush1.msra.mxu0 0.0
      %739 = vmatprep.subr.mxu0 0.0
      %740 = vmatpush1.msra.mxu0 0.0
      %741 = vmatprep.subr.mxu0 0.0
      %742 = vmatpush1.msra.mxu0 0.0
      %743 = vmatprep.subr.mxu0 0.0
      %744 = vmatpush1.msra.mxu0 0.0
      %745 = vmatprep.subr.mxu0 0.0
      %746 = vmatpush1.msra.mxu0 0.0
      %747 = vmatprep.subr.mxu0 0.0
      %748 = vmatpush1.msra.mxu0 0.0
      %749 = vmatprep.subr.mxu0 0.0
      %750 = vmatpush1.msra.mxu0 0.0
      %751 = vmatprep.subr.mxu0 0.0
      %752 = vmatpush1.msra.mxu0 0.0
      %753 = vmatprep.mubr.f32.mxu0 0.0
      %754 = vmatmul.mubr.f32.gmra.mrb[0].mxu0 %v687
      %v755 = vpop.f32.mrb[0].mxu0
      %v756 = vadd.f32 0.0, %v755
      %v757 = vpop.f32.mrb[0].mxu0
      %758 = vdwg.mxu0
      %v759 = vadd.f32 %v686, %v756
      %v760 = vxor.u32 %v759, 2147483648
      %v761 = vmul.f32 %v760, 1.442695
      %v762 = vpow.pop %v761
      %v763 = vadd.f32 %v762, 1.0
      %v764 = vrcp.pop %v763
      %v765 = vmul.f32 1.0, %v764
      %v766 = vtanh.pop %v759
      %v767 = vmul.f32 %v765, %v670
      %769 = vrot.lane.b32.xlu0 %v766, 64
      %v770 = vpop.permute.xlu0 %769
      %v772 = vmul.f32 %v765, %v770
      %774 = vrot.lane.b32.xlu0 %v772, 32
      %v775 = vpop.permute.xlu0 %774
      %v777 = vadd.f32 %v767, %v775
      %v778 = vtanh.pop %v777
      %780 = vrot.lane.b32.xlu0 %v778, 64
      %v781 = vpop.permute.xlu0 %780
      %v783 = vmul.f32 %v765, %v781
      %785 = vrot.lane.b32.xlu0 %v783, 32
      %v786 = vpop.permute.xlu0 %785
      %s788 = scalar_lea.vmem %s241, %s684
      %789 = vst.msk [vmem:[%s788] sm:$0x3] %vm360, %v786
      %s790 = scalar_select %p251, 2, 5
      %s791 = smul.u32 %s790, 2
      %s792 = scalar_lea.vmem %s227, %s791
      %v793 = vld [vmem:[%s792] sm:$0x3]
      %v794 = vsel %vm256, %v786, 0
      %796 = vmatprep.subr.mxu0 0.0
      %797 = vmatpush1.msra.mxu0 %v246
      %798 = vmatprep.subr.mxu0 0.0
      %799 = vmatpush1.msra.mxu0 %v247
      %800 = vmatprep.subr.mxu0 0.0
      %801 = vmatpush1.msra.mxu0 %v248
      %802 = vmatprep.subr.mxu0 0.0
      %803 = vmatpush1.msra.mxu0 %v249
      %804 = vmatprep.subr.mxu0 0.0
      %805 = vmatpush1.msra.mxu0 0.0
      %806 = vmatprep.subr.mxu0 0.0
      %807 = vmatpush1.msra.mxu0 0.0
      %808 = vmatprep.subr.mxu0 0.0
      %809 = vmatpush1.msra.mxu0 0.0
      %810 = vmatprep.subr.mxu0 0.0
      %811 = vmatpush1.msra.mxu0 0.0
      %812 = vmatprep.subr.mxu0 0.0
      %813 = vmatpush1.msra.mxu0 0.0
      %814 = vmatprep.subr.mxu0 0.0
      %815 = vmatpush1.msra.mxu0 0.0
      %816 = vmatprep.subr.mxu0 0.0
      %817 = vmatpush1.msra.mxu0 0.0
      %818 = vmatprep.subr.mxu0 0.0
      %819 = vmatpush1.msra.mxu0 0.0
      %820 = vmatprep.subr.mxu0 0.0
      %821 = vmatpush1.msra.mxu0 0.0
      %822 = vmatprep.subr.mxu0 0.0
      %823 = vmatpush1.msra.mxu0 0.0
      %824 = vmatprep.subr.mxu0 0.0
      %825 = vmatpush1.msra.mxu0 0.0
      %826 = vmatprep.subr.mxu0 0.0
      %827 = vmatpush1.msra.mxu0 0.0
      %828 = vmatprep.subr.mxu0 0.0
      %829 = vmatpush1.msra.mxu0 0.0
      %830 = vmatprep.subr.mxu0 0.0
      %831 = vmatpush1.msra.mxu0 0.0
      %832 = vmatprep.subr.mxu0 0.0
      %833 = vmatpush1.msra.mxu0 0.0
      %834 = vmatprep.subr.mxu0 0.0
      %835 = vmatpush1.msra.mxu0 0.0
      %836 = vmatprep.subr.mxu0 0.0
      %837 = vmatpush1.msra.mxu0 0.0
      %838 = vmatprep.subr.mxu0 0.0
      %839 = vmatpush1.msra.mxu0 0.0
      %840 = vmatprep.subr.mxu0 0.0
      %841 = vmatpush1.msra.mxu0 0.0
      %842 = vmatprep.subr.mxu0 0.0
      %843 = vmatpush1.msra.mxu0 0.0
      %844 = vmatprep.subr.mxu0 0.0
      %845 = vmatpush1.msra.mxu0 0.0
      %846 = vmatprep.subr.mxu0 0.0
      %847 = vmatpush1.msra.mxu0 0.0
      %848 = vmatprep.subr.mxu0 0.0
      %849 = vmatpush1.msra.mxu0 0.0
      %850 = vmatprep.subr.mxu0 0.0
      %851 = vmatpush1.msra.mxu0 0.0
      %852 = vmatprep.subr.mxu0 0.0
      %853 = vmatpush1.msra.mxu0 0.0
      %854 = vmatprep.subr.mxu0 0.0
      %855 = vmatpush1.msra.mxu0 0.0
      %856 = vmatprep.subr.mxu0 0.0
      %857 = vmatpush1.msra.mxu0 0.0
      %858 = vmatprep.subr.mxu0 0.0
      %859 = vmatpush1.msra.mxu0 0.0
      %860 = vmatprep.mubr.f32.mxu0 0.0
      %861 = vmatmul.mubr.f32.gmra.mrb[0].mxu0 %v794
      %v862 = vpop.f32.mrb[0].mxu0
      %v863 = vadd.f32 0.0, %v862
      %v864 = vpop.f32.mrb[0].mxu0
      %865 = vdwg.mxu0
      %v866 = vadd.f32 %v793, %v863
      %v867 = vxor.u32 %v866, 2147483648
      %v868 = vmul.f32 %v867, 1.442695
      %v869 = vpow.pop %v868
      %v870 = vadd.f32 %v869, 1.0
      %v871 = vrcp.pop %v870
      %v872 = vmul.f32 1.0, %v871
      %v873 = vtanh.pop %v866
      %v874 = vmul.f32 %v872, %v777
      %876 = vrot.lane.b32.xlu0 %v873, 64
      %v877 = vpop.permute.xlu0 %876
      %v879 = vmul.f32 %v872, %v877
      %881 = vrot.lane.b32.xlu0 %v879, 32
      %v882 = vpop.permute.xlu0 %881
      %v884 = vadd.f32 %v874, %v882
      %v885 = vtanh.pop %v884
      %887 = vrot.lane.b32.xlu0 %v885, 64
      %v888 = vpop.permute.xlu0 %887
      %v890 = vmul.f32 %v872, %v888
      %892 = vrot.lane.b32.xlu0 %v890, 32
      %v893 = vpop.permute.xlu0 %892
      %s895 = scalar_lea.vmem %s241, %s791
      %896 = vst.msk [vmem:[%s895] sm:$0x3] %vm360, %v893
      %s897 = scalar_select %p251, 1, 6
      %s898 = smul.u32 %s897, 2
      %s899 = scalar_lea.vmem %s227, %s898
      %v900 = vld [vmem:[%s899] sm:$0x3]
      %v901 = vsel %vm256, %v893, 0
      %903 = vmatprep.subr.mxu0 0.0
      %904 = vmatpush1.msra.mxu0 %v246
      %905 = vmatprep.subr.mxu0 0.0
      %906 = vmatpush1.msra.mxu0 %v247
      %907 = vmatprep.subr.mxu0 0.0
      %908 = vmatpush1.msra.mxu0 %v248
      %909 = vmatprep.subr.mxu0 0.0
      %910 = vmatpush1.msra.mxu0 %v249
      %911 = vmatprep.subr.mxu0 0.0
      %912 = vmatpush1.msra.mxu0 0.0
      %913 = vmatprep.subr.mxu0 0.0
      %914 = vmatpush1.msra.mxu0 0.0
      %915 = vmatprep.subr.mxu0 0.0
      %916 = vmatpush1.msra.mxu0 0.0
      %917 = vmatprep.subr.mxu0 0.0
      %918 = vmatpush1.msra.mxu0 0.0
      %919 = vmatprep.subr.mxu0 0.0
      %920 = vmatpush1.msra.mxu0 0.0
      %921 = vmatprep.subr.mxu0 0.0
      %922 = vmatpush1.msra.mxu0 0.0
      %923 = vmatprep.subr.mxu0 0.0
      %924 = vmatpush1.msra.mxu0 0.0
      %925 = vmatprep.subr.mxu0 0.0
      %926 = vmatpush1.msra.mxu0 0.0
      %927 = vmatprep.subr.mxu0 0.0
      %928 = vmatpush1.msra.mxu0 0.0
      %929 = vmatprep.subr.mxu0 0.0
      %930 = vmatpush1.msra.mxu0 0.0
      %931 = vmatprep.subr.mxu0 0.0
      %932 = vmatpush1.msra.mxu0 0.0
      %933 = vmatprep.subr.mxu0 0.0
      %934 = vmatpush1.msra.mxu0 0.0
      %935 = vmatprep.subr.mxu0 0.0
      %936 = vmatpush1.msra.mxu0 0.0
      %937 = vmatprep.subr.mxu0 0.0
      %938 = vmatpush1.msra.mxu0 0.0
      %939 = vmatprep.subr.mxu0 0.0
      %940 = vmatpush1.msra.mxu0 0.0
      %941 = vmatprep.subr.mxu0 0.0
      %942 = vmatpush1.msra.mxu0 0.0
      %943 = vmatprep.subr.mxu0 0.0
      %944 = vmatpush1.msra.mxu0 0.0
      %945 = vmatprep.subr.mxu0 0.0
      %946 = vmatpush1.msra.mxu0 0.0
      %947 = vmatprep.subr.mxu0 0.0
      %948 = vmatpush1.msra.mxu0 0.0
      %949 = vmatprep.subr.mxu0 0.0
      %950 = vmatpush1.msra.mxu0 0.0
      %951 = vmatprep.subr.mxu0 0.0
      %952 = vmatpush1.msra.mxu0 0.0
      %953 = vmatprep.subr.mxu0 0.0
      %954 = vmatpush1.msra.mxu0 0.0
      %955 = vmatprep.subr.mxu0 0.0
      %956 = vmatpush1.msra.mxu0 0.0
      %957 = vmatprep.subr.mxu0 0.0
      %958 = vmatpush1.msra.mxu0 0.0
      %959 = vmatprep.subr.mxu0 0.0
      %960 = vmatpush1.msra.mxu0 0.0
      %961 = vmatprep.subr.mxu0 0.0
      %962 = vmatpush1.msra.mxu0 0.0
      %963 = vmatprep.subr.mxu0 0.0
      %964 = vmatpush1.msra.mxu0 0.0
      %965 = vmatprep.subr.mxu0 0.0
      %966 = vmatpush1.msra.mxu0 0.0
      %967 = vmatprep.mubr.f32.mxu0 0.0
      %968 = vmatmul.mubr.f32.gmra.mrb[0].mxu0 %v901
      %v969 = vpop.f32.mrb[0].mxu0
      %v970 = vadd.f32 0.0, %v969
      %v971 = vpop.f32.mrb[0].mxu0
      %972 = vdwg.mxu0
      %v973 = vadd.f32 %v900, %v970
      %v974 = vxor.u32 %v973, 2147483648
      %v975 = vmul.f32 %v974, 1.442695
      %v976 = vpow.pop %v975
      %v977 = vadd.f32 %v976, 1.0
      %v978 = vrcp.pop %v977
      %v979 = vmul.f32 1.0, %v978
      %v980 = vtanh.pop %v973
      %v981 = vmul.f32 %v979, %v884
      %983 = vrot.lane.b32.xlu0 %v980, 64
      %v984 = vpop.permute.xlu0 %983
      %v986 = vmul.f32 %v979, %v984
      %988 = vrot.lane.b32.xlu0 %v986, 32
      %v989 = vpop.permute.xlu0 %988
      %v991 = vadd.f32 %v981, %v989
      %v992 = vtanh.pop %v991
      %994 = vrot.lane.b32.xlu0 %v992, 64
      %v995 = vpop.permute.xlu0 %994
      %v997 = vmul.f32 %v979, %v995
      %999 = vrot.lane.b32.xlu0 %v997, 32
      %v1000 = vpop.permute.xlu0 %999
      %s1002 = scalar_lea.vmem %s241, %s898
      %1003 = vst.msk [vmem:[%s1002] sm:$0x3] %vm360, %v1000
      %s1004 = scalar_select %p251, 0, 7
      %s1005 = smul.u32 %s1004, 2
      %s1006 = scalar_lea.vmem %s227, %s1005
      %v1007 = vld [vmem:[%s1006] sm:$0x3]
      %v1008 = vsel %vm256, %v1000, 0
      %1010 = vmatprep.subr.mxu0 0.0
      %1011 = vmatpush1.msra.mxu0 %v246
      %1012 = vmatprep.subr.mxu0 0.0
      %1013 = vmatpush1.msra.mxu0 %v247
      %1014 = vmatprep.subr.mxu0 0.0
      %1015 = vmatpush1.msra.mxu0 %v248
      %1016 = vmatprep.subr.mxu0 0.0
      %1017 = vmatpush1.msra.mxu0 %v249
      %1018 = vmatprep.subr.mxu0 0.0
      %1019 = vmatpush1.msra.mxu0 0.0
      %1020 = vmatprep.subr.mxu0 0.0
      %1021 = vmatpush1.msra.mxu0 0.0
      %1022 = vmatprep.subr.mxu0 0.0
      %1023 = vmatpush1.msra.mxu0 0.0
      %1024 = vmatprep.subr.mxu0 0.0
      %1025 = vmatpush1.msra.mxu0 0.0
      %1026 = vmatprep.subr.mxu0 0.0
      %1027 = vmatpush1.msra.mxu0 0.0
      %1028 = vmatprep.subr.mxu0 0.0
      %1029 = vmatpush1.msra.mxu0 0.0
      %1030 = vmatprep.subr.mxu0 0.0
      %1031 = vmatpush1.msra.mxu0 0.0
      %1032 = vmatprep.subr.mxu0 0.0
      %1033 = vmatpush1.msra.mxu0 0.0
      %1034 = vmatprep.subr.mxu0 0.0
      %1035 = vmatpush1.msra.mxu0 0.0
      %1036 = vmatprep.subr.mxu0 0.0
      %1037 = vmatpush1.msra.mxu0 0.0
      %1038 = vmatprep.subr.mxu0 0.0
      %1039 = vmatpush1.msra.mxu0 0.0
      %1040 = vmatprep.subr.mxu0 0.0
      %1041 = vmatpush1.msra.mxu0 0.0
      %1042 = vmatprep.subr.mxu0 0.0
      %1043 = vmatpush1.msra.mxu0 0.0
      %1044 = vmatprep.subr.mxu0 0.0
      %1045 = vmatpush1.msra.mxu0 0.0
      %1046 = vmatprep.subr.mxu0 0.0
      %1047 = vmatpush1.msra.mxu0 0.0
      %1048 = vmatprep.subr.mxu0 0.0
      %1049 = vmatpush1.msra.mxu0 0.0
      %1050 = vmatprep.subr.mxu0 0.0
      %1051 = vmatpush1.msra.mxu0 0.0
      %1052 = vmatprep.subr.mxu0 0.0
      %1053 = vmatpush1.msra.mxu0 0.0
      %1054 = vmatprep.subr.mxu0 0.0
      %1055 = vmatpush1.msra.mxu0 0.0
      %1056 = vmatprep.subr.mxu0 0.0
      %1057 = vmatpush1.msra.mxu0 0.0
      %1058 = vmatprep.subr.mxu0 0.0
      %1059 = vmatpush1.msra.mxu0 0.0
      %1060 = vmatprep.subr.mxu0 0.0
      %1061 = vmatpush1.msra.mxu0 0.0
      %1062 = vmatprep.subr.mxu0 0.0
      %1063 = vmatpush1.msra.mxu0 0.0
      %1064 = vmatprep.subr.mxu0 0.0
      %1065 = vmatpush1.msra.mxu0 0.0
      %1066 = vmatprep.subr.mxu0 0.0
      %1067 = vmatpush1.msra.mxu0 0.0
      %1068 = vmatprep.subr.mxu0 0.0
      %1069 = vmatpush1.msra.mxu0 0.0
      %1070 = vmatprep.subr.mxu0 0.0
      %1071 = vmatpush1.msra.mxu0 0.0
      %1072 = vmatprep.subr.mxu0 0.0
      %1073 = vmatpush1.msra.mxu0 0.0
      %1074 = vmatprep.mubr.f32.mxu0 0.0
      %1075 = vmatmul.mubr.f32.gmra.mrb[0].mxu0 %v1008
      %v1076 = vpop.f32.mrb[0].mxu0
      %v1077 = vadd.f32 0.0, %v1076
      %v1078 = vpop.f32.mrb[0].mxu0
      %1079 = vdwg.mxu0
      %v1080 = vadd.f32 %v1007, %v1077
      %v1081 = vxor.u32 %v1080, 2147483648
      %v1082 = vmul.f32 %v1081, 1.442695
      %v1083 = vpow.pop %v1082
      %v1084 = vadd.f32 %v1083, 1.0
      %v1085 = vrcp.pop %v1084
      %v1086 = vmul.f32 1.0, %v1085
      %v1087 = vtanh.pop %v1080
      %v1088 = vmul.f32 %v1086, %v991
      %1090 = vrot.lane.b32.xlu0 %v1087, 64
      %v1091 = vpop.permute.xlu0 %1090
      %v1093 = vmul.f32 %v1086, %v1091
      %1095 = vrot.lane.b32.xlu0 %v1093, 32
      %v1096 = vpop.permute.xlu0 %1095
      %v1098 = vadd.f32 %v1088, %v1096
      %v1099 = vtanh.pop %v1098
      %1101 = vrot.lane.b32.xlu0 %v1099, 64
      %v1102 = vpop.permute.xlu0 %1101
      %v1104 = vmul.f32 %v1086, %v1102
      %1106 = vrot.lane.b32.xlu0 %v1104, 32
      %v1107 = vpop.permute.xlu0 %1106
      %s1109 = scalar_lea.vmem %s241, %s1005
      %1110 = vst.msk [vmem:[%s1109] sm:$0x3] %vm360, %v1107
      %1111 = vst.msk [vmem:[%s245] sm:$0x3] %vm360, %v1107
      %p1112 = scmp.lt.s32.totalorder %s16, 1
      %s1113 = scalar_select %p1112, %s16, 1
      %s1114 = smul.addr %s1113, 8
      %s1115 = smul.addr %s1114, 2
      %s1116 = scalar_lea.vmem %s3, %s1115
      %p1117 = scmp.lt.s32.totalorder %s16, 1
      %s1118 = scalar_select %p1117, %s16, 1
      %s1119 = smul.addr %s1118, 2
      %s1120 = scalar_lea.vmem %s4, %s1119
      // Predicated region
      $region33: #{sden_forward.21} parent=31 // pred_check
        %p1121 = pneg %p112
      $region34: #{sden_forward.21} parent=31 // pred_check_branch
        %1123 = sbr.rel (%p1121) target = $region36
      $region35: #{sden_forward.21} parent=31 // pred_region
        _
      $region36: #{sden_forward.21} parent=31 // pred_fallthru
        _
      // Predicated region
      $region37: #{sden_forward.21} parent=31 // pred_check
        %p1124 = pneg %p138
      $region38: #{sden_forward.21} parent=31 // pred_check_branch
        %1126 = sbr.rel (%p1124) target = $region40
      $region39: #{sden_forward.21} parent=31 // pred_region
        _
      $region40: #{sden_forward.21} parent=31 // pred_fallthru
        _
    $region32: #{sden_forward.21} parent=5 // pred_fallthru
      _
    %p1127 = scmp.le.s32.totalorder 2, %s11
    // Predicated region
    $region41: #{sden_forward.21} parent=5 // pred_check
      %p1128 = pneg %p1127
    $region42: #{sden_forward.21} parent=5 // pred_check_branch
      %1130 = sbr.rel (%p1128) target = $region44
    $region43: #{sden_forward.21} parent=5 // pred_region
      %s1131 = ssub.s32 %s11, 2
      // Predicated region
      $region45: #{sden_forward.21} parent=43 // pred_check
        %p1132 = pneg %p118
      $region46: #{sden_forward.21} parent=43 // pred_check_branch
        %1134 = sbr.rel (%p1132) target = $region48
      $region47: #{sden_forward.21} parent=43 // pred_region
        %p1135 = scmp.lt.s32.totalorder %s17, 1
        %s1136 = scalar_select %p1135, %s17, 1
        %s1137 = smul.addr %s1136, 8
        %s1138 = smul.addr %s1137, 2
        %s1139 = scalar_lea.vmem %s3, %s1138
      $region48: #{sden_forward.21} parent=43 // pred_fallthru
        _
      // Predicated region
      $region49: #{sden_forward.21} parent=43 // pred_check
        %p1140 = pneg %p144
      $region50: #{sden_forward.21} parent=43 // pred_check_branch
        %1142 = sbr.rel (%p1140) target = $region52
      $region51: #{sden_forward.21} parent=43 // pred_region
        %p1143 = scmp.lt.s32.totalorder %s17, 1
        %s1144 = scalar_select %p1143, %s17, 1
        %s1145 = smul.addr %s1144, 2
        %s1146 = scalar_lea.vmem %s4, %s1145
      $region52: #{sden_forward.21} parent=43 // pred_fallthru
        _
    $region44: #{sden_forward.21} parent=5 // pred_fallthru
      _
  $region6: #{sden_forward.21} parent=0 // loop_footer
    %s15 = sadd.s32 1, %s11
  $region7: #{sden_forward.21} parent=0 // loop_footer_branch
    %10 = sbr.rel target = $region3
  $region8: #{sden_forward.21} parent=0 // loop_exit
    _

// kernel: sden_forward.23
$region0: #{sden_forward.23}
  #allocation0 [shape = 'u32[]', space=smem, size = 0x4, offset = 0x4, fixed_abs, tag = 'smem constant byte address 0x4 - core index']
  #allocation1 [shape = 'u32[144,128]{1,0:T(1,128)}', space=vmem, size = 0x12000, scoped, tag = 'internal scratch']
  %s0 = inlined_call_operand.vmem [shape: f32[16,64], index: 0, kind: input, shape index: {}]
  %s1 = inlined_call_operand.vmem [shape: bf16[64,10], index: 1, kind: input, shape index: {}]
  %s2 = inlined_call_operand.vmem [shape: f32[1,10], index: 2, kind: input, shape index: {}]
  %s3 = inlined_call_operand.hbm [shape: f32[16,10], index: 3, kind: output, shape index: {}]
  %s4 = sld [smem:[#allocation0]]
  $region22: #{sden_forward.23} parent=0
    _
  %s6 = ssub.s32 1, %s4
  %s7 = scalar_select 0, %s6, %s4
  $region1: #{sden_forward.23} parent=0
    #allocation2 [shape = 'u8[8192]{0}', space=vmem, size = 0x2000, scoped, tag = 'output window, operand 0, single buffered']
    #allocation3 [shape = 's32[1]{0}', space=sflag, size = 0x4, scoped, tag = 'scoped memory for sden_forward.23']
    %8 = vsyncpa [#allocation3], 0
    // Predicated region
    $region2: #{sden_forward.23} parent=1 // pred_check
      _
    $region3: #{sden_forward.23} parent=1 // pred_check_branch
      %10 = sbr.rel (0) target = $region5
    $region4: #{sden_forward.23} parent=1 // pred_region
      _
    $region5: #{sden_forward.23} parent=1 // pred_fallthru
      _
    // Predicated region
    $region6: #{sden_forward.23} parent=1 // pred_check
      _
    $region7: #{sden_forward.23} parent=1 // pred_check_branch
      %12 = sbr.rel (0) target = $region9
    $region8: #{sden_forward.23} parent=1 // pred_region
      _
    $region9: #{sden_forward.23} parent=1 // pred_fallthru
      _
    // Predicated region
    $region10: #{sden_forward.23} parent=1 // pred_check
      _
    $region11: #{sden_forward.23} parent=1 // pred_check_branch
      %14 = sbr.rel (0) target = $region13
    $region12: #{sden_forward.23} parent=1 // pred_region
      _
    $region13: #{sden_forward.23} parent=1 // pred_fallthru
      _
    %v16 = vld [vmem:[%s0] sm:$0xff]
    %v17 = vld [vmem:[%s0 + $0x8] sm:$0xff]
    %v18 = vpack.c.bf16 %v17, %v16
    %v19 = vld [vmem:[%s1] sm:$0xf]
    %v20 = vld [vmem:[%s1 + $0x4] sm:$0xf]
    %v21 = vld [vmem:[%s1 + $0x8] sm:$0xf]
    %v22 = vld [vmem:[%s1 + $0xc] sm:$0xf]
    %v23 = vld [vmem:[%s1 + $0x10] sm:$0xf]
    %v24 = vld [vmem:[%s1 + $0x14] sm:$0xf]
    %v25 = vld [vmem:[%s1 + $0x18] sm:$0xf]
    %v26 = vld [vmem:[%s1 + $0x1c] sm:$0xf]
    %v27 = vld [vmem:[%s2] sm:$0x1]
    %v29 = vlaneseq
    %v30 = vshrl.u32 %v29, 7
    %v31 = vsub.s32 0, %v30
    %v32 = vrot.slane %v27, %v31
    %v42 = vunpack.c.l.b16 %v19
    %v43 = vunpack.c.l.b16 %v20
    %v44 = vunpack.c.l.b16 %v21
    %v45 = vunpack.c.l.b16 %v22
    %v46 = vunpack.c.l.b16 %v23
    %v47 = vunpack.c.l.b16 %v24
    %v48 = vunpack.c.l.b16 %v25
    %v49 = vunpack.c.l.b16 %v26
    %v50 = vpack.c.b16 %v43, %v42
    %v51 = vpack.c.b16 %v45, %v44
    %v52 = vpack.c.b16 %v47, %v46
    %v53 = vpack.c.b16 %v49, %v48
    %vm58 = vcmask 523264
    %v60 = vsel %vm58, %v18, 0
    %62 = vmatprep.subr.bf16.mxu0 0
    %63 = vmatpush1.bf16.msra.mxu0 %v50
    %64 = vmatprep.subr.bf16.mxu0 0
    %65 = vmatpush1.bf16.msra.mxu0 %v51
    %66 = vmatprep.subr.bf16.mxu0 0
    %67 = vmatpush1.bf16.msra.mxu0 %v52
    %68 = vmatprep.subr.bf16.mxu0 0
    %69 = vmatpush1.bf16.msra.mxu0 %v53
    %70 = vmatprep.subr.bf16.mxu0 0
    %71 = vmatpush1.bf16.msra.mxu0 0
    %72 = vmatprep.subr.bf16.mxu0 0
    %73 = vmatpush1.bf16.msra.mxu0 0
    %74 = vmatprep.subr.bf16.mxu0 0
    %75 = vmatpush1.bf16.msra.mxu0 0
    %76 = vmatprep.subr.bf16.mxu0 0
    %77 = vmatpush1.bf16.msra.mxu0 0
    %78 = vmatprep.subr.bf16.mxu0 0
    %79 = vmatpush1.bf16.msra.mxu0 0
    %80 = vmatprep.subr.bf16.mxu0 0
    %81 = vmatpush1.bf16.msra.mxu0 0
    %82 = vmatprep.subr.bf16.mxu0 0
    %83 = vmatpush1.bf16.msra.mxu0 0
    %84 = vmatprep.subr.bf16.mxu0 0
    %85 = vmatpush1.bf16.msra.mxu0 0
    %86 = vmatprep.subr.bf16.mxu0 0
    %87 = vmatpush1.bf16.msra.mxu0 0
    %88 = vmatprep.subr.bf16.mxu0 0
    %89 = vmatpush1.bf16.msra.mxu0 0
    %90 = vmatprep.subr.bf16.mxu0 0
    %91 = vmatpush1.bf16.msra.mxu0 0
    %92 = vmatprep.subr.bf16.mxu0 0
    %93 = vmatpush1.bf16.msra.mxu0 0
    %94 = vmatprep.mubr.bf16.mxu0 0
    %95 = vmatmul.mubr.bf16.gmra.mrb[0].mxu0 %v60
    %v96 = vpop.f32.mrb[0].mxu0
    %v97 = vadd.f32 %v32, %v96
    %v98 = vpop.f32.mrb[0].mxu0
    %v99 = vpop.f32.mrb[0].mxu0
    %v100 = vadd.f32 %v32, %v99
    %v101 = vpop.f32.mrb[0].mxu0
    %102 = vdwg.mxu0
    %vm103 = vcmask 80896
    %104 = vst.msk [vmem:[#allocation2] sm:$0xff] %vm103, %v97
    %105 = vst.msk [vmem:[#allocation2 + $0x8] sm:$0xff] %vm103, %v100
    // Predicated region
    $region14: #{sden_forward.23} parent=1 // pred_check
      _
    $region15: #{sden_forward.23} parent=1 // pred_check_branch
      %107 = sbr.rel (0) target = $region17
    $region16: #{sden_forward.23} parent=1 // pred_region
      %s109 = ssub.s32 256, 256
      %110 = vsyncadd [#allocation3], %s109
      %s111 = sshll.u32 [#allocation2], 4
      %s112 = int_to_ptr.vmem [resolvable:$true] %s111
      %117 = dma.vmem_to_hbm [thread:$0]  %s112, 256, %s3, [#allocation3], 128, 128, 8
    $region17: #{sden_forward.23} parent=1 // pred_fallthru
      _
    // Predicated region
    $region18: #{sden_forward.23} parent=1 // pred_check
      _
    $region19: #{sden_forward.23} parent=1 // pred_check_branch
      %119 = sbr.rel (0) target = $region21
    $region20: #{sden_forward.23} parent=1 // pred_region
      %120 = dma.done [#allocation3], 256
    $region21: #{sden_forward.23} parent=1 // pred_fallthru
      _
    %121 = vsyncpa [#allocation3], 1

</llo_original>
